<compile_context>
chip_gen: v7x
topology: tpu7x:2x2x1
jax: 0.10.0
libtpu: 0.0.40
codegen_flags: <defaults>
</compile_context>

<pallas_src>
import numpy as np
import jax
import jax.numpy as jnp
from jax.experimental import pallas as pl
from jax.experimental.pallas import tpu as pltpu


# ----------------------------------------------------------------------------
# VMEM budget (per TPU generation)
# ----------------------------------------------------------------------------
def _vmem_limit_bytes():
    """~7/8 of physical VMEM, capped at 100 MiB (v5e/v6e -> 100 MiB, v7x -> 56 MiB)."""
    cap = 128 * 1024 * 1024
    try:
        cap = int(pltpu.get_tpu_info().vmem_capacity_bytes) or cap
    except Exception:
        pass
    return min(100 * 1024 * 1024, (cap // 8) * 7)


# ----------------------------------------------------------------------------
# Fused conv (+bias +act [+2x2 maxpool] [+1x1 proj] [+sigmoid]) kernel
# ----------------------------------------------------------------------------
def _make_conv_kernel(*, K, pad, cin, cout, H, W, Wo, pool, th_out,
                      act, final_act, has_proj):
    th_in = th_out * pool + 2 * pad
    n_compact = (Wo - 1).bit_length() if pool == 2 else 0

    def pooled_w_max(m):
        # 1x2 max over adjacent lane pairs, then compact the even lanes into
        # the first Wo lanes with log2(Wo) roll+select steps.  Replaces the
        # previous full-width f32 selection matmuls (pure XLU/VPU work now).
        y = jnp.maximum(m, jnp.roll(m, -1, axis=1))     # even lane p: max(m[p], m[p+1])
        lane = jax.lax.broadcasted_iota(jnp.int32, y.shape, 1)
        for b in range(n_compact):
            k = 1 << b
            y = jnp.where((lane & k) != 0, jnp.roll(y, -k, axis=1), y)
        return y[:, :Wo]                                # lane p < Wo now holds y[2p]

    def kernel(*refs):
        if has_proj:
            x_ref, w_ref, b_ref, w2_ref, b2_ref, o_ref, xpad_ref, slab_ref = refs
        else:
            x_ref, w_ref, b_ref, o_ref, xpad_ref, slab_ref = refs

        t = pl.program_id(1)
        conv_row0 = t * (th_out * pool)

        # ---- Stage 1: zero-padded input rows in VMEM (in-kernel padding: no
        # jnp.pad HBM round trip).  Rows outside the image and the left/right
        # `pad` lane halo stay zero; valid rows are copied from the resident
        # whole-image block.
        xpad_ref[...] = jnp.zeros(xpad_ref.shape, xpad_ref.dtype)

        def fill(r, carry):
            g = conv_row0 - pad + r                       # global input row
            gc = jnp.clip(g, 0, H - 1)
            valid = jnp.logical_and(g >= 0, g < H).astype(xpad_ref.dtype)
            xpad_ref[r, :, pad:pad + W] = x_ref[0, gc].astype(xpad_ref.dtype) * valid
            return carry

        jax.lax.fori_loop(0, th_in, fill, 0, unroll=True)

        # ---- Stage 2: one output row at a time.  im2col-in-VMEM slab -> a
        # single MXU dot with contraction K*K*Cin (never materialized in HBM).
        def conv_row(conv_r):
            for ky in range(K):
                xrow = xpad_ref[conv_r + ky]              # (cin, W + 2*pad)
                for kx in range(K):
                    tap = ky * K + kx
                    slab_ref[tap * cin:(tap + 1) * cin, :] = xrow[:, kx:kx + W]
            acc = jnp.dot(w_ref[...], slab_ref[...],
                          preferred_element_type=jnp.float32)     # (cout, W) f32
            acc = acc + b_ref[...]
            if act == "relu":
                acc = jnp.maximum(acc, 0.0)
            return acc

        def row_body(r_out, carry):
            base = r_out * pool
            m = conv_row(base)
            if pool == 2:
                m = jnp.maximum(m, conv_row(base + 1))    # 2x1 max over H
                m = pooled_w_max(m)                       # 1x2 max over W -> (cout, Wo)
            if has_proj:
                # fused FMNet 1x1 mapping conv on the pooled row (MXU)
                m = jnp.dot(w2_ref[...], m.astype(w2_ref.dtype),
                            preferred_element_type=jnp.float32) + b2_ref[...]
            if final_act == "sigmoid":
                # exact sigmoid via EUP tanh: no VALU divide, bounded in [0, 1]
                m = 0.5 * (jnp.tanh(0.5 * m) + 1.0)
            o_ref[0, r_out] = m.astype(o_ref.dtype)
            return carry

        jax.lax.fori_loop(0, th_out, row_body, 0)

    return kernel


def conv_block(x, w, b, *, K, pool=1, act="none", proj=None, final_act="none",
               out_dtype=jnp.bfloat16, row_tile=16):
    """Fused conv (+bias +act [+2x2 maxpool] [+1x1 proj] [+sigmoid]), stride 1.

    x:    (N, H, Cin, W) channel-major activations, W on the lane axis.
    w:    (Cout, K*K*Cin) flattened HWIO weights ((ky, kx) outer, cin inner).
    b:    (Cout, 1) float32 bias.
    proj: optional (w2 (C2, Cout), b2 (C2, 1)) fused 1x1 conv after pooling.
    """
    N, H, Cin, W = x.shape
    Cout, kk = w.shape
    assert kk == K * K * Cin
    pad = (K - 1) // 2
    assert H % pool == 0 and W % pool == 0
    if pool == 2:
        # TODO(synk): the log-step even-lane compaction assumes power-of-two W;
        # generalize with an in-kernel width pad for other widths.
        assert W & (W - 1) == 0
    Ho, Wo = H // pool, W // pool

    th_out = min(row_tile, Ho)            # fixed-size row tile (no gcd degeneracy)
    n_row_tiles = pl.cdiv(Ho, th_out)     # last tile row-clamps in-kernel
    th_in = th_out * pool + 2 * pad
    Wp = W + 2 * pad

    has_proj = proj is not None
    c_out_final = proj[0].shape[0] if has_proj else Cout

    kernel = _make_conv_kernel(K=K, pad=pad, cin=Cin, cout=Cout, H=H, W=W,
                               Wo=Wo, pool=pool, th_out=th_out, act=act,
                               final_act=final_act, has_proj=has_proj)

    in_specs = [
        # Whole image of one batch element stays resident across its row tiles
        # (constant index along the row-tile axis -> fetched once per element).
        # TODO(synk): for very large images on v7x (64 MiB VMEM) single-buffer
        # this operand (pl.Buffered(1)) or switch to halo'd row-slab DMA.
        pl.BlockSpec((1, H, Cin, W), lambda n, t: (n, 0, 0, 0)),
        pl.BlockSpec((Cout, kk), lambda n, t: (0, 0)),     # resident weights
        pl.BlockSpec((Cout, 1), lambda n, t: (0, 0)),      # resident bias
    ]
    operands = [x, w, b]
    if has_proj:
        w2, b2 = proj
        in_specs += [pl.BlockSpec(w2.shape, lambda n, t: (0, 0)),
                     pl.BlockSpec(b2.shape, lambda n, t: (0, 0))]
        operands += [w2, b2]

    scratch_shapes = [
        pltpu.VMEM((th_in, Cin, Wp), w.dtype),    # zero-padded input rows
        pltpu.VMEM((K * K * Cin, W), w.dtype),    # im2col slab (VMEM-only)
    ]

    return pl.pallas_call(
        kernel,
        out_shape=jax.ShapeDtypeStruct((N, Ho, c_out_final, Wo), out_dtype),
        grid=(N, n_row_tiles),
        in_specs=in_specs,
        out_specs=pl.BlockSpec((1, th_out, c_out_final, Wo),
                               lambda n, t: (n, t, 0, 0)),
        scratch_shapes=scratch_shapes,
        compiler_params=pltpu.CompilerParams(
            # Both axes are independent (no carried state) -> megacore can also
            # split the row axis, keeping both v7x TensorCores busy at N=1.
            dimension_semantics=("parallel", "parallel"),
            vmem_limit_bytes=_vmem_limit_bytes()),
    )(*operands)


# ----------------------------------------------------------------------------
# Parameters (deterministic surrogate)
# ----------------------------------------------------------------------------
def make_fixed_kernels():
    """FENetwFW: fixed multi-scale 7x7 filters, padded to 16 output channels."""
    K, nfw = 7, 16                       # 12 real filters + 4 zero pad channels
    ks = np.zeros((K, K, 1, nfw), np.float32)
    c = K // 2
    ks[c, c, 0, 0] = 1.0                                   # identity
    for i, s in enumerate([3, 5, 7]):                      # mean filters
        ks[c - s // 2:c + s // 2 + 1, c - s // 2:c + s // 2 + 1, 0, 1 + i] = 1.0 / (s * s)
    for i, s in enumerate([3, 5, 7]):                      # center-surround differences
        ks[c - s // 2:c + s // 2 + 1, c - s // 2:c + s // 2 + 1, 0, 4 + i] = -1.0 / (s * s)
        ks[c, c, 0, 4 + i] += 1.0
    sob = np.array([[-1, 0, 1], [-2, 0, 2], [-1, 0, 1]], np.float32)
    ks[c - 1:c + 2, c - 1:c + 2, 0, 7] = sob               # sobel x
    ks[c - 1:c + 2, c - 1:c + 2, 0, 8] = sob.T             # sobel y
    lap = np.array([[0, 1, 0], [1, -4, 1], [0, 1, 0]], np.float32)
    ks[c - 1:c + 2, c - 1:c + 2, 0, 9] = lap               # laplacian
    ks[c, :, 0, 10] = 1.0 / K                              # horizontal mean
    ks[:, c, 0, 11] = 1.0 / K                              # vertical mean
    return jnp.asarray(ks)


def _to_mat(w, dtype):
    # (K, K, Cin, Cout) HWIO -> (Cout, K*K*Cin), tap-major / cin-minor order
    # (matches the in-kernel im2col slab layout).
    K, _, Cin, Cout = w.shape
    return jnp.transpose(w, (3, 0, 1, 2)).reshape(Cout, K * K * Cin).astype(dtype)


def init_params(key):
    def _conv_init(k, K, cin, cout):
        kw, kb = jax.random.split(k)
        scale = 1.0 / np.sqrt(K * K * cin)
        w = scale * jax.random.normal(kw, (K, K, cin, cout), jnp.float32)
        b = scale * jax.random.normal(kb, (cout,), jnp.float32)
        return w, b

    k1, k2, k3, k4 = jax.random.split(key, 4)
    vw1_w, vw1_b = _conv_init(k1, 3, 16, 16)               # FENetwVW learned stack
    vw2_w, vw2_b = _conv_init(k2, 3, 16, 32)
    vw3_w, vw3_b = _conv_init(k3, 3, 32, 16)
    fm_w, fm_b = _conv_init(k4, 1, 16, 16)                 # FMNet 1x1 map (16 = 4*4)
    return {
        # fixed bank kept in f32 (small-target contrast; review concern)
        "fw_w": _to_mat(make_fixed_kernels(), jnp.float32),  # (16, 49)
        "fw_b": jnp.zeros((16, 1), jnp.float32),
        "vw1_w": _to_mat(vw1_w, jnp.bfloat16), "vw1_b": vw1_b.reshape(16, 1),
        "vw2_w": _to_mat(vw2_w, jnp.bfloat16), "vw2_b": vw2_b.reshape(32, 1),
        "vw3_w": _to_mat(vw3_w, jnp.bfloat16), "vw3_b": vw3_b.reshape(16, 1),
        "fm_w": _to_mat(fm_w, jnp.bfloat16), "fm_b": fm_b.reshape(16, 1),
    }


# ----------------------------------------------------------------------------
# RISTDnet forward
# ----------------------------------------------------------------------------
def ristdnet_forward(params, img_nchw):
    N, C, H, W = img_nchw.shape
    assert C == 1 and H % 4 == 0 and W % 4 == 0
    x = jnp.transpose(img_nchw, (0, 2, 1, 3)).astype(jnp.float32)    # (N, H, 1, W)

    # FENetwFW: fixed 7x7 multi-scale filter bank (MXU im2col dot), no activation.
    fw = conv_block(x, params["fw_w"], params["fw_b"], K=7, pool=1,
                    act="none", out_dtype=jnp.bfloat16)              # (N, H, 16, W)

    # FENetwVW: learned conv stack, ReLU, two fused 2x2 max-pools.
    v = conv_block(fw, params["vw1_w"], params["vw1_b"], K=3, pool=2,
                   act="relu", out_dtype=jnp.bfloat16)               # (N, H/2, 16, W/2)
    v = conv_block(v, params["vw2_w"], params["vw2_b"], K=3, pool=2,
                   act="relu", out_dtype=jnp.bfloat16)               # (N, H/4, 32, W/4)

    # Last FENetwVW conv with FMNet 1x1 mapping + sigmoid fused into its
    # epilogue (the sigmoid commutes with the pixel-shuffle rearrangement).
    m = conv_block(v, params["vw3_w"], params["vw3_b"], K=3, pool=1, act="relu",
                   proj=(params["fm_w"], params["fm_b"]), final_act="sigmoid",
                   out_dtype=jnp.float32)                            # (N, H/4, 16, W/4)

    # Rearrange the 16 = 4*4 channels back to image resolution (XLA layout glue).
    # TODO(synk): verify channel-to-space order (ry*4+rx) against the original
    # FMNet convention.
    Hc, Wc = H // 4, W // 4
    m = m.reshape(N, Hc, 4, 4, Wc)               # (N, Hc, ry, rx, Wc)
    m = jnp.transpose(m, (0, 1, 2, 4, 3))        # (N, Hc, ry, Wc, rx)
    return m.reshape(N, 1, H, W)                 # NCHW likelihood map


if __name__ == "__main__":
    img = jax.random.uniform(jax.random.PRNGKey(0), (2, 1, 16, 16), jnp.float32)
    params = init_params(jax.random.PRNGKey(42))
    fwd = jax.jit(ristdnet_forward)
    out = jax.block_until_ready(fwd(params, img))
    assert out.shape == (2, 1, 16, 16), out.shape
    assert bool(jnp.all(jnp.isfinite(out)))
    assert bool(jnp.all((out >= 0.0) & (out <= 1.0)))   # sigmoid output
    print("KERNEL_OK")
</pallas_src>

<mosaic_0001>
module attributes {stable_mosaic.version = 11 : i64} {
  func.func @kernel(%arg0: i32, %arg1: i32, %arg2: memref<1x16x16x16xbf16, #tpu.memory_space<vmem>>, %arg3: memref<16x144xbf16, #tpu.memory_space<vmem>>, %arg4: memref<16x1xf32, #tpu.memory_space<vmem>>, %arg5: memref<1x8x16x8xbf16, #tpu.memory_space<vmem>>, %arg6: memref<18x16x18xbf16, #tpu.memory_space<vmem>>, %arg7: memref<144x16xbf16, #tpu.memory_space<vmem>>) attributes {dimension_semantics = [#tpu.dimension_semantics<parallel>, #tpu.dimension_semantics<parallel>], iteration_bounds = array<i64: 2, 1>, scalar_prefetch = 0 : i64, scratch_operands = 2 : i64, tpu.core_type = #tpu.core_type<tc>, window_params = [{transform_indices = @transform_0, window_bounds = array<i64: 1, 16, 16, 16>}, {pipeline_mode = #tpu.pipeline_mode<synchronous>, transform_indices = @transform_1, window_bounds = array<i64: 16, 144>}, {pipeline_mode = #tpu.pipeline_mode<synchronous>, transform_indices = @transform_2, window_bounds = array<i64: 16, 1>}, {transform_indices = @transform_3, window_bounds = array<i64: 1, 8, 16, 8>}]} {
    %c16_i32 = arith.constant 16 : i32
    %0 = arith.muli %arg1, %c16_i32 : i32
    %cst = arith.constant 0.000000e+00 : bf16
    %1 = vector.broadcast %cst : bf16 to vector<18x16x18xbf16>
    %c0 = arith.constant 0 : index
    %c0_0 = arith.constant 0 : index
    %c0_1 = arith.constant 0 : index
    %2 = vector.load %arg6[%c0, %c0_0, %c0_1] : memref<18x16x18xbf16, #tpu.memory_space<vmem>>, vector<18x16x18xbf16>
    tpu.vector_store %arg6[%c0, %c0_0, %c0_1], %1 {strides = array<i32>} : memref<18x16x18xbf16, #tpu.memory_space<vmem>>, vector<18x16x18xbf16>,
    %c0_i32 = arith.constant 0 : i32
    %c1_i32 = arith.constant 1 : i32
    %3 = arith.subi %0, %c1_i32 : i32
    %4 = arith.addi %3, %c0_i32 : i32
    %c0_i32_2 = arith.constant 0 : i32
    %c15_i32 = arith.constant 15 : i32
    %5 = arith.maxsi %c0_i32_2, %4 : i32
    %6 = arith.minsi %c15_i32, %5 : i32
    %c0_i32_3 = arith.constant 0 : i32
    %7 = arith.cmpi sge, %4, %c0_i32_3 : i32
    %c16_i32_4 = arith.constant 16 : i32
    %8 = arith.cmpi slt, %4, %c16_i32_4 : i32
    %9 = arith.andi %7, %8 : i1
    %10 = arith.extui %9 : i1 to i32
    %11 = arith.sitofp %10 : i32 to f32
    %12 = arith.truncf %11 : f32 to bf16
    %c0_5 = arith.constant 0 : index
    %13 = arith.index_cast %6 : i32 to index
    %c0_6 = arith.constant 0 : index
    %c0_7 = arith.constant 0 : index
    %14 = vector.load %arg2[%c0_5, %13, %c0_6, %c0_7] : memref<1x16x16x16xbf16, #tpu.memory_space<vmem>>, vector<1x1x16x16xbf16>
    %15 = vector.shape_cast %14 : vector<1x1x16x16xbf16> to vector<16x16xbf16>
    %16 = vector.broadcast %12 : bf16 to vector<16x16xbf16>
    %17 = arith.mulf %15, %16 : vector<16x16xbf16>
    %18 = arith.index_cast %c0_i32 : i32 to index
    %c0_8 = arith.constant 0 : index
    %c1 = arith.constant 1 : index
    %19 = vector.load %arg6[%18, %c0_8, %c1] : memref<18x16x18xbf16, #tpu.memory_space<vmem>>, vector<1x16x16xbf16>
    %20 = vector.shape_cast %19 : vector<1x16x16xbf16> to vector<16x16xbf16>
    %21 = vector.shape_cast %17 : vector<16x16xbf16> to vector<1x16x16xbf16>
    tpu.vector_store %arg6[%18, %c0_8, %c1], %21 {strides = array<i32>} : memref<18x16x18xbf16, #tpu.memory_space<vmem>>, vector<1x16x16xbf16>,
    %c1_i32_9 = arith.constant 1 : i32
    %c1_i32_10 = arith.constant 1 : i32
    %22 = arith.subi %0, %c1_i32_10 : i32
    %23 = arith.addi %22, %c1_i32_9 : i32
    %c0_i32_11 = arith.constant 0 : i32
    %c15_i32_12 = arith.constant 15 : i32
    %24 = arith.maxsi %c0_i32_11, %23 : i32
    %25 = arith.minsi %c15_i32_12, %24 : i32
    %c0_i32_13 = arith.constant 0 : i32
    %26 = arith.cmpi sge, %23, %c0_i32_13 : i32
    %c16_i32_14 = arith.constant 16 : i32
    %27 = arith.cmpi slt, %23, %c16_i32_14 : i32
    %28 = arith.andi %26, %27 : i1
    %29 = arith.extui %28 : i1 to i32
    %30 = arith.sitofp %29 : i32 to f32
    %31 = arith.truncf %30 : f32 to bf16
    %c0_15 = arith.constant 0 : index
    %32 = arith.index_cast %25 : i32 to index
    %c0_16 = arith.constant 0 : index
    %c0_17 = arith.constant 0 : index
    %33 = vector.load %arg2[%c0_15, %32, %c0_16, %c0_17] : memref<1x16x16x16xbf16, #tpu.memory_space<vmem>>, vector<1x1x16x16xbf16>
    %34 = vector.shape_cast %33 : vector<1x1x16x16xbf16> to vector<16x16xbf16>
    %35 = vector.broadcast %31 : bf16 to vector<16x16xbf16>
    %36 = arith.mulf %34, %35 : vector<16x16xbf16>
    %37 = arith.index_cast %c1_i32_9 : i32 to index
    %c0_18 = arith.constant 0 : index
    %c1_19 = arith.constant 1 : index
    %38 = vector.load %arg6[%37, %c0_18, %c1_19] : memref<18x16x18xbf16, #tpu.memory_space<vmem>>, vector<1x16x16xbf16>
    %39 = vector.shape_cast %38 : vector<1x16x16xbf16> to vector<16x16xbf16>
    %40 = vector.shape_cast %36 : vector<16x16xbf16> to vector<1x16x16xbf16>
    tpu.vector_store %arg6[%37, %c0_18, %c1_19], %40 {strides = array<i32>} : memref<18x16x18xbf16, #tpu.memory_space<vmem>>, vector<1x16x16xbf16>,
    %c2_i32 = arith.constant 2 : i32
    %c1_i32_20 = arith.constant 1 : i32
    %41 = arith.subi %0, %c1_i32_20 : i32
    %42 = arith.addi %41, %c2_i32 : i32
    %c0_i32_21 = arith.constant 0 : i32
    %c15_i32_22 = arith.constant 15 : i32
    %43 = arith.maxsi %c0_i32_21, %42 : i32
    %44 = arith.minsi %c15_i32_22, %43 : i32
    %c0_i32_23 = arith.constant 0 : i32
    %45 = arith.cmpi sge, %42, %c0_i32_23 : i32
    %c16_i32_24 = arith.constant 16 : i32
    %46 = arith.cmpi slt, %42, %c16_i32_24 : i32
    %47 = arith.andi %45, %46 : i1
    %48 = arith.extui %47 : i1 to i32
    %49 = arith.sitofp %48 : i32 to f32
    %50 = arith.truncf %49 : f32 to bf16
    %c0_25 = arith.constant 0 : index
    %51 = arith.index_cast %44 : i32 to index
    %c0_26 = arith.constant 0 : index
    %c0_27 = arith.constant 0 : index
    %52 = vector.load %arg2[%c0_25, %51, %c0_26, %c0_27] : memref<1x16x16x16xbf16, #tpu.memory_space<vmem>>, vector<1x1x16x16xbf16>
    %53 = vector.shape_cast %52 : vector<1x1x16x16xbf16> to vector<16x16xbf16>
    %54 = vector.broadcast %50 : bf16 to vector<16x16xbf16>
    %55 = arith.mulf %53, %54 : vector<16x16xbf16>
    %56 = arith.index_cast %c2_i32 : i32 to index
    %c0_28 = arith.constant 0 : index
    %c1_29 = arith.constant 1 : index
    %57 = vector.load %arg6[%56, %c0_28, %c1_29] : memref<18x16x18xbf16, #tpu.memory_space<vmem>>, vector<1x16x16xbf16>
    %58 = vector.shape_cast %57 : vector<1x16x16xbf16> to vector<16x16xbf16>
    %59 = vector.shape_cast %55 : vector<16x16xbf16> to vector<1x16x16xbf16>
    tpu.vector_store %arg6[%56, %c0_28, %c1_29], %59 {strides = array<i32>} : memref<18x16x18xbf16, #tpu.memory_space<vmem>>, vector<1x16x16xbf16>,
    %c3_i32 = arith.constant 3 : i32
    %c1_i32_30 = arith.constant 1 : i32
    %60 = arith.subi %0, %c1_i32_30 : i32
    %61 = arith.addi %60, %c3_i32 : i32
    %c0_i32_31 = arith.constant 0 : i32
    %c15_i32_32 = arith.constant 15 : i32
    %62 = arith.maxsi %c0_i32_31, %61 : i32
    %63 = arith.minsi %c15_i32_32, %62 : i32
    %c0_i32_33 = arith.constant 0 : i32
    %64 = arith.cmpi sge, %61, %c0_i32_33 : i32
    %c16_i32_34 = arith.constant 16 : i32
    %65 = arith.cmpi slt, %61, %c16_i32_34 : i32
    %66 = arith.andi %64, %65 : i1
    %67 = arith.extui %66 : i1 to i32
    %68 = arith.sitofp %67 : i32 to f32
    %69 = arith.truncf %68 : f32 to bf16
    %c0_35 = arith.constant 0 : index
    %70 = arith.index_cast %63 : i32 to index
    %c0_36 = arith.constant 0 : index
    %c0_37 = arith.constant 0 : index
    %71 = vector.load %arg2[%c0_35, %70, %c0_36, %c0_37] : memref<1x16x16x16xbf16, #tpu.memory_space<vmem>>, vector<1x1x16x16xbf16>
    %72 = vector.shape_cast %71 : vector<1x1x16x16xbf16> to vector<16x16xbf16>
    %73 = vector.broadcast %69 : bf16 to vector<16x16xbf16>
    %74 = arith.mulf %72, %73 : vector<16x16xbf16>
    %75 = arith.index_cast %c3_i32 : i32 to index
    %c0_38 = arith.constant 0 : index
    %c1_39 = arith.constant 1 : index
    %76 = vector.load %arg6[%75, %c0_38, %c1_39] : memref<18x16x18xbf16, #tpu.memory_space<vmem>>, vector<1x16x16xbf16>
    %77 = vector.shape_cast %76 : vector<1x16x16xbf16> to vector<16x16xbf16>
    %78 = vector.shape_cast %74 : vector<16x16xbf16> to vector<1x16x16xbf16>
    tpu.vector_store %arg6[%75, %c0_38, %c1_39], %78 {strides = array<i32>} : memref<18x16x18xbf16, #tpu.memory_space<vmem>>, vector<1x16x16xbf16>,
    %c4_i32 = arith.constant 4 : i32
    %c1_i32_40 = arith.constant 1 : i32
    %79 = arith.subi %0, %c1_i32_40 : i32
    %80 = arith.addi %79, %c4_i32 : i32
    %c0_i32_41 = arith.constant 0 : i32
    %c15_i32_42 = arith.constant 15 : i32
    %81 = arith.maxsi %c0_i32_41, %80 : i32
    %82 = arith.minsi %c15_i32_42, %81 : i32
    %c0_i32_43 = arith.constant 0 : i32
    %83 = arith.cmpi sge, %80, %c0_i32_43 : i32
    %c16_i32_44 = arith.constant 16 : i32
    %84 = arith.cmpi slt, %80, %c16_i32_44 : i32
    %85 = arith.andi %83, %84 : i1
    %86 = arith.extui %85 : i1 to i32
    %87 = arith.sitofp %86 : i32 to f32
    %88 = arith.truncf %87 : f32 to bf16
    %c0_45 = arith.constant 0 : index
    %89 = arith.index_cast %82 : i32 to index
    %c0_46 = arith.constant 0 : index
    %c0_47 = arith.constant 0 : index
    %90 = vector.load %arg2[%c0_45, %89, %c0_46, %c0_47] : memref<1x16x16x16xbf16, #tpu.memory_space<vmem>>, vector<1x1x16x16xbf16>
    %91 = vector.shape_cast %90 : vector<1x1x16x16xbf16> to vector<16x16xbf16>
    %92 = vector.broadcast %88 : bf16 to vector<16x16xbf16>
    %93 = arith.mulf %91, %92 : vector<16x16xbf16>
    %94 = arith.index_cast %c4_i32 : i32 to index
    %c0_48 = arith.constant 0 : index
    %c1_49 = arith.constant 1 : index
    %95 = vector.load %arg6[%94, %c0_48, %c1_49] : memref<18x16x18xbf16, #tpu.memory_space<vmem>>, vector<1x16x16xbf16>
    %96 = vector.shape_cast %95 : vector<1x16x16xbf16> to vector<16x16xbf16>
    %97 = vector.shape_cast %93 : vector<16x16xbf16> to vector<1x16x16xbf16>
    tpu.vector_store %arg6[%94, %c0_48, %c1_49], %97 {strides = array<i32>} : memref<18x16x18xbf16, #tpu.memory_space<vmem>>, vector<1x16x16xbf16>,
    %c5_i32 = arith.constant 5 : i32
    %c1_i32_50 = arith.constant 1 : i32
    %98 = arith.subi %0, %c1_i32_50 : i32
    %99 = arith.addi %98, %c5_i32 : i32
    %c0_i32_51 = arith.constant 0 : i32
    %c15_i32_52 = arith.constant 15 : i32
    %100 = arith.maxsi %c0_i32_51, %99 : i32
    %101 = arith.minsi %c15_i32_52, %100 : i32
    %c0_i32_53 = arith.constant 0 : i32
    %102 = arith.cmpi sge, %99, %c0_i32_53 : i32
    %c16_i32_54 = arith.constant 16 : i32
    %103 = arith.cmpi slt, %99, %c16_i32_54 : i32
    %104 = arith.andi %102, %103 : i1
    %105 = arith.extui %104 : i1 to i32
    %106 = arith.sitofp %105 : i32 to f32
    %107 = arith.truncf %106 : f32 to bf16
    %c0_55 = arith.constant 0 : index
    %108 = arith.index_cast %101 : i32 to index
    %c0_56 = arith.constant 0 : index
    %c0_57 = arith.constant 0 : index
    %109 = vector.load %arg2[%c0_55, %108, %c0_56, %c0_57] : memref<1x16x16x16xbf16, #tpu.memory_space<vmem>>, vector<1x1x16x16xbf16>
    %110 = vector.shape_cast %109 : vector<1x1x16x16xbf16> to vector<16x16xbf16>
    %111 = vector.broadcast %107 : bf16 to vector<16x16xbf16>
    %112 = arith.mulf %110, %111 : vector<16x16xbf16>
    %113 = arith.index_cast %c5_i32 : i32 to index
    %c0_58 = arith.constant 0 : index
    %c1_59 = arith.constant 1 : index
    %114 = vector.load %arg6[%113, %c0_58, %c1_59] : memref<18x16x18xbf16, #tpu.memory_space<vmem>>, vector<1x16x16xbf16>
    %115 = vector.shape_cast %114 : vector<1x16x16xbf16> to vector<16x16xbf16>
    %116 = vector.shape_cast %112 : vector<16x16xbf16> to vector<1x16x16xbf16>
    tpu.vector_store %arg6[%113, %c0_58, %c1_59], %116 {strides = array<i32>} : memref<18x16x18xbf16, #tpu.memory_space<vmem>>, vector<1x16x16xbf16>,
    %c6_i32 = arith.constant 6 : i32
    %c1_i32_60 = arith.constant 1 : i32
    %117 = arith.subi %0, %c1_i32_60 : i32
    %118 = arith.addi %117, %c6_i32 : i32
    %c0_i32_61 = arith.constant 0 : i32
    %c15_i32_62 = arith.constant 15 : i32
    %119 = arith.maxsi %c0_i32_61, %118 : i32
    %120 = arith.minsi %c15_i32_62, %119 : i32
    %c0_i32_63 = arith.constant 0 : i32
    %121 = arith.cmpi sge, %118, %c0_i32_63 : i32
    %c16_i32_64 = arith.constant 16 : i32
    %122 = arith.cmpi slt, %118, %c16_i32_64 : i32
    %123 = arith.andi %121, %122 : i1
    %124 = arith.extui %123 : i1 to i32
    %125 = arith.sitofp %124 : i32 to f32
    %126 = arith.truncf %125 : f32 to bf16
    %c0_65 = arith.constant 0 : index
    %127 = arith.index_cast %120 : i32 to index
    %c0_66 = arith.constant 0 : index
    %c0_67 = arith.constant 0 : index
    %128 = vector.load %arg2[%c0_65, %127, %c0_66, %c0_67] : memref<1x16x16x16xbf16, #tpu.memory_space<vmem>>, vector<1x1x16x16xbf16>
    %129 = vector.shape_cast %128 : vector<1x1x16x16xbf16> to vector<16x16xbf16>
    %130 = vector.broadcast %126 : bf16 to vector<16x16xbf16>
    %131 = arith.mulf %129, %130 : vector<16x16xbf16>
    %132 = arith.index_cast %c6_i32 : i32 to index
    %c0_68 = arith.constant 0 : index
    %c1_69 = arith.constant 1 : index
    %133 = vector.load %arg6[%132, %c0_68, %c1_69] : memref<18x16x18xbf16, #tpu.memory_space<vmem>>, vector<1x16x16xbf16>
    %134 = vector.shape_cast %133 : vector<1x16x16xbf16> to vector<16x16xbf16>
    %135 = vector.shape_cast %131 : vector<16x16xbf16> to vector<1x16x16xbf16>
    tpu.vector_store %arg6[%132, %c0_68, %c1_69], %135 {strides = array<i32>} : memref<18x16x18xbf16, #tpu.memory_space<vmem>>, vector<1x16x16xbf16>,
    %c7_i32 = arith.constant 7 : i32
    %c1_i32_70 = arith.constant 1 : i32
    %136 = arith.subi %0, %c1_i32_70 : i32
    %137 = arith.addi %136, %c7_i32 : i32
    %c0_i32_71 = arith.constant 0 : i32
    %c15_i32_72 = arith.constant 15 : i32
    %138 = arith.maxsi %c0_i32_71, %137 : i32
    %139 = arith.minsi %c15_i32_72, %138 : i32
    %c0_i32_73 = arith.constant 0 : i32
    %140 = arith.cmpi sge, %137, %c0_i32_73 : i32
    %c16_i32_74 = arith.constant 16 : i32
    %141 = arith.cmpi slt, %137, %c16_i32_74 : i32
    %142 = arith.andi %140, %141 : i1
    %143 = arith.extui %142 : i1 to i32
    %144 = arith.sitofp %143 : i32 to f32
    %145 = arith.truncf %144 : f32 to bf16
    %c0_75 = arith.constant 0 : index
    %146 = arith.index_cast %139 : i32 to index
    %c0_76 = arith.constant 0 : index
    %c0_77 = arith.constant 0 : index
    %147 = vector.load %arg2[%c0_75, %146, %c0_76, %c0_77] : memref<1x16x16x16xbf16, #tpu.memory_space<vmem>>, vector<1x1x16x16xbf16>
    %148 = vector.shape_cast %147 : vector<1x1x16x16xbf16> to vector<16x16xbf16>
    %149 = vector.broadcast %145 : bf16 to vector<16x16xbf16>
    %150 = arith.mulf %148, %149 : vector<16x16xbf16>
    %151 = arith.index_cast %c7_i32 : i32 to index
    %c0_78 = arith.constant 0 : index
    %c1_79 = arith.constant 1 : index
    %152 = vector.load %arg6[%151, %c0_78, %c1_79] : memref<18x16x18xbf16, #tpu.memory_space<vmem>>, vector<1x16x16xbf16>
    %153 = vector.shape_cast %152 : vector<1x16x16xbf16> to vector<16x16xbf16>
    %154 = vector.shape_cast %150 : vector<16x16xbf16> to vector<1x16x16xbf16>
    tpu.vector_store %arg6[%151, %c0_78, %c1_79], %154 {strides = array<i32>} : memref<18x16x18xbf16, #tpu.memory_space<vmem>>, vector<1x16x16xbf16>,
    %c8_i32 = arith.constant 8 : i32
    %c1_i32_80 = arith.constant 1 : i32
    %155 = arith.subi %0, %c1_i32_80 : i32
    %156 = arith.addi %155, %c8_i32 : i32
    %c0_i32_81 = arith.constant 0 : i32
    %c15_i32_82 = arith.constant 15 : i32
    %157 = arith.maxsi %c0_i32_81, %156 : i32
    %158 = arith.minsi %c15_i32_82, %157 : i32
    %c0_i32_83 = arith.constant 0 : i32
    %159 = arith.cmpi sge, %156, %c0_i32_83 : i32
    %c16_i32_84 = arith.constant 16 : i32
    %160 = arith.cmpi slt, %156, %c16_i32_84 : i32
    %161 = arith.andi %159, %160 : i1
    %162 = arith.extui %161 : i1 to i32
    %163 = arith.sitofp %162 : i32 to f32
    %164 = arith.truncf %163 : f32 to bf16
    %c0_85 = arith.constant 0 : index
    %165 = arith.index_cast %158 : i32 to index
    %c0_86 = arith.constant 0 : index
    %c0_87 = arith.constant 0 : index
    %166 = vector.load %arg2[%c0_85, %165, %c0_86, %c0_87] : memref<1x16x16x16xbf16, #tpu.memory_space<vmem>>, vector<1x1x16x16xbf16>
    %167 = vector.shape_cast %166 : vector<1x1x16x16xbf16> to vector<16x16xbf16>
    %168 = vector.broadcast %164 : bf16 to vector<16x16xbf16>
    %169 = arith.mulf %167, %168 : vector<16x16xbf16>
    %170 = arith.index_cast %c8_i32 : i32 to index
    %c0_88 = arith.constant 0 : index
    %c1_89 = arith.constant 1 : index
    %171 = vector.load %arg6[%170, %c0_88, %c1_89] : memref<18x16x18xbf16, #tpu.memory_space<vmem>>, vector<1x16x16xbf16>
    %172 = vector.shape_cast %171 : vector<1x16x16xbf16> to vector<16x16xbf16>
    %173 = vector.shape_cast %169 : vector<16x16xbf16> to vector<1x16x16xbf16>
    tpu.vector_store %arg6[%170, %c0_88, %c1_89], %173 {strides = array<i32>} : memref<18x16x18xbf16, #tpu.memory_space<vmem>>, vector<1x16x16xbf16>,
    %c9_i32 = arith.constant 9 : i32
    %c1_i32_90 = arith.constant 1 : i32
    %174 = arith.subi %0, %c1_i32_90 : i32
    %175 = arith.addi %174, %c9_i32 : i32
    %c0_i32_91 = arith.constant 0 : i32
    %c15_i32_92 = arith.constant 15 : i32
    %176 = arith.maxsi %c0_i32_91, %175 : i32
    %177 = arith.minsi %c15_i32_92, %176 : i32
    %c0_i32_93 = arith.constant 0 : i32
    %178 = arith.cmpi sge, %175, %c0_i32_93 : i32
    %c16_i32_94 = arith.constant 16 : i32
    %179 = arith.cmpi slt, %175, %c16_i32_94 : i32
    %180 = arith.andi %178, %179 : i1
    %181 = arith.extui %180 : i1 to i32
    %182 = arith.sitofp %181 : i32 to f32
    %183 = arith.truncf %182 : f32 to bf16
    %c0_95 = arith.constant 0 : index
    %184 = arith.index_cast %177 : i32 to index
    %c0_96 = arith.constant 0 : index
    %c0_97 = arith.constant 0 : index
    %185 = vector.load %arg2[%c0_95, %184, %c0_96, %c0_97] : memref<1x16x16x16xbf16, #tpu.memory_space<vmem>>, vector<1x1x16x16xbf16>
    %186 = vector.shape_cast %185 : vector<1x1x16x16xbf16> to vector<16x16xbf16>
    %187 = vector.broadcast %183 : bf16 to vector<16x16xbf16>
    %188 = arith.mulf %186, %187 : vector<16x16xbf16>
    %189 = arith.index_cast %c9_i32 : i32 to index
    %c0_98 = arith.constant 0 : index
    %c1_99 = arith.constant 1 : index
    %190 = vector.load %arg6[%189, %c0_98, %c1_99] : memref<18x16x18xbf16, #tpu.memory_space<vmem>>, vector<1x16x16xbf16>
    %191 = vector.shape_cast %190 : vector<1x16x16xbf16> to vector<16x16xbf16>
    %192 = vector.shape_cast %188 : vector<16x16xbf16> to vector<1x16x16xbf16>
    tpu.vector_store %arg6[%189, %c0_98, %c1_99], %192 {strides = array<i32>} : memref<18x16x18xbf16, #tpu.memory_space<vmem>>, vector<1x16x16xbf16>,
    %c10_i32 = arith.constant 10 : i32
    %c1_i32_100 = arith.constant 1 : i32
    %193 = arith.subi %0, %c1_i32_100 : i32
    %194 = arith.addi %193, %c10_i32 : i32
    %c0_i32_101 = arith.constant 0 : i32
    %c15_i32_102 = arith.constant 15 : i32
    %195 = arith.maxsi %c0_i32_101, %194 : i32
    %196 = arith.minsi %c15_i32_102, %195 : i32
    %c0_i32_103 = arith.constant 0 : i32
    %197 = arith.cmpi sge, %194, %c0_i32_103 : i32
    %c16_i32_104 = arith.constant 16 : i32
    %198 = arith.cmpi slt, %194, %c16_i32_104 : i32
    %199 = arith.andi %197, %198 : i1
    %200 = arith.extui %199 : i1 to i32
    %201 = arith.sitofp %200 : i32 to f32
    %202 = arith.truncf %201 : f32 to bf16
    %c0_105 = arith.constant 0 : index
    %203 = arith.index_cast %196 : i32 to index
    %c0_106 = arith.constant 0 : index
    %c0_107 = arith.constant 0 : index
    %204 = vector.load %arg2[%c0_105, %203, %c0_106, %c0_107] : memref<1x16x16x16xbf16, #tpu.memory_space<vmem>>, vector<1x1x16x16xbf16>
    %205 = vector.shape_cast %204 : vector<1x1x16x16xbf16> to vector<16x16xbf16>
    %206 = vector.broadcast %202 : bf16 to vector<16x16xbf16>
    %207 = arith.mulf %205, %206 : vector<16x16xbf16>
    %208 = arith.index_cast %c10_i32 : i32 to index
    %c0_108 = arith.constant 0 : index
    %c1_109 = arith.constant 1 : index
    %209 = vector.load %arg6[%208, %c0_108, %c1_109] : memref<18x16x18xbf16, #tpu.memory_space<vmem>>, vector<1x16x16xbf16>
    %210 = vector.shape_cast %209 : vector<1x16x16xbf16> to vector<16x16xbf16>
    %211 = vector.shape_cast %207 : vector<16x16xbf16> to vector<1x16x16xbf16>
    tpu.vector_store %arg6[%208, %c0_108, %c1_109], %211 {strides = array<i32>} : memref<18x16x18xbf16, #tpu.memory_space<vmem>>, vector<1x16x16xbf16>,
    %c11_i32 = arith.constant 11 : i32
    %c1_i32_110 = arith.constant 1 : i32
    %212 = arith.subi %0, %c1_i32_110 : i32
    %213 = arith.addi %212, %c11_i32 : i32
    %c0_i32_111 = arith.constant 0 : i32
    %c15_i32_112 = arith.constant 15 : i32
    %214 = arith.maxsi %c0_i32_111, %213 : i32
    %215 = arith.minsi %c15_i32_112, %214 : i32
    %c0_i32_113 = arith.constant 0 : i32
    %216 = arith.cmpi sge, %213, %c0_i32_113 : i32
    %c16_i32_114 = arith.constant 16 : i32
    %217 = arith.cmpi slt, %213, %c16_i32_114 : i32
    %218 = arith.andi %216, %217 : i1
    %219 = arith.extui %218 : i1 to i32
    %220 = arith.sitofp %219 : i32 to f32
    %221 = arith.truncf %220 : f32 to bf16
    %c0_115 = arith.constant 0 : index
    %222 = arith.index_cast %215 : i32 to index
    %c0_116 = arith.constant 0 : index
    %c0_117 = arith.constant 0 : index
    %223 = vector.load %arg2[%c0_115, %222, %c0_116, %c0_117] : memref<1x16x16x16xbf16, #tpu.memory_space<vmem>>, vector<1x1x16x16xbf16>
    %224 = vector.shape_cast %223 : vector<1x1x16x16xbf16> to vector<16x16xbf16>
    %225 = vector.broadcast %221 : bf16 to vector<16x16xbf16>
    %226 = arith.mulf %224, %225 : vector<16x16xbf16>
    %227 = arith.index_cast %c11_i32 : i32 to index
    %c0_118 = arith.constant 0 : index
    %c1_119 = arith.constant 1 : index
    %228 = vector.load %arg6[%227, %c0_118, %c1_119] : memref<18x16x18xbf16, #tpu.memory_space<vmem>>, vector<1x16x16xbf16>
    %229 = vector.shape_cast %228 : vector<1x16x16xbf16> to vector<16x16xbf16>
    %230 = vector.shape_cast %226 : vector<16x16xbf16> to vector<1x16x16xbf16>
    tpu.vector_store %arg6[%227, %c0_118, %c1_119], %230 {strides = array<i32>} : memref<18x16x18xbf16, #tpu.memory_space<vmem>>, vector<1x16x16xbf16>,
    %c12_i32 = arith.constant 12 : i32
    %c1_i32_120 = arith.constant 1 : i32
    %231 = arith.subi %0, %c1_i32_120 : i32
    %232 = arith.addi %231, %c12_i32 : i32
    %c0_i32_121 = arith.constant 0 : i32
    %c15_i32_122 = arith.constant 15 : i32
    %233 = arith.maxsi %c0_i32_121, %232 : i32
    %234 = arith.minsi %c15_i32_122, %233 : i32
    %c0_i32_123 = arith.constant 0 : i32
    %235 = arith.cmpi sge, %232, %c0_i32_123 : i32
    %c16_i32_124 = arith.constant 16 : i32
    %236 = arith.cmpi slt, %232, %c16_i32_124 : i32
    %237 = arith.andi %235, %236 : i1
    %238 = arith.extui %237 : i1 to i32
    %239 = arith.sitofp %238 : i32 to f32
    %240 = arith.truncf %239 : f32 to bf16
    %c0_125 = arith.constant 0 : index
    %241 = arith.index_cast %234 : i32 to index
    %c0_126 = arith.constant 0 : index
    %c0_127 = arith.constant 0 : index
    %242 = vector.load %arg2[%c0_125, %241, %c0_126, %c0_127] : memref<1x16x16x16xbf16, #tpu.memory_space<vmem>>, vector<1x1x16x16xbf16>
    %243 = vector.shape_cast %242 : vector<1x1x16x16xbf16> to vector<16x16xbf16>
    %244 = vector.broadcast %240 : bf16 to vector<16x16xbf16>
    %245 = arith.mulf %243, %244 : vector<16x16xbf16>
    %246 = arith.index_cast %c12_i32 : i32 to index
    %c0_128 = arith.constant 0 : index
    %c1_129 = arith.constant 1 : index
    %247 = vector.load %arg6[%246, %c0_128, %c1_129] : memref<18x16x18xbf16, #tpu.memory_space<vmem>>, vector<1x16x16xbf16>
    %248 = vector.shape_cast %247 : vector<1x16x16xbf16> to vector<16x16xbf16>
    %249 = vector.shape_cast %245 : vector<16x16xbf16> to vector<1x16x16xbf16>
    tpu.vector_store %arg6[%246, %c0_128, %c1_129], %249 {strides = array<i32>} : memref<18x16x18xbf16, #tpu.memory_space<vmem>>, vector<1x16x16xbf16>,
    %c13_i32 = arith.constant 13 : i32
    %c1_i32_130 = arith.constant 1 : i32
    %250 = arith.subi %0, %c1_i32_130 : i32
    %251 = arith.addi %250, %c13_i32 : i32
    %c0_i32_131 = arith.constant 0 : i32
    %c15_i32_132 = arith.constant 15 : i32
    %252 = arith.maxsi %c0_i32_131, %251 : i32
    %253 = arith.minsi %c15_i32_132, %252 : i32
    %c0_i32_133 = arith.constant 0 : i32
    %254 = arith.cmpi sge, %251, %c0_i32_133 : i32
    %c16_i32_134 = arith.constant 16 : i32
    %255 = arith.cmpi slt, %251, %c16_i32_134 : i32
    %256 = arith.andi %254, %255 : i1
    %257 = arith.extui %256 : i1 to i32
    %258 = arith.sitofp %257 : i32 to f32
    %259 = arith.truncf %258 : f32 to bf16
    %c0_135 = arith.constant 0 : index
    %260 = arith.index_cast %253 : i32 to index
    %c0_136 = arith.constant 0 : index
    %c0_137 = arith.constant 0 : index
    %261 = vector.load %arg2[%c0_135, %260, %c0_136, %c0_137] : memref<1x16x16x16xbf16, #tpu.memory_space<vmem>>, vector<1x1x16x16xbf16>
    %262 = vector.shape_cast %261 : vector<1x1x16x16xbf16> to vector<16x16xbf16>
    %263 = vector.broadcast %259 : bf16 to vector<16x16xbf16>
    %264 = arith.mulf %262, %263 : vector<16x16xbf16>
    %265 = arith.index_cast %c13_i32 : i32 to index
    %c0_138 = arith.constant 0 : index
    %c1_139 = arith.constant 1 : index
    %266 = vector.load %arg6[%265, %c0_138, %c1_139] : memref<18x16x18xbf16, #tpu.memory_space<vmem>>, vector<1x16x16xbf16>
    %267 = vector.shape_cast %266 : vector<1x16x16xbf16> to vector<16x16xbf16>
    %268 = vector.shape_cast %264 : vector<16x16xbf16> to vector<1x16x16xbf16>
    tpu.vector_store %arg6[%265, %c0_138, %c1_139], %268 {strides = array<i32>} : memref<18x16x18xbf16, #tpu.memory_space<vmem>>, vector<1x16x16xbf16>,
    %c14_i32 = arith.constant 14 : i32
    %c1_i32_140 = arith.constant 1 : i32
    %269 = arith.subi %0, %c1_i32_140 : i32
    %270 = arith.addi %269, %c14_i32 : i32
    %c0_i32_141 = arith.constant 0 : i32
    %c15_i32_142 = arith.constant 15 : i32
    %271 = arith.maxsi %c0_i32_141, %270 : i32
    %272 = arith.minsi %c15_i32_142, %271 : i32
    %c0_i32_143 = arith.constant 0 : i32
    %273 = arith.cmpi sge, %270, %c0_i32_143 : i32
    %c16_i32_144 = arith.constant 16 : i32
    %274 = arith.cmpi slt, %270, %c16_i32_144 : i32
    %275 = arith.andi %273, %274 : i1
    %276 = arith.extui %275 : i1 to i32
    %277 = arith.sitofp %276 : i32 to f32
    %278 = arith.truncf %277 : f32 to bf16
    %c0_145 = arith.constant 0 : index
    %279 = arith.index_cast %272 : i32 to index
    %c0_146 = arith.constant 0 : index
    %c0_147 = arith.constant 0 : index
    %280 = vector.load %arg2[%c0_145, %279, %c0_146, %c0_147] : memref<1x16x16x16xbf16, #tpu.memory_space<vmem>>, vector<1x1x16x16xbf16>
    %281 = vector.shape_cast %280 : vector<1x1x16x16xbf16> to vector<16x16xbf16>
    %282 = vector.broadcast %278 : bf16 to vector<16x16xbf16>
    %283 = arith.mulf %281, %282 : vector<16x16xbf16>
    %284 = arith.index_cast %c14_i32 : i32 to index
    %c0_148 = arith.constant 0 : index
    %c1_149 = arith.constant 1 : index
    %285 = vector.load %arg6[%284, %c0_148, %c1_149] : memref<18x16x18xbf16, #tpu.memory_space<vmem>>, vector<1x16x16xbf16>
    %286 = vector.shape_cast %285 : vector<1x16x16xbf16> to vector<16x16xbf16>
    %287 = vector.shape_cast %283 : vector<16x16xbf16> to vector<1x16x16xbf16>
    tpu.vector_store %arg6[%284, %c0_148, %c1_149], %287 {strides = array<i32>} : memref<18x16x18xbf16, #tpu.memory_space<vmem>>, vector<1x16x16xbf16>,
    %c15_i32_150 = arith.constant 15 : i32
    %c1_i32_151 = arith.constant 1 : i32
    %288 = arith.subi %0, %c1_i32_151 : i32
    %289 = arith.addi %288, %c15_i32_150 : i32
    %c0_i32_152 = arith.constant 0 : i32
    %c15_i32_153 = arith.constant 15 : i32
    %290 = arith.maxsi %c0_i32_152, %289 : i32
    %291 = arith.minsi %c15_i32_153, %290 : i32
    %c0_i32_154 = arith.constant 0 : i32
    %292 = arith.cmpi sge, %289, %c0_i32_154 : i32
    %c16_i32_155 = arith.constant 16 : i32
    %293 = arith.cmpi slt, %289, %c16_i32_155 : i32
    %294 = arith.andi %292, %293 : i1
    %295 = arith.extui %294 : i1 to i32
    %296 = arith.sitofp %295 : i32 to f32
    %297 = arith.truncf %296 : f32 to bf16
    %c0_156 = arith.constant 0 : index
    %298 = arith.index_cast %291 : i32 to index
    %c0_157 = arith.constant 0 : index
    %c0_158 = arith.constant 0 : index
    %299 = vector.load %arg2[%c0_156, %298, %c0_157, %c0_158] : memref<1x16x16x16xbf16, #tpu.memory_space<vmem>>, vector<1x1x16x16xbf16>
    %300 = vector.shape_cast %299 : vector<1x1x16x16xbf16> to vector<16x16xbf16>
    %301 = vector.broadcast %297 : bf16 to vector<16x16xbf16>
    %302 = arith.mulf %300, %301 : vector<16x16xbf16>
    %303 = arith.index_cast %c15_i32_150 : i32 to index
    %c0_159 = arith.constant 0 : index
    %c1_160 = arith.constant 1 : index
    %304 = vector.load %arg6[%303, %c0_159, %c1_160] : memref<18x16x18xbf16, #tpu.memory_space<vmem>>, vector<1x16x16xbf16>
    %305 = vector.shape_cast %304 : vector<1x16x16xbf16> to vector<16x16xbf16>
    %306 = vector.shape_cast %302 : vector<16x16xbf16> to vector<1x16x16xbf16>
    tpu.vector_store %arg6[%303, %c0_159, %c1_160], %306 {strides = array<i32>} : memref<18x16x18xbf16, #tpu.memory_space<vmem>>, vector<1x16x16xbf16>,
    %c16_i32_161 = arith.constant 16 : i32
    %c1_i32_162 = arith.constant 1 : i32
    %307 = arith.subi %0, %c1_i32_162 : i32
    %308 = arith.addi %307, %c16_i32_161 : i32
    %c0_i32_163 = arith.constant 0 : i32
    %c15_i32_164 = arith.constant 15 : i32
    %309 = arith.maxsi %c0_i32_163, %308 : i32
    %310 = arith.minsi %c15_i32_164, %309 : i32
    %c0_i32_165 = arith.constant 0 : i32
    %311 = arith.cmpi sge, %308, %c0_i32_165 : i32
    %c16_i32_166 = arith.constant 16 : i32
    %312 = arith.cmpi slt, %308, %c16_i32_166 : i32
    %313 = arith.andi %311, %312 : i1
    %314 = arith.extui %313 : i1 to i32
    %315 = arith.sitofp %314 : i32 to f32
    %316 = arith.truncf %315 : f32 to bf16
    %c0_167 = arith.constant 0 : index
    %317 = arith.index_cast %310 : i32 to index
    %c0_168 = arith.constant 0 : index
    %c0_169 = arith.constant 0 : index
    %318 = vector.load %arg2[%c0_167, %317, %c0_168, %c0_169] : memref<1x16x16x16xbf16, #tpu.memory_space<vmem>>, vector<1x1x16x16xbf16>
    %319 = vector.shape_cast %318 : vector<1x1x16x16xbf16> to vector<16x16xbf16>
    %320 = vector.broadcast %316 : bf16 to vector<16x16xbf16>
    %321 = arith.mulf %319, %320 : vector<16x16xbf16>
    %322 = arith.index_cast %c16_i32_161 : i32 to index
    %c0_170 = arith.constant 0 : index
    %c1_171 = arith.constant 1 : index
    %323 = vector.load %arg6[%322, %c0_170, %c1_171] : memref<18x16x18xbf16, #tpu.memory_space<vmem>>, vector<1x16x16xbf16>
    %324 = vector.shape_cast %323 : vector<1x16x16xbf16> to vector<16x16xbf16>
    %325 = vector.shape_cast %321 : vector<16x16xbf16> to vector<1x16x16xbf16>
    tpu.vector_store %arg6[%322, %c0_170, %c1_171], %325 {strides = array<i32>} : memref<18x16x18xbf16, #tpu.memory_space<vmem>>, vector<1x16x16xbf16>,
    %c17_i32 = arith.constant 17 : i32
    %c1_i32_172 = arith.constant 1 : i32
    %326 = arith.subi %0, %c1_i32_172 : i32
    %327 = arith.addi %326, %c17_i32 : i32
    %c0_i32_173 = arith.constant 0 : i32
    %c15_i32_174 = arith.constant 15 : i32
    %328 = arith.maxsi %c0_i32_173, %327 : i32
    %329 = arith.minsi %c15_i32_174, %328 : i32
    %c0_i32_175 = arith.constant 0 : i32
    %330 = arith.cmpi sge, %327, %c0_i32_175 : i32
    %c16_i32_176 = arith.constant 16 : i32
    %331 = arith.cmpi slt, %327, %c16_i32_176 : i32
    %332 = arith.andi %330, %331 : i1
    %333 = arith.extui %332 : i1 to i32
    %334 = arith.sitofp %333 : i32 to f32
    %335 = arith.truncf %334 : f32 to bf16
    %c0_177 = arith.constant 0 : index
    %336 = arith.index_cast %329 : i32 to index
    %c0_178 = arith.constant 0 : index
    %c0_179 = arith.constant 0 : index
    %337 = vector.load %arg2[%c0_177, %336, %c0_178, %c0_179] : memref<1x16x16x16xbf16, #tpu.memory_space<vmem>>, vector<1x1x16x16xbf16>
    %338 = vector.shape_cast %337 : vector<1x1x16x16xbf16> to vector<16x16xbf16>
    %339 = vector.broadcast %335 : bf16 to vector<16x16xbf16>
    %340 = arith.mulf %338, %339 : vector<16x16xbf16>
    %341 = arith.index_cast %c17_i32 : i32 to index
    %c0_180 = arith.constant 0 : index
    %c1_181 = arith.constant 1 : index
    %342 = vector.load %arg6[%341, %c0_180, %c1_181] : memref<18x16x18xbf16, #tpu.memory_space<vmem>>, vector<1x16x16xbf16>
    %343 = vector.shape_cast %342 : vector<1x16x16xbf16> to vector<16x16xbf16>
    %344 = vector.shape_cast %340 : vector<16x16xbf16> to vector<1x16x16xbf16>
    tpu.vector_store %arg6[%341, %c0_180, %c1_181], %344 {strides = array<i32>} : memref<18x16x18xbf16, #tpu.memory_space<vmem>>, vector<1x16x16xbf16>,
    %c18_i32 = arith.constant 18 : i32
    %c0_i32_182 = arith.constant 0 : i32
    %c8_i32_183 = arith.constant 8 : i32
    %345 = arith.addi %c0_i32_182, %c8_i32_183 : i32
    %c1_i32_184 = arith.constant 1 : i32
    scf.for %arg8 = %c0_i32_182 to %345 step %c1_i32_184  : i32 {
      %c2_i32_186 = arith.constant 2 : i32
      %346 = arith.muli %arg8, %c2_i32_186 : i32
      %c0_i32_187 = arith.constant 0 : i32
      %347 = arith.addi %346, %c0_i32_187 : i32
      %348 = arith.index_cast %347 : i32 to index
      %c0_188 = arith.constant 0 : index
      %c0_189 = arith.constant 0 : index
      %349 = vector.load %arg6[%348, %c0_188, %c0_189] : memref<18x16x18xbf16, #tpu.memory_space<vmem>>, vector<1x16x18xbf16>
      %350 = vector.shape_cast %349 : vector<1x16x18xbf16> to vector<16x18xbf16>
      %351 = vector.extract_strided_slice %350 {offsets = [0, 0], sizes = [16, 16], strides = [1, 1]} : vector<16x18xbf16> to vector<16x16xbf16>
      %c0_190 = arith.constant 0 : index
      %c0_191 = arith.constant 0 : index
      %352 = vector.load %arg7[%c0_190, %c0_191] : memref<144x16xbf16, #tpu.memory_space<vmem>>, vector<16x16xbf16>
      tpu.vector_store %arg7[%c0_190, %c0_191], %351 {strides = array<i32>} : memref<144x16xbf16, #tpu.memory_space<vmem>>, vector<16x16xbf16>,
      %353 = vector.extract_strided_slice %350 {offsets = [0, 1], sizes = [16, 16], strides = [1, 1]} : vector<16x18xbf16> to vector<16x16xbf16>
      %c16 = arith.constant 16 : index
      %c0_192 = arith.constant 0 : index
      %354 = vector.load %arg7[%c16, %c0_192] : memref<144x16xbf16, #tpu.memory_space<vmem>>, vector<16x16xbf16>
      tpu.vector_store %arg7[%c16, %c0_192], %353 {strides = array<i32>} : memref<144x16xbf16, #tpu.memory_space<vmem>>, vector<16x16xbf16>,
      %355 = vector.extract_strided_slice %350 {offsets = [0, 2], sizes = [16, 16], strides = [1, 1]} : vector<16x18xbf16> to vector<16x16xbf16>
      %c32 = arith.constant 32 : index
      %c0_193 = arith.constant 0 : index
      %356 = vector.load %arg7[%c32, %c0_193] : memref<144x16xbf16, #tpu.memory_space<vmem>>, vector<16x16xbf16>
      tpu.vector_store %arg7[%c32, %c0_193], %355 {strides = array<i32>} : memref<144x16xbf16, #tpu.memory_space<vmem>>, vector<16x16xbf16>,
      %c1_i32_194 = arith.constant 1 : i32
      %357 = arith.addi %346, %c1_i32_194 : i32
      %358 = arith.index_cast %357 : i32 to index
      %c0_195 = arith.constant 0 : index
      %c0_196 = arith.constant 0 : index
      %359 = vector.load %arg6[%358, %c0_195, %c0_196] : memref<18x16x18xbf16, #tpu.memory_space<vmem>>, vector<1x16x18xbf16>
      %360 = vector.shape_cast %359 : vector<1x16x18xbf16> to vector<16x18xbf16>
      %361 = vector.extract_strided_slice %360 {offsets = [0, 0], sizes = [16, 16], strides = [1, 1]} : vector<16x18xbf16> to vector<16x16xbf16>
      %c48 = arith.constant 48 : index
      %c0_197 = arith.constant 0 : index
      %362 = vector.load %arg7[%c48, %c0_197] : memref<144x16xbf16, #tpu.memory_space<vmem>>, vector<16x16xbf16>
      tpu.vector_store %arg7[%c48, %c0_197], %361 {strides = array<i32>} : memref<144x16xbf16, #tpu.memory_space<vmem>>, vector<16x16xbf16>,
      %363 = vector.extract_strided_slice %360 {offsets = [0, 1], sizes = [16, 16], strides = [1, 1]} : vector<16x18xbf16> to vector<16x16xbf16>
      %c64 = arith.constant 64 : index
      %c0_198 = arith.constant 0 : index
      %364 = vector.load %arg7[%c64, %c0_198] : memref<144x16xbf16, #tpu.memory_space<vmem>>, vector<16x16xbf16>
      tpu.vector_store %arg7[%c64, %c0_198], %363 {strides = array<i32>} : memref<144x16xbf16, #tpu.memory_space<vmem>>, vector<16x16xbf16>,
      %365 = vector.extract_strided_slice %360 {offsets = [0, 2], sizes = [16, 16], strides = [1, 1]} : vector<16x18xbf16> to vector<16x16xbf16>
      %c80 = arith.constant 80 : index
      %c0_199 = arith.constant 0 : index
      %366 = vector.load %arg7[%c80, %c0_199] : memref<144x16xbf16, #tpu.memory_space<vmem>>, vector<16x16xbf16>
      tpu.vector_store %arg7[%c80, %c0_199], %365 {strides = array<i32>} : memref<144x16xbf16, #tpu.memory_space<vmem>>, vector<16x16xbf16>,
      %c2_i32_200 = arith.constant 2 : i32
      %367 = arith.addi %346, %c2_i32_200 : i32
      %368 = arith.index_cast %367 : i32 to index
      %c0_201 = arith.constant 0 : index
      %c0_202 = arith.constant 0 : index
      %369 = vector.load %arg6[%368, %c0_201, %c0_202] : memref<18x16x18xbf16, #tpu.memory_space<vmem>>, vector<1x16x18xbf16>
      %370 = vector.shape_cast %369 : vector<1x16x18xbf16> to vector<16x18xbf16>
      %371 = vector.extract_strided_slice %370 {offsets = [0, 0], sizes = [16, 16], strides = [1, 1]} : vector<16x18xbf16> to vector<16x16xbf16>
      %c96 = arith.constant 96 : index
      %c0_203 = arith.constant 0 : index
      %372 = vector.load %arg7[%c96, %c0_203] : memref<144x16xbf16, #tpu.memory_space<vmem>>, vector<16x16xbf16>
      tpu.vector_store %arg7[%c96, %c0_203], %371 {strides = array<i32>} : memref<144x16xbf16, #tpu.memory_space<vmem>>, vector<16x16xbf16>,
      %373 = vector.extract_strided_slice %370 {offsets = [0, 1], sizes = [16, 16], strides = [1, 1]} : vector<16x18xbf16> to vector<16x16xbf16>
      %c112 = arith.constant 112 : index
      %c0_204 = arith.constant 0 : index
      %374 = vector.load %arg7[%c112, %c0_204] : memref<144x16xbf16, #tpu.memory_space<vmem>>, vector<16x16xbf16>
      tpu.vector_store %arg7[%c112, %c0_204], %373 {strides = array<i32>} : memref<144x16xbf16, #tpu.memory_space<vmem>>, vector<16x16xbf16>,
      %375 = vector.extract_strided_slice %370 {offsets = [0, 2], sizes = [16, 16], strides = [1, 1]} : vector<16x18xbf16> to vector<16x16xbf16>
      %c128 = arith.constant 128 : index
      %c0_205 = arith.constant 0 : index
      %376 = vector.load %arg7[%c128, %c0_205] : memref<144x16xbf16, #tpu.memory_space<vmem>>, vector<16x16xbf16>
      tpu.vector_store %arg7[%c128, %c0_205], %375 {strides = array<i32>} : memref<144x16xbf16, #tpu.memory_space<vmem>>, vector<16x16xbf16>,
      %c0_206 = arith.constant 0 : index
      %c0_207 = arith.constant 0 : index
      %377 = vector.load %arg3[%c0_206, %c0_207] : memref<16x144xbf16, #tpu.memory_space<vmem>>, vector<16x144xbf16>
      %c0_208 = arith.constant 0 : index
      %c0_209 = arith.constant 0 : index
      %378 = vector.load %arg7[%c0_208, %c0_209] : memref<144x16xbf16, #tpu.memory_space<vmem>>, vector<144x16xbf16>
      %cst_210 = arith.constant dense<0.000000e+00> : vector<16x16xf32>
      %379 = tpu.matmul %377, %378, %cst_210 {dimension_numbers = #tpu.dot_dimension_numbers<[1], [0], [0], [1], [0, 0, 1, 1], [], []>} : vector<16x144xbf16>, vector<144x16xbf16>, vector<16x16xf32> -> vector<16x16xf32>
      %c0_211 = arith.constant 0 : index
      %c0_212 = arith.constant 0 : index
      %380 = vector.load %arg4[%c0_211, %c0_212] : memref<16x1xf32, #tpu.memory_space<vmem>>, vector<16x1xf32>
      %381 = vector.broadcast %380 : vector<16x1xf32> to vector<16x16xf32>
      %382 = arith.addf %379, %381 : vector<16x16xf32>
      %cst_213 = arith.constant 0.000000e+00 : f32
      %383 = vector.broadcast %cst_213 : f32 to vector<16x16xf32>
      %384 = arith.maximumf %382, %383 : vector<16x16xf32>
      %c1_i32_214 = arith.constant 1 : i32
      %385 = arith.addi %346, %c1_i32_214 : i32
      %c0_i32_215 = arith.constant 0 : i32
      %386 = arith.addi %385, %c0_i32_215 : i32
      %387 = arith.index_cast %386 : i32 to index
      %c0_216 = arith.constant 0 : index
      %c0_217 = arith.constant 0 : index
      %388 = vector.load %arg6[%387, %c0_216, %c0_217] : memref<18x16x18xbf16, #tpu.memory_space<vmem>>, vector<1x16x18xbf16>
      %389 = vector.shape_cast %388 : vector<1x16x18xbf16> to vector<16x18xbf16>
      %390 = vector.extract_strided_slice %389 {offsets = [0, 0], sizes = [16, 16], strides = [1, 1]} : vector<16x18xbf16> to vector<16x16xbf16>
      %c0_218 = arith.constant 0 : index
      %c0_219 = arith.constant 0 : index
      %391 = vector.load %arg7[%c0_218, %c0_219] : memref<144x16xbf16, #tpu.memory_space<vmem>>, vector<16x16xbf16>
      tpu.vector_store %arg7[%c0_218, %c0_219], %390 {strides = array<i32>} : memref<144x16xbf16, #tpu.memory_space<vmem>>, vector<16x16xbf16>,
      %392 = vector.extract_strided_slice %389 {offsets = [0, 1], sizes = [16, 16], strides = [1, 1]} : vector<16x18xbf16> to vector<16x16xbf16>
      %c16_220 = arith.constant 16 : index
      %c0_221 = arith.constant 0 : index
      %393 = vector.load %arg7[%c16_220, %c0_221] : memref<144x16xbf16, #tpu.memory_space<vmem>>, vector<16x16xbf16>
      tpu.vector_store %arg7[%c16_220, %c0_221], %392 {strides = array<i32>} : memref<144x16xbf16, #tpu.memory_space<vmem>>, vector<16x16xbf16>,
      %394 = vector.extract_strided_slice %389 {offsets = [0, 2], sizes = [16, 16], strides = [1, 1]} : vector<16x18xbf16> to vector<16x16xbf16>
      %c32_222 = arith.constant 32 : index
      %c0_223 = arith.constant 0 : index
      %395 = vector.load %arg7[%c32_222, %c0_223] : memref<144x16xbf16, #tpu.memory_space<vmem>>, vector<16x16xbf16>
      tpu.vector_store %arg7[%c32_222, %c0_223], %394 {strides = array<i32>} : memref<144x16xbf16, #tpu.memory_space<vmem>>, vector<16x16xbf16>,
      %c1_i32_224 = arith.constant 1 : i32
      %396 = arith.addi %385, %c1_i32_224 : i32
      %397 = arith.index_cast %396 : i32 to index
      %c0_225 = arith.constant 0 : index
      %c0_226 = arith.constant 0 : index
      %398 = vector.load %arg6[%397, %c0_225, %c0_226] : memref<18x16x18xbf16, #tpu.memory_space<vmem>>, vector<1x16x18xbf16>
      %399 = vector.shape_cast %398 : vector<1x16x18xbf16> to vector<16x18xbf16>
      %400 = vector.extract_strided_slice %399 {offsets = [0, 0], sizes = [16, 16], strides = [1, 1]} : vector<16x18xbf16> to vector<16x16xbf16>
      %c48_227 = arith.constant 48 : index
      %c0_228 = arith.constant 0 : index
      %401 = vector.load %arg7[%c48_227, %c0_228] : memref<144x16xbf16, #tpu.memory_space<vmem>>, vector<16x16xbf16>
      tpu.vector_store %arg7[%c48_227, %c0_228], %400 {strides = array<i32>} : memref<144x16xbf16, #tpu.memory_space<vmem>>, vector<16x16xbf16>,
      %402 = vector.extract_strided_slice %399 {offsets = [0, 1], sizes = [16, 16], strides = [1, 1]} : vector<16x18xbf16> to vector<16x16xbf16>
      %c64_229 = arith.constant 64 : index
      %c0_230 = arith.constant 0 : index
      %403 = vector.load %arg7[%c64_229, %c0_230] : memref<144x16xbf16, #tpu.memory_space<vmem>>, vector<16x16xbf16>
      tpu.vector_store %arg7[%c64_229, %c0_230], %402 {strides = array<i32>} : memref<144x16xbf16, #tpu.memory_space<vmem>>, vector<16x16xbf16>,
      %404 = vector.extract_strided_slice %399 {offsets = [0, 2], sizes = [16, 16], strides = [1, 1]} : vector<16x18xbf16> to vector<16x16xbf16>
      %c80_231 = arith.constant 80 : index
      %c0_232 = arith.constant 0 : index
      %405 = vector.load %arg7[%c80_231, %c0_232] : memref<144x16xbf16, #tpu.memory_space<vmem>>, vector<16x16xbf16>
      tpu.vector_store %arg7[%c80_231, %c0_232], %404 {strides = array<i32>} : memref<144x16xbf16, #tpu.memory_space<vmem>>, vector<16x16xbf16>,
      %c2_i32_233 = arith.constant 2 : i32
      %406 = arith.addi %385, %c2_i32_233 : i32
      %407 = arith.index_cast %406 : i32 to index
      %c0_234 = arith.constant 0 : index
      %c0_235 = arith.constant 0 : index
      %408 = vector.load %arg6[%407, %c0_234, %c0_235] : memref<18x16x18xbf16, #tpu.memory_space<vmem>>, vector<1x16x18xbf16>
      %409 = vector.shape_cast %408 : vector<1x16x18xbf16> to vector<16x18xbf16>
      %410 = vector.extract_strided_slice %409 {offsets = [0, 0], sizes = [16, 16], strides = [1, 1]} : vector<16x18xbf16> to vector<16x16xbf16>
      %c96_236 = arith.constant 96 : index
      %c0_237 = arith.constant 0 : index
      %411 = vector.load %arg7[%c96_236, %c0_237] : memref<144x16xbf16, #tpu.memory_space<vmem>>, vector<16x16xbf16>
      tpu.vector_store %arg7[%c96_236, %c0_237], %410 {strides = array<i32>} : memref<144x16xbf16, #tpu.memory_space<vmem>>, vector<16x16xbf16>,
      %412 = vector.extract_strided_slice %409 {offsets = [0, 1], sizes = [16, 16], strides = [1, 1]} : vector<16x18xbf16> to vector<16x16xbf16>
      %c112_238 = arith.constant 112 : index
      %c0_239 = arith.constant 0 : index
      %413 = vector.load %arg7[%c112_238, %c0_239] : memref<144x16xbf16, #tpu.memory_space<vmem>>, vector<16x16xbf16>
      tpu.vector_store %arg7[%c112_238, %c0_239], %412 {strides = array<i32>} : memref<144x16xbf16, #tpu.memory_space<vmem>>, vector<16x16xbf16>,
      %414 = vector.extract_strided_slice %409 {offsets = [0, 2], sizes = [16, 16], strides = [1, 1]} : vector<16x18xbf16> to vector<16x16xbf16>
      %c128_240 = arith.constant 128 : index
      %c0_241 = arith.constant 0 : index
      %415 = vector.load %arg7[%c128_240, %c0_241] : memref<144x16xbf16, #tpu.memory_space<vmem>>, vector<16x16xbf16>
      tpu.vector_store %arg7[%c128_240, %c0_241], %414 {strides = array<i32>} : memref<144x16xbf16, #tpu.memory_space<vmem>>, vector<16x16xbf16>,
      %c0_242 = arith.constant 0 : index
      %c0_243 = arith.constant 0 : index
      %416 = vector.load %arg3[%c0_242, %c0_243] : memref<16x144xbf16, #tpu.memory_space<vmem>>, vector<16x144xbf16>
      %c0_244 = arith.constant 0 : index
      %c0_245 = arith.constant 0 : index
      %417 = vector.load %arg7[%c0_244, %c0_245] : memref<144x16xbf16, #tpu.memory_space<vmem>>, vector<144x16xbf16>
      %cst_246 = arith.constant dense<0.000000e+00> : vector<16x16xf32>
      %418 = tpu.matmul %416, %417, %cst_246 {dimension_numbers = #tpu.dot_dimension_numbers<[1], [0], [0], [1], [0, 0, 1, 1], [], []>} : vector<16x144xbf16>, vector<144x16xbf16>, vector<16x16xf32> -> vector<16x16xf32>
      %c0_247 = arith.constant 0 : index
      %c0_248 = arith.constant 0 : index
      %419 = vector.load %arg4[%c0_247, %c0_248] : memref<16x1xf32, #tpu.memory_space<vmem>>, vector<16x1xf32>
      %420 = vector.broadcast %419 : vector<16x1xf32> to vector<16x16xf32>
      %421 = arith.addf %418, %420 : vector<16x16xf32>
      %cst_249 = arith.constant 0.000000e+00 : f32
      %422 = vector.broadcast %cst_249 : f32 to vector<16x16xf32>
      %423 = arith.maximumf %421, %422 : vector<16x16xf32>
      %424 = arith.maximumf %384, %423 : vector<16x16xf32>
      %425 = vector.extract_strided_slice %424 {offsets = [0, 1], sizes = [16, 15], strides = [1, 1]} : vector<16x16xf32> to vector<16x15xf32>
      %426 = vector.extract_strided_slice %424 {offsets = [0, 0], sizes = [16, 1], strides = [1, 1]} : vector<16x16xf32> to vector<16x1xf32>
      %427 = tpu.concatenate %425, %426 in 1 : vector<16x15xf32>, vector<16x1xf32> -> vector<16x16xf32>
      %428 = arith.maximumf %424, %427 : vector<16x16xf32>
      %429 = tpu.iota {dimensions = array<i32: 1>} : vector<16x16xi32>
      %c1_i32_250 = arith.constant 1 : i32
      %430 = vector.broadcast %c1_i32_250 : i32 to vector<16x16xi32>
      %431 = arith.andi %429, %430 : vector<16x16xi32>
      %c0_i32_251 = arith.constant 0 : i32
      %432 = vector.broadcast %c0_i32_251 : i32 to vector<16x16xi32>
      %433 = arith.cmpi ne, %431, %432 : vector<16x16xi32>
      %434 = vector.extract_strided_slice %428 {offsets = [0, 1], sizes = [16, 15], strides = [1, 1]} : vector<16x16xf32> to vector<16x15xf32>
      %435 = vector.extract_strided_slice %428 {offsets = [0, 0], sizes = [16, 1], strides = [1, 1]} : vector<16x16xf32> to vector<16x1xf32>
      %436 = tpu.concatenate %434, %435 in 1 : vector<16x15xf32>, vector<16x1xf32> -> vector<16x16xf32>
      %437 = arith.select %433, %436, %428 : vector<16x16xi1>, vector<16x16xf32>
      %c2_i32_252 = arith.constant 2 : i32
      %438 = vector.broadcast %c2_i32_252 : i32 to vector<16x16xi32>
      %439 = arith.andi %429, %438 : vector<16x16xi32>
      %c0_i32_253 = arith.constant 0 : i32
      %440 = vector.broadcast %c0_i32_253 : i32 to vector<16x16xi32>
      %441 = arith.cmpi ne, %439, %440 : vector<16x16xi32>
      %442 = vector.extract_strided_slice %437 {offsets = [0, 2], sizes = [16, 14], strides = [1, 1]} : vector<16x16xf32> to vector<16x14xf32>
      %443 = vector.extract_strided_slice %437 {offsets = [0, 0], sizes = [16, 2], strides = [1, 1]} : vector<16x16xf32> to vector<16x2xf32>
      %444 = tpu.concatenate %442, %443 in 1 : vector<16x14xf32>, vector<16x2xf32> -> vector<16x16xf32>
      %445 = arith.select %441, %444, %437 : vector<16x16xi1>, vector<16x16xf32>
      %c4_i32_254 = arith.constant 4 : i32
      %446 = vector.broadcast %c4_i32_254 : i32 to vector<16x16xi32>
      %447 = arith.andi %429, %446 : vector<16x16xi32>
      %c0_i32_255 = arith.constant 0 : i32
      %448 = vector.broadcast %c0_i32_255 : i32 to vector<16x16xi32>
      %449 = arith.cmpi ne, %447, %448 : vector<16x16xi32>
      %450 = vector.extract_strided_slice %445 {offsets = [0, 4], sizes = [16, 12], strides = [1, 1]} : vector<16x16xf32> to vector<16x12xf32>
      %451 = vector.extract_strided_slice %445 {offsets = [0, 0], sizes = [16, 4], strides = [1, 1]} : vector<16x16xf32> to vector<16x4xf32>
      %452 = tpu.concatenate %450, %451 in 1 : vector<16x12xf32>, vector<16x4xf32> -> vector<16x16xf32>
      %453 = arith.select %449, %452, %445 : vector<16x16xi1>, vector<16x16xf32>
      %454 = vector.extract_strided_slice %453 {offsets = [0, 0], sizes = [16, 8], strides = [1, 1]} : vector<16x16xf32> to vector<16x8xf32>
      %455 = arith.truncf %454 : vector<16x8xf32> to vector<16x8xbf16>
      %c0_256 = arith.constant 0 : index
      %456 = arith.index_cast %arg8 : i32 to index
      %c0_257 = arith.constant 0 : index
      %c0_258 = arith.constant 0 : index
      %457 = vector.load %arg5[%c0_256, %456, %c0_257, %c0_258] : memref<1x8x16x8xbf16, #tpu.memory_space<vmem>>, vector<1x1x16x8xbf16>
      %458 = vector.shape_cast %457 : vector<1x1x16x8xbf16> to vector<16x8xbf16>
      %459 = vector.shape_cast %455 : vector<16x8xbf16> to vector<1x1x16x8xbf16>
      tpu.vector_store %arg5[%c0_256, %456, %c0_257, %c0_258], %459 {strides = array<i32>} : memref<1x8x16x8xbf16, #tpu.memory_space<vmem>>, vector<1x1x16x8xbf16>,
    }
    %c8_i32_185 = arith.constant 8 : i32
    return
  }
  func.func @transform_0(%arg0: i32, %arg1: i32) -> (i32, i32, i32, i32) {
    %c0_i32 = arith.constant 0 : i32
    %c0_i32_0 = arith.constant 0 : i32
    %c0_i32_1 = arith.constant 0 : i32
    %c0_i32_2 = arith.constant 0 : i32
    return %arg0, %c0_i32, %c0_i32_0, %c0_i32_1 : i32, i32, i32, i32
  }
  func.func @transform_1(%arg0: i32, %arg1: i32) -> (i32, i32) {
    %c0_i32 = arith.constant 0 : i32
    %c0_i32_0 = arith.constant 0 : i32
    %c0_i32_1 = arith.constant 0 : i32
    return %c0_i32, %c0_i32_0 : i32, i32
  }
  func.func @transform_2(%arg0: i32, %arg1: i32) -> (i32, i32) {
    %c0_i32 = arith.constant 0 : i32
    %c0_i32_0 = arith.constant 0 : i32
    %c0_i32_1 = arith.constant 0 : i32
    return %c0_i32, %c0_i32_0 : i32, i32
  }
  func.func @transform_3(%arg0: i32, %arg1: i32) -> (i32, i32, i32, i32) {
    %c0_i32 = arith.constant 0 : i32
    %c0_i32_0 = arith.constant 0 : i32
    %c0_i32_1 = arith.constant 0 : i32
    return %arg0, %arg1, %c0_i32, %c0_i32_0 : i32, i32, i32, i32
  }
}

module attributes {stable_mosaic.version = 11 : i64} {
  func.func @kernel(%arg0: i32, %arg1: i32, %arg2: memref<1x16x1x16xf32, #tpu.memory_space<vmem>>, %arg3: memref<16x49xf32, #tpu.memory_space<vmem>>, %arg4: memref<16x1xf32, #tpu.memory_space<vmem>>, %arg5: memref<1x16x16x16xbf16, #tpu.memory_space<vmem>>, %arg6: memref<22x1x22xf32, #tpu.memory_space<vmem>>, %arg7: memref<49x16xf32, #tpu.memory_space<vmem>>) attributes {dimension_semantics = [#tpu.dimension_semantics<parallel>, #tpu.dimension_semantics<parallel>], iteration_bounds = array<i64: 2, 1>, scalar_prefetch = 0 : i64, scratch_operands = 2 : i64, tpu.core_type = #tpu.core_type<tc>, window_params = [{transform_indices = @transform_0, window_bounds = array<i64: 1, 16, 1, 16>}, {pipeline_mode = #tpu.pipeline_mode<synchronous>, transform_indices = @transform_1, window_bounds = array<i64: 16, 49>}, {pipeline_mode = #tpu.pipeline_mode<synchronous>, transform_indices = @transform_2, window_bounds = array<i64: 16, 1>}, {transform_indices = @transform_3, window_bounds = array<i64: 1, 16, 16, 16>}]} {
    %c16_i32 = arith.constant 16 : i32
    %0 = arith.muli %arg1, %c16_i32 : i32
    %cst = arith.constant 0.000000e+00 : f32
    %1 = vector.broadcast %cst : f32 to vector<22x1x22xf32>
    %c0 = arith.constant 0 : index
    %c0_0 = arith.constant 0 : index
    %c0_1 = arith.constant 0 : index
    %2 = vector.load %arg6[%c0, %c0_0, %c0_1] : memref<22x1x22xf32, #tpu.memory_space<vmem>>, vector<22x1x22xf32>
    tpu.vector_store %arg6[%c0, %c0_0, %c0_1], %1 {strides = array<i32>} : memref<22x1x22xf32, #tpu.memory_space<vmem>>, vector<22x1x22xf32>,
    %c0_i32 = arith.constant 0 : i32
    %c3_i32 = arith.constant 3 : i32
    %3 = arith.subi %0, %c3_i32 : i32
    %4 = arith.addi %3, %c0_i32 : i32
    %c0_i32_2 = arith.constant 0 : i32
    %c15_i32 = arith.constant 15 : i32
    %5 = arith.maxsi %c0_i32_2, %4 : i32
    %6 = arith.minsi %c15_i32, %5 : i32
    %c0_i32_3 = arith.constant 0 : i32
    %7 = arith.cmpi sge, %4, %c0_i32_3 : i32
    %c16_i32_4 = arith.constant 16 : i32
    %8 = arith.cmpi slt, %4, %c16_i32_4 : i32
    %9 = arith.andi %7, %8 : i1
    %10 = arith.extui %9 : i1 to i32
    %11 = arith.sitofp %10 : i32 to f32
    %c0_5 = arith.constant 0 : index
    %12 = arith.index_cast %6 : i32 to index
    %c0_6 = arith.constant 0 : index
    %c0_7 = arith.constant 0 : index
    %13 = vector.load %arg2[%c0_5, %12, %c0_6, %c0_7] : memref<1x16x1x16xf32, #tpu.memory_space<vmem>>, vector<1x1x1x16xf32>
    %14 = vector.shape_cast %13 : vector<1x1x1x16xf32> to vector<1x16xf32>
    %15 = vector.broadcast %11 : f32 to vector<1x16xf32>
    %16 = arith.mulf %14, %15 : vector<1x16xf32>
    %17 = arith.index_cast %c0_i32 : i32 to index
    %c0_8 = arith.constant 0 : index
    %c3 = arith.constant 3 : index
    %18 = vector.load %arg6[%17, %c0_8, %c3] : memref<22x1x22xf32, #tpu.memory_space<vmem>>, vector<1x1x16xf32>
    %19 = vector.shape_cast %18 : vector<1x1x16xf32> to vector<1x16xf32>
    %20 = vector.shape_cast %16 : vector<1x16xf32> to vector<1x1x16xf32>
    tpu.vector_store %arg6[%17, %c0_8, %c3], %20 {strides = array<i32>} : memref<22x1x22xf32, #tpu.memory_space<vmem>>, vector<1x1x16xf32>,
    %c1_i32 = arith.constant 1 : i32
    %c3_i32_9 = arith.constant 3 : i32
    %21 = arith.subi %0, %c3_i32_9 : i32
    %22 = arith.addi %21, %c1_i32 : i32
    %c0_i32_10 = arith.constant 0 : i32
    %c15_i32_11 = arith.constant 15 : i32
    %23 = arith.maxsi %c0_i32_10, %22 : i32
    %24 = arith.minsi %c15_i32_11, %23 : i32
    %c0_i32_12 = arith.constant 0 : i32
    %25 = arith.cmpi sge, %22, %c0_i32_12 : i32
    %c16_i32_13 = arith.constant 16 : i32
    %26 = arith.cmpi slt, %22, %c16_i32_13 : i32
    %27 = arith.andi %25, %26 : i1
    %28 = arith.extui %27 : i1 to i32
    %29 = arith.sitofp %28 : i32 to f32
    %c0_14 = arith.constant 0 : index
    %30 = arith.index_cast %24 : i32 to index
    %c0_15 = arith.constant 0 : index
    %c0_16 = arith.constant 0 : index
    %31 = vector.load %arg2[%c0_14, %30, %c0_15, %c0_16] : memref<1x16x1x16xf32, #tpu.memory_space<vmem>>, vector<1x1x1x16xf32>
    %32 = vector.shape_cast %31 : vector<1x1x1x16xf32> to vector<1x16xf32>
    %33 = vector.broadcast %29 : f32 to vector<1x16xf32>
    %34 = arith.mulf %32, %33 : vector<1x16xf32>
    %35 = arith.index_cast %c1_i32 : i32 to index
    %c0_17 = arith.constant 0 : index
    %c3_18 = arith.constant 3 : index
    %36 = vector.load %arg6[%35, %c0_17, %c3_18] : memref<22x1x22xf32, #tpu.memory_space<vmem>>, vector<1x1x16xf32>
    %37 = vector.shape_cast %36 : vector<1x1x16xf32> to vector<1x16xf32>
    %38 = vector.shape_cast %34 : vector<1x16xf32> to vector<1x1x16xf32>
    tpu.vector_store %arg6[%35, %c0_17, %c3_18], %38 {strides = array<i32>} : memref<22x1x22xf32, #tpu.memory_space<vmem>>, vector<1x1x16xf32>,
    %c2_i32 = arith.constant 2 : i32
    %c3_i32_19 = arith.constant 3 : i32
    %39 = arith.subi %0, %c3_i32_19 : i32
    %40 = arith.addi %39, %c2_i32 : i32
    %c0_i32_20 = arith.constant 0 : i32
    %c15_i32_21 = arith.constant 15 : i32
    %41 = arith.maxsi %c0_i32_20, %40 : i32
    %42 = arith.minsi %c15_i32_21, %41 : i32
    %c0_i32_22 = arith.constant 0 : i32
    %43 = arith.cmpi sge, %40, %c0_i32_22 : i32
    %c16_i32_23 = arith.constant 16 : i32
    %44 = arith.cmpi slt, %40, %c16_i32_23 : i32
    %45 = arith.andi %43, %44 : i1
    %46 = arith.extui %45 : i1 to i32
    %47 = arith.sitofp %46 : i32 to f32
    %c0_24 = arith.constant 0 : index
    %48 = arith.index_cast %42 : i32 to index
    %c0_25 = arith.constant 0 : index
    %c0_26 = arith.constant 0 : index
    %49 = vector.load %arg2[%c0_24, %48, %c0_25, %c0_26] : memref<1x16x1x16xf32, #tpu.memory_space<vmem>>, vector<1x1x1x16xf32>
    %50 = vector.shape_cast %49 : vector<1x1x1x16xf32> to vector<1x16xf32>
    %51 = vector.broadcast %47 : f32 to vector<1x16xf32>
    %52 = arith.mulf %50, %51 : vector<1x16xf32>
    %53 = arith.index_cast %c2_i32 : i32 to index
    %c0_27 = arith.constant 0 : index
    %c3_28 = arith.constant 3 : index
    %54 = vector.load %arg6[%53, %c0_27, %c3_28] : memref<22x1x22xf32, #tpu.memory_space<vmem>>, vector<1x1x16xf32>
    %55 = vector.shape_cast %54 : vector<1x1x16xf32> to vector<1x16xf32>
    %56 = vector.shape_cast %52 : vector<1x16xf32> to vector<1x1x16xf32>
    tpu.vector_store %arg6[%53, %c0_27, %c3_28], %56 {strides = array<i32>} : memref<22x1x22xf32, #tpu.memory_space<vmem>>, vector<1x1x16xf32>,
    %c3_i32_29 = arith.constant 3 : i32
    %c3_i32_30 = arith.constant 3 : i32
    %57 = arith.subi %0, %c3_i32_30 : i32
    %58 = arith.addi %57, %c3_i32_29 : i32
    %c0_i32_31 = arith.constant 0 : i32
    %c15_i32_32 = arith.constant 15 : i32
    %59 = arith.maxsi %c0_i32_31, %58 : i32
    %60 = arith.minsi %c15_i32_32, %59 : i32
    %c0_i32_33 = arith.constant 0 : i32
    %61 = arith.cmpi sge, %58, %c0_i32_33 : i32
    %c16_i32_34 = arith.constant 16 : i32
    %62 = arith.cmpi slt, %58, %c16_i32_34 : i32
    %63 = arith.andi %61, %62 : i1
    %64 = arith.extui %63 : i1 to i32
    %65 = arith.sitofp %64 : i32 to f32
    %c0_35 = arith.constant 0 : index
    %66 = arith.index_cast %60 : i32 to index
    %c0_36 = arith.constant 0 : index
    %c0_37 = arith.constant 0 : index
    %67 = vector.load %arg2[%c0_35, %66, %c0_36, %c0_37] : memref<1x16x1x16xf32, #tpu.memory_space<vmem>>, vector<1x1x1x16xf32>
    %68 = vector.shape_cast %67 : vector<1x1x1x16xf32> to vector<1x16xf32>
    %69 = vector.broadcast %65 : f32 to vector<1x16xf32>
    %70 = arith.mulf %68, %69 : vector<1x16xf32>
    %71 = arith.index_cast %c3_i32_29 : i32 to index
    %c0_38 = arith.constant 0 : index
    %c3_39 = arith.constant 3 : index
    %72 = vector.load %arg6[%71, %c0_38, %c3_39] : memref<22x1x22xf32, #tpu.memory_space<vmem>>, vector<1x1x16xf32>
    %73 = vector.shape_cast %72 : vector<1x1x16xf32> to vector<1x16xf32>
    %74 = vector.shape_cast %70 : vector<1x16xf32> to vector<1x1x16xf32>
    tpu.vector_store %arg6[%71, %c0_38, %c3_39], %74 {strides = array<i32>} : memref<22x1x22xf32, #tpu.memory_space<vmem>>, vector<1x1x16xf32>,
    %c4_i32 = arith.constant 4 : i32
    %c3_i32_40 = arith.constant 3 : i32
    %75 = arith.subi %0, %c3_i32_40 : i32
    %76 = arith.addi %75, %c4_i32 : i32
    %c0_i32_41 = arith.constant 0 : i32
    %c15_i32_42 = arith.constant 15 : i32
    %77 = arith.maxsi %c0_i32_41, %76 : i32
    %78 = arith.minsi %c15_i32_42, %77 : i32
    %c0_i32_43 = arith.constant 0 : i32
    %79 = arith.cmpi sge, %76, %c0_i32_43 : i32
    %c16_i32_44 = arith.constant 16 : i32
    %80 = arith.cmpi slt, %76, %c16_i32_44 : i32
    %81 = arith.andi %79, %80 : i1
    %82 = arith.extui %81 : i1 to i32
    %83 = arith.sitofp %82 : i32 to f32
    %c0_45 = arith.constant 0 : index
    %84 = arith.index_cast %78 : i32 to index
    %c0_46 = arith.constant 0 : index
    %c0_47 = arith.constant 0 : index
    %85 = vector.load %arg2[%c0_45, %84, %c0_46, %c0_47] : memref<1x16x1x16xf32, #tpu.memory_space<vmem>>, vector<1x1x1x16xf32>
    %86 = vector.shape_cast %85 : vector<1x1x1x16xf32> to vector<1x16xf32>
    %87 = vector.broadcast %83 : f32 to vector<1x16xf32>
    %88 = arith.mulf %86, %87 : vector<1x16xf32>
    %89 = arith.index_cast %c4_i32 : i32 to index
    %c0_48 = arith.constant 0 : index
    %c3_49 = arith.constant 3 : index
    %90 = vector.load %arg6[%89, %c0_48, %c3_49] : memref<22x1x22xf32, #tpu.memory_space<vmem>>, vector<1x1x16xf32>
    %91 = vector.shape_cast %90 : vector<1x1x16xf32> to vector<1x16xf32>
    %92 = vector.shape_cast %88 : vector<1x16xf32> to vector<1x1x16xf32>
    tpu.vector_store %arg6[%89, %c0_48, %c3_49], %92 {strides = array<i32>} : memref<22x1x22xf32, #tpu.memory_space<vmem>>, vector<1x1x16xf32>,
    %c5_i32 = arith.constant 5 : i32
    %c3_i32_50 = arith.constant 3 : i32
    %93 = arith.subi %0, %c3_i32_50 : i32
    %94 = arith.addi %93, %c5_i32 : i32
    %c0_i32_51 = arith.constant 0 : i32
    %c15_i32_52 = arith.constant 15 : i32
    %95 = arith.maxsi %c0_i32_51, %94 : i32
    %96 = arith.minsi %c15_i32_52, %95 : i32
    %c0_i32_53 = arith.constant 0 : i32
    %97 = arith.cmpi sge, %94, %c0_i32_53 : i32
    %c16_i32_54 = arith.constant 16 : i32
    %98 = arith.cmpi slt, %94, %c16_i32_54 : i32
    %99 = arith.andi %97, %98 : i1
    %100 = arith.extui %99 : i1 to i32
    %101 = arith.sitofp %100 : i32 to f32
    %c0_55 = arith.constant 0 : index
    %102 = arith.index_cast %96 : i32 to index
    %c0_56 = arith.constant 0 : index
    %c0_57 = arith.constant 0 : index
    %103 = vector.load %arg2[%c0_55, %102, %c0_56, %c0_57] : memref<1x16x1x16xf32, #tpu.memory_space<vmem>>, vector<1x1x1x16xf32>
    %104 = vector.shape_cast %103 : vector<1x1x1x16xf32> to vector<1x16xf32>
    %105 = vector.broadcast %101 : f32 to vector<1x16xf32>
    %106 = arith.mulf %104, %105 : vector<1x16xf32>
    %107 = arith.index_cast %c5_i32 : i32 to index
    %c0_58 = arith.constant 0 : index
    %c3_59 = arith.constant 3 : index
    %108 = vector.load %arg6[%107, %c0_58, %c3_59] : memref<22x1x22xf32, #tpu.memory_space<vmem>>, vector<1x1x16xf32>
    %109 = vector.shape_cast %108 : vector<1x1x16xf32> to vector<1x16xf32>
    %110 = vector.shape_cast %106 : vector<1x16xf32> to vector<1x1x16xf32>
    tpu.vector_store %arg6[%107, %c0_58, %c3_59], %110 {strides = array<i32>} : memref<22x1x22xf32, #tpu.memory_space<vmem>>, vector<1x1x16xf32>,
    %c6_i32 = arith.constant 6 : i32
    %c3_i32_60 = arith.constant 3 : i32
    %111 = arith.subi %0, %c3_i32_60 : i32
    %112 = arith.addi %111, %c6_i32 : i32
    %c0_i32_61 = arith.constant 0 : i32
    %c15_i32_62 = arith.constant 15 : i32
    %113 = arith.maxsi %c0_i32_61, %112 : i32
    %114 = arith.minsi %c15_i32_62, %113 : i32
    %c0_i32_63 = arith.constant 0 : i32
    %115 = arith.cmpi sge, %112, %c0_i32_63 : i32
    %c16_i32_64 = arith.constant 16 : i32
    %116 = arith.cmpi slt, %112, %c16_i32_64 : i32
    %117 = arith.andi %115, %116 : i1
    %118 = arith.extui %117 : i1 to i32
    %119 = arith.sitofp %118 : i32 to f32
    %c0_65 = arith.constant 0 : index
    %120 = arith.index_cast %114 : i32 to index
    %c0_66 = arith.constant 0 : index
    %c0_67 = arith.constant 0 : index
    %121 = vector.load %arg2[%c0_65, %120, %c0_66, %c0_67] : memref<1x16x1x16xf32, #tpu.memory_space<vmem>>, vector<1x1x1x16xf32>
    %122 = vector.shape_cast %121 : vector<1x1x1x16xf32> to vector<1x16xf32>
    %123 = vector.broadcast %119 : f32 to vector<1x16xf32>
    %124 = arith.mulf %122, %123 : vector<1x16xf32>
    %125 = arith.index_cast %c6_i32 : i32 to index
    %c0_68 = arith.constant 0 : index
    %c3_69 = arith.constant 3 : index
    %126 = vector.load %arg6[%125, %c0_68, %c3_69] : memref<22x1x22xf32, #tpu.memory_space<vmem>>, vector<1x1x16xf32>
    %127 = vector.shape_cast %126 : vector<1x1x16xf32> to vector<1x16xf32>
    %128 = vector.shape_cast %124 : vector<1x16xf32> to vector<1x1x16xf32>
    tpu.vector_store %arg6[%125, %c0_68, %c3_69], %128 {strides = array<i32>} : memref<22x1x22xf32, #tpu.memory_space<vmem>>, vector<1x1x16xf32>,
    %c7_i32 = arith.constant 7 : i32
    %c3_i32_70 = arith.constant 3 : i32
    %129 = arith.subi %0, %c3_i32_70 : i32
    %130 = arith.addi %129, %c7_i32 : i32
    %c0_i32_71 = arith.constant 0 : i32
    %c15_i32_72 = arith.constant 15 : i32
    %131 = arith.maxsi %c0_i32_71, %130 : i32
    %132 = arith.minsi %c15_i32_72, %131 : i32
    %c0_i32_73 = arith.constant 0 : i32
    %133 = arith.cmpi sge, %130, %c0_i32_73 : i32
    %c16_i32_74 = arith.constant 16 : i32
    %134 = arith.cmpi slt, %130, %c16_i32_74 : i32
    %135 = arith.andi %133, %134 : i1
    %136 = arith.extui %135 : i1 to i32
    %137 = arith.sitofp %136 : i32 to f32
    %c0_75 = arith.constant 0 : index
    %138 = arith.index_cast %132 : i32 to index
    %c0_76 = arith.constant 0 : index
    %c0_77 = arith.constant 0 : index
    %139 = vector.load %arg2[%c0_75, %138, %c0_76, %c0_77] : memref<1x16x1x16xf32, #tpu.memory_space<vmem>>, vector<1x1x1x16xf32>
    %140 = vector.shape_cast %139 : vector<1x1x1x16xf32> to vector<1x16xf32>
    %141 = vector.broadcast %137 : f32 to vector<1x16xf32>
    %142 = arith.mulf %140, %141 : vector<1x16xf32>
    %143 = arith.index_cast %c7_i32 : i32 to index
    %c0_78 = arith.constant 0 : index
    %c3_79 = arith.constant 3 : index
    %144 = vector.load %arg6[%143, %c0_78, %c3_79] : memref<22x1x22xf32, #tpu.memory_space<vmem>>, vector<1x1x16xf32>
    %145 = vector.shape_cast %144 : vector<1x1x16xf32> to vector<1x16xf32>
    %146 = vector.shape_cast %142 : vector<1x16xf32> to vector<1x1x16xf32>
    tpu.vector_store %arg6[%143, %c0_78, %c3_79], %146 {strides = array<i32>} : memref<22x1x22xf32, #tpu.memory_space<vmem>>, vector<1x1x16xf32>,
    %c8_i32 = arith.constant 8 : i32
    %c3_i32_80 = arith.constant 3 : i32
    %147 = arith.subi %0, %c3_i32_80 : i32
    %148 = arith.addi %147, %c8_i32 : i32
    %c0_i32_81 = arith.constant 0 : i32
    %c15_i32_82 = arith.constant 15 : i32
    %149 = arith.maxsi %c0_i32_81, %148 : i32
    %150 = arith.minsi %c15_i32_82, %149 : i32
    %c0_i32_83 = arith.constant 0 : i32
    %151 = arith.cmpi sge, %148, %c0_i32_83 : i32
    %c16_i32_84 = arith.constant 16 : i32
    %152 = arith.cmpi slt, %148, %c16_i32_84 : i32
    %153 = arith.andi %151, %152 : i1
    %154 = arith.extui %153 : i1 to i32
    %155 = arith.sitofp %154 : i32 to f32
    %c0_85 = arith.constant 0 : index
    %156 = arith.index_cast %150 : i32 to index
    %c0_86 = arith.constant 0 : index
    %c0_87 = arith.constant 0 : index
    %157 = vector.load %arg2[%c0_85, %156, %c0_86, %c0_87] : memref<1x16x1x16xf32, #tpu.memory_space<vmem>>, vector<1x1x1x16xf32>
    %158 = vector.shape_cast %157 : vector<1x1x1x16xf32> to vector<1x16xf32>
    %159 = vector.broadcast %155 : f32 to vector<1x16xf32>
    %160 = arith.mulf %158, %159 : vector<1x16xf32>
    %161 = arith.index_cast %c8_i32 : i32 to index
    %c0_88 = arith.constant 0 : index
    %c3_89 = arith.constant 3 : index
    %162 = vector.load %arg6[%161, %c0_88, %c3_89] : memref<22x1x22xf32, #tpu.memory_space<vmem>>, vector<1x1x16xf32>
    %163 = vector.shape_cast %162 : vector<1x1x16xf32> to vector<1x16xf32>
    %164 = vector.shape_cast %160 : vector<1x16xf32> to vector<1x1x16xf32>
    tpu.vector_store %arg6[%161, %c0_88, %c3_89], %164 {strides = array<i32>} : memref<22x1x22xf32, #tpu.memory_space<vmem>>, vector<1x1x16xf32>,
    %c9_i32 = arith.constant 9 : i32
    %c3_i32_90 = arith.constant 3 : i32
    %165 = arith.subi %0, %c3_i32_90 : i32
    %166 = arith.addi %165, %c9_i32 : i32
    %c0_i32_91 = arith.constant 0 : i32
    %c15_i32_92 = arith.constant 15 : i32
    %167 = arith.maxsi %c0_i32_91, %166 : i32
    %168 = arith.minsi %c15_i32_92, %167 : i32
    %c0_i32_93 = arith.constant 0 : i32
    %169 = arith.cmpi sge, %166, %c0_i32_93 : i32
    %c16_i32_94 = arith.constant 16 : i32
    %170 = arith.cmpi slt, %166, %c16_i32_94 : i32
    %171 = arith.andi %169, %170 : i1
    %172 = arith.extui %171 : i1 to i32
    %173 = arith.sitofp %172 : i32 to f32
    %c0_95 = arith.constant 0 : index
    %174 = arith.index_cast %168 : i32 to index
    %c0_96 = arith.constant 0 : index
    %c0_97 = arith.constant 0 : index
    %175 = vector.load %arg2[%c0_95, %174, %c0_96, %c0_97] : memref<1x16x1x16xf32, #tpu.memory_space<vmem>>, vector<1x1x1x16xf32>
    %176 = vector.shape_cast %175 : vector<1x1x1x16xf32> to vector<1x16xf32>
    %177 = vector.broadcast %173 : f32 to vector<1x16xf32>
    %178 = arith.mulf %176, %177 : vector<1x16xf32>
    %179 = arith.index_cast %c9_i32 : i32 to index
    %c0_98 = arith.constant 0 : index
    %c3_99 = arith.constant 3 : index
    %180 = vector.load %arg6[%179, %c0_98, %c3_99] : memref<22x1x22xf32, #tpu.memory_space<vmem>>, vector<1x1x16xf32>
    %181 = vector.shape_cast %180 : vector<1x1x16xf32> to vector<1x16xf32>
    %182 = vector.shape_cast %178 : vector<1x16xf32> to vector<1x1x16xf32>
    tpu.vector_store %arg6[%179, %c0_98, %c3_99], %182 {strides = array<i32>} : memref<22x1x22xf32, #tpu.memory_space<vmem>>, vector<1x1x16xf32>,
    %c10_i32 = arith.constant 10 : i32
    %c3_i32_100 = arith.constant 3 : i32
    %183 = arith.subi %0, %c3_i32_100 : i32
    %184 = arith.addi %183, %c10_i32 : i32
    %c0_i32_101 = arith.constant 0 : i32
    %c15_i32_102 = arith.constant 15 : i32
    %185 = arith.maxsi %c0_i32_101, %184 : i32
    %186 = arith.minsi %c15_i32_102, %185 : i32
    %c0_i32_103 = arith.constant 0 : i32
    %187 = arith.cmpi sge, %184, %c0_i32_103 : i32
    %c16_i32_104 = arith.constant 16 : i32
    %188 = arith.cmpi slt, %184, %c16_i32_104 : i32
    %189 = arith.andi %187, %188 : i1
    %190 = arith.extui %189 : i1 to i32
    %191 = arith.sitofp %190 : i32 to f32
    %c0_105 = arith.constant 0 : index
    %192 = arith.index_cast %186 : i32 to index
    %c0_106 = arith.constant 0 : index
    %c0_107 = arith.constant 0 : index
    %193 = vector.load %arg2[%c0_105, %192, %c0_106, %c0_107] : memref<1x16x1x16xf32, #tpu.memory_space<vmem>>, vector<1x1x1x16xf32>
    %194 = vector.shape_cast %193 : vector<1x1x1x16xf32> to vector<1x16xf32>
    %195 = vector.broadcast %191 : f32 to vector<1x16xf32>
    %196 = arith.mulf %194, %195 : vector<1x16xf32>
    %197 = arith.index_cast %c10_i32 : i32 to index
    %c0_108 = arith.constant 0 : index
    %c3_109 = arith.constant 3 : index
    %198 = vector.load %arg6[%197, %c0_108, %c3_109] : memref<22x1x22xf32, #tpu.memory_space<vmem>>, vector<1x1x16xf32>
    %199 = vector.shape_cast %198 : vector<1x1x16xf32> to vector<1x16xf32>
    %200 = vector.shape_cast %196 : vector<1x16xf32> to vector<1x1x16xf32>
    tpu.vector_store %arg6[%197, %c0_108, %c3_109], %200 {strides = array<i32>} : memref<22x1x22xf32, #tpu.memory_space<vmem>>, vector<1x1x16xf32>,
    %c11_i32 = arith.constant 11 : i32
    %c3_i32_110 = arith.constant 3 : i32
    %201 = arith.subi %0, %c3_i32_110 : i32
    %202 = arith.addi %201, %c11_i32 : i32
    %c0_i32_111 = arith.constant 0 : i32
    %c15_i32_112 = arith.constant 15 : i32
    %203 = arith.maxsi %c0_i32_111, %202 : i32
    %204 = arith.minsi %c15_i32_112, %203 : i32
    %c0_i32_113 = arith.constant 0 : i32
    %205 = arith.cmpi sge, %202, %c0_i32_113 : i32
    %c16_i32_114 = arith.constant 16 : i32
    %206 = arith.cmpi slt, %202, %c16_i32_114 : i32
    %207 = arith.andi %205, %206 : i1
    %208 = arith.extui %207 : i1 to i32
    %209 = arith.sitofp %208 : i32 to f32
    %c0_115 = arith.constant 0 : index
    %210 = arith.index_cast %204 : i32 to index
    %c0_116 = arith.constant 0 : index
    %c0_117 = arith.constant 0 : index
    %211 = vector.load %arg2[%c0_115, %210, %c0_116, %c0_117] : memref<1x16x1x16xf32, #tpu.memory_space<vmem>>, vector<1x1x1x16xf32>
    %212 = vector.shape_cast %211 : vector<1x1x1x16xf32> to vector<1x16xf32>
    %213 = vector.broadcast %209 : f32 to vector<1x16xf32>
    %214 = arith.mulf %212, %213 : vector<1x16xf32>
    %215 = arith.index_cast %c11_i32 : i32 to index
    %c0_118 = arith.constant 0 : index
    %c3_119 = arith.constant 3 : index
    %216 = vector.load %arg6[%215, %c0_118, %c3_119] : memref<22x1x22xf32, #tpu.memory_space<vmem>>, vector<1x1x16xf32>
    %217 = vector.shape_cast %216 : vector<1x1x16xf32> to vector<1x16xf32>
    %218 = vector.shape_cast %214 : vector<1x16xf32> to vector<1x1x16xf32>
    tpu.vector_store %arg6[%215, %c0_118, %c3_119], %218 {strides = array<i32>} : memref<22x1x22xf32, #tpu.memory_space<vmem>>, vector<1x1x16xf32>,
    %c12_i32 = arith.constant 12 : i32
    %c3_i32_120 = arith.constant 3 : i32
    %219 = arith.subi %0, %c3_i32_120 : i32
    %220 = arith.addi %219, %c12_i32 : i32
    %c0_i32_121 = arith.constant 0 : i32
    %c15_i32_122 = arith.constant 15 : i32
    %221 = arith.maxsi %c0_i32_121, %220 : i32
    %222 = arith.minsi %c15_i32_122, %221 : i32
    %c0_i32_123 = arith.constant 0 : i32
    %223 = arith.cmpi sge, %220, %c0_i32_123 : i32
    %c16_i32_124 = arith.constant 16 : i32
    %224 = arith.cmpi slt, %220, %c16_i32_124 : i32
    %225 = arith.andi %223, %224 : i1
    %226 = arith.extui %225 : i1 to i32
    %227 = arith.sitofp %226 : i32 to f32
    %c0_125 = arith.constant 0 : index
    %228 = arith.index_cast %222 : i32 to index
    %c0_126 = arith.constant 0 : index
    %c0_127 = arith.constant 0 : index
    %229 = vector.load %arg2[%c0_125, %228, %c0_126, %c0_127] : memref<1x16x1x16xf32, #tpu.memory_space<vmem>>, vector<1x1x1x16xf32>
    %230 = vector.shape_cast %229 : vector<1x1x1x16xf32> to vector<1x16xf32>
    %231 = vector.broadcast %227 : f32 to vector<1x16xf32>
    %232 = arith.mulf %230, %231 : vector<1x16xf32>
    %233 = arith.index_cast %c12_i32 : i32 to index
    %c0_128 = arith.constant 0 : index
    %c3_129 = arith.constant 3 : index
    %234 = vector.load %arg6[%233, %c0_128, %c3_129] : memref<22x1x22xf32, #tpu.memory_space<vmem>>, vector<1x1x16xf32>
    %235 = vector.shape_cast %234 : vector<1x1x16xf32> to vector<1x16xf32>
    %236 = vector.shape_cast %232 : vector<1x16xf32> to vector<1x1x16xf32>
    tpu.vector_store %arg6[%233, %c0_128, %c3_129], %236 {strides = array<i32>} : memref<22x1x22xf32, #tpu.memory_space<vmem>>, vector<1x1x16xf32>,
    %c13_i32 = arith.constant 13 : i32
    %c3_i32_130 = arith.constant 3 : i32
    %237 = arith.subi %0, %c3_i32_130 : i32
    %238 = arith.addi %237, %c13_i32 : i32
    %c0_i32_131 = arith.constant 0 : i32
    %c15_i32_132 = arith.constant 15 : i32
    %239 = arith.maxsi %c0_i32_131, %238 : i32
    %240 = arith.minsi %c15_i32_132, %239 : i32
    %c0_i32_133 = arith.constant 0 : i32
    %241 = arith.cmpi sge, %238, %c0_i32_133 : i32
    %c16_i32_134 = arith.constant 16 : i32
    %242 = arith.cmpi slt, %238, %c16_i32_134 : i32
    %243 = arith.andi %241, %242 : i1
    %244 = arith.extui %243 : i1 to i32
    %245 = arith.sitofp %244 : i32 to f32
    %c0_135 = arith.constant 0 : index
    %246 = arith.index_cast %240 : i32 to index
    %c0_136 = arith.constant 0 : index
    %c0_137 = arith.constant 0 : index
    %247 = vector.load %arg2[%c0_135, %246, %c0_136, %c0_137] : memref<1x16x1x16xf32, #tpu.memory_space<vmem>>, vector<1x1x1x16xf32>
    %248 = vector.shape_cast %247 : vector<1x1x1x16xf32> to vector<1x16xf32>
    %249 = vector.broadcast %245 : f32 to vector<1x16xf32>
    %250 = arith.mulf %248, %249 : vector<1x16xf32>
    %251 = arith.index_cast %c13_i32 : i32 to index
    %c0_138 = arith.constant 0 : index
    %c3_139 = arith.constant 3 : index
    %252 = vector.load %arg6[%251, %c0_138, %c3_139] : memref<22x1x22xf32, #tpu.memory_space<vmem>>, vector<1x1x16xf32>
    %253 = vector.shape_cast %252 : vector<1x1x16xf32> to vector<1x16xf32>
    %254 = vector.shape_cast %250 : vector<1x16xf32> to vector<1x1x16xf32>
    tpu.vector_store %arg6[%251, %c0_138, %c3_139], %254 {strides = array<i32>} : memref<22x1x22xf32, #tpu.memory_space<vmem>>, vector<1x1x16xf32>,
    %c14_i32 = arith.constant 14 : i32
    %c3_i32_140 = arith.constant 3 : i32
    %255 = arith.subi %0, %c3_i32_140 : i32
    %256 = arith.addi %255, %c14_i32 : i32
    %c0_i32_141 = arith.constant 0 : i32
    %c15_i32_142 = arith.constant 15 : i32
    %257 = arith.maxsi %c0_i32_141, %256 : i32
    %258 = arith.minsi %c15_i32_142, %257 : i32
    %c0_i32_143 = arith.constant 0 : i32
    %259 = arith.cmpi sge, %256, %c0_i32_143 : i32
    %c16_i32_144 = arith.constant 16 : i32
    %260 = arith.cmpi slt, %256, %c16_i32_144 : i32
    %261 = arith.andi %259, %260 : i1
    %262 = arith.extui %261 : i1 to i32
    %263 = arith.sitofp %262 : i32 to f32
    %c0_145 = arith.constant 0 : index
    %264 = arith.index_cast %258 : i32 to index
    %c0_146 = arith.constant 0 : index
    %c0_147 = arith.constant 0 : index
    %265 = vector.load %arg2[%c0_145, %264, %c0_146, %c0_147] : memref<1x16x1x16xf32, #tpu.memory_space<vmem>>, vector<1x1x1x16xf32>
    %266 = vector.shape_cast %265 : vector<1x1x1x16xf32> to vector<1x16xf32>
    %267 = vector.broadcast %263 : f32 to vector<1x16xf32>
    %268 = arith.mulf %266, %267 : vector<1x16xf32>
    %269 = arith.index_cast %c14_i32 : i32 to index
    %c0_148 = arith.constant 0 : index
    %c3_149 = arith.constant 3 : index
    %270 = vector.load %arg6[%269, %c0_148, %c3_149] : memref<22x1x22xf32, #tpu.memory_space<vmem>>, vector<1x1x16xf32>
    %271 = vector.shape_cast %270 : vector<1x1x16xf32> to vector<1x16xf32>
    %272 = vector.shape_cast %268 : vector<1x16xf32> to vector<1x1x16xf32>
    tpu.vector_store %arg6[%269, %c0_148, %c3_149], %272 {strides = array<i32>} : memref<22x1x22xf32, #tpu.memory_space<vmem>>, vector<1x1x16xf32>,
    %c15_i32_150 = arith.constant 15 : i32
    %c3_i32_151 = arith.constant 3 : i32
    %273 = arith.subi %0, %c3_i32_151 : i32
    %274 = arith.addi %273, %c15_i32_150 : i32
    %c0_i32_152 = arith.constant 0 : i32
    %c15_i32_153 = arith.constant 15 : i32
    %275 = arith.maxsi %c0_i32_152, %274 : i32
    %276 = arith.minsi %c15_i32_153, %275 : i32
    %c0_i32_154 = arith.constant 0 : i32
    %277 = arith.cmpi sge, %274, %c0_i32_154 : i32
    %c16_i32_155 = arith.constant 16 : i32
    %278 = arith.cmpi slt, %274, %c16_i32_155 : i32
    %279 = arith.andi %277, %278 : i1
    %280 = arith.extui %279 : i1 to i32
    %281 = arith.sitofp %280 : i32 to f32
    %c0_156 = arith.constant 0 : index
    %282 = arith.index_cast %276 : i32 to index
    %c0_157 = arith.constant 0 : index
    %c0_158 = arith.constant 0 : index
    %283 = vector.load %arg2[%c0_156, %282, %c0_157, %c0_158] : memref<1x16x1x16xf32, #tpu.memory_space<vmem>>, vector<1x1x1x16xf32>
    %284 = vector.shape_cast %283 : vector<1x1x1x16xf32> to vector<1x16xf32>
    %285 = vector.broadcast %281 : f32 to vector<1x16xf32>
    %286 = arith.mulf %284, %285 : vector<1x16xf32>
    %287 = arith.index_cast %c15_i32_150 : i32 to index
    %c0_159 = arith.constant 0 : index
    %c3_160 = arith.constant 3 : index
    %288 = vector.load %arg6[%287, %c0_159, %c3_160] : memref<22x1x22xf32, #tpu.memory_space<vmem>>, vector<1x1x16xf32>
    %289 = vector.shape_cast %288 : vector<1x1x16xf32> to vector<1x16xf32>
    %290 = vector.shape_cast %286 : vector<1x16xf32> to vector<1x1x16xf32>
    tpu.vector_store %arg6[%287, %c0_159, %c3_160], %290 {strides = array<i32>} : memref<22x1x22xf32, #tpu.memory_space<vmem>>, vector<1x1x16xf32>,
    %c16_i32_161 = arith.constant 16 : i32
    %c3_i32_162 = arith.constant 3 : i32
    %291 = arith.subi %0, %c3_i32_162 : i32
    %292 = arith.addi %291, %c16_i32_161 : i32
    %c0_i32_163 = arith.constant 0 : i32
    %c15_i32_164 = arith.constant 15 : i32
    %293 = arith.maxsi %c0_i32_163, %292 : i32
    %294 = arith.minsi %c15_i32_164, %293 : i32
    %c0_i32_165 = arith.constant 0 : i32
    %295 = arith.cmpi sge, %292, %c0_i32_165 : i32
    %c16_i32_166 = arith.constant 16 : i32
    %296 = arith.cmpi slt, %292, %c16_i32_166 : i32
    %297 = arith.andi %295, %296 : i1
    %298 = arith.extui %297 : i1 to i32
    %299 = arith.sitofp %298 : i32 to f32
    %c0_167 = arith.constant 0 : index
    %300 = arith.index_cast %294 : i32 to index
    %c0_168 = arith.constant 0 : index
    %c0_169 = arith.constant 0 : index
    %301 = vector.load %arg2[%c0_167, %300, %c0_168, %c0_169] : memref<1x16x1x16xf32, #tpu.memory_space<vmem>>, vector<1x1x1x16xf32>
    %302 = vector.shape_cast %301 : vector<1x1x1x16xf32> to vector<1x16xf32>
    %303 = vector.broadcast %299 : f32 to vector<1x16xf32>
    %304 = arith.mulf %302, %303 : vector<1x16xf32>
    %305 = arith.index_cast %c16_i32_161 : i32 to index
    %c0_170 = arith.constant 0 : index
    %c3_171 = arith.constant 3 : index
    %306 = vector.load %arg6[%305, %c0_170, %c3_171] : memref<22x1x22xf32, #tpu.memory_space<vmem>>, vector<1x1x16xf32>
    %307 = vector.shape_cast %306 : vector<1x1x16xf32> to vector<1x16xf32>
    %308 = vector.shape_cast %304 : vector<1x16xf32> to vector<1x1x16xf32>
    tpu.vector_store %arg6[%305, %c0_170, %c3_171], %308 {strides = array<i32>} : memref<22x1x22xf32, #tpu.memory_space<vmem>>, vector<1x1x16xf32>,
    %c17_i32 = arith.constant 17 : i32
    %c3_i32_172 = arith.constant 3 : i32
    %309 = arith.subi %0, %c3_i32_172 : i32
    %310 = arith.addi %309, %c17_i32 : i32
    %c0_i32_173 = arith.constant 0 : i32
    %c15_i32_174 = arith.constant 15 : i32
    %311 = arith.maxsi %c0_i32_173, %310 : i32
    %312 = arith.minsi %c15_i32_174, %311 : i32
    %c0_i32_175 = arith.constant 0 : i32
    %313 = arith.cmpi sge, %310, %c0_i32_175 : i32
    %c16_i32_176 = arith.constant 16 : i32
    %314 = arith.cmpi slt, %310, %c16_i32_176 : i32
    %315 = arith.andi %313, %314 : i1
    %316 = arith.extui %315 : i1 to i32
    %317 = arith.sitofp %316 : i32 to f32
    %c0_177 = arith.constant 0 : index
    %318 = arith.index_cast %312 : i32 to index
    %c0_178 = arith.constant 0 : index
    %c0_179 = arith.constant 0 : index
    %319 = vector.load %arg2[%c0_177, %318, %c0_178, %c0_179] : memref<1x16x1x16xf32, #tpu.memory_space<vmem>>, vector<1x1x1x16xf32>
    %320 = vector.shape_cast %319 : vector<1x1x1x16xf32> to vector<1x16xf32>
    %321 = vector.broadcast %317 : f32 to vector<1x16xf32>
    %322 = arith.mulf %320, %321 : vector<1x16xf32>
    %323 = arith.index_cast %c17_i32 : i32 to index
    %c0_180 = arith.constant 0 : index
    %c3_181 = arith.constant 3 : index
    %324 = vector.load %arg6[%323, %c0_180, %c3_181] : memref<22x1x22xf32, #tpu.memory_space<vmem>>, vector<1x1x16xf32>
    %325 = vector.shape_cast %324 : vector<1x1x16xf32> to vector<1x16xf32>
    %326 = vector.shape_cast %322 : vector<1x16xf32> to vector<1x1x16xf32>
    tpu.vector_store %arg6[%323, %c0_180, %c3_181], %326 {strides = array<i32>} : memref<22x1x22xf32, #tpu.memory_space<vmem>>, vector<1x1x16xf32>,
    %c18_i32 = arith.constant 18 : i32
    %c3_i32_182 = arith.constant 3 : i32
    %327 = arith.subi %0, %c3_i32_182 : i32
    %328 = arith.addi %327, %c18_i32 : i32
    %c0_i32_183 = arith.constant 0 : i32
    %c15_i32_184 = arith.constant 15 : i32
    %329 = arith.maxsi %c0_i32_183, %328 : i32
    %330 = arith.minsi %c15_i32_184, %329 : i32
    %c0_i32_185 = arith.constant 0 : i32
    %331 = arith.cmpi sge, %328, %c0_i32_185 : i32
    %c16_i32_186 = arith.constant 16 : i32
    %332 = arith.cmpi slt, %328, %c16_i32_186 : i32
    %333 = arith.andi %331, %332 : i1
    %334 = arith.extui %333 : i1 to i32
    %335 = arith.sitofp %334 : i32 to f32
    %c0_187 = arith.constant 0 : index
    %336 = arith.index_cast %330 : i32 to index
    %c0_188 = arith.constant 0 : index
    %c0_189 = arith.constant 0 : index
    %337 = vector.load %arg2[%c0_187, %336, %c0_188, %c0_189] : memref<1x16x1x16xf32, #tpu.memory_space<vmem>>, vector<1x1x1x16xf32>
    %338 = vector.shape_cast %337 : vector<1x1x1x16xf32> to vector<1x16xf32>
    %339 = vector.broadcast %335 : f32 to vector<1x16xf32>
    %340 = arith.mulf %338, %339 : vector<1x16xf32>
    %341 = arith.index_cast %c18_i32 : i32 to index
    %c0_190 = arith.constant 0 : index
    %c3_191 = arith.constant 3 : index
    %342 = vector.load %arg6[%341, %c0_190, %c3_191] : memref<22x1x22xf32, #tpu.memory_space<vmem>>, vector<1x1x16xf32>
    %343 = vector.shape_cast %342 : vector<1x1x16xf32> to vector<1x16xf32>
    %344 = vector.shape_cast %340 : vector<1x16xf32> to vector<1x1x16xf32>
    tpu.vector_store %arg6[%341, %c0_190, %c3_191], %344 {strides = array<i32>} : memref<22x1x22xf32, #tpu.memory_space<vmem>>, vector<1x1x16xf32>,
    %c19_i32 = arith.constant 19 : i32
    %c3_i32_192 = arith.constant 3 : i32
    %345 = arith.subi %0, %c3_i32_192 : i32
    %346 = arith.addi %345, %c19_i32 : i32
    %c0_i32_193 = arith.constant 0 : i32
    %c15_i32_194 = arith.constant 15 : i32
    %347 = arith.maxsi %c0_i32_193, %346 : i32
    %348 = arith.minsi %c15_i32_194, %347 : i32
    %c0_i32_195 = arith.constant 0 : i32
    %349 = arith.cmpi sge, %346, %c0_i32_195 : i32
    %c16_i32_196 = arith.constant 16 : i32
    %350 = arith.cmpi slt, %346, %c16_i32_196 : i32
    %351 = arith.andi %349, %350 : i1
    %352 = arith.extui %351 : i1 to i32
    %353 = arith.sitofp %352 : i32 to f32
    %c0_197 = arith.constant 0 : index
    %354 = arith.index_cast %348 : i32 to index
    %c0_198 = arith.constant 0 : index
    %c0_199 = arith.constant 0 : index
    %355 = vector.load %arg2[%c0_197, %354, %c0_198, %c0_199] : memref<1x16x1x16xf32, #tpu.memory_space<vmem>>, vector<1x1x1x16xf32>
    %356 = vector.shape_cast %355 : vector<1x1x1x16xf32> to vector<1x16xf32>
    %357 = vector.broadcast %353 : f32 to vector<1x16xf32>
    %358 = arith.mulf %356, %357 : vector<1x16xf32>
    %359 = arith.index_cast %c19_i32 : i32 to index
    %c0_200 = arith.constant 0 : index
    %c3_201 = arith.constant 3 : index
    %360 = vector.load %arg6[%359, %c0_200, %c3_201] : memref<22x1x22xf32, #tpu.memory_space<vmem>>, vector<1x1x16xf32>
    %361 = vector.shape_cast %360 : vector<1x1x16xf32> to vector<1x16xf32>
    %362 = vector.shape_cast %358 : vector<1x16xf32> to vector<1x1x16xf32>
    tpu.vector_store %arg6[%359, %c0_200, %c3_201], %362 {strides = array<i32>} : memref<22x1x22xf32, #tpu.memory_space<vmem>>, vector<1x1x16xf32>,
    %c20_i32 = arith.constant 20 : i32
    %c3_i32_202 = arith.constant 3 : i32
    %363 = arith.subi %0, %c3_i32_202 : i32
    %364 = arith.addi %363, %c20_i32 : i32
    %c0_i32_203 = arith.constant 0 : i32
    %c15_i32_204 = arith.constant 15 : i32
    %365 = arith.maxsi %c0_i32_203, %364 : i32
    %366 = arith.minsi %c15_i32_204, %365 : i32
    %c0_i32_205 = arith.constant 0 : i32
    %367 = arith.cmpi sge, %364, %c0_i32_205 : i32
    %c16_i32_206 = arith.constant 16 : i32
    %368 = arith.cmpi slt, %364, %c16_i32_206 : i32
    %369 = arith.andi %367, %368 : i1
    %370 = arith.extui %369 : i1 to i32
    %371 = arith.sitofp %370 : i32 to f32
    %c0_207 = arith.constant 0 : index
    %372 = arith.index_cast %366 : i32 to index
    %c0_208 = arith.constant 0 : index
    %c0_209 = arith.constant 0 : index
    %373 = vector.load %arg2[%c0_207, %372, %c0_208, %c0_209] : memref<1x16x1x16xf32, #tpu.memory_space<vmem>>, vector<1x1x1x16xf32>
    %374 = vector.shape_cast %373 : vector<1x1x1x16xf32> to vector<1x16xf32>
    %375 = vector.broadcast %371 : f32 to vector<1x16xf32>
    %376 = arith.mulf %374, %375 : vector<1x16xf32>
    %377 = arith.index_cast %c20_i32 : i32 to index
    %c0_210 = arith.constant 0 : index
    %c3_211 = arith.constant 3 : index
    %378 = vector.load %arg6[%377, %c0_210, %c3_211] : memref<22x1x22xf32, #tpu.memory_space<vmem>>, vector<1x1x16xf32>
    %379 = vector.shape_cast %378 : vector<1x1x16xf32> to vector<1x16xf32>
    %380 = vector.shape_cast %376 : vector<1x16xf32> to vector<1x1x16xf32>
    tpu.vector_store %arg6[%377, %c0_210, %c3_211], %380 {strides = array<i32>} : memref<22x1x22xf32, #tpu.memory_space<vmem>>, vector<1x1x16xf32>,
    %c21_i32 = arith.constant 21 : i32
    %c3_i32_212 = arith.constant 3 : i32
    %381 = arith.subi %0, %c3_i32_212 : i32
    %382 = arith.addi %381, %c21_i32 : i32
    %c0_i32_213 = arith.constant 0 : i32
    %c15_i32_214 = arith.constant 15 : i32
    %383 = arith.maxsi %c0_i32_213, %382 : i32
    %384 = arith.minsi %c15_i32_214, %383 : i32
    %c0_i32_215 = arith.constant 0 : i32
    %385 = arith.cmpi sge, %382, %c0_i32_215 : i32
    %c16_i32_216 = arith.constant 16 : i32
    %386 = arith.cmpi slt, %382, %c16_i32_216 : i32
    %387 = arith.andi %385, %386 : i1
    %388 = arith.extui %387 : i1 to i32
    %389 = arith.sitofp %388 : i32 to f32
    %c0_217 = arith.constant 0 : index
    %390 = arith.index_cast %384 : i32 to index
    %c0_218 = arith.constant 0 : index
    %c0_219 = arith.constant 0 : index
    %391 = vector.load %arg2[%c0_217, %390, %c0_218, %c0_219] : memref<1x16x1x16xf32, #tpu.memory_space<vmem>>, vector<1x1x1x16xf32>
    %392 = vector.shape_cast %391 : vector<1x1x1x16xf32> to vector<1x16xf32>
    %393 = vector.broadcast %389 : f32 to vector<1x16xf32>
    %394 = arith.mulf %392, %393 : vector<1x16xf32>
    %395 = arith.index_cast %c21_i32 : i32 to index
    %c0_220 = arith.constant 0 : index
    %c3_221 = arith.constant 3 : index
    %396 = vector.load %arg6[%395, %c0_220, %c3_221] : memref<22x1x22xf32, #tpu.memory_space<vmem>>, vector<1x1x16xf32>
    %397 = vector.shape_cast %396 : vector<1x1x16xf32> to vector<1x16xf32>
    %398 = vector.shape_cast %394 : vector<1x16xf32> to vector<1x1x16xf32>
    tpu.vector_store %arg6[%395, %c0_220, %c3_221], %398 {strides = array<i32>} : memref<22x1x22xf32, #tpu.memory_space<vmem>>, vector<1x1x16xf32>,
    %c22_i32 = arith.constant 22 : i32
    %c0_i32_222 = arith.constant 0 : i32
    %c16_i32_223 = arith.constant 16 : i32
    %399 = arith.addi %c0_i32_222, %c16_i32_223 : i32
    %c1_i32_224 = arith.constant 1 : i32
    scf.for %arg8 = %c0_i32_222 to %399 step %c1_i32_224  : i32 {
      %c1_i32_226 = arith.constant 1 : i32
      %400 = arith.muli %arg8, %c1_i32_226 : i32
      %c0_i32_227 = arith.constant 0 : i32
      %401 = arith.addi %400, %c0_i32_227 : i32
      %402 = arith.index_cast %401 : i32 to index
      %c0_228 = arith.constant 0 : index
      %c0_229 = arith.constant 0 : index
      %403 = vector.load %arg6[%402, %c0_228, %c0_229] : memref<22x1x22xf32, #tpu.memory_space<vmem>>, vector<1x1x22xf32>
      %404 = vector.shape_cast %403 : vector<1x1x22xf32> to vector<1x22xf32>
      %405 = vector.extract_strided_slice %404 {offsets = [0, 0], sizes = [1, 16], strides = [1, 1]} : vector<1x22xf32> to vector<1x16xf32>
      %c0_230 = arith.constant 0 : index
      %c0_231 = arith.constant 0 : index
      %406 = vector.load %arg7[%c0_230, %c0_231] : memref<49x16xf32, #tpu.memory_space<vmem>>, vector<1x16xf32>
      tpu.vector_store %arg7[%c0_230, %c0_231], %405 {strides = array<i32>} : memref<49x16xf32, #tpu.memory_space<vmem>>, vector<1x16xf32>,
      %407 = vector.extract_strided_slice %404 {offsets = [0, 1], sizes = [1, 16], strides = [1, 1]} : vector<1x22xf32> to vector<1x16xf32>
      %c1 = arith.constant 1 : index
      %c0_232 = arith.constant 0 : index
      %408 = vector.load %arg7[%c1, %c0_232] : memref<49x16xf32, #tpu.memory_space<vmem>>, vector<1x16xf32>
      tpu.vector_store %arg7[%c1, %c0_232], %407 {strides = array<i32>} : memref<49x16xf32, #tpu.memory_space<vmem>>, vector<1x16xf32>,
      %409 = vector.extract_strided_slice %404 {offsets = [0, 2], sizes = [1, 16], strides = [1, 1]} : vector<1x22xf32> to vector<1x16xf32>
      %c2 = arith.constant 2 : index
      %c0_233 = arith.constant 0 : index
      %410 = vector.load %arg7[%c2, %c0_233] : memref<49x16xf32, #tpu.memory_space<vmem>>, vector<1x16xf32>
      tpu.vector_store %arg7[%c2, %c0_233], %409 {strides = array<i32>} : memref<49x16xf32, #tpu.memory_space<vmem>>, vector<1x16xf32>,
      %411 = vector.extract_strided_slice %404 {offsets = [0, 3], sizes = [1, 16], strides = [1, 1]} : vector<1x22xf32> to vector<1x16xf32>
      %c3_234 = arith.constant 3 : index
      %c0_235 = arith.constant 0 : index
      %412 = vector.load %arg7[%c3_234, %c0_235] : memref<49x16xf32, #tpu.memory_space<vmem>>, vector<1x16xf32>
      tpu.vector_store %arg7[%c3_234, %c0_235], %411 {strides = array<i32>} : memref<49x16xf32, #tpu.memory_space<vmem>>, vector<1x16xf32>,
      %413 = vector.extract_strided_slice %404 {offsets = [0, 4], sizes = [1, 16], strides = [1, 1]} : vector<1x22xf32> to vector<1x16xf32>
      %c4 = arith.constant 4 : index
      %c0_236 = arith.constant 0 : index
      %414 = vector.load %arg7[%c4, %c0_236] : memref<49x16xf32, #tpu.memory_space<vmem>>, vector<1x16xf32>
      tpu.vector_store %arg7[%c4, %c0_236], %413 {strides = array<i32>} : memref<49x16xf32, #tpu.memory_space<vmem>>, vector<1x16xf32>,
      %415 = vector.extract_strided_slice %404 {offsets = [0, 5], sizes = [1, 16], strides = [1, 1]} : vector<1x22xf32> to vector<1x16xf32>
      %c5 = arith.constant 5 : index
      %c0_237 = arith.constant 0 : index
      %416 = vector.load %arg7[%c5, %c0_237] : memref<49x16xf32, #tpu.memory_space<vmem>>, vector<1x16xf32>
      tpu.vector_store %arg7[%c5, %c0_237], %415 {strides = array<i32>} : memref<49x16xf32, #tpu.memory_space<vmem>>, vector<1x16xf32>,
      %417 = vector.extract_strided_slice %404 {offsets = [0, 6], sizes = [1, 16], strides = [1, 1]} : vector<1x22xf32> to vector<1x16xf32>
      %c6 = arith.constant 6 : index
      %c0_238 = arith.constant 0 : index
      %418 = vector.load %arg7[%c6, %c0_238] : memref<49x16xf32, #tpu.memory_space<vmem>>, vector<1x16xf32>
      tpu.vector_store %arg7[%c6, %c0_238], %417 {strides = array<i32>} : memref<49x16xf32, #tpu.memory_space<vmem>>, vector<1x16xf32>,
      %c1_i32_239 = arith.constant 1 : i32
      %419 = arith.addi %400, %c1_i32_239 : i32
      %420 = arith.index_cast %419 : i32 to index
      %c0_240 = arith.constant 0 : index
      %c0_241 = arith.constant 0 : index
      %421 = vector.load %arg6[%420, %c0_240, %c0_241] : memref<22x1x22xf32, #tpu.memory_space<vmem>>, vector<1x1x22xf32>
      %422 = vector.shape_cast %421 : vector<1x1x22xf32> to vector<1x22xf32>
      %423 = vector.extract_strided_slice %422 {offsets = [0, 0], sizes = [1, 16], strides = [1, 1]} : vector<1x22xf32> to vector<1x16xf32>
      %c7 = arith.constant 7 : index
      %c0_242 = arith.constant 0 : index
      %424 = vector.load %arg7[%c7, %c0_242] : memref<49x16xf32, #tpu.memory_space<vmem>>, vector<1x16xf32>
      tpu.vector_store %arg7[%c7, %c0_242], %423 {strides = array<i32>} : memref<49x16xf32, #tpu.memory_space<vmem>>, vector<1x16xf32>,
      %425 = vector.extract_strided_slice %422 {offsets = [0, 1], sizes = [1, 16], strides = [1, 1]} : vector<1x22xf32> to vector<1x16xf32>
      %c8 = arith.constant 8 : index
      %c0_243 = arith.constant 0 : index
      %426 = vector.load %arg7[%c8, %c0_243] : memref<49x16xf32, #tpu.memory_space<vmem>>, vector<1x16xf32>
      tpu.vector_store %arg7[%c8, %c0_243], %425 {strides = array<i32>} : memref<49x16xf32, #tpu.memory_space<vmem>>, vector<1x16xf32>,
      %427 = vector.extract_strided_slice %422 {offsets = [0, 2], sizes = [1, 16], strides = [1, 1]} : vector<1x22xf32> to vector<1x16xf32>
      %c9 = arith.constant 9 : index
      %c0_244 = arith.constant 0 : index
      %428 = vector.load %arg7[%c9, %c0_244] : memref<49x16xf32, #tpu.memory_space<vmem>>, vector<1x16xf32>
      tpu.vector_store %arg7[%c9, %c0_244], %427 {strides = array<i32>} : memref<49x16xf32, #tpu.memory_space<vmem>>, vector<1x16xf32>,
      %429 = vector.extract_strided_slice %422 {offsets = [0, 3], sizes = [1, 16], strides = [1, 1]} : vector<1x22xf32> to vector<1x16xf32>
      %c10 = arith.constant 10 : index
      %c0_245 = arith.constant 0 : index
      %430 = vector.load %arg7[%c10, %c0_245] : memref<49x16xf32, #tpu.memory_space<vmem>>, vector<1x16xf32>
      tpu.vector_store %arg7[%c10, %c0_245], %429 {strides = array<i32>} : memref<49x16xf32, #tpu.memory_space<vmem>>, vector<1x16xf32>,
      %431 = vector.extract_strided_slice %422 {offsets = [0, 4], sizes = [1, 16], strides = [1, 1]} : vector<1x22xf32> to vector<1x16xf32>
      %c11 = arith.constant 11 : index
      %c0_246 = arith.constant 0 : index
      %432 = vector.load %arg7[%c11, %c0_246] : memref<49x16xf32, #tpu.memory_space<vmem>>, vector<1x16xf32>
      tpu.vector_store %arg7[%c11, %c0_246], %431 {strides = array<i32>} : memref<49x16xf32, #tpu.memory_space<vmem>>, vector<1x16xf32>,
      %433 = vector.extract_strided_slice %422 {offsets = [0, 5], sizes = [1, 16], strides = [1, 1]} : vector<1x22xf32> to vector<1x16xf32>
      %c12 = arith.constant 12 : index
      %c0_247 = arith.constant 0 : index
      %434 = vector.load %arg7[%c12, %c0_247] : memref<49x16xf32, #tpu.memory_space<vmem>>, vector<1x16xf32>
      tpu.vector_store %arg7[%c12, %c0_247], %433 {strides = array<i32>} : memref<49x16xf32, #tpu.memory_space<vmem>>, vector<1x16xf32>,
      %435 = vector.extract_strided_slice %422 {offsets = [0, 6], sizes = [1, 16], strides = [1, 1]} : vector<1x22xf32> to vector<1x16xf32>
      %c13 = arith.constant 13 : index
      %c0_248 = arith.constant 0 : index
      %436 = vector.load %arg7[%c13, %c0_248] : memref<49x16xf32, #tpu.memory_space<vmem>>, vector<1x16xf32>
      tpu.vector_store %arg7[%c13, %c0_248], %435 {strides = array<i32>} : memref<49x16xf32, #tpu.memory_space<vmem>>, vector<1x16xf32>,
      %c2_i32_249 = arith.constant 2 : i32
      %437 = arith.addi %400, %c2_i32_249 : i32
      %438 = arith.index_cast %437 : i32 to index
      %c0_250 = arith.constant 0 : index
      %c0_251 = arith.constant 0 : index
      %439 = vector.load %arg6[%438, %c0_250, %c0_251] : memref<22x1x22xf32, #tpu.memory_space<vmem>>, vector<1x1x22xf32>
      %440 = vector.shape_cast %439 : vector<1x1x22xf32> to vector<1x22xf32>
      %441 = vector.extract_strided_slice %440 {offsets = [0, 0], sizes = [1, 16], strides = [1, 1]} : vector<1x22xf32> to vector<1x16xf32>
      %c14 = arith.constant 14 : index
      %c0_252 = arith.constant 0 : index
      %442 = vector.load %arg7[%c14, %c0_252] : memref<49x16xf32, #tpu.memory_space<vmem>>, vector<1x16xf32>
      tpu.vector_store %arg7[%c14, %c0_252], %441 {strides = array<i32>} : memref<49x16xf32, #tpu.memory_space<vmem>>, vector<1x16xf32>,
      %443 = vector.extract_strided_slice %440 {offsets = [0, 1], sizes = [1, 16], strides = [1, 1]} : vector<1x22xf32> to vector<1x16xf32>
      %c15 = arith.constant 15 : index
      %c0_253 = arith.constant 0 : index
      %444 = vector.load %arg7[%c15, %c0_253] : memref<49x16xf32, #tpu.memory_space<vmem>>, vector<1x16xf32>
      tpu.vector_store %arg7[%c15, %c0_253], %443 {strides = array<i32>} : memref<49x16xf32, #tpu.memory_space<vmem>>, vector<1x16xf32>,
      %445 = vector.extract_strided_slice %440 {offsets = [0, 2], sizes = [1, 16], strides = [1, 1]} : vector<1x22xf32> to vector<1x16xf32>
      %c16 = arith.constant 16 : index
      %c0_254 = arith.constant 0 : index
      %446 = vector.load %arg7[%c16, %c0_254] : memref<49x16xf32, #tpu.memory_space<vmem>>, vector<1x16xf32>
      tpu.vector_store %arg7[%c16, %c0_254], %445 {strides = array<i32>} : memref<49x16xf32, #tpu.memory_space<vmem>>, vector<1x16xf32>,
      %447 = vector.extract_strided_slice %440 {offsets = [0, 3], sizes = [1, 16], strides = [1, 1]} : vector<1x22xf32> to vector<1x16xf32>
      %c17 = arith.constant 17 : index
      %c0_255 = arith.constant 0 : index
      %448 = vector.load %arg7[%c17, %c0_255] : memref<49x16xf32, #tpu.memory_space<vmem>>, vector<1x16xf32>
      tpu.vector_store %arg7[%c17, %c0_255], %447 {strides = array<i32>} : memref<49x16xf32, #tpu.memory_space<vmem>>, vector<1x16xf32>,
      %449 = vector.extract_strided_slice %440 {offsets = [0, 4], sizes = [1, 16], strides = [1, 1]} : vector<1x22xf32> to vector<1x16xf32>
      %c18 = arith.constant 18 : index
      %c0_256 = arith.constant 0 : index
      %450 = vector.load %arg7[%c18, %c0_256] : memref<49x16xf32, #tpu.memory_space<vmem>>, vector<1x16xf32>
      tpu.vector_store %arg7[%c18, %c0_256], %449 {strides = array<i32>} : memref<49x16xf32, #tpu.memory_space<vmem>>, vector<1x16xf32>,
      %451 = vector.extract_strided_slice %440 {offsets = [0, 5], sizes = [1, 16], strides = [1, 1]} : vector<1x22xf32> to vector<1x16xf32>
      %c19 = arith.constant 19 : index
      %c0_257 = arith.constant 0 : index
      %452 = vector.load %arg7[%c19, %c0_257] : memref<49x16xf32, #tpu.memory_space<vmem>>, vector<1x16xf32>
      tpu.vector_store %arg7[%c19, %c0_257], %451 {strides = array<i32>} : memref<49x16xf32, #tpu.memory_space<vmem>>, vector<1x16xf32>,
      %453 = vector.extract_strided_slice %440 {offsets = [0, 6], sizes = [1, 16], strides = [1, 1]} : vector<1x22xf32> to vector<1x16xf32>
      %c20 = arith.constant 20 : index
      %c0_258 = arith.constant 0 : index
      %454 = vector.load %arg7[%c20, %c0_258] : memref<49x16xf32, #tpu.memory_space<vmem>>, vector<1x16xf32>
      tpu.vector_store %arg7[%c20, %c0_258], %453 {strides = array<i32>} : memref<49x16xf32, #tpu.memory_space<vmem>>, vector<1x16xf32>,
      %c3_i32_259 = arith.constant 3 : i32
      %455 = arith.addi %400, %c3_i32_259 : i32
      %456 = arith.index_cast %455 : i32 to index
      %c0_260 = arith.constant 0 : index
      %c0_261 = arith.constant 0 : index
      %457 = vector.load %arg6[%456, %c0_260, %c0_261] : memref<22x1x22xf32, #tpu.memory_space<vmem>>, vector<1x1x22xf32>
      %458 = vector.shape_cast %457 : vector<1x1x22xf32> to vector<1x22xf32>
      %459 = vector.extract_strided_slice %458 {offsets = [0, 0], sizes = [1, 16], strides = [1, 1]} : vector<1x22xf32> to vector<1x16xf32>
      %c21 = arith.constant 21 : index
      %c0_262 = arith.constant 0 : index
      %460 = vector.load %arg7[%c21, %c0_262] : memref<49x16xf32, #tpu.memory_space<vmem>>, vector<1x16xf32>
      tpu.vector_store %arg7[%c21, %c0_262], %459 {strides = array<i32>} : memref<49x16xf32, #tpu.memory_space<vmem>>, vector<1x16xf32>,
      %461 = vector.extract_strided_slice %458 {offsets = [0, 1], sizes = [1, 16], strides = [1, 1]} : vector<1x22xf32> to vector<1x16xf32>
      %c22 = arith.constant 22 : index
      %c0_263 = arith.constant 0 : index
      %462 = vector.load %arg7[%c22, %c0_263] : memref<49x16xf32, #tpu.memory_space<vmem>>, vector<1x16xf32>
      tpu.vector_store %arg7[%c22, %c0_263], %461 {strides = array<i32>} : memref<49x16xf32, #tpu.memory_space<vmem>>, vector<1x16xf32>,
      %463 = vector.extract_strided_slice %458 {offsets = [0, 2], sizes = [1, 16], strides = [1, 1]} : vector<1x22xf32> to vector<1x16xf32>
      %c23 = arith.constant 23 : index
      %c0_264 = arith.constant 0 : index
      %464 = vector.load %arg7[%c23, %c0_264] : memref<49x16xf32, #tpu.memory_space<vmem>>, vector<1x16xf32>
      tpu.vector_store %arg7[%c23, %c0_264], %463 {strides = array<i32>} : memref<49x16xf32, #tpu.memory_space<vmem>>, vector<1x16xf32>,
      %465 = vector.extract_strided_slice %458 {offsets = [0, 3], sizes = [1, 16], strides = [1, 1]} : vector<1x22xf32> to vector<1x16xf32>
      %c24 = arith.constant 24 : index
      %c0_265 = arith.constant 0 : index
      %466 = vector.load %arg7[%c24, %c0_265] : memref<49x16xf32, #tpu.memory_space<vmem>>, vector<1x16xf32>
      tpu.vector_store %arg7[%c24, %c0_265], %465 {strides = array<i32>} : memref<49x16xf32, #tpu.memory_space<vmem>>, vector<1x16xf32>,
      %467 = vector.extract_strided_slice %458 {offsets = [0, 4], sizes = [1, 16], strides = [1, 1]} : vector<1x22xf32> to vector<1x16xf32>
      %c25 = arith.constant 25 : index
      %c0_266 = arith.constant 0 : index
      %468 = vector.load %arg7[%c25, %c0_266] : memref<49x16xf32, #tpu.memory_space<vmem>>, vector<1x16xf32>
      tpu.vector_store %arg7[%c25, %c0_266], %467 {strides = array<i32>} : memref<49x16xf32, #tpu.memory_space<vmem>>, vector<1x16xf32>,
      %469 = vector.extract_strided_slice %458 {offsets = [0, 5], sizes = [1, 16], strides = [1, 1]} : vector<1x22xf32> to vector<1x16xf32>
      %c26 = arith.constant 26 : index
      %c0_267 = arith.constant 0 : index
      %470 = vector.load %arg7[%c26, %c0_267] : memref<49x16xf32, #tpu.memory_space<vmem>>, vector<1x16xf32>
      tpu.vector_store %arg7[%c26, %c0_267], %469 {strides = array<i32>} : memref<49x16xf32, #tpu.memory_space<vmem>>, vector<1x16xf32>,
      %471 = vector.extract_strided_slice %458 {offsets = [0, 6], sizes = [1, 16], strides = [1, 1]} : vector<1x22xf32> to vector<1x16xf32>
      %c27 = arith.constant 27 : index
      %c0_268 = arith.constant 0 : index
      %472 = vector.load %arg7[%c27, %c0_268] : memref<49x16xf32, #tpu.memory_space<vmem>>, vector<1x16xf32>
      tpu.vector_store %arg7[%c27, %c0_268], %471 {strides = array<i32>} : memref<49x16xf32, #tpu.memory_space<vmem>>, vector<1x16xf32>,
      %c4_i32_269 = arith.constant 4 : i32
      %473 = arith.addi %400, %c4_i32_269 : i32
      %474 = arith.index_cast %473 : i32 to index
      %c0_270 = arith.constant 0 : index
      %c0_271 = arith.constant 0 : index
      %475 = vector.load %arg6[%474, %c0_270, %c0_271] : memref<22x1x22xf32, #tpu.memory_space<vmem>>, vector<1x1x22xf32>
      %476 = vector.shape_cast %475 : vector<1x1x22xf32> to vector<1x22xf32>
      %477 = vector.extract_strided_slice %476 {offsets = [0, 0], sizes = [1, 16], strides = [1, 1]} : vector<1x22xf32> to vector<1x16xf32>
      %c28 = arith.constant 28 : index
      %c0_272 = arith.constant 0 : index
      %478 = vector.load %arg7[%c28, %c0_272] : memref<49x16xf32, #tpu.memory_space<vmem>>, vector<1x16xf32>
      tpu.vector_store %arg7[%c28, %c0_272], %477 {strides = array<i32>} : memref<49x16xf32, #tpu.memory_space<vmem>>, vector<1x16xf32>,
      %479 = vector.extract_strided_slice %476 {offsets = [0, 1], sizes = [1, 16], strides = [1, 1]} : vector<1x22xf32> to vector<1x16xf32>
      %c29 = arith.constant 29 : index
      %c0_273 = arith.constant 0 : index
      %480 = vector.load %arg7[%c29, %c0_273] : memref<49x16xf32, #tpu.memory_space<vmem>>, vector<1x16xf32>
      tpu.vector_store %arg7[%c29, %c0_273], %479 {strides = array<i32>} : memref<49x16xf32, #tpu.memory_space<vmem>>, vector<1x16xf32>,
      %481 = vector.extract_strided_slice %476 {offsets = [0, 2], sizes = [1, 16], strides = [1, 1]} : vector<1x22xf32> to vector<1x16xf32>
      %c30 = arith.constant 30 : index
      %c0_274 = arith.constant 0 : index
      %482 = vector.load %arg7[%c30, %c0_274] : memref<49x16xf32, #tpu.memory_space<vmem>>, vector<1x16xf32>
      tpu.vector_store %arg7[%c30, %c0_274], %481 {strides = array<i32>} : memref<49x16xf32, #tpu.memory_space<vmem>>, vector<1x16xf32>,
      %483 = vector.extract_strided_slice %476 {offsets = [0, 3], sizes = [1, 16], strides = [1, 1]} : vector<1x22xf32> to vector<1x16xf32>
      %c31 = arith.constant 31 : index
      %c0_275 = arith.constant 0 : index
      %484 = vector.load %arg7[%c31, %c0_275] : memref<49x16xf32, #tpu.memory_space<vmem>>, vector<1x16xf32>
      tpu.vector_store %arg7[%c31, %c0_275], %483 {strides = array<i32>} : memref<49x16xf32, #tpu.memory_space<vmem>>, vector<1x16xf32>,
      %485 = vector.extract_strided_slice %476 {offsets = [0, 4], sizes = [1, 16], strides = [1, 1]} : vector<1x22xf32> to vector<1x16xf32>
      %c32 = arith.constant 32 : index
      %c0_276 = arith.constant 0 : index
      %486 = vector.load %arg7[%c32, %c0_276] : memref<49x16xf32, #tpu.memory_space<vmem>>, vector<1x16xf32>
      tpu.vector_store %arg7[%c32, %c0_276], %485 {strides = array<i32>} : memref<49x16xf32, #tpu.memory_space<vmem>>, vector<1x16xf32>,
      %487 = vector.extract_strided_slice %476 {offsets = [0, 5], sizes = [1, 16], strides = [1, 1]} : vector<1x22xf32> to vector<1x16xf32>
      %c33 = arith.constant 33 : index
      %c0_277 = arith.constant 0 : index
      %488 = vector.load %arg7[%c33, %c0_277] : memref<49x16xf32, #tpu.memory_space<vmem>>, vector<1x16xf32>
      tpu.vector_store %arg7[%c33, %c0_277], %487 {strides = array<i32>} : memref<49x16xf32, #tpu.memory_space<vmem>>, vector<1x16xf32>,
      %489 = vector.extract_strided_slice %476 {offsets = [0, 6], sizes = [1, 16], strides = [1, 1]} : vector<1x22xf32> to vector<1x16xf32>
      %c34 = arith.constant 34 : index
      %c0_278 = arith.constant 0 : index
      %490 = vector.load %arg7[%c34, %c0_278] : memref<49x16xf32, #tpu.memory_space<vmem>>, vector<1x16xf32>
      tpu.vector_store %arg7[%c34, %c0_278], %489 {strides = array<i32>} : memref<49x16xf32, #tpu.memory_space<vmem>>, vector<1x16xf32>,
      %c5_i32_279 = arith.constant 5 : i32
      %491 = arith.addi %400, %c5_i32_279 : i32
      %492 = arith.index_cast %491 : i32 to index
      %c0_280 = arith.constant 0 : index
      %c0_281 = arith.constant 0 : index
      %493 = vector.load %arg6[%492, %c0_280, %c0_281] : memref<22x1x22xf32, #tpu.memory_space<vmem>>, vector<1x1x22xf32>
      %494 = vector.shape_cast %493 : vector<1x1x22xf32> to vector<1x22xf32>
      %495 = vector.extract_strided_slice %494 {offsets = [0, 0], sizes = [1, 16], strides = [1, 1]} : vector<1x22xf32> to vector<1x16xf32>
      %c35 = arith.constant 35 : index
      %c0_282 = arith.constant 0 : index
      %496 = vector.load %arg7[%c35, %c0_282] : memref<49x16xf32, #tpu.memory_space<vmem>>, vector<1x16xf32>
      tpu.vector_store %arg7[%c35, %c0_282], %495 {strides = array<i32>} : memref<49x16xf32, #tpu.memory_space<vmem>>, vector<1x16xf32>,
      %497 = vector.extract_strided_slice %494 {offsets = [0, 1], sizes = [1, 16], strides = [1, 1]} : vector<1x22xf32> to vector<1x16xf32>
      %c36 = arith.constant 36 : index
      %c0_283 = arith.constant 0 : index
      %498 = vector.load %arg7[%c36, %c0_283] : memref<49x16xf32, #tpu.memory_space<vmem>>, vector<1x16xf32>
      tpu.vector_store %arg7[%c36, %c0_283], %497 {strides = array<i32>} : memref<49x16xf32, #tpu.memory_space<vmem>>, vector<1x16xf32>,
      %499 = vector.extract_strided_slice %494 {offsets = [0, 2], sizes = [1, 16], strides = [1, 1]} : vector<1x22xf32> to vector<1x16xf32>
      %c37 = arith.constant 37 : index
      %c0_284 = arith.constant 0 : index
      %500 = vector.load %arg7[%c37, %c0_284] : memref<49x16xf32, #tpu.memory_space<vmem>>, vector<1x16xf32>
      tpu.vector_store %arg7[%c37, %c0_284], %499 {strides = array<i32>} : memref<49x16xf32, #tpu.memory_space<vmem>>, vector<1x16xf32>,
      %501 = vector.extract_strided_slice %494 {offsets = [0, 3], sizes = [1, 16], strides = [1, 1]} : vector<1x22xf32> to vector<1x16xf32>
      %c38 = arith.constant 38 : index
      %c0_285 = arith.constant 0 : index
      %502 = vector.load %arg7[%c38, %c0_285] : memref<49x16xf32, #tpu.memory_space<vmem>>, vector<1x16xf32>
      tpu.vector_store %arg7[%c38, %c0_285], %501 {strides = array<i32>} : memref<49x16xf32, #tpu.memory_space<vmem>>, vector<1x16xf32>,
      %503 = vector.extract_strided_slice %494 {offsets = [0, 4], sizes = [1, 16], strides = [1, 1]} : vector<1x22xf32> to vector<1x16xf32>
      %c39 = arith.constant 39 : index
      %c0_286 = arith.constant 0 : index
      %504 = vector.load %arg7[%c39, %c0_286] : memref<49x16xf32, #tpu.memory_space<vmem>>, vector<1x16xf32>
      tpu.vector_store %arg7[%c39, %c0_286], %503 {strides = array<i32>} : memref<49x16xf32, #tpu.memory_space<vmem>>, vector<1x16xf32>,
      %505 = vector.extract_strided_slice %494 {offsets = [0, 5], sizes = [1, 16], strides = [1, 1]} : vector<1x22xf32> to vector<1x16xf32>
      %c40 = arith.constant 40 : index
      %c0_287 = arith.constant 0 : index
      %506 = vector.load %arg7[%c40, %c0_287] : memref<49x16xf32, #tpu.memory_space<vmem>>, vector<1x16xf32>
      tpu.vector_store %arg7[%c40, %c0_287], %505 {strides = array<i32>} : memref<49x16xf32, #tpu.memory_space<vmem>>, vector<1x16xf32>,
      %507 = vector.extract_strided_slice %494 {offsets = [0, 6], sizes = [1, 16], strides = [1, 1]} : vector<1x22xf32> to vector<1x16xf32>
      %c41 = arith.constant 41 : index
      %c0_288 = arith.constant 0 : index
      %508 = vector.load %arg7[%c41, %c0_288] : memref<49x16xf32, #tpu.memory_space<vmem>>, vector<1x16xf32>
      tpu.vector_store %arg7[%c41, %c0_288], %507 {strides = array<i32>} : memref<49x16xf32, #tpu.memory_space<vmem>>, vector<1x16xf32>,
      %c6_i32_289 = arith.constant 6 : i32
      %509 = arith.addi %400, %c6_i32_289 : i32
      %510 = arith.index_cast %509 : i32 to index
      %c0_290 = arith.constant 0 : index
      %c0_291 = arith.constant 0 : index
      %511 = vector.load %arg6[%510, %c0_290, %c0_291] : memref<22x1x22xf32, #tpu.memory_space<vmem>>, vector<1x1x22xf32>
      %512 = vector.shape_cast %511 : vector<1x1x22xf32> to vector<1x22xf32>
      %513 = vector.extract_strided_slice %512 {offsets = [0, 0], sizes = [1, 16], strides = [1, 1]} : vector<1x22xf32> to vector<1x16xf32>
      %c42 = arith.constant 42 : index
      %c0_292 = arith.constant 0 : index
      %514 = vector.load %arg7[%c42, %c0_292] : memref<49x16xf32, #tpu.memory_space<vmem>>, vector<1x16xf32>
      tpu.vector_store %arg7[%c42, %c0_292], %513 {strides = array<i32>} : memref<49x16xf32, #tpu.memory_space<vmem>>, vector<1x16xf32>,
      %515 = vector.extract_strided_slice %512 {offsets = [0, 1], sizes = [1, 16], strides = [1, 1]} : vector<1x22xf32> to vector<1x16xf32>
      %c43 = arith.constant 43 : index
      %c0_293 = arith.constant 0 : index
      %516 = vector.load %arg7[%c43, %c0_293] : memref<49x16xf32, #tpu.memory_space<vmem>>, vector<1x16xf32>
      tpu.vector_store %arg7[%c43, %c0_293], %515 {strides = array<i32>} : memref<49x16xf32, #tpu.memory_space<vmem>>, vector<1x16xf32>,
      %517 = vector.extract_strided_slice %512 {offsets = [0, 2], sizes = [1, 16], strides = [1, 1]} : vector<1x22xf32> to vector<1x16xf32>
      %c44 = arith.constant 44 : index
      %c0_294 = arith.constant 0 : index
      %518 = vector.load %arg7[%c44, %c0_294] : memref<49x16xf32, #tpu.memory_space<vmem>>, vector<1x16xf32>
      tpu.vector_store %arg7[%c44, %c0_294], %517 {strides = array<i32>} : memref<49x16xf32, #tpu.memory_space<vmem>>, vector<1x16xf32>,
      %519 = vector.extract_strided_slice %512 {offsets = [0, 3], sizes = [1, 16], strides = [1, 1]} : vector<1x22xf32> to vector<1x16xf32>
      %c45 = arith.constant 45 : index
      %c0_295 = arith.constant 0 : index
      %520 = vector.load %arg7[%c45, %c0_295] : memref<49x16xf32, #tpu.memory_space<vmem>>, vector<1x16xf32>
      tpu.vector_store %arg7[%c45, %c0_295], %519 {strides = array<i32>} : memref<49x16xf32, #tpu.memory_space<vmem>>, vector<1x16xf32>,
      %521 = vector.extract_strided_slice %512 {offsets = [0, 4], sizes = [1, 16], strides = [1, 1]} : vector<1x22xf32> to vector<1x16xf32>
      %c46 = arith.constant 46 : index
      %c0_296 = arith.constant 0 : index
      %522 = vector.load %arg7[%c46, %c0_296] : memref<49x16xf32, #tpu.memory_space<vmem>>, vector<1x16xf32>
      tpu.vector_store %arg7[%c46, %c0_296], %521 {strides = array<i32>} : memref<49x16xf32, #tpu.memory_space<vmem>>, vector<1x16xf32>,
      %523 = vector.extract_strided_slice %512 {offsets = [0, 5], sizes = [1, 16], strides = [1, 1]} : vector<1x22xf32> to vector<1x16xf32>
      %c47 = arith.constant 47 : index
      %c0_297 = arith.constant 0 : index
      %524 = vector.load %arg7[%c47, %c0_297] : memref<49x16xf32, #tpu.memory_space<vmem>>, vector<1x16xf32>
      tpu.vector_store %arg7[%c47, %c0_297], %523 {strides = array<i32>} : memref<49x16xf32, #tpu.memory_space<vmem>>, vector<1x16xf32>,
      %525 = vector.extract_strided_slice %512 {offsets = [0, 6], sizes = [1, 16], strides = [1, 1]} : vector<1x22xf32> to vector<1x16xf32>
      %c48 = arith.constant 48 : index
      %c0_298 = arith.constant 0 : index
      %526 = vector.load %arg7[%c48, %c0_298] : memref<49x16xf32, #tpu.memory_space<vmem>>, vector<1x16xf32>
      tpu.vector_store %arg7[%c48, %c0_298], %525 {strides = array<i32>} : memref<49x16xf32, #tpu.memory_space<vmem>>, vector<1x16xf32>,
      %c0_299 = arith.constant 0 : index
      %c0_300 = arith.constant 0 : index
      %527 = vector.load %arg3[%c0_299, %c0_300] : memref<16x49xf32, #tpu.memory_space<vmem>>, vector<16x49xf32>
      %c0_301 = arith.constant 0 : index
      %c0_302 = arith.constant 0 : index
      %528 = vector.load %arg7[%c0_301, %c0_302] : memref<49x16xf32, #tpu.memory_space<vmem>>, vector<49x16xf32>
      %cst_303 = arith.constant dense<0.000000e+00> : vector<16x16xf32>
      %529 = tpu.matmul %527, %528, %cst_303 {dimension_numbers = #tpu.dot_dimension_numbers<[1], [0], [0], [1], [0, 0, 1, 1], [], []>} : vector<16x49xf32>, vector<49x16xf32>, vector<16x16xf32> -> vector<16x16xf32>
      %c0_304 = arith.constant 0 : index
      %c0_305 = arith.constant 0 : index
      %530 = vector.load %arg4[%c0_304, %c0_305] : memref<16x1xf32, #tpu.memory_space<vmem>>, vector<16x1xf32>
      %531 = vector.broadcast %530 : vector<16x1xf32> to vector<16x16xf32>
      %532 = arith.addf %529, %531 : vector<16x16xf32>
      %533 = arith.truncf %532 : vector<16x16xf32> to vector<16x16xbf16>
      %c0_306 = arith.constant 0 : index
      %534 = arith.index_cast %arg8 : i32 to index
      %c0_307 = arith.constant 0 : index
      %c0_308 = arith.constant 0 : index
      %535 = vector.load %arg5[%c0_306, %534, %c0_307, %c0_308] : memref<1x16x16x16xbf16, #tpu.memory_space<vmem>>, vector<1x1x16x16xbf16>
      %536 = vector.shape_cast %535 : vector<1x1x16x16xbf16> to vector<16x16xbf16>
      %537 = vector.shape_cast %533 : vector<16x16xbf16> to vector<1x1x16x16xbf16>
      tpu.vector_store %arg5[%c0_306, %534, %c0_307, %c0_308], %537 {strides = array<i32>} : memref<1x16x16x16xbf16, #tpu.memory_space<vmem>>, vector<1x1x16x16xbf16>,
    }
    %c16_i32_225 = arith.constant 16 : i32
    return
  }
  func.func @transform_0(%arg0: i32, %arg1: i32) -> (i32, i32, i32, i32) {
    %c0_i32 = arith.constant 0 : i32
    %c0_i32_0 = arith.constant 0 : i32
    %c0_i32_1 = arith.constant 0 : i32
    %c0_i32_2 = arith.constant 0 : i32
    return %arg0, %c0_i32, %c0_i32_0, %c0_i32_1 : i32, i32, i32, i32
  }
  func.func @transform_1(%arg0: i32, %arg1: i32) -> (i32, i32) {
    %c0_i32 = arith.constant 0 : i32
    %c0_i32_0 = arith.constant 0 : i32
    %c0_i32_1 = arith.constant 0 : i32
    return %c0_i32, %c0_i32_0 : i32, i32
  }
  func.func @transform_2(%arg0: i32, %arg1: i32) -> (i32, i32) {
    %c0_i32 = arith.constant 0 : i32
    %c0_i32_0 = arith.constant 0 : i32
    %c0_i32_1 = arith.constant 0 : i32
    return %c0_i32, %c0_i32_0 : i32, i32
  }
  func.func @transform_3(%arg0: i32, %arg1: i32) -> (i32, i32, i32, i32) {
    %c0_i32 = arith.constant 0 : i32
    %c0_i32_0 = arith.constant 0 : i32
    %c0_i32_1 = arith.constant 0 : i32
    return %arg0, %arg1, %c0_i32, %c0_i32_0 : i32, i32, i32, i32
  }
}

module attributes {stable_mosaic.version = 11 : i64} {
  func.func @kernel(%arg0: i32, %arg1: i32, %arg2: memref<1x8x16x8xbf16, #tpu.memory_space<vmem>>, %arg3: memref<32x144xbf16, #tpu.memory_space<vmem>>, %arg4: memref<32x1xf32, #tpu.memory_space<vmem>>, %arg5: memref<1x4x32x4xbf16, #tpu.memory_space<vmem>>, %arg6: memref<10x16x10xbf16, #tpu.memory_space<vmem>>, %arg7: memref<144x8xbf16, #tpu.memory_space<vmem>>) attributes {dimension_semantics = [#tpu.dimension_semantics<parallel>, #tpu.dimension_semantics<parallel>], iteration_bounds = array<i64: 2, 1>, scalar_prefetch = 0 : i64, scratch_operands = 2 : i64, tpu.core_type = #tpu.core_type<tc>, window_params = [{transform_indices = @transform_0, window_bounds = array<i64: 1, 8, 16, 8>}, {pipeline_mode = #tpu.pipeline_mode<synchronous>, transform_indices = @transform_1, window_bounds = array<i64: 32, 144>}, {pipeline_mode = #tpu.pipeline_mode<synchronous>, transform_indices = @transform_2, window_bounds = array<i64: 32, 1>}, {transform_indices = @transform_3, window_bounds = array<i64: 1, 4, 32, 4>}]} {
    %c8_i32 = arith.constant 8 : i32
    %0 = arith.muli %arg1, %c8_i32 : i32
    %cst = arith.constant 0.000000e+00 : bf16
    %1 = vector.broadcast %cst : bf16 to vector<10x16x10xbf16>
    %c0 = arith.constant 0 : index
    %c0_0 = arith.constant 0 : index
    %c0_1 = arith.constant 0 : index
    %2 = vector.load %arg6[%c0, %c0_0, %c0_1] : memref<10x16x10xbf16, #tpu.memory_space<vmem>>, vector<10x16x10xbf16>
    tpu.vector_store %arg6[%c0, %c0_0, %c0_1], %1 {strides = array<i32>} : memref<10x16x10xbf16, #tpu.memory_space<vmem>>, vector<10x16x10xbf16>,
    %c0_i32 = arith.constant 0 : i32
    %c1_i32 = arith.constant 1 : i32
    %3 = arith.subi %0, %c1_i32 : i32
    %4 = arith.addi %3, %c0_i32 : i32
    %c0_i32_2 = arith.constant 0 : i32
    %c7_i32 = arith.constant 7 : i32
    %5 = arith.maxsi %c0_i32_2, %4 : i32
    %6 = arith.minsi %c7_i32, %5 : i32
    %c0_i32_3 = arith.constant 0 : i32
    %7 = arith.cmpi sge, %4, %c0_i32_3 : i32
    %c8_i32_4 = arith.constant 8 : i32
    %8 = arith.cmpi slt, %4, %c8_i32_4 : i32
    %9 = arith.andi %7, %8 : i1
    %10 = arith.extui %9 : i1 to i32
    %11 = arith.sitofp %10 : i32 to f32
    %12 = arith.truncf %11 : f32 to bf16
    %c0_5 = arith.constant 0 : index
    %13 = arith.index_cast %6 : i32 to index
    %c0_6 = arith.constant 0 : index
    %c0_7 = arith.constant 0 : index
    %14 = vector.load %arg2[%c0_5, %13, %c0_6, %c0_7] : memref<1x8x16x8xbf16, #tpu.memory_space<vmem>>, vector<1x1x16x8xbf16>
    %15 = vector.shape_cast %14 : vector<1x1x16x8xbf16> to vector<16x8xbf16>
    %16 = vector.broadcast %12 : bf16 to vector<16x8xbf16>
    %17 = arith.mulf %15, %16 : vector<16x8xbf16>
    %18 = arith.index_cast %c0_i32 : i32 to index
    %c0_8 = arith.constant 0 : index
    %c1 = arith.constant 1 : index
    %19 = vector.load %arg6[%18, %c0_8, %c1] : memref<10x16x10xbf16, #tpu.memory_space<vmem>>, vector<1x16x8xbf16>
    %20 = vector.shape_cast %19 : vector<1x16x8xbf16> to vector<16x8xbf16>
    %21 = vector.shape_cast %17 : vector<16x8xbf16> to vector<1x16x8xbf16>
    tpu.vector_store %arg6[%18, %c0_8, %c1], %21 {strides = array<i32>} : memref<10x16x10xbf16, #tpu.memory_space<vmem>>, vector<1x16x8xbf16>,
    %c1_i32_9 = arith.constant 1 : i32
    %c1_i32_10 = arith.constant 1 : i32
    %22 = arith.subi %0, %c1_i32_10 : i32
    %23 = arith.addi %22, %c1_i32_9 : i32
    %c0_i32_11 = arith.constant 0 : i32
    %c7_i32_12 = arith.constant 7 : i32
    %24 = arith.maxsi %c0_i32_11, %23 : i32
    %25 = arith.minsi %c7_i32_12, %24 : i32
    %c0_i32_13 = arith.constant 0 : i32
    %26 = arith.cmpi sge, %23, %c0_i32_13 : i32
    %c8_i32_14 = arith.constant 8 : i32
    %27 = arith.cmpi slt, %23, %c8_i32_14 : i32
    %28 = arith.andi %26, %27 : i1
    %29 = arith.extui %28 : i1 to i32
    %30 = arith.sitofp %29 : i32 to f32
    %31 = arith.truncf %30 : f32 to bf16
    %c0_15 = arith.constant 0 : index
    %32 = arith.index_cast %25 : i32 to index
    %c0_16 = arith.constant 0 : index
    %c0_17 = arith.constant 0 : index
    %33 = vector.load %arg2[%c0_15, %32, %c0_16, %c0_17] : memref<1x8x16x8xbf16, #tpu.memory_space<vmem>>, vector<1x1x16x8xbf16>
    %34 = vector.shape_cast %33 : vector<1x1x16x8xbf16> to vector<16x8xbf16>
    %35 = vector.broadcast %31 : bf16 to vector<16x8xbf16>
    %36 = arith.mulf %34, %35 : vector<16x8xbf16>
    %37 = arith.index_cast %c1_i32_9 : i32 to index
    %c0_18 = arith.constant 0 : index
    %c1_19 = arith.constant 1 : index
    %38 = vector.load %arg6[%37, %c0_18, %c1_19] : memref<10x16x10xbf16, #tpu.memory_space<vmem>>, vector<1x16x8xbf16>
    %39 = vector.shape_cast %38 : vector<1x16x8xbf16> to vector<16x8xbf16>
    %40 = vector.shape_cast %36 : vector<16x8xbf16> to vector<1x16x8xbf16>
    tpu.vector_store %arg6[%37, %c0_18, %c1_19], %40 {strides = array<i32>} : memref<10x16x10xbf16, #tpu.memory_space<vmem>>, vector<1x16x8xbf16>,
    %c2_i32 = arith.constant 2 : i32
    %c1_i32_20 = arith.constant 1 : i32
    %41 = arith.subi %0, %c1_i32_20 : i32
    %42 = arith.addi %41, %c2_i32 : i32
    %c0_i32_21 = arith.constant 0 : i32
    %c7_i32_22 = arith.constant 7 : i32
    %43 = arith.maxsi %c0_i32_21, %42 : i32
    %44 = arith.minsi %c7_i32_22, %43 : i32
    %c0_i32_23 = arith.constant 0 : i32
    %45 = arith.cmpi sge, %42, %c0_i32_23 : i32
    %c8_i32_24 = arith.constant 8 : i32
    %46 = arith.cmpi slt, %42, %c8_i32_24 : i32
    %47 = arith.andi %45, %46 : i1
    %48 = arith.extui %47 : i1 to i32
    %49 = arith.sitofp %48 : i32 to f32
    %50 = arith.truncf %49 : f32 to bf16
    %c0_25 = arith.constant 0 : index
    %51 = arith.index_cast %44 : i32 to index
    %c0_26 = arith.constant 0 : index
    %c0_27 = arith.constant 0 : index
    %52 = vector.load %arg2[%c0_25, %51, %c0_26, %c0_27] : memref<1x8x16x8xbf16, #tpu.memory_space<vmem>>, vector<1x1x16x8xbf16>
    %53 = vector.shape_cast %52 : vector<1x1x16x8xbf16> to vector<16x8xbf16>
    %54 = vector.broadcast %50 : bf16 to vector<16x8xbf16>
    %55 = arith.mulf %53, %54 : vector<16x8xbf16>
    %56 = arith.index_cast %c2_i32 : i32 to index
    %c0_28 = arith.constant 0 : index
    %c1_29 = arith.constant 1 : index
    %57 = vector.load %arg6[%56, %c0_28, %c1_29] : memref<10x16x10xbf16, #tpu.memory_space<vmem>>, vector<1x16x8xbf16>
    %58 = vector.shape_cast %57 : vector<1x16x8xbf16> to vector<16x8xbf16>
    %59 = vector.shape_cast %55 : vector<16x8xbf16> to vector<1x16x8xbf16>
    tpu.vector_store %arg6[%56, %c0_28, %c1_29], %59 {strides = array<i32>} : memref<10x16x10xbf16, #tpu.memory_space<vmem>>, vector<1x16x8xbf16>,
    %c3_i32 = arith.constant 3 : i32
    %c1_i32_30 = arith.constant 1 : i32
    %60 = arith.subi %0, %c1_i32_30 : i32
    %61 = arith.addi %60, %c3_i32 : i32
    %c0_i32_31 = arith.constant 0 : i32
    %c7_i32_32 = arith.constant 7 : i32
    %62 = arith.maxsi %c0_i32_31, %61 : i32
    %63 = arith.minsi %c7_i32_32, %62 : i32
    %c0_i32_33 = arith.constant 0 : i32
    %64 = arith.cmpi sge, %61, %c0_i32_33 : i32
    %c8_i32_34 = arith.constant 8 : i32
    %65 = arith.cmpi slt, %61, %c8_i32_34 : i32
    %66 = arith.andi %64, %65 : i1
    %67 = arith.extui %66 : i1 to i32
    %68 = arith.sitofp %67 : i32 to f32
    %69 = arith.truncf %68 : f32 to bf16
    %c0_35 = arith.constant 0 : index
    %70 = arith.index_cast %63 : i32 to index
    %c0_36 = arith.constant 0 : index
    %c0_37 = arith.constant 0 : index
    %71 = vector.load %arg2[%c0_35, %70, %c0_36, %c0_37] : memref<1x8x16x8xbf16, #tpu.memory_space<vmem>>, vector<1x1x16x8xbf16>
    %72 = vector.shape_cast %71 : vector<1x1x16x8xbf16> to vector<16x8xbf16>
    %73 = vector.broadcast %69 : bf16 to vector<16x8xbf16>
    %74 = arith.mulf %72, %73 : vector<16x8xbf16>
    %75 = arith.index_cast %c3_i32 : i32 to index
    %c0_38 = arith.constant 0 : index
    %c1_39 = arith.constant 1 : index
    %76 = vector.load %arg6[%75, %c0_38, %c1_39] : memref<10x16x10xbf16, #tpu.memory_space<vmem>>, vector<1x16x8xbf16>
    %77 = vector.shape_cast %76 : vector<1x16x8xbf16> to vector<16x8xbf16>
    %78 = vector.shape_cast %74 : vector<16x8xbf16> to vector<1x16x8xbf16>
    tpu.vector_store %arg6[%75, %c0_38, %c1_39], %78 {strides = array<i32>} : memref<10x16x10xbf16, #tpu.memory_space<vmem>>, vector<1x16x8xbf16>,
    %c4_i32 = arith.constant 4 : i32
    %c1_i32_40 = arith.constant 1 : i32
    %79 = arith.subi %0, %c1_i32_40 : i32
    %80 = arith.addi %79, %c4_i32 : i32
    %c0_i32_41 = arith.constant 0 : i32
    %c7_i32_42 = arith.constant 7 : i32
    %81 = arith.maxsi %c0_i32_41, %80 : i32
    %82 = arith.minsi %c7_i32_42, %81 : i32
    %c0_i32_43 = arith.constant 0 : i32
    %83 = arith.cmpi sge, %80, %c0_i32_43 : i32
    %c8_i32_44 = arith.constant 8 : i32
    %84 = arith.cmpi slt, %80, %c8_i32_44 : i32
    %85 = arith.andi %83, %84 : i1
    %86 = arith.extui %85 : i1 to i32
    %87 = arith.sitofp %86 : i32 to f32
    %88 = arith.truncf %87 : f32 to bf16
    %c0_45 = arith.constant 0 : index
    %89 = arith.index_cast %82 : i32 to index
    %c0_46 = arith.constant 0 : index
    %c0_47 = arith.constant 0 : index
    %90 = vector.load %arg2[%c0_45, %89, %c0_46, %c0_47] : memref<1x8x16x8xbf16, #tpu.memory_space<vmem>>, vector<1x1x16x8xbf16>
    %91 = vector.shape_cast %90 : vector<1x1x16x8xbf16> to vector<16x8xbf16>
    %92 = vector.broadcast %88 : bf16 to vector<16x8xbf16>
    %93 = arith.mulf %91, %92 : vector<16x8xbf16>
    %94 = arith.index_cast %c4_i32 : i32 to index
    %c0_48 = arith.constant 0 : index
    %c1_49 = arith.constant 1 : index
    %95 = vector.load %arg6[%94, %c0_48, %c1_49] : memref<10x16x10xbf16, #tpu.memory_space<vmem>>, vector<1x16x8xbf16>
    %96 = vector.shape_cast %95 : vector<1x16x8xbf16> to vector<16x8xbf16>
    %97 = vector.shape_cast %93 : vector<16x8xbf16> to vector<1x16x8xbf16>
    tpu.vector_store %arg6[%94, %c0_48, %c1_49], %97 {strides = array<i32>} : memref<10x16x10xbf16, #tpu.memory_space<vmem>>, vector<1x16x8xbf16>,
    %c5_i32 = arith.constant 5 : i32
    %c1_i32_50 = arith.constant 1 : i32
    %98 = arith.subi %0, %c1_i32_50 : i32
    %99 = arith.addi %98, %c5_i32 : i32
    %c0_i32_51 = arith.constant 0 : i32
    %c7_i32_52 = arith.constant 7 : i32
    %100 = arith.maxsi %c0_i32_51, %99 : i32
    %101 = arith.minsi %c7_i32_52, %100 : i32
    %c0_i32_53 = arith.constant 0 : i32
    %102 = arith.cmpi sge, %99, %c0_i32_53 : i32
    %c8_i32_54 = arith.constant 8 : i32
    %103 = arith.cmpi slt, %99, %c8_i32_54 : i32
    %104 = arith.andi %102, %103 : i1
    %105 = arith.extui %104 : i1 to i32
    %106 = arith.sitofp %105 : i32 to f32
    %107 = arith.truncf %106 : f32 to bf16
    %c0_55 = arith.constant 0 : index
    %108 = arith.index_cast %101 : i32 to index
    %c0_56 = arith.constant 0 : index
    %c0_57 = arith.constant 0 : index
    %109 = vector.load %arg2[%c0_55, %108, %c0_56, %c0_57] : memref<1x8x16x8xbf16, #tpu.memory_space<vmem>>, vector<1x1x16x8xbf16>
    %110 = vector.shape_cast %109 : vector<1x1x16x8xbf16> to vector<16x8xbf16>
    %111 = vector.broadcast %107 : bf16 to vector<16x8xbf16>
    %112 = arith.mulf %110, %111 : vector<16x8xbf16>
    %113 = arith.index_cast %c5_i32 : i32 to index
    %c0_58 = arith.constant 0 : index
    %c1_59 = arith.constant 1 : index
    %114 = vector.load %arg6[%113, %c0_58, %c1_59] : memref<10x16x10xbf16, #tpu.memory_space<vmem>>, vector<1x16x8xbf16>
    %115 = vector.shape_cast %114 : vector<1x16x8xbf16> to vector<16x8xbf16>
    %116 = vector.shape_cast %112 : vector<16x8xbf16> to vector<1x16x8xbf16>
    tpu.vector_store %arg6[%113, %c0_58, %c1_59], %116 {strides = array<i32>} : memref<10x16x10xbf16, #tpu.memory_space<vmem>>, vector<1x16x8xbf16>,
    %c6_i32 = arith.constant 6 : i32
    %c1_i32_60 = arith.constant 1 : i32
    %117 = arith.subi %0, %c1_i32_60 : i32
    %118 = arith.addi %117, %c6_i32 : i32
    %c0_i32_61 = arith.constant 0 : i32
    %c7_i32_62 = arith.constant 7 : i32
    %119 = arith.maxsi %c0_i32_61, %118 : i32
    %120 = arith.minsi %c7_i32_62, %119 : i32
    %c0_i32_63 = arith.constant 0 : i32
    %121 = arith.cmpi sge, %118, %c0_i32_63 : i32
    %c8_i32_64 = arith.constant 8 : i32
    %122 = arith.cmpi slt, %118, %c8_i32_64 : i32
    %123 = arith.andi %121, %122 : i1
    %124 = arith.extui %123 : i1 to i32
    %125 = arith.sitofp %124 : i32 to f32
    %126 = arith.truncf %125 : f32 to bf16
    %c0_65 = arith.constant 0 : index
    %127 = arith.index_cast %120 : i32 to index
    %c0_66 = arith.constant 0 : index
    %c0_67 = arith.constant 0 : index
    %128 = vector.load %arg2[%c0_65, %127, %c0_66, %c0_67] : memref<1x8x16x8xbf16, #tpu.memory_space<vmem>>, vector<1x1x16x8xbf16>
    %129 = vector.shape_cast %128 : vector<1x1x16x8xbf16> to vector<16x8xbf16>
    %130 = vector.broadcast %126 : bf16 to vector<16x8xbf16>
    %131 = arith.mulf %129, %130 : vector<16x8xbf16>
    %132 = arith.index_cast %c6_i32 : i32 to index
    %c0_68 = arith.constant 0 : index
    %c1_69 = arith.constant 1 : index
    %133 = vector.load %arg6[%132, %c0_68, %c1_69] : memref<10x16x10xbf16, #tpu.memory_space<vmem>>, vector<1x16x8xbf16>
    %134 = vector.shape_cast %133 : vector<1x16x8xbf16> to vector<16x8xbf16>
    %135 = vector.shape_cast %131 : vector<16x8xbf16> to vector<1x16x8xbf16>
    tpu.vector_store %arg6[%132, %c0_68, %c1_69], %135 {strides = array<i32>} : memref<10x16x10xbf16, #tpu.memory_space<vmem>>, vector<1x16x8xbf16>,
    %c7_i32_70 = arith.constant 7 : i32
    %c1_i32_71 = arith.constant 1 : i32
    %136 = arith.subi %0, %c1_i32_71 : i32
    %137 = arith.addi %136, %c7_i32_70 : i32
    %c0_i32_72 = arith.constant 0 : i32
    %c7_i32_73 = arith.constant 7 : i32
    %138 = arith.maxsi %c0_i32_72, %137 : i32
    %139 = arith.minsi %c7_i32_73, %138 : i32
    %c0_i32_74 = arith.constant 0 : i32
    %140 = arith.cmpi sge, %137, %c0_i32_74 : i32
    %c8_i32_75 = arith.constant 8 : i32
    %141 = arith.cmpi slt, %137, %c8_i32_75 : i32
    %142 = arith.andi %140, %141 : i1
    %143 = arith.extui %142 : i1 to i32
    %144 = arith.sitofp %143 : i32 to f32
    %145 = arith.truncf %144 : f32 to bf16
    %c0_76 = arith.constant 0 : index
    %146 = arith.index_cast %139 : i32 to index
    %c0_77 = arith.constant 0 : index
    %c0_78 = arith.constant 0 : index
    %147 = vector.load %arg2[%c0_76, %146, %c0_77, %c0_78] : memref<1x8x16x8xbf16, #tpu.memory_space<vmem>>, vector<1x1x16x8xbf16>
    %148 = vector.shape_cast %147 : vector<1x1x16x8xbf16> to vector<16x8xbf16>
    %149 = vector.broadcast %145 : bf16 to vector<16x8xbf16>
    %150 = arith.mulf %148, %149 : vector<16x8xbf16>
    %151 = arith.index_cast %c7_i32_70 : i32 to index
    %c0_79 = arith.constant 0 : index
    %c1_80 = arith.constant 1 : index
    %152 = vector.load %arg6[%151, %c0_79, %c1_80] : memref<10x16x10xbf16, #tpu.memory_space<vmem>>, vector<1x16x8xbf16>
    %153 = vector.shape_cast %152 : vector<1x16x8xbf16> to vector<16x8xbf16>
    %154 = vector.shape_cast %150 : vector<16x8xbf16> to vector<1x16x8xbf16>
    tpu.vector_store %arg6[%151, %c0_79, %c1_80], %154 {strides = array<i32>} : memref<10x16x10xbf16, #tpu.memory_space<vmem>>, vector<1x16x8xbf16>,
    %c8_i32_81 = arith.constant 8 : i32
    %c1_i32_82 = arith.constant 1 : i32
    %155 = arith.subi %0, %c1_i32_82 : i32
    %156 = arith.addi %155, %c8_i32_81 : i32
    %c0_i32_83 = arith.constant 0 : i32
    %c7_i32_84 = arith.constant 7 : i32
    %157 = arith.maxsi %c0_i32_83, %156 : i32
    %158 = arith.minsi %c7_i32_84, %157 : i32
    %c0_i32_85 = arith.constant 0 : i32
    %159 = arith.cmpi sge, %156, %c0_i32_85 : i32
    %c8_i32_86 = arith.constant 8 : i32
    %160 = arith.cmpi slt, %156, %c8_i32_86 : i32
    %161 = arith.andi %159, %160 : i1
    %162 = arith.extui %161 : i1 to i32
    %163 = arith.sitofp %162 : i32 to f32
    %164 = arith.truncf %163 : f32 to bf16
    %c0_87 = arith.constant 0 : index
    %165 = arith.index_cast %158 : i32 to index
    %c0_88 = arith.constant 0 : index
    %c0_89 = arith.constant 0 : index
    %166 = vector.load %arg2[%c0_87, %165, %c0_88, %c0_89] : memref<1x8x16x8xbf16, #tpu.memory_space<vmem>>, vector<1x1x16x8xbf16>
    %167 = vector.shape_cast %166 : vector<1x1x16x8xbf16> to vector<16x8xbf16>
    %168 = vector.broadcast %164 : bf16 to vector<16x8xbf16>
    %169 = arith.mulf %167, %168 : vector<16x8xbf16>
    %170 = arith.index_cast %c8_i32_81 : i32 to index
    %c0_90 = arith.constant 0 : index
    %c1_91 = arith.constant 1 : index
    %171 = vector.load %arg6[%170, %c0_90, %c1_91] : memref<10x16x10xbf16, #tpu.memory_space<vmem>>, vector<1x16x8xbf16>
    %172 = vector.shape_cast %171 : vector<1x16x8xbf16> to vector<16x8xbf16>
    %173 = vector.shape_cast %169 : vector<16x8xbf16> to vector<1x16x8xbf16>
    tpu.vector_store %arg6[%170, %c0_90, %c1_91], %173 {strides = array<i32>} : memref<10x16x10xbf16, #tpu.memory_space<vmem>>, vector<1x16x8xbf16>,
    %c9_i32 = arith.constant 9 : i32
    %c1_i32_92 = arith.constant 1 : i32
    %174 = arith.subi %0, %c1_i32_92 : i32
    %175 = arith.addi %174, %c9_i32 : i32
    %c0_i32_93 = arith.constant 0 : i32
    %c7_i32_94 = arith.constant 7 : i32
    %176 = arith.maxsi %c0_i32_93, %175 : i32
    %177 = arith.minsi %c7_i32_94, %176 : i32
    %c0_i32_95 = arith.constant 0 : i32
    %178 = arith.cmpi sge, %175, %c0_i32_95 : i32
    %c8_i32_96 = arith.constant 8 : i32
    %179 = arith.cmpi slt, %175, %c8_i32_96 : i32
    %180 = arith.andi %178, %179 : i1
    %181 = arith.extui %180 : i1 to i32
    %182 = arith.sitofp %181 : i32 to f32
    %183 = arith.truncf %182 : f32 to bf16
    %c0_97 = arith.constant 0 : index
    %184 = arith.index_cast %177 : i32 to index
    %c0_98 = arith.constant 0 : index
    %c0_99 = arith.constant 0 : index
    %185 = vector.load %arg2[%c0_97, %184, %c0_98, %c0_99] : memref<1x8x16x8xbf16, #tpu.memory_space<vmem>>, vector<1x1x16x8xbf16>
    %186 = vector.shape_cast %185 : vector<1x1x16x8xbf16> to vector<16x8xbf16>
    %187 = vector.broadcast %183 : bf16 to vector<16x8xbf16>
    %188 = arith.mulf %186, %187 : vector<16x8xbf16>
    %189 = arith.index_cast %c9_i32 : i32 to index
    %c0_100 = arith.constant 0 : index
    %c1_101 = arith.constant 1 : index
    %190 = vector.load %arg6[%189, %c0_100, %c1_101] : memref<10x16x10xbf16, #tpu.memory_space<vmem>>, vector<1x16x8xbf16>
    %191 = vector.shape_cast %190 : vector<1x16x8xbf16> to vector<16x8xbf16>
    %192 = vector.shape_cast %188 : vector<16x8xbf16> to vector<1x16x8xbf16>
    tpu.vector_store %arg6[%189, %c0_100, %c1_101], %192 {strides = array<i32>} : memref<10x16x10xbf16, #tpu.memory_space<vmem>>, vector<1x16x8xbf16>,
    %c10_i32 = arith.constant 10 : i32
    %c0_i32_102 = arith.constant 0 : i32
    %c4_i32_103 = arith.constant 4 : i32
    %193 = arith.addi %c0_i32_102, %c4_i32_103 : i32
    %c1_i32_104 = arith.constant 1 : i32
    scf.for %arg8 = %c0_i32_102 to %193 step %c1_i32_104  : i32 {
      %c2_i32_106 = arith.constant 2 : i32
      %194 = arith.muli %arg8, %c2_i32_106 : i32
      %c0_i32_107 = arith.constant 0 : i32
      %195 = arith.addi %194, %c0_i32_107 : i32
      %196 = arith.index_cast %195 : i32 to index
      %c0_108 = arith.constant 0 : index
      %c0_109 = arith.constant 0 : index
      %197 = vector.load %arg6[%196, %c0_108, %c0_109] : memref<10x16x10xbf16, #tpu.memory_space<vmem>>, vector<1x16x10xbf16>
      %198 = vector.shape_cast %197 : vector<1x16x10xbf16> to vector<16x10xbf16>
      %199 = vector.extract_strided_slice %198 {offsets = [0, 0], sizes = [16, 8], strides = [1, 1]} : vector<16x10xbf16> to vector<16x8xbf16>
      %c0_110 = arith.constant 0 : index
      %c0_111 = arith.constant 0 : index
      %200 = vector.load %arg7[%c0_110, %c0_111] : memref<144x8xbf16, #tpu.memory_space<vmem>>, vector<16x8xbf16>
      tpu.vector_store %arg7[%c0_110, %c0_111], %199 {strides = array<i32>} : memref<144x8xbf16, #tpu.memory_space<vmem>>, vector<16x8xbf16>,
      %201 = vector.extract_strided_slice %198 {offsets = [0, 1], sizes = [16, 8], strides = [1, 1]} : vector<16x10xbf16> to vector<16x8xbf16>
      %c16 = arith.constant 16 : index
      %c0_112 = arith.constant 0 : index
      %202 = vector.load %arg7[%c16, %c0_112] : memref<144x8xbf16, #tpu.memory_space<vmem>>, vector<16x8xbf16>
      tpu.vector_store %arg7[%c16, %c0_112], %201 {strides = array<i32>} : memref<144x8xbf16, #tpu.memory_space<vmem>>, vector<16x8xbf16>,
      %203 = vector.extract_strided_slice %198 {offsets = [0, 2], sizes = [16, 8], strides = [1, 1]} : vector<16x10xbf16> to vector<16x8xbf16>
      %c32 = arith.constant 32 : index
      %c0_113 = arith.constant 0 : index
      %204 = vector.load %arg7[%c32, %c0_113] : memref<144x8xbf16, #tpu.memory_space<vmem>>, vector<16x8xbf16>
      tpu.vector_store %arg7[%c32, %c0_113], %203 {strides = array<i32>} : memref<144x8xbf16, #tpu.memory_space<vmem>>, vector<16x8xbf16>,
      %c1_i32_114 = arith.constant 1 : i32
      %205 = arith.addi %194, %c1_i32_114 : i32
      %206 = arith.index_cast %205 : i32 to index
      %c0_115 = arith.constant 0 : index
      %c0_116 = arith.constant 0 : index
      %207 = vector.load %arg6[%206, %c0_115, %c0_116] : memref<10x16x10xbf16, #tpu.memory_space<vmem>>, vector<1x16x10xbf16>
      %208 = vector.shape_cast %207 : vector<1x16x10xbf16> to vector<16x10xbf16>
      %209 = vector.extract_strided_slice %208 {offsets = [0, 0], sizes = [16, 8], strides = [1, 1]} : vector<16x10xbf16> to vector<16x8xbf16>
      %c48 = arith.constant 48 : index
      %c0_117 = arith.constant 0 : index
      %210 = vector.load %arg7[%c48, %c0_117] : memref<144x8xbf16, #tpu.memory_space<vmem>>, vector<16x8xbf16>
      tpu.vector_store %arg7[%c48, %c0_117], %209 {strides = array<i32>} : memref<144x8xbf16, #tpu.memory_space<vmem>>, vector<16x8xbf16>,
      %211 = vector.extract_strided_slice %208 {offsets = [0, 1], sizes = [16, 8], strides = [1, 1]} : vector<16x10xbf16> to vector<16x8xbf16>
      %c64 = arith.constant 64 : index
      %c0_118 = arith.constant 0 : index
      %212 = vector.load %arg7[%c64, %c0_118] : memref<144x8xbf16, #tpu.memory_space<vmem>>, vector<16x8xbf16>
      tpu.vector_store %arg7[%c64, %c0_118], %211 {strides = array<i32>} : memref<144x8xbf16, #tpu.memory_space<vmem>>, vector<16x8xbf16>,
      %213 = vector.extract_strided_slice %208 {offsets = [0, 2], sizes = [16, 8], strides = [1, 1]} : vector<16x10xbf16> to vector<16x8xbf16>
      %c80 = arith.constant 80 : index
      %c0_119 = arith.constant 0 : index
      %214 = vector.load %arg7[%c80, %c0_119] : memref<144x8xbf16, #tpu.memory_space<vmem>>, vector<16x8xbf16>
      tpu.vector_store %arg7[%c80, %c0_119], %213 {strides = array<i32>} : memref<144x8xbf16, #tpu.memory_space<vmem>>, vector<16x8xbf16>,
      %c2_i32_120 = arith.constant 2 : i32
      %215 = arith.addi %194, %c2_i32_120 : i32
      %216 = arith.index_cast %215 : i32 to index
      %c0_121 = arith.constant 0 : index
      %c0_122 = arith.constant 0 : index
      %217 = vector.load %arg6[%216, %c0_121, %c0_122] : memref<10x16x10xbf16, #tpu.memory_space<vmem>>, vector<1x16x10xbf16>
      %218 = vector.shape_cast %217 : vector<1x16x10xbf16> to vector<16x10xbf16>
      %219 = vector.extract_strided_slice %218 {offsets = [0, 0], sizes = [16, 8], strides = [1, 1]} : vector<16x10xbf16> to vector<16x8xbf16>
      %c96 = arith.constant 96 : index
      %c0_123 = arith.constant 0 : index
      %220 = vector.load %arg7[%c96, %c0_123] : memref<144x8xbf16, #tpu.memory_space<vmem>>, vector<16x8xbf16>
      tpu.vector_store %arg7[%c96, %c0_123], %219 {strides = array<i32>} : memref<144x8xbf16, #tpu.memory_space<vmem>>, vector<16x8xbf16>,
      %221 = vector.extract_strided_slice %218 {offsets = [0, 1], sizes = [16, 8], strides = [1, 1]} : vector<16x10xbf16> to vector<16x8xbf16>
      %c112 = arith.constant 112 : index
      %c0_124 = arith.constant 0 : index
      %222 = vector.load %arg7[%c112, %c0_124] : memref<144x8xbf16, #tpu.memory_space<vmem>>, vector<16x8xbf16>
      tpu.vector_store %arg7[%c112, %c0_124], %221 {strides = array<i32>} : memref<144x8xbf16, #tpu.memory_space<vmem>>, vector<16x8xbf16>,
      %223 = vector.extract_strided_slice %218 {offsets = [0, 2], sizes = [16, 8], strides = [1, 1]} : vector<16x10xbf16> to vector<16x8xbf16>
      %c128 = arith.constant 128 : index
      %c0_125 = arith.constant 0 : index
      %224 = vector.load %arg7[%c128, %c0_125] : memref<144x8xbf16, #tpu.memory_space<vmem>>, vector<16x8xbf16>
      tpu.vector_store %arg7[%c128, %c0_125], %223 {strides = array<i32>} : memref<144x8xbf16, #tpu.memory_space<vmem>>, vector<16x8xbf16>,
      %c0_126 = arith.constant 0 : index
      %c0_127 = arith.constant 0 : index
      %225 = vector.load %arg3[%c0_126, %c0_127] : memref<32x144xbf16, #tpu.memory_space<vmem>>, vector<32x144xbf16>
      %c0_128 = arith.constant 0 : index
      %c0_129 = arith.constant 0 : index
      %226 = vector.load %arg7[%c0_128, %c0_129] : memref<144x8xbf16, #tpu.memory_space<vmem>>, vector<144x8xbf16>
      %cst_130 = arith.constant dense<0.000000e+00> : vector<32x8xf32>
      %227 = tpu.matmul %225, %226, %cst_130 {dimension_numbers = #tpu.dot_dimension_numbers<[1], [0], [0], [1], [0, 0, 1, 1], [], []>} : vector<32x144xbf16>, vector<144x8xbf16>, vector<32x8xf32> -> vector<32x8xf32>
      %c0_131 = arith.constant 0 : index
      %c0_132 = arith.constant 0 : index
      %228 = vector.load %arg4[%c0_131, %c0_132] : memref<32x1xf32, #tpu.memory_space<vmem>>, vector<32x1xf32>
      %229 = vector.broadcast %228 : vector<32x1xf32> to vector<32x8xf32>
      %230 = arith.addf %227, %229 : vector<32x8xf32>
      %cst_133 = arith.constant 0.000000e+00 : f32
      %231 = vector.broadcast %cst_133 : f32 to vector<32x8xf32>
      %232 = arith.maximumf %230, %231 : vector<32x8xf32>
      %c1_i32_134 = arith.constant 1 : i32
      %233 = arith.addi %194, %c1_i32_134 : i32
      %c0_i32_135 = arith.constant 0 : i32
      %234 = arith.addi %233, %c0_i32_135 : i32
      %235 = arith.index_cast %234 : i32 to index
      %c0_136 = arith.constant 0 : index
      %c0_137 = arith.constant 0 : index
      %236 = vector.load %arg6[%235, %c0_136, %c0_137] : memref<10x16x10xbf16, #tpu.memory_space<vmem>>, vector<1x16x10xbf16>
      %237 = vector.shape_cast %236 : vector<1x16x10xbf16> to vector<16x10xbf16>
      %238 = vector.extract_strided_slice %237 {offsets = [0, 0], sizes = [16, 8], strides = [1, 1]} : vector<16x10xbf16> to vector<16x8xbf16>
      %c0_138 = arith.constant 0 : index
      %c0_139 = arith.constant 0 : index
      %239 = vector.load %arg7[%c0_138, %c0_139] : memref<144x8xbf16, #tpu.memory_space<vmem>>, vector<16x8xbf16>
      tpu.vector_store %arg7[%c0_138, %c0_139], %238 {strides = array<i32>} : memref<144x8xbf16, #tpu.memory_space<vmem>>, vector<16x8xbf16>,
      %240 = vector.extract_strided_slice %237 {offsets = [0, 1], sizes = [16, 8], strides = [1, 1]} : vector<16x10xbf16> to vector<16x8xbf16>
      %c16_140 = arith.constant 16 : index
      %c0_141 = arith.constant 0 : index
      %241 = vector.load %arg7[%c16_140, %c0_141] : memref<144x8xbf16, #tpu.memory_space<vmem>>, vector<16x8xbf16>
      tpu.vector_store %arg7[%c16_140, %c0_141], %240 {strides = array<i32>} : memref<144x8xbf16, #tpu.memory_space<vmem>>, vector<16x8xbf16>,
      %242 = vector.extract_strided_slice %237 {offsets = [0, 2], sizes = [16, 8], strides = [1, 1]} : vector<16x10xbf16> to vector<16x8xbf16>
      %c32_142 = arith.constant 32 : index
      %c0_143 = arith.constant 0 : index
      %243 = vector.load %arg7[%c32_142, %c0_143] : memref<144x8xbf16, #tpu.memory_space<vmem>>, vector<16x8xbf16>
      tpu.vector_store %arg7[%c32_142, %c0_143], %242 {strides = array<i32>} : memref<144x8xbf16, #tpu.memory_space<vmem>>, vector<16x8xbf16>,
      %c1_i32_144 = arith.constant 1 : i32
      %244 = arith.addi %233, %c1_i32_144 : i32
      %245 = arith.index_cast %244 : i32 to index
      %c0_145 = arith.constant 0 : index
      %c0_146 = arith.constant 0 : index
      %246 = vector.load %arg6[%245, %c0_145, %c0_146] : memref<10x16x10xbf16, #tpu.memory_space<vmem>>, vector<1x16x10xbf16>
      %247 = vector.shape_cast %246 : vector<1x16x10xbf16> to vector<16x10xbf16>
      %248 = vector.extract_strided_slice %247 {offsets = [0, 0], sizes = [16, 8], strides = [1, 1]} : vector<16x10xbf16> to vector<16x8xbf16>
      %c48_147 = arith.constant 48 : index
      %c0_148 = arith.constant 0 : index
      %249 = vector.load %arg7[%c48_147, %c0_148] : memref<144x8xbf16, #tpu.memory_space<vmem>>, vector<16x8xbf16>
      tpu.vector_store %arg7[%c48_147, %c0_148], %248 {strides = array<i32>} : memref<144x8xbf16, #tpu.memory_space<vmem>>, vector<16x8xbf16>,
      %250 = vector.extract_strided_slice %247 {offsets = [0, 1], sizes = [16, 8], strides = [1, 1]} : vector<16x10xbf16> to vector<16x8xbf16>
      %c64_149 = arith.constant 64 : index
      %c0_150 = arith.constant 0 : index
      %251 = vector.load %arg7[%c64_149, %c0_150] : memref<144x8xbf16, #tpu.memory_space<vmem>>, vector<16x8xbf16>
      tpu.vector_store %arg7[%c64_149, %c0_150], %250 {strides = array<i32>} : memref<144x8xbf16, #tpu.memory_space<vmem>>, vector<16x8xbf16>,
      %252 = vector.extract_strided_slice %247 {offsets = [0, 2], sizes = [16, 8], strides = [1, 1]} : vector<16x10xbf16> to vector<16x8xbf16>
      %c80_151 = arith.constant 80 : index
      %c0_152 = arith.constant 0 : index
      %253 = vector.load %arg7[%c80_151, %c0_152] : memref<144x8xbf16, #tpu.memory_space<vmem>>, vector<16x8xbf16>
      tpu.vector_store %arg7[%c80_151, %c0_152], %252 {strides = array<i32>} : memref<144x8xbf16, #tpu.memory_space<vmem>>, vector<16x8xbf16>,
      %c2_i32_153 = arith.constant 2 : i32
      %254 = arith.addi %233, %c2_i32_153 : i32
      %255 = arith.index_cast %254 : i32 to index
      %c0_154 = arith.constant 0 : index
      %c0_155 = arith.constant 0 : index
      %256 = vector.load %arg6[%255, %c0_154, %c0_155] : memref<10x16x10xbf16, #tpu.memory_space<vmem>>, vector<1x16x10xbf16>
      %257 = vector.shape_cast %256 : vector<1x16x10xbf16> to vector<16x10xbf16>
      %258 = vector.extract_strided_slice %257 {offsets = [0, 0], sizes = [16, 8], strides = [1, 1]} : vector<16x10xbf16> to vector<16x8xbf16>
      %c96_156 = arith.constant 96 : index
      %c0_157 = arith.constant 0 : index
      %259 = vector.load %arg7[%c96_156, %c0_157] : memref<144x8xbf16, #tpu.memory_space<vmem>>, vector<16x8xbf16>
      tpu.vector_store %arg7[%c96_156, %c0_157], %258 {strides = array<i32>} : memref<144x8xbf16, #tpu.memory_space<vmem>>, vector<16x8xbf16>,
      %260 = vector.extract_strided_slice %257 {offsets = [0, 1], sizes = [16, 8], strides = [1, 1]} : vector<16x10xbf16> to vector<16x8xbf16>
      %c112_158 = arith.constant 112 : index
      %c0_159 = arith.constant 0 : index
      %261 = vector.load %arg7[%c112_158, %c0_159] : memref<144x8xbf16, #tpu.memory_space<vmem>>, vector<16x8xbf16>
      tpu.vector_store %arg7[%c112_158, %c0_159], %260 {strides = array<i32>} : memref<144x8xbf16, #tpu.memory_space<vmem>>, vector<16x8xbf16>,
      %262 = vector.extract_strided_slice %257 {offsets = [0, 2], sizes = [16, 8], strides = [1, 1]} : vector<16x10xbf16> to vector<16x8xbf16>
      %c128_160 = arith.constant 128 : index
      %c0_161 = arith.constant 0 : index
      %263 = vector.load %arg7[%c128_160, %c0_161] : memref<144x8xbf16, #tpu.memory_space<vmem>>, vector<16x8xbf16>
      tpu.vector_store %arg7[%c128_160, %c0_161], %262 {strides = array<i32>} : memref<144x8xbf16, #tpu.memory_space<vmem>>, vector<16x8xbf16>,
      %c0_162 = arith.constant 0 : index
      %c0_163 = arith.constant 0 : index
      %264 = vector.load %arg3[%c0_162, %c0_163] : memref<32x144xbf16, #tpu.memory_space<vmem>>, vector<32x144xbf16>
      %c0_164 = arith.constant 0 : index
      %c0_165 = arith.constant 0 : index
      %265 = vector.load %arg7[%c0_164, %c0_165] : memref<144x8xbf16, #tpu.memory_space<vmem>>, vector<144x8xbf16>
      %cst_166 = arith.constant dense<0.000000e+00> : vector<32x8xf32>
      %266 = tpu.matmul %264, %265, %cst_166 {dimension_numbers = #tpu.dot_dimension_numbers<[1], [0], [0], [1], [0, 0, 1, 1], [], []>} : vector<32x144xbf16>, vector<144x8xbf16>, vector<32x8xf32> -> vector<32x8xf32>
      %c0_167 = arith.constant 0 : index
      %c0_168 = arith.constant 0 : index
      %267 = vector.load %arg4[%c0_167, %c0_168] : memref<32x1xf32, #tpu.memory_space<vmem>>, vector<32x1xf32>
      %268 = vector.broadcast %267 : vector<32x1xf32> to vector<32x8xf32>
      %269 = arith.addf %266, %268 : vector<32x8xf32>
      %cst_169 = arith.constant 0.000000e+00 : f32
      %270 = vector.broadcast %cst_169 : f32 to vector<32x8xf32>
      %271 = arith.maximumf %269, %270 : vector<32x8xf32>
      %272 = arith.maximumf %232, %271 : vector<32x8xf32>
      %273 = vector.extract_strided_slice %272 {offsets = [0, 1], sizes = [32, 7], strides = [1, 1]} : vector<32x8xf32> to vector<32x7xf32>
      %274 = vector.extract_strided_slice %272 {offsets = [0, 0], sizes = [32, 1], strides = [1, 1]} : vector<32x8xf32> to vector<32x1xf32>
      %275 = tpu.concatenate %273, %274 in 1 : vector<32x7xf32>, vector<32x1xf32> -> vector<32x8xf32>
      %276 = arith.maximumf %272, %275 : vector<32x8xf32>
      %277 = tpu.iota {dimensions = array<i32: 1>} : vector<32x8xi32>
      %c1_i32_170 = arith.constant 1 : i32
      %278 = vector.broadcast %c1_i32_170 : i32 to vector<32x8xi32>
      %279 = arith.andi %277, %278 : vector<32x8xi32>
      %c0_i32_171 = arith.constant 0 : i32
      %280 = vector.broadcast %c0_i32_171 : i32 to vector<32x8xi32>
      %281 = arith.cmpi ne, %279, %280 : vector<32x8xi32>
      %282 = vector.extract_strided_slice %276 {offsets = [0, 1], sizes = [32, 7], strides = [1, 1]} : vector<32x8xf32> to vector<32x7xf32>
      %283 = vector.extract_strided_slice %276 {offsets = [0, 0], sizes = [32, 1], strides = [1, 1]} : vector<32x8xf32> to vector<32x1xf32>
      %284 = tpu.concatenate %282, %283 in 1 : vector<32x7xf32>, vector<32x1xf32> -> vector<32x8xf32>
      %285 = arith.select %281, %284, %276 : vector<32x8xi1>, vector<32x8xf32>
      %c2_i32_172 = arith.constant 2 : i32
      %286 = vector.broadcast %c2_i32_172 : i32 to vector<32x8xi32>
      %287 = arith.andi %277, %286 : vector<32x8xi32>
      %c0_i32_173 = arith.constant 0 : i32
      %288 = vector.broadcast %c0_i32_173 : i32 to vector<32x8xi32>
      %289 = arith.cmpi ne, %287, %288 : vector<32x8xi32>
      %290 = vector.extract_strided_slice %285 {offsets = [0, 2], sizes = [32, 6], strides = [1, 1]} : vector<32x8xf32> to vector<32x6xf32>
      %291 = vector.extract_strided_slice %285 {offsets = [0, 0], sizes = [32, 2], strides = [1, 1]} : vector<32x8xf32> to vector<32x2xf32>
      %292 = tpu.concatenate %290, %291 in 1 : vector<32x6xf32>, vector<32x2xf32> -> vector<32x8xf32>
      %293 = arith.select %289, %292, %285 : vector<32x8xi1>, vector<32x8xf32>
      %294 = vector.extract_strided_slice %293 {offsets = [0, 0], sizes = [32, 4], strides = [1, 1]} : vector<32x8xf32> to vector<32x4xf32>
      %295 = arith.truncf %294 : vector<32x4xf32> to vector<32x4xbf16>
      %c0_174 = arith.constant 0 : index
      %296 = arith.index_cast %arg8 : i32 to index
      %c0_175 = arith.constant 0 : index
      %c0_176 = arith.constant 0 : index
      %297 = vector.load %arg5[%c0_174, %296, %c0_175, %c0_176] : memref<1x4x32x4xbf16, #tpu.memory_space<vmem>>, vector<1x1x32x4xbf16>
      %298 = vector.shape_cast %297 : vector<1x1x32x4xbf16> to vector<32x4xbf16>
      %299 = vector.shape_cast %295 : vector<32x4xbf16> to vector<1x1x32x4xbf16>
      tpu.vector_store %arg5[%c0_174, %296, %c0_175, %c0_176], %299 {strides = array<i32>} : memref<1x4x32x4xbf16, #tpu.memory_space<vmem>>, vector<1x1x32x4xbf16>,
    }
    %c4_i32_105 = arith.constant 4 : i32
    return
  }
  func.func @transform_0(%arg0: i32, %arg1: i32) -> (i32, i32, i32, i32) {
    %c0_i32 = arith.constant 0 : i32
    %c0_i32_0 = arith.constant 0 : i32
    %c0_i32_1 = arith.constant 0 : i32
    %c0_i32_2 = arith.constant 0 : i32
    return %arg0, %c0_i32, %c0_i32_0, %c0_i32_1 : i32, i32, i32, i32
  }
  func.func @transform_1(%arg0: i32, %arg1: i32) -> (i32, i32) {
    %c0_i32 = arith.constant 0 : i32
    %c0_i32_0 = arith.constant 0 : i32
    %c0_i32_1 = arith.constant 0 : i32
    return %c0_i32, %c0_i32_0 : i32, i32
  }
  func.func @transform_2(%arg0: i32, %arg1: i32) -> (i32, i32) {
    %c0_i32 = arith.constant 0 : i32
    %c0_i32_0 = arith.constant 0 : i32
    %c0_i32_1 = arith.constant 0 : i32
    return %c0_i32, %c0_i32_0 : i32, i32
  }
  func.func @transform_3(%arg0: i32, %arg1: i32) -> (i32, i32, i32, i32) {
    %c0_i32 = arith.constant 0 : i32
    %c0_i32_0 = arith.constant 0 : i32
    %c0_i32_1 = arith.constant 0 : i32
    return %arg0, %arg1, %c0_i32, %c0_i32_0 : i32, i32, i32, i32
  }
}

module attributes {stable_mosaic.version = 11 : i64} {
  func.func @kernel(%arg0: i32, %arg1: i32, %arg2: memref<1x4x32x4xbf16, #tpu.memory_space<vmem>>, %arg3: memref<16x288xbf16, #tpu.memory_space<vmem>>, %arg4: memref<16x1xf32, #tpu.memory_space<vmem>>, %arg5: memref<16x16xbf16, #tpu.memory_space<vmem>>, %arg6: memref<16x1xf32, #tpu.memory_space<vmem>>, %arg7: memref<1x4x16x4xf32, #tpu.memory_space<vmem>>, %arg8: memref<6x32x6xbf16, #tpu.memory_space<vmem>>, %arg9: memref<288x4xbf16, #tpu.memory_space<vmem>>) attributes {dimension_semantics = [#tpu.dimension_semantics<parallel>, #tpu.dimension_semantics<parallel>], iteration_bounds = array<i64: 2, 1>, scalar_prefetch = 0 : i64, scratch_operands = 2 : i64, tpu.core_type = #tpu.core_type<tc>, window_params = [{transform_indices = @transform_0, window_bounds = array<i64: 1, 4, 32, 4>}, {pipeline_mode = #tpu.pipeline_mode<synchronous>, transform_indices = @transform_1, window_bounds = array<i64: 16, 288>}, {pipeline_mode = #tpu.pipeline_mode<synchronous>, transform_indices = @transform_2, window_bounds = array<i64: 16, 1>}, {pipeline_mode = #tpu.pipeline_mode<synchronous>, transform_indices = @transform_3, window_bounds = array<i64: 16, 16>}, {pipeline_mode = #tpu.pipeline_mode<synchronous>, transform_indices = @transform_4, window_bounds = array<i64: 16, 1>}, {transform_indices = @transform_5, window_bounds = array<i64: 1, 4, 16, 4>}]} {
    %c4_i32 = arith.constant 4 : i32
    %0 = arith.muli %arg1, %c4_i32 : i32
    %cst = arith.constant 0.000000e+00 : bf16
    %1 = vector.broadcast %cst : bf16 to vector<6x32x6xbf16>
    %c0 = arith.constant 0 : index
    %c0_0 = arith.constant 0 : index
    %c0_1 = arith.constant 0 : index
    %2 = vector.load %arg8[%c0, %c0_0, %c0_1] : memref<6x32x6xbf16, #tpu.memory_space<vmem>>, vector<6x32x6xbf16>
    tpu.vector_store %arg8[%c0, %c0_0, %c0_1], %1 {strides = array<i32>} : memref<6x32x6xbf16, #tpu.memory_space<vmem>>, vector<6x32x6xbf16>,
    %c0_i32 = arith.constant 0 : i32
    %c1_i32 = arith.constant 1 : i32
    %3 = arith.subi %0, %c1_i32 : i32
    %4 = arith.addi %3, %c0_i32 : i32
    %c0_i32_2 = arith.constant 0 : i32
    %c3_i32 = arith.constant 3 : i32
    %5 = arith.maxsi %c0_i32_2, %4 : i32
    %6 = arith.minsi %c3_i32, %5 : i32
    %c0_i32_3 = arith.constant 0 : i32
    %7 = arith.cmpi sge, %4, %c0_i32_3 : i32
    %c4_i32_4 = arith.constant 4 : i32
    %8 = arith.cmpi slt, %4, %c4_i32_4 : i32
    %9 = arith.andi %7, %8 : i1
    %10 = arith.extui %9 : i1 to i32
    %11 = arith.sitofp %10 : i32 to f32
    %12 = arith.truncf %11 : f32 to bf16
    %c0_5 = arith.constant 0 : index
    %13 = arith.index_cast %6 : i32 to index
    %c0_6 = arith.constant 0 : index
    %c0_7 = arith.constant 0 : index
    %14 = vector.load %arg2[%c0_5, %13, %c0_6, %c0_7] : memref<1x4x32x4xbf16, #tpu.memory_space<vmem>>, vector<1x1x32x4xbf16>
    %15 = vector.shape_cast %14 : vector<1x1x32x4xbf16> to vector<32x4xbf16>
    %16 = vector.broadcast %12 : bf16 to vector<32x4xbf16>
    %17 = arith.mulf %15, %16 : vector<32x4xbf16>
    %18 = arith.index_cast %c0_i32 : i32 to index
    %c0_8 = arith.constant 0 : index
    %c1 = arith.constant 1 : index
    %19 = vector.load %arg8[%18, %c0_8, %c1] : memref<6x32x6xbf16, #tpu.memory_space<vmem>>, vector<1x32x4xbf16>
    %20 = vector.shape_cast %19 : vector<1x32x4xbf16> to vector<32x4xbf16>
    %21 = vector.shape_cast %17 : vector<32x4xbf16> to vector<1x32x4xbf16>
    tpu.vector_store %arg8[%18, %c0_8, %c1], %21 {strides = array<i32>} : memref<6x32x6xbf16, #tpu.memory_space<vmem>>, vector<1x32x4xbf16>,
    %c1_i32_9 = arith.constant 1 : i32
    %c1_i32_10 = arith.constant 1 : i32
    %22 = arith.subi %0, %c1_i32_10 : i32
    %23 = arith.addi %22, %c1_i32_9 : i32
    %c0_i32_11 = arith.constant 0 : i32
    %c3_i32_12 = arith.constant 3 : i32
    %24 = arith.maxsi %c0_i32_11, %23 : i32
    %25 = arith.minsi %c3_i32_12, %24 : i32
    %c0_i32_13 = arith.constant 0 : i32
    %26 = arith.cmpi sge, %23, %c0_i32_13 : i32
    %c4_i32_14 = arith.constant 4 : i32
    %27 = arith.cmpi slt, %23, %c4_i32_14 : i32
    %28 = arith.andi %26, %27 : i1
    %29 = arith.extui %28 : i1 to i32
    %30 = arith.sitofp %29 : i32 to f32
    %31 = arith.truncf %30 : f32 to bf16
    %c0_15 = arith.constant 0 : index
    %32 = arith.index_cast %25 : i32 to index
    %c0_16 = arith.constant 0 : index
    %c0_17 = arith.constant 0 : index
    %33 = vector.load %arg2[%c0_15, %32, %c0_16, %c0_17] : memref<1x4x32x4xbf16, #tpu.memory_space<vmem>>, vector<1x1x32x4xbf16>
    %34 = vector.shape_cast %33 : vector<1x1x32x4xbf16> to vector<32x4xbf16>
    %35 = vector.broadcast %31 : bf16 to vector<32x4xbf16>
    %36 = arith.mulf %34, %35 : vector<32x4xbf16>
    %37 = arith.index_cast %c1_i32_9 : i32 to index
    %c0_18 = arith.constant 0 : index
    %c1_19 = arith.constant 1 : index
    %38 = vector.load %arg8[%37, %c0_18, %c1_19] : memref<6x32x6xbf16, #tpu.memory_space<vmem>>, vector<1x32x4xbf16>
    %39 = vector.shape_cast %38 : vector<1x32x4xbf16> to vector<32x4xbf16>
    %40 = vector.shape_cast %36 : vector<32x4xbf16> to vector<1x32x4xbf16>
    tpu.vector_store %arg8[%37, %c0_18, %c1_19], %40 {strides = array<i32>} : memref<6x32x6xbf16, #tpu.memory_space<vmem>>, vector<1x32x4xbf16>,
    %c2_i32 = arith.constant 2 : i32
    %c1_i32_20 = arith.constant 1 : i32
    %41 = arith.subi %0, %c1_i32_20 : i32
    %42 = arith.addi %41, %c2_i32 : i32
    %c0_i32_21 = arith.constant 0 : i32
    %c3_i32_22 = arith.constant 3 : i32
    %43 = arith.maxsi %c0_i32_21, %42 : i32
    %44 = arith.minsi %c3_i32_22, %43 : i32
    %c0_i32_23 = arith.constant 0 : i32
    %45 = arith.cmpi sge, %42, %c0_i32_23 : i32
    %c4_i32_24 = arith.constant 4 : i32
    %46 = arith.cmpi slt, %42, %c4_i32_24 : i32
    %47 = arith.andi %45, %46 : i1
    %48 = arith.extui %47 : i1 to i32
    %49 = arith.sitofp %48 : i32 to f32
    %50 = arith.truncf %49 : f32 to bf16
    %c0_25 = arith.constant 0 : index
    %51 = arith.index_cast %44 : i32 to index
    %c0_26 = arith.constant 0 : index
    %c0_27 = arith.constant 0 : index
    %52 = vector.load %arg2[%c0_25, %51, %c0_26, %c0_27] : memref<1x4x32x4xbf16, #tpu.memory_space<vmem>>, vector<1x1x32x4xbf16>
    %53 = vector.shape_cast %52 : vector<1x1x32x4xbf16> to vector<32x4xbf16>
    %54 = vector.broadcast %50 : bf16 to vector<32x4xbf16>
    %55 = arith.mulf %53, %54 : vector<32x4xbf16>
    %56 = arith.index_cast %c2_i32 : i32 to index
    %c0_28 = arith.constant 0 : index
    %c1_29 = arith.constant 1 : index
    %57 = vector.load %arg8[%56, %c0_28, %c1_29] : memref<6x32x6xbf16, #tpu.memory_space<vmem>>, vector<1x32x4xbf16>
    %58 = vector.shape_cast %57 : vector<1x32x4xbf16> to vector<32x4xbf16>
    %59 = vector.shape_cast %55 : vector<32x4xbf16> to vector<1x32x4xbf16>
    tpu.vector_store %arg8[%56, %c0_28, %c1_29], %59 {strides = array<i32>} : memref<6x32x6xbf16, #tpu.memory_space<vmem>>, vector<1x32x4xbf16>,
    %c3_i32_30 = arith.constant 3 : i32
    %c1_i32_31 = arith.constant 1 : i32
    %60 = arith.subi %0, %c1_i32_31 : i32
    %61 = arith.addi %60, %c3_i32_30 : i32
    %c0_i32_32 = arith.constant 0 : i32
    %c3_i32_33 = arith.constant 3 : i32
    %62 = arith.maxsi %c0_i32_32, %61 : i32
    %63 = arith.minsi %c3_i32_33, %62 : i32
    %c0_i32_34 = arith.constant 0 : i32
    %64 = arith.cmpi sge, %61, %c0_i32_34 : i32
    %c4_i32_35 = arith.constant 4 : i32
    %65 = arith.cmpi slt, %61, %c4_i32_35 : i32
    %66 = arith.andi %64, %65 : i1
    %67 = arith.extui %66 : i1 to i32
    %68 = arith.sitofp %67 : i32 to f32
    %69 = arith.truncf %68 : f32 to bf16
    %c0_36 = arith.constant 0 : index
    %70 = arith.index_cast %63 : i32 to index
    %c0_37 = arith.constant 0 : index
    %c0_38 = arith.constant 0 : index
    %71 = vector.load %arg2[%c0_36, %70, %c0_37, %c0_38] : memref<1x4x32x4xbf16, #tpu.memory_space<vmem>>, vector<1x1x32x4xbf16>
    %72 = vector.shape_cast %71 : vector<1x1x32x4xbf16> to vector<32x4xbf16>
    %73 = vector.broadcast %69 : bf16 to vector<32x4xbf16>
    %74 = arith.mulf %72, %73 : vector<32x4xbf16>
    %75 = arith.index_cast %c3_i32_30 : i32 to index
    %c0_39 = arith.constant 0 : index
    %c1_40 = arith.constant 1 : index
    %76 = vector.load %arg8[%75, %c0_39, %c1_40] : memref<6x32x6xbf16, #tpu.memory_space<vmem>>, vector<1x32x4xbf16>
    %77 = vector.shape_cast %76 : vector<1x32x4xbf16> to vector<32x4xbf16>
    %78 = vector.shape_cast %74 : vector<32x4xbf16> to vector<1x32x4xbf16>
    tpu.vector_store %arg8[%75, %c0_39, %c1_40], %78 {strides = array<i32>} : memref<6x32x6xbf16, #tpu.memory_space<vmem>>, vector<1x32x4xbf16>,
    %c4_i32_41 = arith.constant 4 : i32
    %c1_i32_42 = arith.constant 1 : i32
    %79 = arith.subi %0, %c1_i32_42 : i32
    %80 = arith.addi %79, %c4_i32_41 : i32
    %c0_i32_43 = arith.constant 0 : i32
    %c3_i32_44 = arith.constant 3 : i32
    %81 = arith.maxsi %c0_i32_43, %80 : i32
    %82 = arith.minsi %c3_i32_44, %81 : i32
    %c0_i32_45 = arith.constant 0 : i32
    %83 = arith.cmpi sge, %80, %c0_i32_45 : i32
    %c4_i32_46 = arith.constant 4 : i32
    %84 = arith.cmpi slt, %80, %c4_i32_46 : i32
    %85 = arith.andi %83, %84 : i1
    %86 = arith.extui %85 : i1 to i32
    %87 = arith.sitofp %86 : i32 to f32
    %88 = arith.truncf %87 : f32 to bf16
    %c0_47 = arith.constant 0 : index
    %89 = arith.index_cast %82 : i32 to index
    %c0_48 = arith.constant 0 : index
    %c0_49 = arith.constant 0 : index
    %90 = vector.load %arg2[%c0_47, %89, %c0_48, %c0_49] : memref<1x4x32x4xbf16, #tpu.memory_space<vmem>>, vector<1x1x32x4xbf16>
    %91 = vector.shape_cast %90 : vector<1x1x32x4xbf16> to vector<32x4xbf16>
    %92 = vector.broadcast %88 : bf16 to vector<32x4xbf16>
    %93 = arith.mulf %91, %92 : vector<32x4xbf16>
    %94 = arith.index_cast %c4_i32_41 : i32 to index
    %c0_50 = arith.constant 0 : index
    %c1_51 = arith.constant 1 : index
    %95 = vector.load %arg8[%94, %c0_50, %c1_51] : memref<6x32x6xbf16, #tpu.memory_space<vmem>>, vector<1x32x4xbf16>
    %96 = vector.shape_cast %95 : vector<1x32x4xbf16> to vector<32x4xbf16>
    %97 = vector.shape_cast %93 : vector<32x4xbf16> to vector<1x32x4xbf16>
    tpu.vector_store %arg8[%94, %c0_50, %c1_51], %97 {strides = array<i32>} : memref<6x32x6xbf16, #tpu.memory_space<vmem>>, vector<1x32x4xbf16>,
    %c5_i32 = arith.constant 5 : i32
    %c1_i32_52 = arith.constant 1 : i32
    %98 = arith.subi %0, %c1_i32_52 : i32
    %99 = arith.addi %98, %c5_i32 : i32
    %c0_i32_53 = arith.constant 0 : i32
    %c3_i32_54 = arith.constant 3 : i32
    %100 = arith.maxsi %c0_i32_53, %99 : i32
    %101 = arith.minsi %c3_i32_54, %100 : i32
    %c0_i32_55 = arith.constant 0 : i32
    %102 = arith.cmpi sge, %99, %c0_i32_55 : i32
    %c4_i32_56 = arith.constant 4 : i32
    %103 = arith.cmpi slt, %99, %c4_i32_56 : i32
    %104 = arith.andi %102, %103 : i1
    %105 = arith.extui %104 : i1 to i32
    %106 = arith.sitofp %105 : i32 to f32
    %107 = arith.truncf %106 : f32 to bf16
    %c0_57 = arith.constant 0 : index
    %108 = arith.index_cast %101 : i32 to index
    %c0_58 = arith.constant 0 : index
    %c0_59 = arith.constant 0 : index
    %109 = vector.load %arg2[%c0_57, %108, %c0_58, %c0_59] : memref<1x4x32x4xbf16, #tpu.memory_space<vmem>>, vector<1x1x32x4xbf16>
    %110 = vector.shape_cast %109 : vector<1x1x32x4xbf16> to vector<32x4xbf16>
    %111 = vector.broadcast %107 : bf16 to vector<32x4xbf16>
    %112 = arith.mulf %110, %111 : vector<32x4xbf16>
    %113 = arith.index_cast %c5_i32 : i32 to index
    %c0_60 = arith.constant 0 : index
    %c1_61 = arith.constant 1 : index
    %114 = vector.load %arg8[%113, %c0_60, %c1_61] : memref<6x32x6xbf16, #tpu.memory_space<vmem>>, vector<1x32x4xbf16>
    %115 = vector.shape_cast %114 : vector<1x32x4xbf16> to vector<32x4xbf16>
    %116 = vector.shape_cast %112 : vector<32x4xbf16> to vector<1x32x4xbf16>
    tpu.vector_store %arg8[%113, %c0_60, %c1_61], %116 {strides = array<i32>} : memref<6x32x6xbf16, #tpu.memory_space<vmem>>, vector<1x32x4xbf16>,
    %c6_i32 = arith.constant 6 : i32
    %c0_i32_62 = arith.constant 0 : i32
    %c4_i32_63 = arith.constant 4 : i32
    %117 = arith.addi %c0_i32_62, %c4_i32_63 : i32
    %c1_i32_64 = arith.constant 1 : i32
    scf.for %arg10 = %c0_i32_62 to %117 step %c1_i32_64  : i32 {
      %c1_i32_66 = arith.constant 1 : i32
      %118 = arith.muli %arg10, %c1_i32_66 : i32
      %c0_i32_67 = arith.constant 0 : i32
      %119 = arith.addi %118, %c0_i32_67 : i32
      %120 = arith.index_cast %119 : i32 to index
      %c0_68 = arith.constant 0 : index
      %c0_69 = arith.constant 0 : index
      %121 = vector.load %arg8[%120, %c0_68, %c0_69] : memref<6x32x6xbf16, #tpu.memory_space<vmem>>, vector<1x32x6xbf16>
      %122 = vector.shape_cast %121 : vector<1x32x6xbf16> to vector<32x6xbf16>
      %123 = vector.extract_strided_slice %122 {offsets = [0, 0], sizes = [32, 4], strides = [1, 1]} : vector<32x6xbf16> to vector<32x4xbf16>
      %c0_70 = arith.constant 0 : index
      %c0_71 = arith.constant 0 : index
      %124 = vector.load %arg9[%c0_70, %c0_71] : memref<288x4xbf16, #tpu.memory_space<vmem>>, vector<32x4xbf16>
      tpu.vector_store %arg9[%c0_70, %c0_71], %123 {strides = array<i32>} : memref<288x4xbf16, #tpu.memory_space<vmem>>, vector<32x4xbf16>,
      %125 = vector.extract_strided_slice %122 {offsets = [0, 1], sizes = [32, 4], strides = [1, 1]} : vector<32x6xbf16> to vector<32x4xbf16>
      %c32 = arith.constant 32 : index
      %c0_72 = arith.constant 0 : index
      %126 = vector.load %arg9[%c32, %c0_72] : memref<288x4xbf16, #tpu.memory_space<vmem>>, vector<32x4xbf16>
      tpu.vector_store %arg9[%c32, %c0_72], %125 {strides = array<i32>} : memref<288x4xbf16, #tpu.memory_space<vmem>>, vector<32x4xbf16>,
      %127 = vector.extract_strided_slice %122 {offsets = [0, 2], sizes = [32, 4], strides = [1, 1]} : vector<32x6xbf16> to vector<32x4xbf16>
      %c64 = arith.constant 64 : index
      %c0_73 = arith.constant 0 : index
      %128 = vector.load %arg9[%c64, %c0_73] : memref<288x4xbf16, #tpu.memory_space<vmem>>, vector<32x4xbf16>
      tpu.vector_store %arg9[%c64, %c0_73], %127 {strides = array<i32>} : memref<288x4xbf16, #tpu.memory_space<vmem>>, vector<32x4xbf16>,
      %c1_i32_74 = arith.constant 1 : i32
      %129 = arith.addi %118, %c1_i32_74 : i32
      %130 = arith.index_cast %129 : i32 to index
      %c0_75 = arith.constant 0 : index
      %c0_76 = arith.constant 0 : index
      %131 = vector.load %arg8[%130, %c0_75, %c0_76] : memref<6x32x6xbf16, #tpu.memory_space<vmem>>, vector<1x32x6xbf16>
      %132 = vector.shape_cast %131 : vector<1x32x6xbf16> to vector<32x6xbf16>
      %133 = vector.extract_strided_slice %132 {offsets = [0, 0], sizes = [32, 4], strides = [1, 1]} : vector<32x6xbf16> to vector<32x4xbf16>
      %c96 = arith.constant 96 : index
      %c0_77 = arith.constant 0 : index
      %134 = vector.load %arg9[%c96, %c0_77] : memref<288x4xbf16, #tpu.memory_space<vmem>>, vector<32x4xbf16>
      tpu.vector_store %arg9[%c96, %c0_77], %133 {strides = array<i32>} : memref<288x4xbf16, #tpu.memory_space<vmem>>, vector<32x4xbf16>,
      %135 = vector.extract_strided_slice %132 {offsets = [0, 1], sizes = [32, 4], strides = [1, 1]} : vector<32x6xbf16> to vector<32x4xbf16>
      %c128 = arith.constant 128 : index
      %c0_78 = arith.constant 0 : index
      %136 = vector.load %arg9[%c128, %c0_78] : memref<288x4xbf16, #tpu.memory_space<vmem>>, vector<32x4xbf16>
      tpu.vector_store %arg9[%c128, %c0_78], %135 {strides = array<i32>} : memref<288x4xbf16, #tpu.memory_space<vmem>>, vector<32x4xbf16>,
      %137 = vector.extract_strided_slice %132 {offsets = [0, 2], sizes = [32, 4], strides = [1, 1]} : vector<32x6xbf16> to vector<32x4xbf16>
      %c160 = arith.constant 160 : index
      %c0_79 = arith.constant 0 : index
      %138 = vector.load %arg9[%c160, %c0_79] : memref<288x4xbf16, #tpu.memory_space<vmem>>, vector<32x4xbf16>
      tpu.vector_store %arg9[%c160, %c0_79], %137 {strides = array<i32>} : memref<288x4xbf16, #tpu.memory_space<vmem>>, vector<32x4xbf16>,
      %c2_i32_80 = arith.constant 2 : i32
      %139 = arith.addi %118, %c2_i32_80 : i32
      %140 = arith.index_cast %139 : i32 to index
      %c0_81 = arith.constant 0 : index
      %c0_82 = arith.constant 0 : index
      %141 = vector.load %arg8[%140, %c0_81, %c0_82] : memref<6x32x6xbf16, #tpu.memory_space<vmem>>, vector<1x32x6xbf16>
      %142 = vector.shape_cast %141 : vector<1x32x6xbf16> to vector<32x6xbf16>
      %143 = vector.extract_strided_slice %142 {offsets = [0, 0], sizes = [32, 4], strides = [1, 1]} : vector<32x6xbf16> to vector<32x4xbf16>
      %c192 = arith.constant 192 : index
      %c0_83 = arith.constant 0 : index
      %144 = vector.load %arg9[%c192, %c0_83] : memref<288x4xbf16, #tpu.memory_space<vmem>>, vector<32x4xbf16>
      tpu.vector_store %arg9[%c192, %c0_83], %143 {strides = array<i32>} : memref<288x4xbf16, #tpu.memory_space<vmem>>, vector<32x4xbf16>,
      %145 = vector.extract_strided_slice %142 {offsets = [0, 1], sizes = [32, 4], strides = [1, 1]} : vector<32x6xbf16> to vector<32x4xbf16>
      %c224 = arith.constant 224 : index
      %c0_84 = arith.constant 0 : index
      %146 = vector.load %arg9[%c224, %c0_84] : memref<288x4xbf16, #tpu.memory_space<vmem>>, vector<32x4xbf16>
      tpu.vector_store %arg9[%c224, %c0_84], %145 {strides = array<i32>} : memref<288x4xbf16, #tpu.memory_space<vmem>>, vector<32x4xbf16>,
      %147 = vector.extract_strided_slice %142 {offsets = [0, 2], sizes = [32, 4], strides = [1, 1]} : vector<32x6xbf16> to vector<32x4xbf16>
      %c256 = arith.constant 256 : index
      %c0_85 = arith.constant 0 : index
      %148 = vector.load %arg9[%c256, %c0_85] : memref<288x4xbf16, #tpu.memory_space<vmem>>, vector<32x4xbf16>
      tpu.vector_store %arg9[%c256, %c0_85], %147 {strides = array<i32>} : memref<288x4xbf16, #tpu.memory_space<vmem>>, vector<32x4xbf16>,
      %c0_86 = arith.constant 0 : index
      %c0_87 = arith.constant 0 : index
      %149 = vector.load %arg3[%c0_86, %c0_87] : memref<16x288xbf16, #tpu.memory_space<vmem>>, vector<16x288xbf16>
      %c0_88 = arith.constant 0 : index
      %c0_89 = arith.constant 0 : index
      %150 = vector.load %arg9[%c0_88, %c0_89] : memref<288x4xbf16, #tpu.memory_space<vmem>>, vector<288x4xbf16>
      %cst_90 = arith.constant dense<0.000000e+00> : vector<16x4xf32>
      %151 = tpu.matmul %149, %150, %cst_90 {dimension_numbers = #tpu.dot_dimension_numbers<[1], [0], [0], [1], [0, 0, 1, 1], [], []>} : vector<16x288xbf16>, vector<288x4xbf16>, vector<16x4xf32> -> vector<16x4xf32>
      %c0_91 = arith.constant 0 : index
      %c0_92 = arith.constant 0 : index
      %152 = vector.load %arg4[%c0_91, %c0_92] : memref<16x1xf32, #tpu.memory_space<vmem>>, vector<16x1xf32>
      %153 = vector.broadcast %152 : vector<16x1xf32> to vector<16x4xf32>
      %154 = arith.addf %151, %153 : vector<16x4xf32>
      %cst_93 = arith.constant 0.000000e+00 : f32
      %155 = vector.broadcast %cst_93 : f32 to vector<16x4xf32>
      %156 = arith.maximumf %154, %155 : vector<16x4xf32>
      %c0_94 = arith.constant 0 : index
      %c0_95 = arith.constant 0 : index
      %157 = vector.load %arg5[%c0_94, %c0_95] : memref<16x16xbf16, #tpu.memory_space<vmem>>, vector<16x16xbf16>
      %158 = arith.truncf %156 : vector<16x4xf32> to vector<16x4xbf16>
      %cst_96 = arith.constant dense<0.000000e+00> : vector<16x4xf32>
      %159 = tpu.matmul %157, %158, %cst_96 {dimension_numbers = #tpu.dot_dimension_numbers<[1], [0], [0], [1], [0, 0, 1, 1], [], []>} : vector<16x16xbf16>, vector<16x4xbf16>, vector<16x4xf32> -> vector<16x4xf32>
      %c0_97 = arith.constant 0 : index
      %c0_98 = arith.constant 0 : index
      %160 = vector.load %arg6[%c0_97, %c0_98] : memref<16x1xf32, #tpu.memory_space<vmem>>, vector<16x1xf32>
      %161 = vector.broadcast %160 : vector<16x1xf32> to vector<16x4xf32>
      %162 = arith.addf %159, %161 : vector<16x4xf32>
      %cst_99 = arith.constant 5.000000e-01 : f32
      %163 = vector.broadcast %cst_99 : f32 to vector<16x4xf32>
      %164 = arith.mulf %163, %162 : vector<16x4xf32>
      %165 = math.tanh %164 : vector<16x4xf32>
      %cst_100 = arith.constant 1.000000e+00 : f32
      %166 = vector.broadcast %cst_100 : f32 to vector<16x4xf32>
      %167 = arith.addf %165, %166 : vector<16x4xf32>
      %cst_101 = arith.constant 5.000000e-01 : f32
      %168 = vector.broadcast %cst_101 : f32 to vector<16x4xf32>
      %169 = arith.mulf %168, %167 : vector<16x4xf32>
      %c0_102 = arith.constant 0 : index
      %170 = arith.index_cast %arg10 : i32 to index
      %c0_103 = arith.constant 0 : index
      %c0_104 = arith.constant 0 : index
      %171 = vector.load %arg7[%c0_102, %170, %c0_103, %c0_104] : memref<1x4x16x4xf32, #tpu.memory_space<vmem>>, vector<1x1x16x4xf32>
      %172 = vector.shape_cast %171 : vector<1x1x16x4xf32> to vector<16x4xf32>
      %173 = vector.shape_cast %169 : vector<16x4xf32> to vector<1x1x16x4xf32>
      tpu.vector_store %arg7[%c0_102, %170, %c0_103, %c0_104], %173 {strides = array<i32>} : memref<1x4x16x4xf32, #tpu.memory_space<vmem>>, vector<1x1x16x4xf32>,
    }
    %c4_i32_65 = arith.constant 4 : i32
    return
  }
  func.func @transform_0(%arg0: i32, %arg1: i32) -> (i32, i32, i32, i32) {
    %c0_i32 = arith.constant 0 : i32
    %c0_i32_0 = arith.constant 0 : i32
    %c0_i32_1 = arith.constant 0 : i32
    %c0_i32_2 = arith.constant 0 : i32
    return %arg0, %c0_i32, %c0_i32_0, %c0_i32_1 : i32, i32, i32, i32
  }
  func.func @transform_1(%arg0: i32, %arg1: i32) -> (i32, i32) {
    %c0_i32 = arith.constant 0 : i32
    %c0_i32_0 = arith.constant 0 : i32
    %c0_i32_1 = arith.constant 0 : i32
    return %c0_i32, %c0_i32_0 : i32, i32
  }
  func.func @transform_2(%arg0: i32, %arg1: i32) -> (i32, i32) {
    %c0_i32 = arith.constant 0 : i32
    %c0_i32_0 = arith.constant 0 : i32
    %c0_i32_1 = arith.constant 0 : i32
    return %c0_i32, %c0_i32_0 : i32, i32
  }
  func.func @transform_3(%arg0: i32, %arg1: i32) -> (i32, i32) {
    %c0_i32 = arith.constant 0 : i32
    %c0_i32_0 = arith.constant 0 : i32
    %c0_i32_1 = arith.constant 0 : i32
    return %c0_i32, %c0_i32_0 : i32, i32
  }
  func.func @transform_4(%arg0: i32, %arg1: i32) -> (i32, i32) {
    %c0_i32 = arith.constant 0 : i32
    %c0_i32_0 = arith.constant 0 : i32
    %c0_i32_1 = arith.constant 0 : i32
    return %c0_i32, %c0_i32_0 : i32, i32
  }
  func.func @transform_5(%arg0: i32, %arg1: i32) -> (i32, i32, i32, i32) {
    %c0_i32 = arith.constant 0 : i32
    %c0_i32_0 = arith.constant 0 : i32
    %c0_i32_1 = arith.constant 0 : i32
    return %arg0, %arg1, %c0_i32, %c0_i32_0 : i32, i32, i32, i32
  }
}

</mosaic_0001>

<llo_original>
// kernel: ristdnet_forward.6
$region0: #{ristdnet_forward.6}
  #allocation0 [shape = 'u32[]', space=smem, size = 0x4, offset = 0x4, fixed_abs, tag = 'smem constant byte address 0x4 - core index']
  #allocation1 [shape = 'u32[144,128]{1,0:T(1,128)}', space=vmem, size = 0x12000, scoped, tag = 'internal scratch']
  #allocation2 [shape = 'bf16[10,16,10]{2,1,0:T(16,128)(2,1)}', space=vmem, size = 0xa000, scoped, tag = 'scratch operand']
  #allocation3 [shape = 'bf16[144,8]{1,0:T(16,128)(2,1)}', space=vmem, size = 0x9000, scoped, tag = 'scratch operand']
  %s0 = inlined_call_operand.hbm [shape: bf16[2,8,16,8], index: 0, kind: input, shape index: {}]
  %s1 = inlined_call_operand.hbm [shape: bf16[32,144], index: 1, kind: input, shape index: {}]
  %s2 = inlined_call_operand.hbm [shape: f32[32,1], index: 2, kind: input, shape index: {}]
  %s3 = inlined_call_operand.hbm [shape: bf16[2,4,32,4], index: 3, kind: output, shape index: {}]
  %s4 = sld [smem:[#allocation0]]
  $region64: #{ristdnet_forward.6} parent=0
    _
  %s6 = ssub.s32 1, %s4
  %s7 = scalar_select 0, %s6, %s4
  $region1: #{ristdnet_forward.6} parent=0
    #allocation4 [shape = 'u8[65536]{0}', space=vmem, size = 0x10000, scoped, tag = 'input window, operand 0']
    #allocation5 [shape = 's32[2]{0}', space=sflag, size = 0x8, scoped, tag = 'scoped memory for ristdnet_forward.6']
    #allocation6 [shape = 's32[2]{0}', space=sflag, size = 0x8, scoped, tag = 'scoped memory for ristdnet_forward.6']
    #allocation7 [shape = 'u8[16384]{0}', space=vmem, size = 0x4000, scoped, tag = 'input window, operand 1, single buffered']
    #allocation8 [shape = 's32[1]{0}', space=sflag, size = 0x4, scoped, tag = 'scoped memory for ristdnet_forward.6']
    #allocation9 [shape = 'u8[16384]{0}', space=vmem, size = 0x4000, scoped, tag = 'input window, operand 2, single buffered']
    #allocation10 [shape = 'u8[65536]{0}', space=vmem, size = 0x10000, scoped, tag = 'output window, operand 0']
    %8 = vsyncpa [#allocation5], 0
    %s9 = scalar_lea.sflag [#allocation5], 1
    %10 = vsyncpa %s9, 0
    %11 = vsyncpa [#allocation8], 0
    %12 = vsyncpa [#allocation6], 0
    %s13 = scalar_lea.sflag [#allocation6], 1
    %14 = vsyncpa %s13, 0
    loop: start=0, step=1, limit=4
    $region2: #{ristdnet_forward.6} parent=1 // loop_pre_header
      _
    $region3: #{ristdnet_forward.6} parent=1 // loop_header
      %s16 = sphi 0, %s20
      %p17 = scmp.ge.s32.totalorder %s16, 4
      %s23 = sphi 0, %s35
      %s24 = sphi 0, %s31
      %s25 = sphi 0, %s23
      %s26 = sphi 0, %s24
      %s27 = sphi 0, %s25
      %s28 = sphi 0, %s26
      %s38 = sphi 0, %s40
      %s41 = sphi 0, %s38
      %s42 = sphi 0, %s41
      %s58 = sphi 0, %s42
      %s62 = sphi 0, %s62
      %s64 = sphi 0, %s62
      %s65 = sphi 0, %s64
      %s79 = sphi 0, %s65
      %s83 = sphi 0, %s83
      %s85 = sphi 0, %s83
      %s86 = sphi 0, %s85
      %s100 = sphi 0, %s86
      %s108 = sphi 0, %s110
      %s111 = sphi 0, %s108
      %s112 = sphi 0, %s111
      %s128 = sphi 0, %s112
    $region4: #{ristdnet_forward.6} parent=1 // loop_header_branch
      %19 = sbr.rel (%p17) target = $region8
    $region5: #{ristdnet_forward.6} parent=1 // loop_body
      %s21 = ssub.s32 %s16, 1
      %s22 = ssub.s32 %s16, 2
      %s29 = sadd.s32 1, %s24
      %p30 = scmp.ge.s32.totalorder %s29, 1
      %s31 = scalar_select %p30, 0, %s29
      %s32 = sadd.s32 1, %s23
      %s33 = scalar_select %p30, %s32, %s23
      %p34 = scmp.ge.s32.totalorder %s33, 2
      %s35 = scalar_select %p34, 0, %s33
      %s36 = ssub.s32 %s23, %s35
      %p37 = scmp.eq.s32.totalorder %s36, 0
      %s39 = sadd.s32 %s38, 1
      %s40 = scalar_select %p37, %s38, %s39
      %p43 = pneg %p37
      %p44 = scmp.eq.s32.totalorder %s16, 1
      %p45 = por %p43, %p44
      %p46 = scmp.ne.s32.totalorder %s38, %s41
      %p47 = scmp.eq.s32.totalorder %s16, 0
      %p48 = por %p46, %p47
      %p49 = scmp.ne.s32.totalorder %s38, %s41
      %p50 = scmp.eq.s32.totalorder %s21, 1
      %p51 = por %p49, %p50
      %p52 = scmp.ne.s32.totalorder %s41, %s42
      %p53 = scmp.eq.s32.totalorder %s21, 0
      %p54 = por %p52, %p53
      %p55 = scmp.ne.s32.totalorder %s41, %s42
      %p56 = scmp.eq.s32.totalorder %s22, 1
      %p57 = por %p55, %p56
      %p59 = scmp.ne.s32.totalorder %s42, %s58
      %p60 = scmp.eq.s32.totalorder %s22, 0
      %p61 = por %p59, %p60
      %s63 = sadd.s32 %s62, 1
      %p66 = scmp.eq.s32.totalorder %s16, 1
      %p67 = scmp.ne.s32.totalorder %s62, %s64
      %p68 = scmp.eq.s32.totalorder %s16, 0
      %p69 = por %p67, %p68
      %p70 = scmp.ne.s32.totalorder %s62, %s64
      %p71 = scmp.eq.s32.totalorder %s21, 1
      %p72 = por %p70, %p71
      %p73 = scmp.ne.s32.totalorder %s64, %s65
      %p74 = scmp.eq.s32.totalorder %s21, 0
      %p75 = por %p73, %p74
      %p76 = scmp.ne.s32.totalorder %s64, %s65
      %p77 = scmp.eq.s32.totalorder %s22, 1
      %p78 = por %p76, %p77
      %p80 = scmp.ne.s32.totalorder %s65, %s79
      %p81 = scmp.eq.s32.totalorder %s22, 0
      %p82 = por %p80, %p81
      %s84 = sadd.s32 %s83, 1
      %p87 = scmp.eq.s32.totalorder %s16, 1
      %p88 = scmp.ne.s32.totalorder %s83, %s85
      %p89 = scmp.eq.s32.totalorder %s16, 0
      %p90 = por %p88, %p89
      %p91 = scmp.ne.s32.totalorder %s83, %s85
      %p92 = scmp.eq.s32.totalorder %s21, 1
      %p93 = por %p91, %p92
      %p94 = scmp.ne.s32.totalorder %s85, %s86
      %p95 = scmp.eq.s32.totalorder %s21, 0
      %p96 = por %p94, %p95
      %p97 = scmp.ne.s32.totalorder %s85, %s86
      %p98 = scmp.eq.s32.totalorder %s22, 1
      %p99 = por %p97, %p98
      %p101 = scmp.ne.s32.totalorder %s86, %s100
      %p102 = scmp.eq.s32.totalorder %s22, 0
      %p103 = por %p101, %p102
      %s104 = ssub.s32 %s23, %s35
      %s105 = ssub.s32 %s24, %s31
      %s106 = sor.u32 %s104, %s105
      %p107 = scmp.eq.s32.totalorder %s106, 0
      %s109 = sadd.s32 %s108, 1
      %s110 = scalar_select %p107, %s108, %s109
      %p113 = pneg %p107
      %p114 = scmp.eq.s32.totalorder %s16, 1
      %p115 = por %p113, %p114
      %p116 = scmp.ne.s32.totalorder %s108, %s111
      %p117 = scmp.eq.s32.totalorder %s16, 0
      %p118 = por %p116, %p117
      %p119 = scmp.ne.s32.totalorder %s108, %s111
      %p120 = scmp.eq.s32.totalorder %s21, 1
      %p121 = por %p119, %p120
      %p122 = scmp.ne.s32.totalorder %s111, %s112
      %p123 = scmp.eq.s32.totalorder %s21, 0
      %p124 = por %p122, %p123
      %p125 = scmp.ne.s32.totalorder %s111, %s112
      %p126 = scmp.eq.s32.totalorder %s22, 1
      %p127 = por %p125, %p126
      %p129 = scmp.ne.s32.totalorder %s112, %s128
      %p130 = scmp.eq.s32.totalorder %s22, 0
      %p131 = por %p129, %p130
      %p132 = scmp.le.s32.totalorder 1, %s16
      %p133 = scmp.lt.s32.totalorder %s16, 3
      %p134 = pnand %p132, %p133
      %p135 = pneg %p134
      // Predicated region
      $region9: #{ristdnet_forward.6} parent=5 // pred_check
        _
      $region10: #{ristdnet_forward.6} parent=5 // pred_check_branch
        %137 = sbr.rel (%p134) target = $region12
      $region11: #{ristdnet_forward.6} parent=5 // pred_region
        %s138 = ssub.s32 %s16, 1
        // Predicated region
        $region13: #{ristdnet_forward.6} parent=11 // pred_check
          %p139 = pneg %p75
        $region14: #{ristdnet_forward.6} parent=11 // pred_check_branch
          %141 = sbr.rel (%p139) target = $region16
        $region15: #{ristdnet_forward.6} parent=11 // pred_region
          %s143 = ssub.s32 512, 512
          %144 = vsyncadd [#allocation8], %s143
          %s145 = sshll.u32 [#allocation7], 4
          %s146 = int_to_ptr.vmem [resolvable:$true] %s145
          %151 = dma.hbm_to_vmem [thread:$0]  %s1, 512, %s146, [#allocation8], 128, 128, 8
        $region16: #{ristdnet_forward.6} parent=11 // pred_fallthru
          _
        // Predicated region
        $region17: #{ristdnet_forward.6} parent=11 // pred_check
          %p152 = pneg %p96
        $region18: #{ristdnet_forward.6} parent=11 // pred_check_branch
          %154 = sbr.rel (%p152) target = $region20
        $region19: #{ristdnet_forward.6} parent=11 // pred_region
          %s156 = ssub.s32 512, 512
          %157 = vsyncadd [#allocation8], %s156
          %s158 = sshll.u32 [#allocation9], 4
          %s159 = int_to_ptr.vmem [resolvable:$true] %s158
          %164 = dma.hbm_to_vmem [thread:$0]  %s2, 512, %s159, [#allocation8], 128, 128, 8
        $region20: #{ristdnet_forward.6} parent=11 // pred_fallthru
          _
      $region12: #{ristdnet_forward.6} parent=5 // pred_fallthru
        _
      %p165 = scmp.lt.s32.totalorder %s16, 2
      // Predicated region
      $region21: #{ristdnet_forward.6} parent=5 // pred_check
        %p166 = pneg %p165
      $region22: #{ristdnet_forward.6} parent=5 // pred_check_branch
        %168 = sbr.rel (%p166) target = $region24
      $region23: #{ristdnet_forward.6} parent=5 // pred_region
        // Predicated region
        $region25: #{ristdnet_forward.6} parent=23 // pred_check
          %p169 = pneg %p48
        $region26: #{ristdnet_forward.6} parent=23 // pred_check_branch
          %171 = sbr.rel (%p169) target = $region28
        $region27: #{ristdnet_forward.6} parent=23 // pred_region
          %s172 = sand.u32 %s38, 1
          %s173 = scalar_lea.sflag [#allocation5], %s172
          %s174 = sand.u32 %s38, 1
          %s175 = smul.addr %s174, 64
          %s176 = scalar_lea.vmem [#allocation4], %s175
          %s178 = ssub.s32 1024, 1024
          %179 = vsyncadd %s173, %s178
          %s180 = smul.addr %s23, 16
          %s181 = smul.addr %s180, 64
          %s182 = scalar_lea.hbm %s0, %s181
          %s183 = sshll.u32 %s176, 4
          %s184 = int_to_ptr.vmem [resolvable:$true] %s183
          %189 = dma.hbm_to_vmem [thread:$0]  %s182, 1024, %s184, %s173, 64, 64, 4
        $region28: #{ristdnet_forward.6} parent=23 // pred_fallthru
          _
      $region24: #{ristdnet_forward.6} parent=5 // pred_fallthru
        _
      %p190 = scmp.le.s32.totalorder 1, %s16
      %p191 = scmp.lt.s32.totalorder %s16, 3
      %p192 = pnand %p190, %p191
      %p193 = pneg %p192
      // Predicated region
      $region29: #{ristdnet_forward.6} parent=5 // pred_check
        _
      $region30: #{ristdnet_forward.6} parent=5 // pred_check_branch
        %195 = sbr.rel (%p192) target = $region32
      $region31: #{ristdnet_forward.6} parent=5 // pred_region
        %s196 = ssub.s32 %s16, 1
        %s197 = sand.u32 %s41, 1
        %s198 = scalar_lea.sflag [#allocation5], %s197
        %s199 = sand.u32 %s41, 1
        %s200 = smul.addr %s199, 64
        %s201 = scalar_lea.vmem [#allocation4], %s200
        // Predicated region
        $region33: #{ristdnet_forward.6} parent=31 // pred_check
          %p202 = pneg %p54
        $region34: #{ristdnet_forward.6} parent=31 // pred_check_branch
          %204 = sbr.rel (%p202) target = $region36
        $region35: #{ristdnet_forward.6} parent=31 // pred_region
          %205 = dma.done %s198, 1024
        $region36: #{ristdnet_forward.6} parent=31 // pred_fallthru
          _
        // Predicated region
        $region37: #{ristdnet_forward.6} parent=31 // pred_check
          %p206 = pneg %p75
        $region38: #{ristdnet_forward.6} parent=31 // pred_check_branch
          %208 = sbr.rel (%p206) target = $region40
        $region39: #{ristdnet_forward.6} parent=31 // pred_region
          %209 = dma.done [#allocation8], 512
        $region40: #{ristdnet_forward.6} parent=31 // pred_fallthru
          _
        // Predicated region
        $region41: #{ristdnet_forward.6} parent=31 // pred_check
          %p210 = pneg %p96
        $region42: #{ristdnet_forward.6} parent=31 // pred_check_branch
          %212 = sbr.rel (%p210) target = $region44
        $region43: #{ristdnet_forward.6} parent=31 // pred_region
          %213 = dma.done [#allocation8], 512
        $region44: #{ristdnet_forward.6} parent=31 // pred_fallthru
          _
        %s214 = sand.u32 %s41, 1
        %s215 = scalar_lea.sflag [#allocation5], %s214
        %s216 = sand.u32 %s41, 1
        %s217 = smul.addr %s216, 64
        %s218 = scalar_lea.vmem [#allocation4], %s217
        %p219 = pneg %p54
        %p220 = pneg %p51
        %p221 = pneg %p75
        %p222 = pneg %p72
        %p223 = pneg %p96
        %p224 = pneg %p93
        %p225 = pneg %p124
        %p226 = pneg %p121
        %s227 = sand.u32 %s111, 1
        %s228 = scalar_lea.sflag [#allocation6], %s227
        %s229 = sand.u32 %s111, 1
        %s230 = smul.addr %s229, 64
        %s231 = scalar_lea.vmem [#allocation10], %s230
        %s232 = smul.u32 4, %s26
        %s234 = smul.u32 %s26, 8
        %vm235 = vcmask 80896
        %236 = vst.msk [vmem:[#allocation2] sm:$0xff] %vm235, 0
        %237 = vst.msk [vmem:[#allocation2 + $0x8] sm:$0xff] %vm235, 0
        %238 = vst.msk [vmem:[#allocation2 + $0x10] sm:$0xff] %vm235, 0
        %239 = vst.msk [vmem:[#allocation2 + $0x18] sm:$0xff] %vm235, 0
        %240 = vst.msk [vmem:[#allocation2 + $0x20] sm:$0xff] %vm235, 0
        %241 = vst.msk [vmem:[#allocation2 + $0x28] sm:$0xff] %vm235, 0
        %242 = vst.msk [vmem:[#allocation2 + $0x30] sm:$0xff] %vm235, 0
        %243 = vst.msk [vmem:[#allocation2 + $0x38] sm:$0xff] %vm235, 0
        %244 = vst.msk [vmem:[#allocation2 + $0x40] sm:$0xff] %vm235, 0
        %245 = vst.msk [vmem:[#allocation2 + $0x48] sm:$0xff] %vm235, 0
        %s246 = ssub.s32 %s234, 1
        %p247 = scmp.gt.s32.totalorder %s246, 0
        %s248 = scalar_select %p247, %s246, 0
        %p249 = scmp.lt.s32.totalorder %s248, 7
        %s250 = scalar_select %p249, %s248, 7
        %p251 = scmp.ge.s32.totalorder %s246, 0
        %p252 = scmp.lt.s32.totalorder %s246, 8
        %p253 = pnand %p251, %p252
        %p254 = pneg %p253
        %s255 = scalar_select %p254, 1, 0
        %s256 = scvt.s32.f32 %s255
        %p258 = scmp.ne.f32.partialorder %s256, %s256
        %s259 = sshrl.u32 %s256, 16
        %s260 = sand.u32 %s259, 1
        %s261 = sadd.s32 32767, %s260
        %s262 = sadd.s32 %s256, %s261
        %s263 = sand.u32 %s262, 4294901760
        %s264 = scalar_select %p258, 2143289344, %s263
        %s266 = sshrl.u32 %s264, 16
        %s267 = smul.u32 %s250, 2
        %s268 = smul.addr %s267, 4
        %s269 = scalar_lea.vmem %s201, %s268 [#allocation4]
        %v270 = vld [vmem:[%s269] sm:$0xf]
        %v271 = vld [vmem:[%s269 + $0x4] sm:$0xf]
        %s272 = sshll.u32 %s266, 16
        %s273 = sor.u32 %s266, %s272
        %v274 = vstv %s273
        %v276 = vmul.bf16 %v270, %v274
        %v277 = vmul.bf16 %v271, %v274
        %v280 = vunpack.c.l.b16 %v276
        %v281 = vunpack.c.l.b16 %v277
        %v282 = vpack.c.b16 %v281, %v280
        %283 = vrot.lane.b32.xlu0 %v282, 1
        %v284 = vpop.permute.xlu0 %283
        %vm286 = vcmask 72712
        %287 = vst.msk [vmem:[#allocation2] sm:$0xff] %vm286, %v284
        %p288 = scmp.gt.s32.totalorder %s234, 0
        %s289 = scalar_select %p288, %s234, 0
        %p290 = scmp.lt.s32.totalorder %s289, 7
        %s291 = scalar_select %p290, %s289, 7
        %p292 = scmp.ge.s32.totalorder %s234, 0
        %p293 = scmp.lt.s32.totalorder %s234, 8
        %p294 = pnand %p292, %p293
        %p295 = pneg %p294
        %s296 = scalar_select %p295, 1, 0
        %s297 = scvt.s32.f32 %s296
        %p299 = scmp.ne.f32.partialorder %s297, %s297
        %s300 = sshrl.u32 %s297, 16
        %s301 = sand.u32 %s300, 1
        %s302 = sadd.s32 32767, %s301
        %s303 = sadd.s32 %s297, %s302
        %s304 = sand.u32 %s303, 4294901760
        %s305 = scalar_select %p299, 2143289344, %s304
        %s307 = sshrl.u32 %s305, 16
        %s308 = smul.u32 %s291, 2
        %s309 = smul.addr %s308, 4
        %s310 = scalar_lea.vmem %s201, %s309 [#allocation4]
        %v311 = vld [vmem:[%s310] sm:$0xf]
        %v312 = vld [vmem:[%s310 + $0x4] sm:$0xf]
        %s313 = sshll.u32 %s307, 16
        %s314 = sor.u32 %s307, %s313
        %v315 = vstv %s314
        %v317 = vmul.bf16 %v311, %v315
        %v318 = vmul.bf16 %v312, %v315
        %v321 = vunpack.c.l.b16 %v317
        %v322 = vunpack.c.l.b16 %v318
        %v323 = vpack.c.b16 %v322, %v321
        %324 = vrot.lane.b32.xlu0 %v323, 1
        %v325 = vpop.permute.xlu0 %324
        %s327 = scalar_lea.vmem [#allocation2], 8
        %328 = vst.msk [vmem:[%s327] sm:$0xff] %vm286, %v325
        %s329 = sadd.s32 %s234, 1
        %p330 = scmp.gt.s32.totalorder %s329, 0
        %s331 = scalar_select %p330, %s329, 0
        %p332 = scmp.lt.s32.totalorder %s331, 7
        %s333 = scalar_select %p332, %s331, 7
        %p334 = scmp.ge.s32.totalorder %s329, 0
        %p335 = scmp.lt.s32.totalorder %s329, 8
        %p336 = pnand %p334, %p335
        %p337 = pneg %p336
        %s338 = scalar_select %p337, 1, 0
        %s339 = scvt.s32.f32 %s338
        %p341 = scmp.ne.f32.partialorder %s339, %s339
        %s342 = sshrl.u32 %s339, 16
        %s343 = sand.u32 %s342, 1
        %s344 = sadd.s32 32767, %s343
        %s345 = sadd.s32 %s339, %s344
        %s346 = sand.u32 %s345, 4294901760
        %s347 = scalar_select %p341, 2143289344, %s346
        %s349 = sshrl.u32 %s347, 16
        %s350 = smul.u32 %s333, 2
        %s351 = smul.addr %s350, 4
        %s352 = scalar_lea.vmem %s201, %s351 [#allocation4]
        %v353 = vld [vmem:[%s352] sm:$0xf]
        %v354 = vld [vmem:[%s352 + $0x4] sm:$0xf]
        %s355 = sshll.u32 %s349, 16
        %s356 = sor.u32 %s349, %s355
        %v357 = vstv %s356
        %v359 = vmul.bf16 %v353, %v357
        %v360 = vmul.bf16 %v354, %v357
        %v363 = vunpack.c.l.b16 %v359
        %v364 = vunpack.c.l.b16 %v360
        %v365 = vpack.c.b16 %v364, %v363
        %366 = vrot.lane.b32.xlu0 %v365, 1
        %v367 = vpop.permute.xlu0 %366
        %s369 = scalar_lea.vmem [#allocation2], 16
        %370 = vst.msk [vmem:[%s369] sm:$0xff] %vm286, %v367
        %s371 = sadd.s32 %s234, 2
        %p372 = scmp.gt.s32.totalorder %s371, 0
        %s373 = scalar_select %p372, %s371, 0
        %p374 = scmp.lt.s32.totalorder %s373, 7
        %s375 = scalar_select %p374, %s373, 7
        %p376 = scmp.ge.s32.totalorder %s371, 0
        %p377 = scmp.lt.s32.totalorder %s371, 8
        %p378 = pnand %p376, %p377
        %p379 = pneg %p378
        %s380 = scalar_select %p379, 1, 0
        %s381 = scvt.s32.f32 %s380
        %p383 = scmp.ne.f32.partialorder %s381, %s381
        %s384 = sshrl.u32 %s381, 16
        %s385 = sand.u32 %s384, 1
        %s386 = sadd.s32 32767, %s385
        %s387 = sadd.s32 %s381, %s386
        %s388 = sand.u32 %s387, 4294901760
        %s389 = scalar_select %p383, 2143289344, %s388
        %s391 = sshrl.u32 %s389, 16
        %s392 = smul.u32 %s375, 2
        %s393 = smul.addr %s392, 4
        %s394 = scalar_lea.vmem %s201, %s393 [#allocation4]
        %v395 = vld [vmem:[%s394] sm:$0xf]
        %v396 = vld [vmem:[%s394 + $0x4] sm:$0xf]
        %s397 = sshll.u32 %s391, 16
        %s398 = sor.u32 %s391, %s397
        %v399 = vstv %s398
        %v401 = vmul.bf16 %v395, %v399
        %v402 = vmul.bf16 %v396, %v399
        %v405 = vunpack.c.l.b16 %v401
        %v406 = vunpack.c.l.b16 %v402
        %v407 = vpack.c.b16 %v406, %v405
        %408 = vrot.lane.b32.xlu0 %v407, 1
        %v409 = vpop.permute.xlu0 %408
        %s411 = scalar_lea.vmem [#allocation2], 24
        %412 = vst.msk [vmem:[%s411] sm:$0xff] %vm286, %v409
        %s413 = sadd.s32 %s234, 3
        %p414 = scmp.gt.s32.totalorder %s413, 0
        %s415 = scalar_select %p414, %s413, 0
        %p416 = scmp.lt.s32.totalorder %s415, 7
        %s417 = scalar_select %p416, %s415, 7
        %p418 = scmp.ge.s32.totalorder %s413, 0
        %p419 = scmp.lt.s32.totalorder %s413, 8
        %p420 = pnand %p418, %p419
        %p421 = pneg %p420
        %s422 = scalar_select %p421, 1, 0
        %s423 = scvt.s32.f32 %s422
        %p425 = scmp.ne.f32.partialorder %s423, %s423
        %s426 = sshrl.u32 %s423, 16
        %s427 = sand.u32 %s426, 1
        %s428 = sadd.s32 32767, %s427
        %s429 = sadd.s32 %s423, %s428
        %s430 = sand.u32 %s429, 4294901760
        %s431 = scalar_select %p425, 2143289344, %s430
        %s433 = sshrl.u32 %s431, 16
        %s434 = smul.u32 %s417, 2
        %s435 = smul.addr %s434, 4
        %s436 = scalar_lea.vmem %s201, %s435 [#allocation4]
        %v437 = vld [vmem:[%s436] sm:$0xf]
        %v438 = vld [vmem:[%s436 + $0x4] sm:$0xf]
        %s439 = sshll.u32 %s433, 16
        %s440 = sor.u32 %s433, %s439
        %v441 = vstv %s440
        %v443 = vmul.bf16 %v437, %v441
        %v444 = vmul.bf16 %v438, %v441
        %v447 = vunpack.c.l.b16 %v443
        %v448 = vunpack.c.l.b16 %v444
        %v449 = vpack.c.b16 %v448, %v447
        %450 = vrot.lane.b32.xlu0 %v449, 1
        %v451 = vpop.permute.xlu0 %450
        %s453 = scalar_lea.vmem [#allocation2], 32
        %454 = vst.msk [vmem:[%s453] sm:$0xff] %vm286, %v451
        %s455 = sadd.s32 %s234, 4
        %p456 = scmp.gt.s32.totalorder %s455, 0
        %s457 = scalar_select %p456, %s455, 0
        %p458 = scmp.lt.s32.totalorder %s457, 7
        %s459 = scalar_select %p458, %s457, 7
        %p460 = scmp.ge.s32.totalorder %s455, 0
        %p461 = scmp.lt.s32.totalorder %s455, 8
        %p462 = pnand %p460, %p461
        %p463 = pneg %p462
        %s464 = scalar_select %p463, 1, 0
        %s465 = scvt.s32.f32 %s464
        %p467 = scmp.ne.f32.partialorder %s465, %s465
        %s468 = sshrl.u32 %s465, 16
        %s469 = sand.u32 %s468, 1
        %s470 = sadd.s32 32767, %s469
        %s471 = sadd.s32 %s465, %s470
        %s472 = sand.u32 %s471, 4294901760
        %s473 = scalar_select %p467, 2143289344, %s472
        %s475 = sshrl.u32 %s473, 16
        %s476 = smul.u32 %s459, 2
        %s477 = smul.addr %s476, 4
        %s478 = scalar_lea.vmem %s201, %s477 [#allocation4]
        %v479 = vld [vmem:[%s478] sm:$0xf]
        %v480 = vld [vmem:[%s478 + $0x4] sm:$0xf]
        %s481 = sshll.u32 %s475, 16
        %s482 = sor.u32 %s475, %s481
        %v483 = vstv %s482
        %v485 = vmul.bf16 %v479, %v483
        %v486 = vmul.bf16 %v480, %v483
        %v489 = vunpack.c.l.b16 %v485
        %v490 = vunpack.c.l.b16 %v486
        %v491 = vpack.c.b16 %v490, %v489
        %492 = vrot.lane.b32.xlu0 %v491, 1
        %v493 = vpop.permute.xlu0 %492
        %s495 = scalar_lea.vmem [#allocation2], 40
        %496 = vst.msk [vmem:[%s495] sm:$0xff] %vm286, %v493
        %s497 = sadd.s32 %s234, 5
        %p498 = scmp.gt.s32.totalorder %s497, 0
        %s499 = scalar_select %p498, %s497, 0
        %p500 = scmp.lt.s32.totalorder %s499, 7
        %s501 = scalar_select %p500, %s499, 7
        %p502 = scmp.ge.s32.totalorder %s497, 0
        %p503 = scmp.lt.s32.totalorder %s497, 8
        %p504 = pnand %p502, %p503
        %p505 = pneg %p504
        %s506 = scalar_select %p505, 1, 0
        %s507 = scvt.s32.f32 %s506
        %p509 = scmp.ne.f32.partialorder %s507, %s507
        %s510 = sshrl.u32 %s507, 16
        %s511 = sand.u32 %s510, 1
        %s512 = sadd.s32 32767, %s511
        %s513 = sadd.s32 %s507, %s512
        %s514 = sand.u32 %s513, 4294901760
        %s515 = scalar_select %p509, 2143289344, %s514
        %s517 = sshrl.u32 %s515, 16
        %s518 = smul.u32 %s501, 2
        %s519 = smul.addr %s518, 4
        %s520 = scalar_lea.vmem %s201, %s519 [#allocation4]
        %v521 = vld [vmem:[%s520] sm:$0xf]
        %v522 = vld [vmem:[%s520 + $0x4] sm:$0xf]
        %s523 = sshll.u32 %s517, 16
        %s524 = sor.u32 %s517, %s523
        %v525 = vstv %s524
        %v527 = vmul.bf16 %v521, %v525
        %v528 = vmul.bf16 %v522, %v525
        %v531 = vunpack.c.l.b16 %v527
        %v532 = vunpack.c.l.b16 %v528
        %v533 = vpack.c.b16 %v532, %v531
        %534 = vrot.lane.b32.xlu0 %v533, 1
        %v535 = vpop.permute.xlu0 %534
        %s537 = scalar_lea.vmem [#allocation2], 48
        %538 = vst.msk [vmem:[%s537] sm:$0xff] %vm286, %v535
        %s539 = sadd.s32 %s234, 6
        %p540 = scmp.gt.s32.totalorder %s539, 0
        %s541 = scalar_select %p540, %s539, 0
        %p542 = scmp.lt.s32.totalorder %s541, 7
        %s543 = scalar_select %p542, %s541, 7
        %p544 = scmp.ge.s32.totalorder %s539, 0
        %p545 = scmp.lt.s32.totalorder %s539, 8
        %p546 = pnand %p544, %p545
        %p547 = pneg %p546
        %s548 = scalar_select %p547, 1, 0
        %s549 = scvt.s32.f32 %s548
        %p551 = scmp.ne.f32.partialorder %s549, %s549
        %s552 = sshrl.u32 %s549, 16
        %s553 = sand.u32 %s552, 1
        %s554 = sadd.s32 32767, %s553
        %s555 = sadd.s32 %s549, %s554
        %s556 = sand.u32 %s555, 4294901760
        %s557 = scalar_select %p551, 2143289344, %s556
        %s559 = sshrl.u32 %s557, 16
        %s560 = smul.u32 %s543, 2
        %s561 = smul.addr %s560, 4
        %s562 = scalar_lea.vmem %s201, %s561 [#allocation4]
        %v563 = vld [vmem:[%s562] sm:$0xf]
        %v564 = vld [vmem:[%s562 + $0x4] sm:$0xf]
        %s565 = sshll.u32 %s559, 16
        %s566 = sor.u32 %s559, %s565
        %v567 = vstv %s566
        %v569 = vmul.bf16 %v563, %v567
        %v570 = vmul.bf16 %v564, %v567
        %v573 = vunpack.c.l.b16 %v569
        %v574 = vunpack.c.l.b16 %v570
        %v575 = vpack.c.b16 %v574, %v573
        %576 = vrot.lane.b32.xlu0 %v575, 1
        %v577 = vpop.permute.xlu0 %576
        %s579 = scalar_lea.vmem [#allocation2], 56
        %580 = vst.msk [vmem:[%s579] sm:$0xff] %vm286, %v577
        %s581 = sadd.s32 %s234, 7
        %p582 = scmp.gt.s32.totalorder %s581, 0
        %s583 = scalar_select %p582, %s581, 0
        %p584 = scmp.lt.s32.totalorder %s583, 7
        %s585 = scalar_select %p584, %s583, 7
        %p586 = scmp.ge.s32.totalorder %s581, 0
        %p587 = scmp.lt.s32.totalorder %s581, 8
        %p588 = pnand %p586, %p587
        %p589 = pneg %p588
        %s590 = scalar_select %p589, 1, 0
        %s591 = scvt.s32.f32 %s590
        %p593 = scmp.ne.f32.partialorder %s591, %s591
        %s594 = sshrl.u32 %s591, 16
        %s595 = sand.u32 %s594, 1
        %s596 = sadd.s32 32767, %s595
        %s597 = sadd.s32 %s591, %s596
        %s598 = sand.u32 %s597, 4294901760
        %s599 = scalar_select %p593, 2143289344, %s598
        %s601 = sshrl.u32 %s599, 16
        %s602 = smul.u32 %s585, 2
        %s603 = smul.addr %s602, 4
        %s604 = scalar_lea.vmem %s201, %s603 [#allocation4]
        %v605 = vld [vmem:[%s604] sm:$0xf]
        %v606 = vld [vmem:[%s604 + $0x4] sm:$0xf]
        %s607 = sshll.u32 %s601, 16
        %s608 = sor.u32 %s601, %s607
        %v609 = vstv %s608
        %v611 = vmul.bf16 %v605, %v609
        %v612 = vmul.bf16 %v606, %v609
        %v615 = vunpack.c.l.b16 %v611
        %v616 = vunpack.c.l.b16 %v612
        %v617 = vpack.c.b16 %v616, %v615
        %618 = vrot.lane.b32.xlu0 %v617, 1
        %v619 = vpop.permute.xlu0 %618
        %s621 = scalar_lea.vmem [#allocation2], 64
        %622 = vst.msk [vmem:[%s621] sm:$0xff] %vm286, %v619
        %s623 = sadd.s32 %s234, 8
        %p624 = scmp.gt.s32.totalorder %s623, 0
        %s625 = scalar_select %p624, %s623, 0
        %p626 = scmp.lt.s32.totalorder %s625, 7
        %s627 = scalar_select %p626, %s625, 7
        %p628 = scmp.ge.s32.totalorder %s623, 0
        %p629 = scmp.lt.s32.totalorder %s623, 8
        %p630 = pnand %p628, %p629
        %p631 = pneg %p630
        %s632 = scalar_select %p631, 1, 0
        %s633 = scvt.s32.f32 %s632
        %p635 = scmp.ne.f32.partialorder %s633, %s633
        %s636 = sshrl.u32 %s633, 16
        %s637 = sand.u32 %s636, 1
        %s638 = sadd.s32 32767, %s637
        %s639 = sadd.s32 %s633, %s638
        %s640 = sand.u32 %s639, 4294901760
        %s641 = scalar_select %p635, 2143289344, %s640
        %s643 = sshrl.u32 %s641, 16
        %s644 = smul.u32 %s627, 2
        %s645 = smul.addr %s644, 4
        %s646 = scalar_lea.vmem %s201, %s645 [#allocation4]
        %v647 = vld [vmem:[%s646] sm:$0xf]
        %v648 = vld [vmem:[%s646 + $0x4] sm:$0xf]
        %s649 = sshll.u32 %s643, 16
        %s650 = sor.u32 %s643, %s649
        %v651 = vstv %s650
        %v653 = vmul.bf16 %v647, %v651
        %v654 = vmul.bf16 %v648, %v651
        %v657 = vunpack.c.l.b16 %v653
        %v658 = vunpack.c.l.b16 %v654
        %v659 = vpack.c.b16 %v658, %v657
        %660 = vrot.lane.b32.xlu0 %v659, 1
        %v661 = vpop.permute.xlu0 %660
        %s663 = scalar_lea.vmem [#allocation2], 72
        %664 = vst.msk [vmem:[%s663] sm:$0xff] %vm286, %v661
        loop: start=0, step=1, limit=4
        $region45: #{ristdnet_forward.6} parent=31 // loop_pre_header
          _
        $region46: #{ristdnet_forward.6} parent=31 // loop_header
          %s666 = sphi 0, %s670
          %p667 = scmp.ge.s32.totalorder %s666, 4
        $region47: #{ristdnet_forward.6} parent=31 // loop_header_branch
          %669 = sbr.rel (%p667) target = $region51
        $region48: #{ristdnet_forward.6} parent=31 // loop_body
          %s671 = smul.u32 %s666, 2
          %s672 = smul.addr %s671, 8
          %s673 = scalar_lea.vmem [#allocation2], %s672
          %v674 = vld [vmem:[%s673] sm:$0xff]
          %vm675 = vcmask 64512
          %676 = vst.msk [vmem:[#allocation3] sm:$0xff] %vm675, %v674
          %678 = vrot.lane.b32.xlu0 %v674, 127
          %v679 = vpop.permute.xlu0 %678
          %681 = vst.msk [vmem:[#allocation3 + $0x8] sm:$0xff] %vm675, %v679
          %682 = vrot.lane.b32.xlu0 %v674, 126
          %v683 = vpop.permute.xlu0 %682
          %685 = vst.msk [vmem:[#allocation3 + $0x10] sm:$0xff] %vm675, %v683
          %s686 = sadd.s32 %s671, 1
          %s687 = smul.addr %s686, 8
          %s688 = scalar_lea.vmem [#allocation2], %s687
          %v689 = vld [vmem:[%s688] sm:$0xff]
          %690 = vst.msk [vmem:[#allocation3 + $0x18] sm:$0xff] %vm675, %v689
          %692 = vrot.lane.b32.xlu0 %v689, 127
          %v693 = vpop.permute.xlu0 %692
          %695 = vst.msk [vmem:[#allocation3 + $0x20] sm:$0xff] %vm675, %v693
          %696 = vrot.lane.b32.xlu0 %v689, 126
          %v697 = vpop.permute.xlu0 %696
          %699 = vst.msk [vmem:[#allocation3 + $0x28] sm:$0xff] %vm675, %v697
          %s700 = sadd.s32 %s671, 2
          %s701 = smul.addr %s700, 8
          %s702 = scalar_lea.vmem [#allocation2], %s701
          %v703 = vld [vmem:[%s702] sm:$0xff]
          %704 = vst.msk [vmem:[#allocation3 + $0x30] sm:$0xff] %vm675, %v703
          %706 = vrot.lane.b32.xlu0 %v703, 127
          %v707 = vpop.permute.xlu0 %706
          %709 = vst.msk [vmem:[#allocation3 + $0x38] sm:$0xff] %vm675, %v707
          %710 = vrot.lane.b32.xlu0 %v703, 126
          %v711 = vpop.permute.xlu0 %710
          %713 = vst.msk [vmem:[#allocation3 + $0x40] sm:$0xff] %vm675, %v711
          %v714 = vld [vmem:[#allocation7] sm:$0xff]
          %v715 = vld [vmem:[#allocation7 + $0x8] sm:$0xff]
          %v716 = vld [vmem:[#allocation7 + $0x10] sm:$0xff]
          %v717 = vld [vmem:[#allocation7 + $0x18] sm:$0xff]
          %v718 = vld [vmem:[#allocation3] sm:$0xff]
          %v719 = vld [vmem:[#allocation3 + $0x8] sm:$0xff]
          %v720 = vld [vmem:[#allocation3 + $0x10] sm:$0xff]
          %v721 = vld [vmem:[#allocation3 + $0x18] sm:$0xff]
          %v722 = vld [vmem:[#allocation3 + $0x20] sm:$0xff]
          %v723 = vld [vmem:[#allocation3 + $0x28] sm:$0xff]
          %v724 = vld [vmem:[#allocation3 + $0x30] sm:$0xff]
          %v725 = vld [vmem:[#allocation3 + $0x38] sm:$0xff]
          %v726 = vld [vmem:[#allocation3 + $0x40] sm:$0xff]
          %v727 = vld [vmem:[#allocation9] sm:$0xff]
          %v728 = vld [vmem:[#allocation9 + $0x8] sm:$0xff]
          %v729 = vld [vmem:[#allocation9 + $0x10] sm:$0xff]
          %v730 = vld [vmem:[#allocation9 + $0x18] sm:$0xff]
          %732 = vset.pattern.permute.xlu0 0
          %733 = vperm.xlu0 %732, %v727
          %v734 = vpop.permute.xlu0 %733
          %737 = vset.pattern.permute.xlu0 0
          %738 = vperm.xlu0 %737, %v728
          %v739 = vpop.permute.xlu0 %738
          %742 = vset.pattern.permute.xlu0 0
          %743 = vperm.xlu0 %742, %v729
          %v744 = vpop.permute.xlu0 %743
          %747 = vset.pattern.permute.xlu0 0
          %748 = vperm.xlu0 %747, %v730
          %v749 = vpop.permute.xlu0 %748
          %v755 = vunpack.c.l.b16 %v714
          %v756 = vunpack.c.h.b16 %v714
          %v757 = vunpack.c.l.b16 %v715
          %v758 = vunpack.c.h.b16 %v715
          %v759 = vunpack.c.l.b16 %v716
          %v760 = vunpack.c.h.b16 %v716
          %v761 = vunpack.c.l.b16 %v717
          %v762 = vunpack.c.h.b16 %v717
          %v763 = vpack.c.b16 %v757, %v755
          %v764 = vpack.c.b16 %v758, %v756
          %v765 = vpack.c.b16 %v761, %v759
          %v766 = vpack.c.b16 %v762, %v760
          %vm769 = vcmask 130048
          %v771 = vsel %vm769, %v764, 0
          %v774 = vsel %vm769, %v766, 0
          %776 = vmatprep.subr.bf16.mxu0 0
          %777 = vmatpush1.bf16.msra.mxu0 %v718
          %778 = vmatprep.subr.bf16.mxu0 0
          %779 = vmatpush1.bf16.msra.mxu0 %v719
          %780 = vmatprep.subr.bf16.mxu0 0
          %781 = vmatpush1.bf16.msra.mxu0 %v720
          %782 = vmatprep.subr.bf16.mxu0 0
          %783 = vmatpush1.bf16.msra.mxu0 %v721
          %784 = vmatprep.subr.bf16.mxu0 0
          %785 = vmatpush1.bf16.msra.mxu0 %v722
          %786 = vmatprep.subr.bf16.mxu0 0
          %787 = vmatpush1.bf16.msra.mxu0 %v723
          %788 = vmatprep.subr.bf16.mxu0 0
          %789 = vmatpush1.bf16.msra.mxu0 %v724
          %790 = vmatprep.subr.bf16.mxu0 0
          %791 = vmatpush1.bf16.msra.mxu0 %v725
          %792 = vmatprep.subr.bf16.mxu0 0
          %793 = vmatpush1.bf16.msra.mxu0 %v726
          %794 = vmatprep.subr.bf16.mxu0 0
          %795 = vmatpush1.bf16.msra.mxu0 0
          %796 = vmatprep.subr.bf16.mxu0 0
          %797 = vmatpush1.bf16.msra.mxu0 0
          %798 = vmatprep.subr.bf16.mxu0 0
          %799 = vmatpush1.bf16.msra.mxu0 0
          %800 = vmatprep.subr.bf16.mxu0 0
          %801 = vmatpush1.bf16.msra.mxu0 0
          %802 = vmatprep.subr.bf16.mxu0 0
          %803 = vmatpush1.bf16.msra.mxu0 0
          %804 = vmatprep.subr.bf16.mxu0 0
          %805 = vmatpush1.bf16.msra.mxu0 0
          %806 = vmatprep.subr.bf16.mxu0 0
          %807 = vmatpush1.bf16.msra.mxu0 0
          %808 = vmatprep.mubr.bf16.mxu0 %v771
          %809 = vmatmul.mubr.bf16.gmra.mrb[0].mxu0 %v763
          %v810 = vpop.f32.mrb[0].mxu0
          %v811 = vadd.f32 %v734, %v810
          %v812 = vpop.f32.mrb[0].mxu0
          %v813 = vpop.f32.mrb[0].mxu0
          %v814 = vadd.f32 %v739, %v813
          %v815 = vpop.f32.mrb[0].mxu0
          %816 = vmatprep.mubr.bf16.mxu0 %v774
          %817 = vmatmul.mubr.bf16.gmra.mrb[0].mxu0 %v765
          %v818 = vpop.f32.mrb[0].mxu0
          %v819 = vadd.f32 %v744, %v818
          %v820 = vpop.f32.mrb[0].mxu0
          %v821 = vpop.f32.mrb[0].mxu0
          %v822 = vadd.f32 %v749, %v821
          %v823 = vpop.f32.mrb[0].mxu0
          %824 = vdwg.mxu0
          %v825 = vmax.f32 %v811, 0.0
          %v826 = vmax.f32 %v814, 0.0
          %v827 = vmax.f32 %v819, 0.0
          %v828 = vmax.f32 %v822, 0.0
          %v829 = vld [vmem:[%s688] sm:$0xff]
          %830 = vst.msk [vmem:[#allocation3] sm:$0xff] %vm675, %v829
          %832 = vrot.lane.b32.xlu0 %v829, 127
          %v833 = vpop.permute.xlu0 %832
          %835 = vst.msk [vmem:[#allocation3 + $0x8] sm:$0xff] %vm675, %v833
          %836 = vrot.lane.b32.xlu0 %v829, 126
          %v837 = vpop.permute.xlu0 %836
          %839 = vst.msk [vmem:[#allocation3 + $0x10] sm:$0xff] %vm675, %v837
          %v840 = vld [vmem:[%s702] sm:$0xff]
          %841 = vst.msk [vmem:[#allocation3 + $0x18] sm:$0xff] %vm675, %v840
          %843 = vrot.lane.b32.xlu0 %v840, 127
          %v844 = vpop.permute.xlu0 %843
          %846 = vst.msk [vmem:[#allocation3 + $0x20] sm:$0xff] %vm675, %v844
          %847 = vrot.lane.b32.xlu0 %v840, 126
          %v848 = vpop.permute.xlu0 %847
          %850 = vst.msk [vmem:[#allocation3 + $0x28] sm:$0xff] %vm675, %v848
          %s851 = sadd.s32 %s671, 3
          %s852 = smul.addr %s851, 8
          %s853 = scalar_lea.vmem [#allocation2], %s852
          %v854 = vld [vmem:[%s853] sm:$0xff]
          %855 = vst.msk [vmem:[#allocation3 + $0x30] sm:$0xff] %vm675, %v854
          %857 = vrot.lane.b32.xlu0 %v854, 127
          %v858 = vpop.permute.xlu0 %857
          %860 = vst.msk [vmem:[#allocation3 + $0x38] sm:$0xff] %vm675, %v858
          %861 = vrot.lane.b32.xlu0 %v854, 126
          %v862 = vpop.permute.xlu0 %861
          %864 = vst.msk [vmem:[#allocation3 + $0x40] sm:$0xff] %vm675, %v862
          %v865 = vld [vmem:[#allocation7] sm:$0xff]
          %v866 = vld [vmem:[#allocation7 + $0x8] sm:$0xff]
          %v867 = vld [vmem:[#allocation7 + $0x10] sm:$0xff]
          %v868 = vld [vmem:[#allocation7 + $0x18] sm:$0xff]
          %v869 = vld [vmem:[#allocation3] sm:$0xff]
          %v870 = vld [vmem:[#allocation3 + $0x8] sm:$0xff]
          %v871 = vld [vmem:[#allocation3 + $0x10] sm:$0xff]
          %v872 = vld [vmem:[#allocation3 + $0x18] sm:$0xff]
          %v873 = vld [vmem:[#allocation3 + $0x20] sm:$0xff]
          %v874 = vld [vmem:[#allocation3 + $0x28] sm:$0xff]
          %v875 = vld [vmem:[#allocation3 + $0x30] sm:$0xff]
          %v876 = vld [vmem:[#allocation3 + $0x38] sm:$0xff]
          %v877 = vld [vmem:[#allocation3 + $0x40] sm:$0xff]
          %v878 = vld [vmem:[#allocation9] sm:$0xff]
          %v879 = vld [vmem:[#allocation9 + $0x8] sm:$0xff]
          %v880 = vld [vmem:[#allocation9 + $0x10] sm:$0xff]
          %v881 = vld [vmem:[#allocation9 + $0x18] sm:$0xff]
          %883 = vset.pattern.permute.xlu0 0
          %884 = vperm.xlu0 %883, %v878
          %v885 = vpop.permute.xlu0 %884
          %888 = vset.pattern.permute.xlu0 0
          %889 = vperm.xlu0 %888, %v879
          %v890 = vpop.permute.xlu0 %889
          %893 = vset.pattern.permute.xlu0 0
          %894 = vperm.xlu0 %893, %v880
          %v895 = vpop.permute.xlu0 %894
          %898 = vset.pattern.permute.xlu0 0
          %899 = vperm.xlu0 %898, %v881
          %v900 = vpop.permute.xlu0 %899
          %v906 = vunpack.c.l.b16 %v865
          %v907 = vunpack.c.h.b16 %v865
          %v908 = vunpack.c.l.b16 %v866
          %v909 = vunpack.c.h.b16 %v866
          %v910 = vunpack.c.l.b16 %v867
          %v911 = vunpack.c.h.b16 %v867
          %v912 = vunpack.c.l.b16 %v868
          %v913 = vunpack.c.h.b16 %v868
          %v914 = vpack.c.b16 %v908, %v906
          %v915 = vpack.c.b16 %v909, %v907
          %v916 = vpack.c.b16 %v912, %v910
          %v917 = vpack.c.b16 %v913, %v911
          %v921 = vsel %vm769, %v915, 0
          %v924 = vsel %vm769, %v917, 0
          %926 = vmatprep.subr.bf16.mxu0 0
          %927 = vmatpush1.bf16.msra.mxu0 %v869
          %928 = vmatprep.subr.bf16.mxu0 0
          %929 = vmatpush1.bf16.msra.mxu0 %v870
          %930 = vmatprep.subr.bf16.mxu0 0
          %931 = vmatpush1.bf16.msra.mxu0 %v871
          %932 = vmatprep.subr.bf16.mxu0 0
          %933 = vmatpush1.bf16.msra.mxu0 %v872
          %934 = vmatprep.subr.bf16.mxu0 0
          %935 = vmatpush1.bf16.msra.mxu0 %v873
          %936 = vmatprep.subr.bf16.mxu0 0
          %937 = vmatpush1.bf16.msra.mxu0 %v874
          %938 = vmatprep.subr.bf16.mxu0 0
          %939 = vmatpush1.bf16.msra.mxu0 %v875
          %940 = vmatprep.subr.bf16.mxu0 0
          %941 = vmatpush1.bf16.msra.mxu0 %v876
          %942 = vmatprep.subr.bf16.mxu0 0
          %943 = vmatpush1.bf16.msra.mxu0 %v877
          %944 = vmatprep.subr.bf16.mxu0 0
          %945 = vmatpush1.bf16.msra.mxu0 0
          %946 = vmatprep.subr.bf16.mxu0 0
          %947 = vmatpush1.bf16.msra.mxu0 0
          %948 = vmatprep.subr.bf16.mxu0 0
          %949 = vmatpush1.bf16.msra.mxu0 0
          %950 = vmatprep.subr.bf16.mxu0 0
          %951 = vmatpush1.bf16.msra.mxu0 0
          %952 = vmatprep.subr.bf16.mxu0 0
          %953 = vmatpush1.bf16.msra.mxu0 0
          %954 = vmatprep.subr.bf16.mxu0 0
          %955 = vmatpush1.bf16.msra.mxu0 0
          %956 = vmatprep.subr.bf16.mxu0 0
          %957 = vmatpush1.bf16.msra.mxu0 0
          %958 = vmatprep.mubr.bf16.mxu0 %v921
          %959 = vmatmul.mubr.bf16.gmra.mrb[0].mxu0 %v914
          %v960 = vpop.f32.mrb[0].mxu0
          %v961 = vadd.f32 %v885, %v960
          %v962 = vpop.f32.mrb[0].mxu0
          %v963 = vpop.f32.mrb[0].mxu0
          %v964 = vadd.f32 %v890, %v963
          %v965 = vpop.f32.mrb[0].mxu0
          %966 = vmatprep.mubr.bf16.mxu0 %v924
          %967 = vmatmul.mubr.bf16.gmra.mrb[0].mxu0 %v916
          %v968 = vpop.f32.mrb[0].mxu0
          %v969 = vadd.f32 %v895, %v968
          %v970 = vpop.f32.mrb[0].mxu0
          %v971 = vpop.f32.mrb[0].mxu0
          %v972 = vadd.f32 %v900, %v971
          %v973 = vpop.f32.mrb[0].mxu0
          %974 = vdwg.mxu0
          %v975 = vmax.f32 %v961, 0.0
          %v976 = vmax.f32 %v964, 0.0
          %v977 = vmax.f32 %v969, 0.0
          %v978 = vmax.f32 %v972, 0.0
          %v979 = vmax.f32 %v825, %v975
          %v980 = vmax.f32 %v826, %v976
          %v981 = vmax.f32 %v827, %v977
          %v982 = vmax.f32 %v828, %v978
          %987 = vrot.lane.b32.xlu0 %v979, 127
          %v988 = vpop.permute.xlu0 %987
          %989 = vrot.lane.b32.xlu0 %v980, 127
          %v990 = vpop.permute.xlu0 %989
          %991 = vrot.lane.b32.xlu0 %v981, 127
          %v992 = vpop.permute.xlu0 %991
          %993 = vrot.lane.b32.xlu0 %v982, 127
          %v994 = vpop.permute.xlu0 %993
          %999 = vrot.lane.b32.xlu0 %v979, 7
          %v1000 = vpop.permute.xlu0 %999
          %1001 = vrot.lane.b32.xlu0 %v980, 7
          %v1002 = vpop.permute.xlu0 %1001
          %1003 = vrot.lane.b32.xlu0 %v981, 7
          %v1004 = vpop.permute.xlu0 %1003
          %1005 = vrot.lane.b32.xlu0 %v982, 7
          %v1006 = vpop.permute.xlu0 %1005
          %vm1011 = vcmask 56320
          %v1012 = vsel %vm1011, %v988, %v1000
          %v1013 = vsel %vm1011, %v990, %v1002
          %v1014 = vsel %vm1011, %v992, %v1004
          %v1015 = vsel %vm1011, %v994, %v1006
          %v1016 = vmax.f32 %v979, %v1012
          %v1017 = vmax.f32 %v980, %v1013
          %v1018 = vmax.f32 %v981, %v1014
          %v1019 = vmax.f32 %v982, %v1015
          %v1020 = vlaneseq
          %v1021 = vand.u32 %v1020, 127
          %v1022 = vand.u32 %v1021, 1
          %vm1023 = vcmp.ne.s32.totalorder %v1022, 0
          %1028 = vrot.lane.b32.xlu0 %v1016, 127
          %v1029 = vpop.permute.xlu0 %1028
          %1030 = vrot.lane.b32.xlu0 %v1017, 127
          %v1031 = vpop.permute.xlu0 %1030
          %1032 = vrot.lane.b32.xlu0 %v1018, 127
          %v1033 = vpop.permute.xlu0 %1032
          %1034 = vrot.lane.b32.xlu0 %v1019, 127
          %v1035 = vpop.permute.xlu0 %1034
          %1040 = vrot.lane.b32.xlu0 %v1016, 7
          %v1041 = vpop.permute.xlu0 %1040
          %1042 = vrot.lane.b32.xlu0 %v1017, 7
          %v1043 = vpop.permute.xlu0 %1042
          %1044 = vrot.lane.b32.xlu0 %v1018, 7
          %v1045 = vpop.permute.xlu0 %1044
          %1046 = vrot.lane.b32.xlu0 %v1019, 7
          %v1047 = vpop.permute.xlu0 %1046
          %v1052 = vsel %vm1011, %v1029, %v1041
          %v1053 = vsel %vm1011, %v1031, %v1043
          %v1054 = vsel %vm1011, %v1033, %v1045
          %v1055 = vsel %vm1011, %v1035, %v1047
          %v1056 = vsel %vm1023, %v1052, %v1016
          %v1057 = vsel %vm1023, %v1053, %v1017
          %v1058 = vsel %vm1023, %v1054, %v1018
          %v1059 = vsel %vm1023, %v1055, %v1019
          %v1060 = vand.u32 %v1021, 2
          %vm1061 = vcmp.ne.s32.totalorder %v1060, 0
          %1066 = vrot.lane.b32.xlu0 %v1056, 126
          %v1067 = vpop.permute.xlu0 %1066
          %1068 = vrot.lane.b32.xlu0 %v1057, 126
          %v1069 = vpop.permute.xlu0 %1068
          %1070 = vrot.lane.b32.xlu0 %v1058, 126
          %v1071 = vpop.permute.xlu0 %1070
          %1072 = vrot.lane.b32.xlu0 %v1059, 126
          %v1073 = vpop.permute.xlu0 %1072
          %1078 = vrot.lane.b32.xlu0 %v1056, 6
          %v1079 = vpop.permute.xlu0 %1078
          %1080 = vrot.lane.b32.xlu0 %v1057, 6
          %v1081 = vpop.permute.xlu0 %1080
          %1082 = vrot.lane.b32.xlu0 %v1058, 6
          %v1083 = vpop.permute.xlu0 %1082
          %1084 = vrot.lane.b32.xlu0 %v1059, 6
          %v1085 = vpop.permute.xlu0 %1084
          %vm1090 = vcmask 48128
          %v1091 = vsel %vm1090, %v1067, %v1079
          %v1092 = vsel %vm1090, %v1069, %v1081
          %v1093 = vsel %vm1090, %v1071, %v1083
          %v1094 = vsel %vm1090, %v1073, %v1085
          %v1095 = vsel %vm1061, %v1091, %v1056
          %v1096 = vsel %vm1061, %v1092, %v1057
          %v1097 = vsel %vm1061, %v1093, %v1058
          %v1098 = vsel %vm1061, %v1094, %v1059
          %v1099 = vpack.c.bf16 %v1096, %v1095
          %v1100 = vpack.c.bf16 %v1098, %v1097
          %v1103 = vunpack.c.l.b16 %v1099
          %v1104 = vunpack.c.h.b16 %v1099
          %v1105 = vunpack.c.l.b16 %v1100
          %v1106 = vunpack.c.h.b16 %v1100
          %v1107 = vpack.c.b16 %v1103, %v1103
          %v1108 = vpack.c.b16 %v1104, %v1104
          %v1109 = vpack.c.b16 %v1105, %v1105
          %v1110 = vpack.c.b16 %v1106, %v1106
          %s1115 = smul.u32 %s666, 4
          %s1116 = smul.addr %s1115, 4
          %s1117 = scalar_lea.vmem %s231, %s1116 [#allocation10]
          %vm1118 = vcmask 27648
          %1119 = vst.msk [vmem:[%s1117] sm:$0xf] %vm1118, %v1107
          %1120 = vst.msk [vmem:[%s1117 + $0x4] sm:$0xf] %vm1118, %v1108
          %1121 = vst.msk [vmem:[%s1117 + $0x8] sm:$0xf] %vm1118, %v1109
          %1122 = vst.msk [vmem:[%s1117 + $0xc] sm:$0xf] %vm1118, %v1110
        $region49: #{ristdnet_forward.6} parent=31 // loop_footer
          %s670 = sadd.s32 1, %s666
        $region50: #{ristdnet_forward.6} parent=31 // loop_footer_branch
          %665 = sbr.rel target = $region46
        $region51: #{ristdnet_forward.6} parent=31 // loop_exit
          _
        %s1123 = sand.u32 %s111, 1
        %s1124 = scalar_lea.sflag [#allocation6], %s1123
        %s1125 = sand.u32 %s111, 1
        %s1126 = smul.addr %s1125, 64
        %s1127 = scalar_lea.vmem [#allocation10], %s1126
        // Predicated region
        $region52: #{ristdnet_forward.6} parent=31 // pred_check
          %p1128 = pneg %p121
        $region53: #{ristdnet_forward.6} parent=31 // pred_check_branch
          %1130 = sbr.rel (%p1128) target = $region55
        $region54: #{ristdnet_forward.6} parent=31 // pred_region
          %s1131 = smul.u32 4, %s26
          %s1133 = ssub.s32 1024, 1024
          %1134 = vsyncadd %s1124, %s1133
          %s1135 = smul.addr %s1131, 4
          %s1136 = smul.addr %s25, 16
          %s1137 = sadd.s32 %s1135, %s1136
          %s1138 = smul.addr %s1137, 64
          %s1139 = scalar_lea.hbm %s3, %s1138
          %s1140 = sshll.u32 %s1127, 4
          %s1141 = int_to_ptr.vmem [resolvable:$true] %s1140
          %1146 = dma.vmem_to_hbm [thread:$0]  %s1141, 1024, %s1139, %s1124, 64, 64, 4
        $region55: #{ristdnet_forward.6} parent=31 // pred_fallthru
          _
      $region32: #{ristdnet_forward.6} parent=5 // pred_fallthru
        _
      %p1147 = scmp.le.s32.totalorder 2, %s16
      // Predicated region
      $region56: #{ristdnet_forward.6} parent=5 // pred_check
        %p1148 = pneg %p1147
      $region57: #{ristdnet_forward.6} parent=5 // pred_check_branch
        %1150 = sbr.rel (%p1148) target = $region59
      $region58: #{ristdnet_forward.6} parent=5 // pred_region
        %s1151 = ssub.s32 %s16, 2
        // Predicated region
        $region60: #{ristdnet_forward.6} parent=58 // pred_check
          %p1152 = pneg %p127
        $region61: #{ristdnet_forward.6} parent=58 // pred_check_branch
          %1154 = sbr.rel (%p1152) target = $region63
        $region62: #{ristdnet_forward.6} parent=58 // pred_region
          %s1155 = sand.u32 %s112, 1
          %s1156 = scalar_lea.sflag [#allocation6], %s1155
          %s1157 = sand.u32 %s112, 1
          %s1158 = smul.addr %s1157, 64
          %s1159 = scalar_lea.vmem [#allocation10], %s1158
          %1160 = dma.done %s1156, 1024
        $region63: #{ristdnet_forward.6} parent=58 // pred_fallthru
          _
      $region59: #{ristdnet_forward.6} parent=5 // pred_fallthru
        _
    $region6: #{ristdnet_forward.6} parent=1 // loop_footer
      %s20 = sadd.s32 1, %s16
    $region7: #{ristdnet_forward.6} parent=1 // loop_footer_branch
      %15 = sbr.rel target = $region3
    $region8: #{ristdnet_forward.6} parent=1 // loop_exit
      _
    %1161 = vsyncpa [#allocation5], 1
    %s1162 = scalar_lea.sflag [#allocation5], 1
    %1163 = vsyncpa %s1162, 1
    %1164 = vsyncpa [#allocation8], 1
    %1165 = vsyncpa [#allocation6], 1
    %s1166 = scalar_lea.sflag [#allocation6], 1
    %1167 = vsyncpa %s1166, 1

// kernel: ristdnet_forward.7
$region0: #{ristdnet_forward.7}
  #allocation0 [shape = 'u32[]', space=smem, size = 0x4, offset = 0x4, fixed_abs, tag = 'smem constant byte address 0x4 - core index']
  #allocation1 [shape = 'u32[144,128]{1,0:T(1,128)}', space=vmem, size = 0x12000, scoped, tag = 'internal scratch']
  #allocation2 [shape = 'bf16[6,32,6]{2,1,0:T(16,128)(2,1)}', space=vmem, size = 0xc000, scoped, tag = 'scratch operand']
  #allocation3 [shape = 'bf16[288,4]{1,0:T(16,128)(2,1)}', space=vmem, size = 0x12000, scoped, tag = 'scratch operand']
  %s0 = inlined_call_operand.hbm [shape: bf16[2,4,32,4], index: 0, kind: input, shape index: {}]
  %s1 = inlined_call_operand.hbm [shape: bf16[16,288], index: 1, kind: input, shape index: {}]
  %s2 = inlined_call_operand.hbm [shape: f32[16,1], index: 2, kind: input, shape index: {}]
  %s3 = inlined_call_operand.hbm [shape: bf16[16,16], index: 3, kind: input, shape index: {}]
  %s4 = inlined_call_operand.hbm [shape: f32[16,1], index: 4, kind: input, shape index: {}]
  %s5 = inlined_call_operand.hbm [shape: f32[2,4,16,4], index: 5, kind: output, shape index: {}]
  %s6 = sld [smem:[#allocation0]]
  $region80: #{ristdnet_forward.7} parent=0
    _
  %s8 = ssub.s32 1, %s6
  %s9 = scalar_select 0, %s8, %s6
  $region1: #{ristdnet_forward.7} parent=0
    #allocation4 [shape = 'u8[65536]{0}', space=vmem, size = 0x10000, scoped, tag = 'input window, operand 0']
    #allocation5 [shape = 's32[2]{0}', space=sflag, size = 0x8, scoped, tag = 'scoped memory for ristdnet_forward.7']
    #allocation6 [shape = 's32[2]{0}', space=sflag, size = 0x8, scoped, tag = 'scoped memory for ristdnet_forward.7']
    #allocation7 [shape = 'u8[12288]{0}', space=vmem, size = 0x3000, scoped, tag = 'input window, operand 1, single buffered']
    #allocation8 [shape = 's32[1]{0}', space=sflag, size = 0x4, scoped, tag = 'scoped memory for ristdnet_forward.7']
    #allocation9 [shape = 'u8[8192]{0}', space=vmem, size = 0x2000, scoped, tag = 'input window, operand 2, single buffered']
    #allocation10 [shape = 'u8[4096]{0}', space=vmem, size = 0x1000, scoped, tag = 'input window, operand 3, single buffered']
    #allocation11 [shape = 's32[1]{0}', space=sflag, size = 0x4, scoped, tag = 'scoped memory for ristdnet_forward.7']
    #allocation12 [shape = 'u8[8192]{0}', space=vmem, size = 0x2000, scoped, tag = 'input window, operand 4, single buffered']
    #allocation13 [shape = 'u8[65536]{0}', space=vmem, size = 0x10000, scoped, tag = 'output window, operand 0']
    %10 = vsyncpa [#allocation5], 0
    %s11 = scalar_lea.sflag [#allocation5], 1
    %12 = vsyncpa %s11, 0
    %13 = vsyncpa [#allocation8], 0
    %14 = vsyncpa [#allocation11], 0
    %15 = vsyncpa [#allocation6], 0
    %s16 = scalar_lea.sflag [#allocation6], 1
    %17 = vsyncpa %s16, 0
    loop: start=0, step=1, limit=4
    $region2: #{ristdnet_forward.7} parent=1 // loop_pre_header
      _
    $region3: #{ristdnet_forward.7} parent=1 // loop_header
      %s19 = sphi 0, %s23
      %p20 = scmp.ge.s32.totalorder %s19, 4
      %s26 = sphi 0, %s38
      %s27 = sphi 0, %s34
      %s28 = sphi 0, %s26
      %s29 = sphi 0, %s27
      %s30 = sphi 0, %s28
      %s31 = sphi 0, %s29
      %s41 = sphi 0, %s43
      %s44 = sphi 0, %s41
      %s45 = sphi 0, %s44
      %s61 = sphi 0, %s45
      %s65 = sphi 0, %s65
      %s67 = sphi 0, %s65
      %s68 = sphi 0, %s67
      %s82 = sphi 0, %s68
      %s86 = sphi 0, %s86
      %s88 = sphi 0, %s86
      %s89 = sphi 0, %s88
      %s103 = sphi 0, %s89
      %s107 = sphi 0, %s107
      %s109 = sphi 0, %s107
      %s110 = sphi 0, %s109
      %s124 = sphi 0, %s110
      %s128 = sphi 0, %s128
      %s130 = sphi 0, %s128
      %s131 = sphi 0, %s130
      %s145 = sphi 0, %s131
      %s153 = sphi 0, %s155
      %s156 = sphi 0, %s153
      %s157 = sphi 0, %s156
      %s173 = sphi 0, %s157
    $region4: #{ristdnet_forward.7} parent=1 // loop_header_branch
      %22 = sbr.rel (%p20) target = $region8
    $region5: #{ristdnet_forward.7} parent=1 // loop_body
      %s24 = ssub.s32 %s19, 1
      %s25 = ssub.s32 %s19, 2
      %s32 = sadd.s32 1, %s27
      %p33 = scmp.ge.s32.totalorder %s32, 1
      %s34 = scalar_select %p33, 0, %s32
      %s35 = sadd.s32 1, %s26
      %s36 = scalar_select %p33, %s35, %s26
      %p37 = scmp.ge.s32.totalorder %s36, 2
      %s38 = scalar_select %p37, 0, %s36
      %s39 = ssub.s32 %s26, %s38
      %p40 = scmp.eq.s32.totalorder %s39, 0
      %s42 = sadd.s32 %s41, 1
      %s43 = scalar_select %p40, %s41, %s42
      %p46 = pneg %p40
      %p47 = scmp.eq.s32.totalorder %s19, 1
      %p48 = por %p46, %p47
      %p49 = scmp.ne.s32.totalorder %s41, %s44
      %p50 = scmp.eq.s32.totalorder %s19, 0
      %p51 = por %p49, %p50
      %p52 = scmp.ne.s32.totalorder %s41, %s44
      %p53 = scmp.eq.s32.totalorder %s24, 1
      %p54 = por %p52, %p53
      %p55 = scmp.ne.s32.totalorder %s44, %s45
      %p56 = scmp.eq.s32.totalorder %s24, 0
      %p57 = por %p55, %p56
      %p58 = scmp.ne.s32.totalorder %s44, %s45
      %p59 = scmp.eq.s32.totalorder %s25, 1
      %p60 = por %p58, %p59
      %p62 = scmp.ne.s32.totalorder %s45, %s61
      %p63 = scmp.eq.s32.totalorder %s25, 0
      %p64 = por %p62, %p63
      %s66 = sadd.s32 %s65, 1
      %p69 = scmp.eq.s32.totalorder %s19, 1
      %p70 = scmp.ne.s32.totalorder %s65, %s67
      %p71 = scmp.eq.s32.totalorder %s19, 0
      %p72 = por %p70, %p71
      %p73 = scmp.ne.s32.totalorder %s65, %s67
      %p74 = scmp.eq.s32.totalorder %s24, 1
      %p75 = por %p73, %p74
      %p76 = scmp.ne.s32.totalorder %s67, %s68
      %p77 = scmp.eq.s32.totalorder %s24, 0
      %p78 = por %p76, %p77
      %p79 = scmp.ne.s32.totalorder %s67, %s68
      %p80 = scmp.eq.s32.totalorder %s25, 1
      %p81 = por %p79, %p80
      %p83 = scmp.ne.s32.totalorder %s68, %s82
      %p84 = scmp.eq.s32.totalorder %s25, 0
      %p85 = por %p83, %p84
      %s87 = sadd.s32 %s86, 1
      %p90 = scmp.eq.s32.totalorder %s19, 1
      %p91 = scmp.ne.s32.totalorder %s86, %s88
      %p92 = scmp.eq.s32.totalorder %s19, 0
      %p93 = por %p91, %p92
      %p94 = scmp.ne.s32.totalorder %s86, %s88
      %p95 = scmp.eq.s32.totalorder %s24, 1
      %p96 = por %p94, %p95
      %p97 = scmp.ne.s32.totalorder %s88, %s89
      %p98 = scmp.eq.s32.totalorder %s24, 0
      %p99 = por %p97, %p98
      %p100 = scmp.ne.s32.totalorder %s88, %s89
      %p101 = scmp.eq.s32.totalorder %s25, 1
      %p102 = por %p100, %p101
      %p104 = scmp.ne.s32.totalorder %s89, %s103
      %p105 = scmp.eq.s32.totalorder %s25, 0
      %p106 = por %p104, %p105
      %s108 = sadd.s32 %s107, 1
      %p111 = scmp.eq.s32.totalorder %s19, 1
      %p112 = scmp.ne.s32.totalorder %s107, %s109
      %p113 = scmp.eq.s32.totalorder %s19, 0
      %p114 = por %p112, %p113
      %p115 = scmp.ne.s32.totalorder %s107, %s109
      %p116 = scmp.eq.s32.totalorder %s24, 1
      %p117 = por %p115, %p116
      %p118 = scmp.ne.s32.totalorder %s109, %s110
      %p119 = scmp.eq.s32.totalorder %s24, 0
      %p120 = por %p118, %p119
      %p121 = scmp.ne.s32.totalorder %s109, %s110
      %p122 = scmp.eq.s32.totalorder %s25, 1
      %p123 = por %p121, %p122
      %p125 = scmp.ne.s32.totalorder %s110, %s124
      %p126 = scmp.eq.s32.totalorder %s25, 0
      %p127 = por %p125, %p126
      %s129 = sadd.s32 %s128, 1
      %p132 = scmp.eq.s32.totalorder %s19, 1
      %p133 = scmp.ne.s32.totalorder %s128, %s130
      %p134 = scmp.eq.s32.totalorder %s19, 0
      %p135 = por %p133, %p134
      %p136 = scmp.ne.s32.totalorder %s128, %s130
      %p137 = scmp.eq.s32.totalorder %s24, 1
      %p138 = por %p136, %p137
      %p139 = scmp.ne.s32.totalorder %s130, %s131
      %p140 = scmp.eq.s32.totalorder %s24, 0
      %p141 = por %p139, %p140
      %p142 = scmp.ne.s32.totalorder %s130, %s131
      %p143 = scmp.eq.s32.totalorder %s25, 1
      %p144 = por %p142, %p143
      %p146 = scmp.ne.s32.totalorder %s131, %s145
      %p147 = scmp.eq.s32.totalorder %s25, 0
      %p148 = por %p146, %p147
      %s149 = ssub.s32 %s26, %s38
      %s150 = ssub.s32 %s27, %s34
      %s151 = sor.u32 %s149, %s150
      %p152 = scmp.eq.s32.totalorder %s151, 0
      %s154 = sadd.s32 %s153, 1
      %s155 = scalar_select %p152, %s153, %s154
      %p158 = pneg %p152
      %p159 = scmp.eq.s32.totalorder %s19, 1
      %p160 = por %p158, %p159
      %p161 = scmp.ne.s32.totalorder %s153, %s156
      %p162 = scmp.eq.s32.totalorder %s19, 0
      %p163 = por %p161, %p162
      %p164 = scmp.ne.s32.totalorder %s153, %s156
      %p165 = scmp.eq.s32.totalorder %s24, 1
      %p166 = por %p164, %p165
      %p167 = scmp.ne.s32.totalorder %s156, %s157
      %p168 = scmp.eq.s32.totalorder %s24, 0
      %p169 = por %p167, %p168
      %p170 = scmp.ne.s32.totalorder %s156, %s157
      %p171 = scmp.eq.s32.totalorder %s25, 1
      %p172 = por %p170, %p171
      %p174 = scmp.ne.s32.totalorder %s157, %s173
      %p175 = scmp.eq.s32.totalorder %s25, 0
      %p176 = por %p174, %p175
      %p177 = scmp.le.s32.totalorder 1, %s19
      %p178 = scmp.lt.s32.totalorder %s19, 3
      %p179 = pnand %p177, %p178
      %p180 = pneg %p179
      // Predicated region
      $region9: #{ristdnet_forward.7} parent=5 // pred_check
        _
      $region10: #{ristdnet_forward.7} parent=5 // pred_check_branch
        %182 = sbr.rel (%p179) target = $region12
      $region11: #{ristdnet_forward.7} parent=5 // pred_region
        %s183 = ssub.s32 %s19, 1
        // Predicated region
        $region13: #{ristdnet_forward.7} parent=11 // pred_check
          %p184 = pneg %p78
        $region14: #{ristdnet_forward.7} parent=11 // pred_check_branch
          %186 = sbr.rel (%p184) target = $region16
        $region15: #{ristdnet_forward.7} parent=11 // pred_region
          %s188 = ssub.s32 384, 384
          %189 = vsyncadd [#allocation8], %s188
          %s190 = sshll.u32 [#allocation7], 4
          %s191 = int_to_ptr.vmem [resolvable:$true] %s190
          %196 = dma.hbm_to_vmem [thread:$0]  %s1, 384, %s191, [#allocation8], 192, 192, 12
        $region16: #{ristdnet_forward.7} parent=11 // pred_fallthru
          _
        // Predicated region
        $region17: #{ristdnet_forward.7} parent=11 // pred_check
          %p197 = pneg %p99
        $region18: #{ristdnet_forward.7} parent=11 // pred_check_branch
          %199 = sbr.rel (%p197) target = $region20
        $region19: #{ristdnet_forward.7} parent=11 // pred_region
          %s201 = ssub.s32 256, 256
          %202 = vsyncadd [#allocation8], %s201
          %s203 = sshll.u32 [#allocation9], 4
          %s204 = int_to_ptr.vmem [resolvable:$true] %s203
          %209 = dma.hbm_to_vmem [thread:$0]  %s2, 256, %s204, [#allocation8], 128, 128, 8
        $region20: #{ristdnet_forward.7} parent=11 // pred_fallthru
          _
        // Predicated region
        $region21: #{ristdnet_forward.7} parent=11 // pred_check
          %p210 = pneg %p120
        $region22: #{ristdnet_forward.7} parent=11 // pred_check_branch
          %212 = sbr.rel (%p210) target = $region24
        $region23: #{ristdnet_forward.7} parent=11 // pred_region
          %s214 = ssub.s32 128, 128
          %215 = vsyncadd [#allocation11], %s214
          %s216 = sshll.u32 [#allocation10], 4
          %s217 = int_to_ptr.vmem [resolvable:$true] %s216
          %222 = dma.hbm_to_vmem [thread:$0]  %s3, 128, %s217, [#allocation11], 64, 64, 4
        $region24: #{ristdnet_forward.7} parent=11 // pred_fallthru
          _
        // Predicated region
        $region25: #{ristdnet_forward.7} parent=11 // pred_check
          %p223 = pneg %p141
        $region26: #{ristdnet_forward.7} parent=11 // pred_check_branch
          %225 = sbr.rel (%p223) target = $region28
        $region27: #{ristdnet_forward.7} parent=11 // pred_region
          %s227 = ssub.s32 256, 256
          %228 = vsyncadd [#allocation11], %s227
          %s229 = sshll.u32 [#allocation12], 4
          %s230 = int_to_ptr.vmem [resolvable:$true] %s229
          %235 = dma.hbm_to_vmem [thread:$0]  %s4, 256, %s230, [#allocation11], 128, 128, 8
        $region28: #{ristdnet_forward.7} parent=11 // pred_fallthru
          _
      $region12: #{ristdnet_forward.7} parent=5 // pred_fallthru
        _
      %p236 = scmp.lt.s32.totalorder %s19, 2
      // Predicated region
      $region29: #{ristdnet_forward.7} parent=5 // pred_check
        %p237 = pneg %p236
      $region30: #{ristdnet_forward.7} parent=5 // pred_check_branch
        %239 = sbr.rel (%p237) target = $region32
      $region31: #{ristdnet_forward.7} parent=5 // pred_region
        // Predicated region
        $region33: #{ristdnet_forward.7} parent=31 // pred_check
          %p240 = pneg %p51
        $region34: #{ristdnet_forward.7} parent=31 // pred_check_branch
          %242 = sbr.rel (%p240) target = $region36
        $region35: #{ristdnet_forward.7} parent=31 // pred_region
          %s243 = sand.u32 %s41, 1
          %s244 = scalar_lea.sflag [#allocation5], %s243
          %s245 = sand.u32 %s41, 1
          %s246 = smul.addr %s245, 64
          %s247 = scalar_lea.vmem [#allocation4], %s246
          %s249 = ssub.s32 1024, 1024
          %250 = vsyncadd %s244, %s249
          %s251 = smul.addr %s26, 16
          %s252 = smul.addr %s251, 64
          %s253 = scalar_lea.hbm %s0, %s252
          %s254 = sshll.u32 %s247, 4
          %s255 = int_to_ptr.vmem [resolvable:$true] %s254
          %260 = dma.hbm_to_vmem [thread:$0]  %s253, 1024, %s255, %s244, 64, 64, 4
        $region36: #{ristdnet_forward.7} parent=31 // pred_fallthru
          _
      $region32: #{ristdnet_forward.7} parent=5 // pred_fallthru
        _
      %p261 = scmp.le.s32.totalorder 1, %s19
      %p262 = scmp.lt.s32.totalorder %s19, 3
      %p263 = pnand %p261, %p262
      %p264 = pneg %p263
      // Predicated region
      $region37: #{ristdnet_forward.7} parent=5 // pred_check
        _
      $region38: #{ristdnet_forward.7} parent=5 // pred_check_branch
        %266 = sbr.rel (%p263) target = $region40
      $region39: #{ristdnet_forward.7} parent=5 // pred_region
        %s267 = ssub.s32 %s19, 1
        %s268 = sand.u32 %s44, 1
        %s269 = scalar_lea.sflag [#allocation5], %s268
        %s270 = sand.u32 %s44, 1
        %s271 = smul.addr %s270, 64
        %s272 = scalar_lea.vmem [#allocation4], %s271
        // Predicated region
        $region41: #{ristdnet_forward.7} parent=39 // pred_check
          %p273 = pneg %p57
        $region42: #{ristdnet_forward.7} parent=39 // pred_check_branch
          %275 = sbr.rel (%p273) target = $region44
        $region43: #{ristdnet_forward.7} parent=39 // pred_region
          %276 = dma.done %s269, 1024
        $region44: #{ristdnet_forward.7} parent=39 // pred_fallthru
          _
        // Predicated region
        $region45: #{ristdnet_forward.7} parent=39 // pred_check
          %p277 = pneg %p78
        $region46: #{ristdnet_forward.7} parent=39 // pred_check_branch
          %279 = sbr.rel (%p277) target = $region48
        $region47: #{ristdnet_forward.7} parent=39 // pred_region
          %280 = dma.done [#allocation8], 384
        $region48: #{ristdnet_forward.7} parent=39 // pred_fallthru
          _
        // Predicated region
        $region49: #{ristdnet_forward.7} parent=39 // pred_check
          %p281 = pneg %p99
        $region50: #{ristdnet_forward.7} parent=39 // pred_check_branch
          %283 = sbr.rel (%p281) target = $region52
        $region51: #{ristdnet_forward.7} parent=39 // pred_region
          %284 = dma.done [#allocation8], 256
        $region52: #{ristdnet_forward.7} parent=39 // pred_fallthru
          _
        // Predicated region
        $region53: #{ristdnet_forward.7} parent=39 // pred_check
          %p285 = pneg %p120
        $region54: #{ristdnet_forward.7} parent=39 // pred_check_branch
          %287 = sbr.rel (%p285) target = $region56
        $region55: #{ristdnet_forward.7} parent=39 // pred_region
          %288 = dma.done [#allocation11], 128
        $region56: #{ristdnet_forward.7} parent=39 // pred_fallthru
          _
        // Predicated region
        $region57: #{ristdnet_forward.7} parent=39 // pred_check
          %p289 = pneg %p141
        $region58: #{ristdnet_forward.7} parent=39 // pred_check_branch
          %291 = sbr.rel (%p289) target = $region60
        $region59: #{ristdnet_forward.7} parent=39 // pred_region
          %292 = dma.done [#allocation11], 256
        $region60: #{ristdnet_forward.7} parent=39 // pred_fallthru
          _
        %s293 = sand.u32 %s44, 1
        %s294 = scalar_lea.sflag [#allocation5], %s293
        %s295 = sand.u32 %s44, 1
        %s296 = smul.addr %s295, 64
        %s297 = scalar_lea.vmem [#allocation4], %s296
        %p298 = pneg %p57
        %p299 = pneg %p54
        %p300 = pneg %p78
        %p301 = pneg %p75
        %p302 = pneg %p99
        %p303 = pneg %p96
        %p304 = pneg %p120
        %p305 = pneg %p117
        %p306 = pneg %p141
        %p307 = pneg %p138
        %p308 = pneg %p169
        %p309 = pneg %p166
        %s310 = sand.u32 %s156, 1
        %s311 = scalar_lea.sflag [#allocation6], %s310
        %s312 = sand.u32 %s156, 1
        %s313 = smul.addr %s312, 64
        %s314 = scalar_lea.vmem [#allocation13], %s313
        %s315 = smul.u32 4, %s29
        %s317 = smul.u32 %s29, 4
        %vm318 = vcmask 48128
        %319 = vst.msk [vmem:[#allocation2] sm:$0xff] %vm318, 0
        %320 = vst.msk [vmem:[#allocation2 + $0x8] sm:$0xff] %vm318, 0
        %321 = vst.msk [vmem:[#allocation2 + $0x10] sm:$0xff] %vm318, 0
        %322 = vst.msk [vmem:[#allocation2 + $0x18] sm:$0xff] %vm318, 0
        %323 = vst.msk [vmem:[#allocation2 + $0x20] sm:$0xff] %vm318, 0
        %324 = vst.msk [vmem:[#allocation2 + $0x28] sm:$0xff] %vm318, 0
        %325 = vst.msk [vmem:[#allocation2 + $0x30] sm:$0xff] %vm318, 0
        %326 = vst.msk [vmem:[#allocation2 + $0x38] sm:$0xff] %vm318, 0
        %327 = vst.msk [vmem:[#allocation2 + $0x40] sm:$0xff] %vm318, 0
        %328 = vst.msk [vmem:[#allocation2 + $0x48] sm:$0xff] %vm318, 0
        %329 = vst.msk [vmem:[#allocation2 + $0x50] sm:$0xff] %vm318, 0
        %330 = vst.msk [vmem:[#allocation2 + $0x58] sm:$0xff] %vm318, 0
        %s331 = ssub.s32 %s317, 1
        %p332 = scmp.gt.s32.totalorder %s331, 0
        %s333 = scalar_select %p332, %s331, 0
        %p334 = scmp.lt.s32.totalorder %s333, 3
        %s335 = scalar_select %p334, %s333, 3
        %p336 = scmp.ge.s32.totalorder %s331, 0
        %p337 = scmp.lt.s32.totalorder %s331, 4
        %p338 = pnand %p336, %p337
        %p339 = pneg %p338
        %s340 = scalar_select %p339, 1, 0
        %s341 = scvt.s32.f32 %s340
        %p343 = scmp.ne.f32.partialorder %s341, %s341
        %s344 = sshrl.u32 %s341, 16
        %s345 = sand.u32 %s344, 1
        %s346 = sadd.s32 32767, %s345
        %s347 = sadd.s32 %s341, %s346
        %s348 = sand.u32 %s347, 4294901760
        %s349 = scalar_select %p343, 2143289344, %s348
        %s351 = sshrl.u32 %s349, 16
        %s352 = smul.u32 %s335, 4
        %s353 = smul.addr %s352, 4
        %s354 = scalar_lea.vmem %s272, %s353 [#allocation4]
        %v355 = vld [vmem:[%s354] sm:$0xf]
        %v356 = vld [vmem:[%s354 + $0x4] sm:$0xf]
        %v357 = vld [vmem:[%s354 + $0x8] sm:$0xf]
        %v358 = vld [vmem:[%s354 + $0xc] sm:$0xf]
        %s359 = sshll.u32 %s351, 16
        %s360 = sor.u32 %s351, %s359
        %v361 = vstv %s360
        %v363 = vmul.bf16 %v355, %v361
        %v364 = vmul.bf16 %v356, %v361
        %v365 = vmul.bf16 %v357, %v361
        %v366 = vmul.bf16 %v358, %v361
        %v371 = vunpack.c.l.b16 %v363
        %v372 = vunpack.c.l.b16 %v364
        %v373 = vunpack.c.l.b16 %v365
        %v374 = vunpack.c.l.b16 %v366
        %v375 = vpack.c.b16 %v372, %v371
        %v376 = vpack.c.b16 %v374, %v373
        %377 = vrot.lane.b32.xlu0 %v375, 1
        %v378 = vpop.permute.xlu0 %377
        %379 = vrot.lane.b32.xlu0 %v376, 1
        %v380 = vpop.permute.xlu0 %379
        %vm383 = vcmask 39944
        %384 = vst.msk [vmem:[#allocation2] sm:$0xff] %vm383, %v378
        %385 = vst.msk [vmem:[#allocation2 + $0x8] sm:$0xff] %vm383, %v380
        %p386 = scmp.gt.s32.totalorder %s317, 0
        %s387 = scalar_select %p386, %s317, 0
        %p388 = scmp.lt.s32.totalorder %s387, 3
        %s389 = scalar_select %p388, %s387, 3
        %p390 = scmp.ge.s32.totalorder %s317, 0
        %p391 = scmp.lt.s32.totalorder %s317, 4
        %p392 = pnand %p390, %p391
        %p393 = pneg %p392
        %s394 = scalar_select %p393, 1, 0
        %s395 = scvt.s32.f32 %s394
        %p397 = scmp.ne.f32.partialorder %s395, %s395
        %s398 = sshrl.u32 %s395, 16
        %s399 = sand.u32 %s398, 1
        %s400 = sadd.s32 32767, %s399
        %s401 = sadd.s32 %s395, %s400
        %s402 = sand.u32 %s401, 4294901760
        %s403 = scalar_select %p397, 2143289344, %s402
        %s405 = sshrl.u32 %s403, 16
        %s406 = smul.u32 %s389, 4
        %s407 = smul.addr %s406, 4
        %s408 = scalar_lea.vmem %s272, %s407 [#allocation4]
        %v409 = vld [vmem:[%s408] sm:$0xf]
        %v410 = vld [vmem:[%s408 + $0x4] sm:$0xf]
        %v411 = vld [vmem:[%s408 + $0x8] sm:$0xf]
        %v412 = vld [vmem:[%s408 + $0xc] sm:$0xf]
        %s413 = sshll.u32 %s405, 16
        %s414 = sor.u32 %s405, %s413
        %v415 = vstv %s414
        %v417 = vmul.bf16 %v409, %v415
        %v418 = vmul.bf16 %v410, %v415
        %v419 = vmul.bf16 %v411, %v415
        %v420 = vmul.bf16 %v412, %v415
        %v425 = vunpack.c.l.b16 %v417
        %v426 = vunpack.c.l.b16 %v418
        %v427 = vunpack.c.l.b16 %v419
        %v428 = vunpack.c.l.b16 %v420
        %v429 = vpack.c.b16 %v426, %v425
        %v430 = vpack.c.b16 %v428, %v427
        %431 = vrot.lane.b32.xlu0 %v429, 1
        %v432 = vpop.permute.xlu0 %431
        %433 = vrot.lane.b32.xlu0 %v430, 1
        %v434 = vpop.permute.xlu0 %433
        %s437 = scalar_lea.vmem [#allocation2], 16
        %438 = vst.msk [vmem:[%s437] sm:$0xff] %vm383, %v432
        %439 = vst.msk [vmem:[%s437 + $0x8] sm:$0xff] %vm383, %v434
        %s440 = sadd.s32 %s317, 1
        %p441 = scmp.gt.s32.totalorder %s440, 0
        %s442 = scalar_select %p441, %s440, 0
        %p443 = scmp.lt.s32.totalorder %s442, 3
        %s444 = scalar_select %p443, %s442, 3
        %p445 = scmp.ge.s32.totalorder %s440, 0
        %p446 = scmp.lt.s32.totalorder %s440, 4
        %p447 = pnand %p445, %p446
        %p448 = pneg %p447
        %s449 = scalar_select %p448, 1, 0
        %s450 = scvt.s32.f32 %s449
        %p452 = scmp.ne.f32.partialorder %s450, %s450
        %s453 = sshrl.u32 %s450, 16
        %s454 = sand.u32 %s453, 1
        %s455 = sadd.s32 32767, %s454
        %s456 = sadd.s32 %s450, %s455
        %s457 = sand.u32 %s456, 4294901760
        %s458 = scalar_select %p452, 2143289344, %s457
        %s460 = sshrl.u32 %s458, 16
        %s461 = smul.u32 %s444, 4
        %s462 = smul.addr %s461, 4
        %s463 = scalar_lea.vmem %s272, %s462 [#allocation4]
        %v464 = vld [vmem:[%s463] sm:$0xf]
        %v465 = vld [vmem:[%s463 + $0x4] sm:$0xf]
        %v466 = vld [vmem:[%s463 + $0x8] sm:$0xf]
        %v467 = vld [vmem:[%s463 + $0xc] sm:$0xf]
        %s468 = sshll.u32 %s460, 16
        %s469 = sor.u32 %s460, %s468
        %v470 = vstv %s469
        %v472 = vmul.bf16 %v464, %v470
        %v473 = vmul.bf16 %v465, %v470
        %v474 = vmul.bf16 %v466, %v470
        %v475 = vmul.bf16 %v467, %v470
        %v480 = vunpack.c.l.b16 %v472
        %v481 = vunpack.c.l.b16 %v473
        %v482 = vunpack.c.l.b16 %v474
        %v483 = vunpack.c.l.b16 %v475
        %v484 = vpack.c.b16 %v481, %v480
        %v485 = vpack.c.b16 %v483, %v482
        %486 = vrot.lane.b32.xlu0 %v484, 1
        %v487 = vpop.permute.xlu0 %486
        %488 = vrot.lane.b32.xlu0 %v485, 1
        %v489 = vpop.permute.xlu0 %488
        %s492 = scalar_lea.vmem [#allocation2], 32
        %493 = vst.msk [vmem:[%s492] sm:$0xff] %vm383, %v487
        %494 = vst.msk [vmem:[%s492 + $0x8] sm:$0xff] %vm383, %v489
        %s495 = sadd.s32 %s317, 2
        %p496 = scmp.gt.s32.totalorder %s495, 0
        %s497 = scalar_select %p496, %s495, 0
        %p498 = scmp.lt.s32.totalorder %s497, 3
        %s499 = scalar_select %p498, %s497, 3
        %p500 = scmp.ge.s32.totalorder %s495, 0
        %p501 = scmp.lt.s32.totalorder %s495, 4
        %p502 = pnand %p500, %p501
        %p503 = pneg %p502
        %s504 = scalar_select %p503, 1, 0
        %s505 = scvt.s32.f32 %s504
        %p507 = scmp.ne.f32.partialorder %s505, %s505
        %s508 = sshrl.u32 %s505, 16
        %s509 = sand.u32 %s508, 1
        %s510 = sadd.s32 32767, %s509
        %s511 = sadd.s32 %s505, %s510
        %s512 = sand.u32 %s511, 4294901760
        %s513 = scalar_select %p507, 2143289344, %s512
        %s515 = sshrl.u32 %s513, 16
        %s516 = smul.u32 %s499, 4
        %s517 = smul.addr %s516, 4
        %s518 = scalar_lea.vmem %s272, %s517 [#allocation4]
        %v519 = vld [vmem:[%s518] sm:$0xf]
        %v520 = vld [vmem:[%s518 + $0x4] sm:$0xf]
        %v521 = vld [vmem:[%s518 + $0x8] sm:$0xf]
        %v522 = vld [vmem:[%s518 + $0xc] sm:$0xf]
        %s523 = sshll.u32 %s515, 16
        %s524 = sor.u32 %s515, %s523
        %v525 = vstv %s524
        %v527 = vmul.bf16 %v519, %v525
        %v528 = vmul.bf16 %v520, %v525
        %v529 = vmul.bf16 %v521, %v525
        %v530 = vmul.bf16 %v522, %v525
        %v535 = vunpack.c.l.b16 %v527
        %v536 = vunpack.c.l.b16 %v528
        %v537 = vunpack.c.l.b16 %v529
        %v538 = vunpack.c.l.b16 %v530
        %v539 = vpack.c.b16 %v536, %v535
        %v540 = vpack.c.b16 %v538, %v537
        %541 = vrot.lane.b32.xlu0 %v539, 1
        %v542 = vpop.permute.xlu0 %541
        %543 = vrot.lane.b32.xlu0 %v540, 1
        %v544 = vpop.permute.xlu0 %543
        %s547 = scalar_lea.vmem [#allocation2], 48
        %548 = vst.msk [vmem:[%s547] sm:$0xff] %vm383, %v542
        %549 = vst.msk [vmem:[%s547 + $0x8] sm:$0xff] %vm383, %v544
        %s550 = sadd.s32 %s317, 3
        %p551 = scmp.gt.s32.totalorder %s550, 0
        %s552 = scalar_select %p551, %s550, 0
        %p553 = scmp.lt.s32.totalorder %s552, 3
        %s554 = scalar_select %p553, %s552, 3
        %p555 = scmp.ge.s32.totalorder %s550, 0
        %p556 = scmp.lt.s32.totalorder %s550, 4
        %p557 = pnand %p555, %p556
        %p558 = pneg %p557
        %s559 = scalar_select %p558, 1, 0
        %s560 = scvt.s32.f32 %s559
        %p562 = scmp.ne.f32.partialorder %s560, %s560
        %s563 = sshrl.u32 %s560, 16
        %s564 = sand.u32 %s563, 1
        %s565 = sadd.s32 32767, %s564
        %s566 = sadd.s32 %s560, %s565
        %s567 = sand.u32 %s566, 4294901760
        %s568 = scalar_select %p562, 2143289344, %s567
        %s570 = sshrl.u32 %s568, 16
        %s571 = smul.u32 %s554, 4
        %s572 = smul.addr %s571, 4
        %s573 = scalar_lea.vmem %s272, %s572 [#allocation4]
        %v574 = vld [vmem:[%s573] sm:$0xf]
        %v575 = vld [vmem:[%s573 + $0x4] sm:$0xf]
        %v576 = vld [vmem:[%s573 + $0x8] sm:$0xf]
        %v577 = vld [vmem:[%s573 + $0xc] sm:$0xf]
        %s578 = sshll.u32 %s570, 16
        %s579 = sor.u32 %s570, %s578
        %v580 = vstv %s579
        %v582 = vmul.bf16 %v574, %v580
        %v583 = vmul.bf16 %v575, %v580
        %v584 = vmul.bf16 %v576, %v580
        %v585 = vmul.bf16 %v577, %v580
        %v590 = vunpack.c.l.b16 %v582
        %v591 = vunpack.c.l.b16 %v583
        %v592 = vunpack.c.l.b16 %v584
        %v593 = vunpack.c.l.b16 %v585
        %v594 = vpack.c.b16 %v591, %v590
        %v595 = vpack.c.b16 %v593, %v592
        %596 = vrot.lane.b32.xlu0 %v594, 1
        %v597 = vpop.permute.xlu0 %596
        %598 = vrot.lane.b32.xlu0 %v595, 1
        %v599 = vpop.permute.xlu0 %598
        %s602 = scalar_lea.vmem [#allocation2], 64
        %603 = vst.msk [vmem:[%s602] sm:$0xff] %vm383, %v597
        %604 = vst.msk [vmem:[%s602 + $0x8] sm:$0xff] %vm383, %v599
        %s605 = sadd.s32 %s317, 4
        %p606 = scmp.gt.s32.totalorder %s605, 0
        %s607 = scalar_select %p606, %s605, 0
        %p608 = scmp.lt.s32.totalorder %s607, 3
        %s609 = scalar_select %p608, %s607, 3
        %p610 = scmp.ge.s32.totalorder %s605, 0
        %p611 = scmp.lt.s32.totalorder %s605, 4
        %p612 = pnand %p610, %p611
        %p613 = pneg %p612
        %s614 = scalar_select %p613, 1, 0
        %s615 = scvt.s32.f32 %s614
        %p617 = scmp.ne.f32.partialorder %s615, %s615
        %s618 = sshrl.u32 %s615, 16
        %s619 = sand.u32 %s618, 1
        %s620 = sadd.s32 32767, %s619
        %s621 = sadd.s32 %s615, %s620
        %s622 = sand.u32 %s621, 4294901760
        %s623 = scalar_select %p617, 2143289344, %s622
        %s625 = sshrl.u32 %s623, 16
        %s626 = smul.u32 %s609, 4
        %s627 = smul.addr %s626, 4
        %s628 = scalar_lea.vmem %s272, %s627 [#allocation4]
        %v629 = vld [vmem:[%s628] sm:$0xf]
        %v630 = vld [vmem:[%s628 + $0x4] sm:$0xf]
        %v631 = vld [vmem:[%s628 + $0x8] sm:$0xf]
        %v632 = vld [vmem:[%s628 + $0xc] sm:$0xf]
        %s633 = sshll.u32 %s625, 16
        %s634 = sor.u32 %s625, %s633
        %v635 = vstv %s634
        %v637 = vmul.bf16 %v629, %v635
        %v638 = vmul.bf16 %v630, %v635
        %v639 = vmul.bf16 %v631, %v635
        %v640 = vmul.bf16 %v632, %v635
        %v645 = vunpack.c.l.b16 %v637
        %v646 = vunpack.c.l.b16 %v638
        %v647 = vunpack.c.l.b16 %v639
        %v648 = vunpack.c.l.b16 %v640
        %v649 = vpack.c.b16 %v646, %v645
        %v650 = vpack.c.b16 %v648, %v647
        %651 = vrot.lane.b32.xlu0 %v649, 1
        %v652 = vpop.permute.xlu0 %651
        %653 = vrot.lane.b32.xlu0 %v650, 1
        %v654 = vpop.permute.xlu0 %653
        %s657 = scalar_lea.vmem [#allocation2], 80
        %658 = vst.msk [vmem:[%s657] sm:$0xff] %vm383, %v652
        %659 = vst.msk [vmem:[%s657 + $0x8] sm:$0xff] %vm383, %v654
        loop: start=0, step=1, limit=4
        $region61: #{ristdnet_forward.7} parent=39 // loop_pre_header
          _
        $region62: #{ristdnet_forward.7} parent=39 // loop_header
          %s661 = sphi 0, %s665
          %p662 = scmp.ge.s32.totalorder %s661, 4
        $region63: #{ristdnet_forward.7} parent=39 // loop_header_branch
          %664 = sbr.rel (%p662) target = $region67
        $region64: #{ristdnet_forward.7} parent=39 // loop_body
          %s666 = smul.u32 %s661, 2
          %s667 = smul.addr %s666, 8
          %s668 = scalar_lea.vmem [#allocation2], %s667
          %v669 = vld [vmem:[%s668] sm:$0xff]
          %v670 = vld [vmem:[%s668 + $0x8] sm:$0xff]
          %vm671 = vcmask 31744
          %672 = vst.msk [vmem:[#allocation3] sm:$0xff] %vm671, %v669
          %673 = vst.msk [vmem:[#allocation3 + $0x8] sm:$0xff] %vm671, %v670
          %676 = vrot.lane.b32.xlu0 %v669, 127
          %v677 = vpop.permute.xlu0 %676
          %678 = vrot.lane.b32.xlu0 %v670, 127
          %v679 = vpop.permute.xlu0 %678
          %682 = vst.msk [vmem:[#allocation3 + $0x10] sm:$0xff] %vm671, %v677
          %683 = vst.msk [vmem:[#allocation3 + $0x18] sm:$0xff] %vm671, %v679
          %684 = vrot.lane.b32.xlu0 %v669, 126
          %v685 = vpop.permute.xlu0 %684
          %686 = vrot.lane.b32.xlu0 %v670, 126
          %v687 = vpop.permute.xlu0 %686
          %690 = vst.msk [vmem:[#allocation3 + $0x20] sm:$0xff] %vm671, %v685
          %691 = vst.msk [vmem:[#allocation3 + $0x28] sm:$0xff] %vm671, %v687
          %s692 = sadd.s32 %s661, 1
          %s693 = smul.u32 %s692, 2
          %s694 = smul.addr %s693, 8
          %s695 = scalar_lea.vmem [#allocation2], %s694
          %v696 = vld [vmem:[%s695] sm:$0xff]
          %v697 = vld [vmem:[%s695 + $0x8] sm:$0xff]
          %698 = vst.msk [vmem:[#allocation3 + $0x30] sm:$0xff] %vm671, %v696
          %699 = vst.msk [vmem:[#allocation3 + $0x38] sm:$0xff] %vm671, %v697
          %702 = vrot.lane.b32.xlu0 %v696, 127
          %v703 = vpop.permute.xlu0 %702
          %704 = vrot.lane.b32.xlu0 %v697, 127
          %v705 = vpop.permute.xlu0 %704
          %708 = vst.msk [vmem:[#allocation3 + $0x40] sm:$0xff] %vm671, %v703
          %709 = vst.msk [vmem:[#allocation3 + $0x48] sm:$0xff] %vm671, %v705
          %710 = vrot.lane.b32.xlu0 %v696, 126
          %v711 = vpop.permute.xlu0 %710
          %712 = vrot.lane.b32.xlu0 %v697, 126
          %v713 = vpop.permute.xlu0 %712
          %716 = vst.msk [vmem:[#allocation3 + $0x50] sm:$0xff] %vm671, %v711
          %717 = vst.msk [vmem:[#allocation3 + $0x58] sm:$0xff] %vm671, %v713
          %s718 = sadd.s32 %s661, 2
          %s719 = smul.u32 %s718, 2
          %s720 = smul.addr %s719, 8
          %s721 = scalar_lea.vmem [#allocation2], %s720
          %v722 = vld [vmem:[%s721] sm:$0xff]
          %v723 = vld [vmem:[%s721 + $0x8] sm:$0xff]
          %724 = vst.msk [vmem:[#allocation3 + $0x60] sm:$0xff] %vm671, %v722
          %725 = vst.msk [vmem:[#allocation3 + $0x68] sm:$0xff] %vm671, %v723
          %728 = vrot.lane.b32.xlu0 %v722, 127
          %v729 = vpop.permute.xlu0 %728
          %730 = vrot.lane.b32.xlu0 %v723, 127
          %v731 = vpop.permute.xlu0 %730
          %734 = vst.msk [vmem:[#allocation3 + $0x70] sm:$0xff] %vm671, %v729
          %735 = vst.msk [vmem:[#allocation3 + $0x78] sm:$0xff] %vm671, %v731
          %736 = vrot.lane.b32.xlu0 %v722, 126
          %v737 = vpop.permute.xlu0 %736
          %738 = vrot.lane.b32.xlu0 %v723, 126
          %v739 = vpop.permute.xlu0 %738
          %742 = vst.msk [vmem:[#allocation3 + $0x80] sm:$0xff] %vm671, %v737
          %743 = vst.msk [vmem:[#allocation3 + $0x88] sm:$0xff] %vm671, %v739
          %v744 = vld [vmem:[#allocation7] sm:$0xff]
          %v745 = vld [vmem:[#allocation7 + $0x8] sm:$0xf]
          %v746 = vld [vmem:[#allocation7 + $0xc] sm:$0xff]
          %v747 = vld [vmem:[#allocation7 + $0x14] sm:$0xf]
          %v748 = vld [vmem:[#allocation3] sm:$0xff]
          %v749 = vld [vmem:[#allocation3 + $0x8] sm:$0xff]
          %v750 = vld [vmem:[#allocation3 + $0x10] sm:$0xff]
          %v751 = vld [vmem:[#allocation3 + $0x18] sm:$0xff]
          %v752 = vld [vmem:[#allocation3 + $0x20] sm:$0xff]
          %v753 = vld [vmem:[#allocation3 + $0x28] sm:$0xff]
          %v754 = vld [vmem:[#allocation3 + $0x30] sm:$0xff]
          %v755 = vld [vmem:[#allocation3 + $0x38] sm:$0xff]
          %v756 = vld [vmem:[#allocation3 + $0x40] sm:$0xff]
          %v757 = vld [vmem:[#allocation3 + $0x48] sm:$0xff]
          %v758 = vld [vmem:[#allocation3 + $0x50] sm:$0xff]
          %v759 = vld [vmem:[#allocation3 + $0x58] sm:$0xff]
          %v760 = vld [vmem:[#allocation3 + $0x60] sm:$0xff]
          %v761 = vld [vmem:[#allocation3 + $0x68] sm:$0xff]
          %v762 = vld [vmem:[#allocation3 + $0x70] sm:$0xff]
          %v763 = vld [vmem:[#allocation3 + $0x78] sm:$0xff]
          %v764 = vld [vmem:[#allocation3 + $0x80] sm:$0xff]
          %v765 = vld [vmem:[#allocation3 + $0x88] sm:$0xff]
          %v766 = vld [vmem:[#allocation9] sm:$0xff]
          %v767 = vld [vmem:[#allocation9 + $0x8] sm:$0xff]
          %769 = vset.pattern.permute.xlu0 0
          %770 = vperm.xlu0 %769, %v766
          %v771 = vpop.permute.xlu0 %770
          %774 = vset.pattern.permute.xlu0 0
          %775 = vperm.xlu0 %774, %v767
          %v776 = vpop.permute.xlu0 %775
          %v782 = vunpack.c.l.b16 %v744
          %v783 = vunpack.c.h.b16 %v744
          %v784 = vunpack.c.l.b16 %v745
          %v785 = vunpack.c.l.b16 %v746
          %v786 = vunpack.c.h.b16 %v746
          %v787 = vunpack.c.l.b16 %v747
          %v788 = vpack.c.b16 %v785, %v782
          %v789 = vpack.c.b16 %v786, %v783
          %v790 = vpack.c.b16 %v787, %v784
          %vm793 = vcmask 261120
          %v795 = vsel %vm793, %v790, 0
          %797 = vmatprep.subr.bf16.mxu0 0
          %798 = vmatpush1.bf16.msra.mxu0 %v748
          %799 = vmatprep.subr.bf16.mxu0 0
          %800 = vmatpush1.bf16.msra.mxu0 %v749
          %801 = vmatprep.subr.bf16.mxu0 0
          %802 = vmatpush1.bf16.msra.mxu0 %v750
          %803 = vmatprep.subr.bf16.mxu0 0
          %804 = vmatpush1.bf16.msra.mxu0 %v751
          %805 = vmatprep.subr.bf16.mxu0 0
          %806 = vmatpush1.bf16.msra.mxu0 %v752
          %807 = vmatprep.subr.bf16.mxu0 0
          %808 = vmatpush1.bf16.msra.mxu0 %v753
          %809 = vmatprep.subr.bf16.mxu0 0
          %810 = vmatpush1.bf16.msra.mxu0 %v754
          %811 = vmatprep.subr.bf16.mxu0 0
          %812 = vmatpush1.bf16.msra.mxu0 %v755
          %813 = vmatprep.subr.bf16.mxu0 0
          %814 = vmatpush1.bf16.msra.mxu0 %v756
          %815 = vmatprep.subr.bf16.mxu0 0
          %816 = vmatpush1.bf16.msra.mxu0 %v757
          %817 = vmatprep.subr.bf16.mxu0 0
          %818 = vmatpush1.bf16.msra.mxu0 %v758
          %819 = vmatprep.subr.bf16.mxu0 0
          %820 = vmatpush1.bf16.msra.mxu0 %v759
          %821 = vmatprep.subr.bf16.mxu0 0
          %822 = vmatpush1.bf16.msra.mxu0 %v760
          %823 = vmatprep.subr.bf16.mxu0 0
          %824 = vmatpush1.bf16.msra.mxu0 %v761
          %825 = vmatprep.subr.bf16.mxu0 0
          %826 = vmatpush1.bf16.msra.mxu0 %v762
          %827 = vmatprep.subr.bf16.mxu0 0
          %828 = vmatpush1.bf16.msra.mxu0 %v763
          %829 = vmatprep.mubr.bf16.mxu0 %v789
          %830 = vmatmul.mubr.bf16.gmra.mrb[0].mxu0 %v788
          %v831 = vpop.f32.mrb[0].mxu0
          %v832 = vadd.f32 %v771, %v831
          %v833 = vpop.f32.mrb[0].mxu0
          %v834 = vpop.f32.mrb[0].mxu0
          %v835 = vadd.f32 %v776, %v834
          %v836 = vpop.f32.mrb[0].mxu0
          %837 = vdwg.mxu0
          %838 = vmatprep.subr.bf16.mxu0 0
          %839 = vmatpush1.bf16.msra.mxu0 %v764
          %840 = vmatprep.subr.bf16.mxu0 0
          %841 = vmatpush1.bf16.msra.mxu0 %v765
          %842 = vmatprep.subr.bf16.mxu0 0
          %843 = vmatpush1.bf16.msra.mxu0 0
          %844 = vmatprep.subr.bf16.mxu0 0
          %845 = vmatpush1.bf16.msra.mxu0 0
          %846 = vmatprep.subr.bf16.mxu0 0
          %847 = vmatpush1.bf16.msra.mxu0 0
          %848 = vmatprep.subr.bf16.mxu0 0
          %849 = vmatpush1.bf16.msra.mxu0 0
          %850 = vmatprep.subr.bf16.mxu0 0
          %851 = vmatpush1.bf16.msra.mxu0 0
          %852 = vmatprep.subr.bf16.mxu0 0
          %853 = vmatpush1.bf16.msra.mxu0 0
          %854 = vmatprep.subr.bf16.mxu0 0
          %855 = vmatpush1.bf16.msra.mxu0 0
          %856 = vmatprep.subr.bf16.mxu0 0
          %857 = vmatpush1.bf16.msra.mxu0 0
          %858 = vmatprep.subr.bf16.mxu0 0
          %859 = vmatpush1.bf16.msra.mxu0 0
          %860 = vmatprep.subr.bf16.mxu0 0
          %861 = vmatpush1.bf16.msra.mxu0 0
          %862 = vmatprep.subr.bf16.mxu0 0
          %863 = vmatpush1.bf16.msra.mxu0 0
          %864 = vmatprep.subr.bf16.mxu0 0
          %865 = vmatpush1.bf16.msra.mxu0 0
          %866 = vmatprep.subr.bf16.mxu0 0
          %867 = vmatpush1.bf16.msra.mxu0 0
          %868 = vmatprep.subr.bf16.mxu0 0
          %869 = vmatpush1.bf16.msra.mxu0 0
          %870 = vmatprep.mubr.bf16.mxu0 0
          %871 = vmatmul.mubr.bf16.gmra.mrb[0].mxu0 %v795
          %v872 = vpop.f32.mrb[0].mxu0
          %v873 = vadd.f32 %v832, %v872
          %v874 = vpop.f32.mrb[0].mxu0
          %v875 = vpop.f32.mrb[0].mxu0
          %v876 = vadd.f32 %v835, %v875
          %v877 = vpop.f32.mrb[0].mxu0
          %878 = vdwg.mxu0
          %v879 = vmax.f32 %v873, 0.0
          %v880 = vmax.f32 %v876, 0.0
          %v881 = vld [vmem:[#allocation10] sm:$0xf]
          %v882 = vld [vmem:[#allocation10 + $0x4] sm:$0xf]
          %v883 = vpack.c.bf16 %v880, %v879
          %v884 = vld [vmem:[#allocation12] sm:$0xff]
          %v885 = vld [vmem:[#allocation12 + $0x8] sm:$0xff]
          %887 = vset.pattern.permute.xlu0 0
          %888 = vperm.xlu0 %887, %v884
          %v889 = vpop.permute.xlu0 %888
          %892 = vset.pattern.permute.xlu0 0
          %893 = vperm.xlu0 %892, %v885
          %v894 = vpop.permute.xlu0 %893
          %v898 = vunpack.c.l.b16 %v881
          %v899 = vunpack.c.l.b16 %v882
          %v900 = vpack.c.b16 %v899, %v898
          %vm901 = vcmask 130048
          %v903 = vsel %vm901, %v900, 0
          %905 = vmatprep.subr.bf16.mxu0 0
          %906 = vmatpush1.bf16.msra.mxu0 %v883
          %907 = vmatprep.subr.bf16.mxu0 0
          %908 = vmatpush1.bf16.msra.mxu0 0
          %909 = vmatprep.subr.bf16.mxu0 0
          %910 = vmatpush1.bf16.msra.mxu0 0
          %911 = vmatprep.subr.bf16.mxu0 0
          %912 = vmatpush1.bf16.msra.mxu0 0
          %913 = vmatprep.subr.bf16.mxu0 0
          %914 = vmatpush1.bf16.msra.mxu0 0
          %915 = vmatprep.subr.bf16.mxu0 0
          %916 = vmatpush1.bf16.msra.mxu0 0
          %917 = vmatprep.subr.bf16.mxu0 0
          %918 = vmatpush1.bf16.msra.mxu0 0
          %919 = vmatprep.subr.bf16.mxu0 0
          %920 = vmatpush1.bf16.msra.mxu0 0
          %921 = vmatprep.subr.bf16.mxu0 0
          %922 = vmatpush1.bf16.msra.mxu0 0
          %923 = vmatprep.subr.bf16.mxu0 0
          %924 = vmatpush1.bf16.msra.mxu0 0
          %925 = vmatprep.subr.bf16.mxu0 0
          %926 = vmatpush1.bf16.msra.mxu0 0
          %927 = vmatprep.subr.bf16.mxu0 0
          %928 = vmatpush1.bf16.msra.mxu0 0
          %929 = vmatprep.subr.bf16.mxu0 0
          %930 = vmatpush1.bf16.msra.mxu0 0
          %931 = vmatprep.subr.bf16.mxu0 0
          %932 = vmatpush1.bf16.msra.mxu0 0
          %933 = vmatprep.subr.bf16.mxu0 0
          %934 = vmatpush1.bf16.msra.mxu0 0
          %935 = vmatprep.subr.bf16.mxu0 0
          %936 = vmatpush1.bf16.msra.mxu0 0
          %937 = vmatprep.mubr.bf16.mxu0 0
          %938 = vmatmul.mubr.bf16.gmra.mrb[0].mxu0 %v903
          %v939 = vpop.f32.mrb[0].mxu0
          %v940 = vadd.f32 %v889, %v939
          %v941 = vpop.f32.mrb[0].mxu0
          %v942 = vpop.f32.mrb[0].mxu0
          %v943 = vadd.f32 %v894, %v942
          %v944 = vpop.f32.mrb[0].mxu0
          %945 = vdwg.mxu0
          %v946 = vmul.f32 %v940, 0.5
          %v947 = vmul.f32 %v943, 0.5
          %v948 = vtanh.pop %v946
          %v949 = vtanh.pop %v947
          %v950 = vadd.f32 %v948, 1.0
          %v951 = vadd.f32 %v949, 1.0
          %v952 = vmul.f32 %v950, 0.5
          %v953 = vmul.f32 %v951, 0.5
          %s954 = smul.u32 %s661, 16
          %s955 = scalar_lea.vmem %s314, %s954 [#allocation13]
          %956 = vst.msk [vmem:[%s955] sm:$0xff] %vm671, %v952
          %957 = vst.msk [vmem:[%s955 + $0x8] sm:$0xff] %vm671, %v953
        $region65: #{ristdnet_forward.7} parent=39 // loop_footer
          %s665 = sadd.s32 1, %s661
        $region66: #{ristdnet_forward.7} parent=39 // loop_footer_branch
          %660 = sbr.rel target = $region62
        $region67: #{ristdnet_forward.7} parent=39 // loop_exit
          _
        %s958 = sand.u32 %s156, 1
        %s959 = scalar_lea.sflag [#allocation6], %s958
        %s960 = sand.u32 %s156, 1
        %s961 = smul.addr %s960, 64
        %s962 = scalar_lea.vmem [#allocation13], %s961
        // Predicated region
        $region68: #{ristdnet_forward.7} parent=39 // pred_check
          %p963 = pneg %p166
        $region69: #{ristdnet_forward.7} parent=39 // pred_check_branch
          %965 = sbr.rel (%p963) target = $region71
        $region70: #{ristdnet_forward.7} parent=39 // pred_region
          %s966 = smul.u32 4, %s29
          %s968 = ssub.s32 1024, 1024
          %969 = vsyncadd %s959, %s968
          %s970 = smul.addr %s966, 2
          %s971 = smul.addr %s28, 8
          %s972 = sadd.s32 %s970, %s971
          %s973 = smul.addr %s972, 128
          %s974 = scalar_lea.hbm %s5, %s973
          %s975 = sshll.u32 %s962, 4
          %s976 = int_to_ptr.vmem [resolvable:$true] %s975
          %981 = dma.vmem_to_hbm [thread:$0]  %s976, 1024, %s974, %s959, 128, 128, 8
        $region71: #{ristdnet_forward.7} parent=39 // pred_fallthru
          _
      $region40: #{ristdnet_forward.7} parent=5 // pred_fallthru
        _
      %p982 = scmp.le.s32.totalorder 2, %s19
      // Predicated region
      $region72: #{ristdnet_forward.7} parent=5 // pred_check
        %p983 = pneg %p982
      $region73: #{ristdnet_forward.7} parent=5 // pred_check_branch
        %985 = sbr.rel (%p983) target = $region75
      $region74: #{ristdnet_forward.7} parent=5 // pred_region
        %s986 = ssub.s32 %s19, 2
        // Predicated region
        $region76: #{ristdnet_forward.7} parent=74 // pred_check
          %p987 = pneg %p172
        $region77: #{ristdnet_forward.7} parent=74 // pred_check_branch
          %989 = sbr.rel (%p987) target = $region79
        $region78: #{ristdnet_forward.7} parent=74 // pred_region
          %s990 = sand.u32 %s157, 1
          %s991 = scalar_lea.sflag [#allocation6], %s990
          %s992 = sand.u32 %s157, 1
          %s993 = smul.addr %s992, 64
          %s994 = scalar_lea.vmem [#allocation13], %s993
          %995 = dma.done %s991, 1024
        $region79: #{ristdnet_forward.7} parent=74 // pred_fallthru
          _
      $region75: #{ristdnet_forward.7} parent=5 // pred_fallthru
        _
    $region6: #{ristdnet_forward.7} parent=1 // loop_footer
      %s23 = sadd.s32 1, %s19
    $region7: #{ristdnet_forward.7} parent=1 // loop_footer_branch
      %18 = sbr.rel target = $region3
    $region8: #{ristdnet_forward.7} parent=1 // loop_exit
      _
    %996 = vsyncpa [#allocation5], 1
    %s997 = scalar_lea.sflag [#allocation5], 1
    %998 = vsyncpa %s997, 1
    %999 = vsyncpa [#allocation8], 1
    %1000 = vsyncpa [#allocation11], 1
    %1001 = vsyncpa [#allocation6], 1
    %s1002 = scalar_lea.sflag [#allocation6], 1
    %1003 = vsyncpa %s1002, 1

// kernel: ristdnet_forward.4
$region0: #{ristdnet_forward.4}
  #allocation0 [shape = 'u32[]', space=smem, size = 0x4, offset = 0x4, fixed_abs, tag = 'smem constant byte address 0x4 - core index']
  #allocation1 [shape = 'u32[144,128]{1,0:T(1,128)}', space=vmem, size = 0x12000, scoped, tag = 'internal scratch']
  #allocation2 [shape = 'f32[22,1,22]{2,1,0:T(1,128)}', space=vmem, size = 0x2c00, scoped, tag = 'scratch operand']
  #allocation3 [shape = 'f32[49,16]{1,0:T(8,128)}', space=vmem, size = 0x7000, scoped, tag = 'scratch operand']
  %s0 = inlined_call_operand.hbm [shape: f32[2,16,1,16], index: 0, kind: input, shape index: {}]
  %s1 = inlined_call_operand.hbm [shape: f32[16,49], index: 1, kind: input, shape index: {}]
  %s2 = inlined_call_operand.hbm [shape: f32[16,1], index: 2, kind: input, shape index: {}]
  %s3 = inlined_call_operand.hbm [shape: bf16[2,16,16,16], index: 3, kind: output, shape index: {}]
  %s4 = sld [smem:[#allocation0]]
  $region64: #{ristdnet_forward.4} parent=0
    _
  %s6 = ssub.s32 1, %s4
  %s7 = scalar_select 0, %s6, %s4
  $region1: #{ristdnet_forward.4} parent=0
    #allocation4 [shape = 'u8[16384]{0}', space=vmem, size = 0x4000, scoped, tag = 'input window, operand 0']
    #allocation5 [shape = 's32[2]{0}', space=sflag, size = 0x8, scoped, tag = 'scoped memory for ristdnet_forward.4']
    #allocation6 [shape = 's32[2]{0}', space=sflag, size = 0x8, scoped, tag = 'scoped memory for ristdnet_forward.4']
    #allocation7 [shape = 'u8[8192]{0}', space=vmem, size = 0x2000, scoped, tag = 'input window, operand 1, single buffered']
    #allocation8 [shape = 's32[1]{0}', space=sflag, size = 0x4, scoped, tag = 'scoped memory for ristdnet_forward.4']
    #allocation9 [shape = 'u8[8192]{0}', space=vmem, size = 0x2000, scoped, tag = 'input window, operand 2, single buffered']
    #allocation10 [shape = 'u8[131072]{0}', space=vmem, size = 0x20000, scoped, tag = 'output window, operand 0']
    %8 = vsyncpa [#allocation5], 0
    %s9 = scalar_lea.sflag [#allocation5], 1
    %10 = vsyncpa %s9, 0
    %11 = vsyncpa [#allocation8], 0
    %12 = vsyncpa [#allocation6], 0
    %s13 = scalar_lea.sflag [#allocation6], 1
    %14 = vsyncpa %s13, 0
    loop: start=0, step=1, limit=4
    $region2: #{ristdnet_forward.4} parent=1 // loop_pre_header
      _
    $region3: #{ristdnet_forward.4} parent=1 // loop_header
      %s16 = sphi 0, %s20
      %p17 = scmp.ge.s32.totalorder %s16, 4
      %s23 = sphi 0, %s35
      %s24 = sphi 0, %s31
      %s25 = sphi 0, %s23
      %s26 = sphi 0, %s24
      %s27 = sphi 0, %s25
      %s28 = sphi 0, %s26
      %s38 = sphi 0, %s40
      %s41 = sphi 0, %s38
      %s42 = sphi 0, %s41
      %s58 = sphi 0, %s42
      %s62 = sphi 0, %s62
      %s64 = sphi 0, %s62
      %s65 = sphi 0, %s64
      %s79 = sphi 0, %s65
      %s83 = sphi 0, %s83
      %s85 = sphi 0, %s83
      %s86 = sphi 0, %s85
      %s100 = sphi 0, %s86
      %s108 = sphi 0, %s110
      %s111 = sphi 0, %s108
      %s112 = sphi 0, %s111
      %s128 = sphi 0, %s112
    $region4: #{ristdnet_forward.4} parent=1 // loop_header_branch
      %19 = sbr.rel (%p17) target = $region8
    $region5: #{ristdnet_forward.4} parent=1 // loop_body
      %s21 = ssub.s32 %s16, 1
      %s22 = ssub.s32 %s16, 2
      %s29 = sadd.s32 1, %s24
      %p30 = scmp.ge.s32.totalorder %s29, 1
      %s31 = scalar_select %p30, 0, %s29
      %s32 = sadd.s32 1, %s23
      %s33 = scalar_select %p30, %s32, %s23
      %p34 = scmp.ge.s32.totalorder %s33, 2
      %s35 = scalar_select %p34, 0, %s33
      %s36 = ssub.s32 %s23, %s35
      %p37 = scmp.eq.s32.totalorder %s36, 0
      %s39 = sadd.s32 %s38, 1
      %s40 = scalar_select %p37, %s38, %s39
      %p43 = pneg %p37
      %p44 = scmp.eq.s32.totalorder %s16, 1
      %p45 = por %p43, %p44
      %p46 = scmp.ne.s32.totalorder %s38, %s41
      %p47 = scmp.eq.s32.totalorder %s16, 0
      %p48 = por %p46, %p47
      %p49 = scmp.ne.s32.totalorder %s38, %s41
      %p50 = scmp.eq.s32.totalorder %s21, 1
      %p51 = por %p49, %p50
      %p52 = scmp.ne.s32.totalorder %s41, %s42
      %p53 = scmp.eq.s32.totalorder %s21, 0
      %p54 = por %p52, %p53
      %p55 = scmp.ne.s32.totalorder %s41, %s42
      %p56 = scmp.eq.s32.totalorder %s22, 1
      %p57 = por %p55, %p56
      %p59 = scmp.ne.s32.totalorder %s42, %s58
      %p60 = scmp.eq.s32.totalorder %s22, 0
      %p61 = por %p59, %p60
      %s63 = sadd.s32 %s62, 1
      %p66 = scmp.eq.s32.totalorder %s16, 1
      %p67 = scmp.ne.s32.totalorder %s62, %s64
      %p68 = scmp.eq.s32.totalorder %s16, 0
      %p69 = por %p67, %p68
      %p70 = scmp.ne.s32.totalorder %s62, %s64
      %p71 = scmp.eq.s32.totalorder %s21, 1
      %p72 = por %p70, %p71
      %p73 = scmp.ne.s32.totalorder %s64, %s65
      %p74 = scmp.eq.s32.totalorder %s21, 0
      %p75 = por %p73, %p74
      %p76 = scmp.ne.s32.totalorder %s64, %s65
      %p77 = scmp.eq.s32.totalorder %s22, 1
      %p78 = por %p76, %p77
      %p80 = scmp.ne.s32.totalorder %s65, %s79
      %p81 = scmp.eq.s32.totalorder %s22, 0
      %p82 = por %p80, %p81
      %s84 = sadd.s32 %s83, 1
      %p87 = scmp.eq.s32.totalorder %s16, 1
      %p88 = scmp.ne.s32.totalorder %s83, %s85
      %p89 = scmp.eq.s32.totalorder %s16, 0
      %p90 = por %p88, %p89
      %p91 = scmp.ne.s32.totalorder %s83, %s85
      %p92 = scmp.eq.s32.totalorder %s21, 1
      %p93 = por %p91, %p92
      %p94 = scmp.ne.s32.totalorder %s85, %s86
      %p95 = scmp.eq.s32.totalorder %s21, 0
      %p96 = por %p94, %p95
      %p97 = scmp.ne.s32.totalorder %s85, %s86
      %p98 = scmp.eq.s32.totalorder %s22, 1
      %p99 = por %p97, %p98
      %p101 = scmp.ne.s32.totalorder %s86, %s100
      %p102 = scmp.eq.s32.totalorder %s22, 0
      %p103 = por %p101, %p102
      %s104 = ssub.s32 %s23, %s35
      %s105 = ssub.s32 %s24, %s31
      %s106 = sor.u32 %s104, %s105
      %p107 = scmp.eq.s32.totalorder %s106, 0
      %s109 = sadd.s32 %s108, 1
      %s110 = scalar_select %p107, %s108, %s109
      %p113 = pneg %p107
      %p114 = scmp.eq.s32.totalorder %s16, 1
      %p115 = por %p113, %p114
      %p116 = scmp.ne.s32.totalorder %s108, %s111
      %p117 = scmp.eq.s32.totalorder %s16, 0
      %p118 = por %p116, %p117
      %p119 = scmp.ne.s32.totalorder %s108, %s111
      %p120 = scmp.eq.s32.totalorder %s21, 1
      %p121 = por %p119, %p120
      %p122 = scmp.ne.s32.totalorder %s111, %s112
      %p123 = scmp.eq.s32.totalorder %s21, 0
      %p124 = por %p122, %p123
      %p125 = scmp.ne.s32.totalorder %s111, %s112
      %p126 = scmp.eq.s32.totalorder %s22, 1
      %p127 = por %p125, %p126
      %p129 = scmp.ne.s32.totalorder %s112, %s128
      %p130 = scmp.eq.s32.totalorder %s22, 0
      %p131 = por %p129, %p130
      %p132 = scmp.le.s32.totalorder 1, %s16
      %p133 = scmp.lt.s32.totalorder %s16, 3
      %p134 = pnand %p132, %p133
      %p135 = pneg %p134
      // Predicated region
      $region9: #{ristdnet_forward.4} parent=5 // pred_check
        _
      $region10: #{ristdnet_forward.4} parent=5 // pred_check_branch
        %137 = sbr.rel (%p134) target = $region12
      $region11: #{ristdnet_forward.4} parent=5 // pred_region
        %s138 = ssub.s32 %s16, 1
        // Predicated region
        $region13: #{ristdnet_forward.4} parent=11 // pred_check
          %p139 = pneg %p75
        $region14: #{ristdnet_forward.4} parent=11 // pred_check_branch
          %141 = sbr.rel (%p139) target = $region16
        $region15: #{ristdnet_forward.4} parent=11 // pred_region
          %s143 = ssub.s32 256, 256
          %144 = vsyncadd [#allocation8], %s143
          %s145 = sshll.u32 [#allocation7], 4
          %s146 = int_to_ptr.vmem [resolvable:$true] %s145
          %151 = dma.hbm_to_vmem [thread:$0]  %s1, 256, %s146, [#allocation8], 128, 128, 8
        $region16: #{ristdnet_forward.4} parent=11 // pred_fallthru
          _
        // Predicated region
        $region17: #{ristdnet_forward.4} parent=11 // pred_check
          %p152 = pneg %p96
        $region18: #{ristdnet_forward.4} parent=11 // pred_check_branch
          %154 = sbr.rel (%p152) target = $region20
        $region19: #{ristdnet_forward.4} parent=11 // pred_region
          %s156 = ssub.s32 256, 256
          %157 = vsyncadd [#allocation8], %s156
          %s158 = sshll.u32 [#allocation9], 4
          %s159 = int_to_ptr.vmem [resolvable:$true] %s158
          %164 = dma.hbm_to_vmem [thread:$0]  %s2, 256, %s159, [#allocation8], 128, 128, 8
        $region20: #{ristdnet_forward.4} parent=11 // pred_fallthru
          _
      $region12: #{ristdnet_forward.4} parent=5 // pred_fallthru
        _
      %p165 = scmp.lt.s32.totalorder %s16, 2
      // Predicated region
      $region21: #{ristdnet_forward.4} parent=5 // pred_check
        %p166 = pneg %p165
      $region22: #{ristdnet_forward.4} parent=5 // pred_check_branch
        %168 = sbr.rel (%p166) target = $region24
      $region23: #{ristdnet_forward.4} parent=5 // pred_region
        // Predicated region
        $region25: #{ristdnet_forward.4} parent=23 // pred_check
          %p169 = pneg %p48
        $region26: #{ristdnet_forward.4} parent=23 // pred_check_branch
          %171 = sbr.rel (%p169) target = $region28
        $region27: #{ristdnet_forward.4} parent=23 // pred_region
          %s172 = sand.u32 %s38, 1
          %s173 = scalar_lea.sflag [#allocation5], %s172
          %s174 = sand.u32 %s38, 1
          %s175 = smul.addr %s174, 16
          %s176 = scalar_lea.vmem [#allocation4], %s175
          %s178 = ssub.s32 256, 256
          %179 = vsyncadd %s173, %s178
          %s180 = smul.addr %s23, 16
          %s181 = smul.addr %s180, 16
          %s182 = scalar_lea.hbm %s0, %s181
          %s183 = sshll.u32 %s176, 4
          %s184 = int_to_ptr.vmem [resolvable:$true] %s183
          %189 = dma.hbm_to_vmem [thread:$0]  %s182, 256, %s184, %s173, 16, 16, 1
        $region28: #{ristdnet_forward.4} parent=23 // pred_fallthru
          _
      $region24: #{ristdnet_forward.4} parent=5 // pred_fallthru
        _
      %p190 = scmp.le.s32.totalorder 1, %s16
      %p191 = scmp.lt.s32.totalorder %s16, 3
      %p192 = pnand %p190, %p191
      %p193 = pneg %p192
      // Predicated region
      $region29: #{ristdnet_forward.4} parent=5 // pred_check
        _
      $region30: #{ristdnet_forward.4} parent=5 // pred_check_branch
        %195 = sbr.rel (%p192) target = $region32
      $region31: #{ristdnet_forward.4} parent=5 // pred_region
        %s196 = ssub.s32 %s16, 1
        %s197 = sand.u32 %s41, 1
        %s198 = scalar_lea.sflag [#allocation5], %s197
        %s199 = sand.u32 %s41, 1
        %s200 = smul.addr %s199, 16
        %s201 = scalar_lea.vmem [#allocation4], %s200
        // Predicated region
        $region33: #{ristdnet_forward.4} parent=31 // pred_check
          %p202 = pneg %p54
        $region34: #{ristdnet_forward.4} parent=31 // pred_check_branch
          %204 = sbr.rel (%p202) target = $region36
        $region35: #{ristdnet_forward.4} parent=31 // pred_region
          %205 = dma.done %s198, 256
        $region36: #{ristdnet_forward.4} parent=31 // pred_fallthru
          _
        // Predicated region
        $region37: #{ristdnet_forward.4} parent=31 // pred_check
          %p206 = pneg %p75
        $region38: #{ristdnet_forward.4} parent=31 // pred_check_branch
          %208 = sbr.rel (%p206) target = $region40
        $region39: #{ristdnet_forward.4} parent=31 // pred_region
          %209 = dma.done [#allocation8], 256
        $region40: #{ristdnet_forward.4} parent=31 // pred_fallthru
          _
        // Predicated region
        $region41: #{ristdnet_forward.4} parent=31 // pred_check
          %p210 = pneg %p96
        $region42: #{ristdnet_forward.4} parent=31 // pred_check_branch
          %212 = sbr.rel (%p210) target = $region44
        $region43: #{ristdnet_forward.4} parent=31 // pred_region
          %213 = dma.done [#allocation8], 256
        $region44: #{ristdnet_forward.4} parent=31 // pred_fallthru
          _
        %s214 = sand.u32 %s41, 1
        %s215 = scalar_lea.sflag [#allocation5], %s214
        %s216 = sand.u32 %s41, 1
        %s217 = smul.addr %s216, 16
        %s218 = scalar_lea.vmem [#allocation4], %s217
        %p219 = pneg %p54
        %p220 = pneg %p51
        %p221 = pneg %p75
        %p222 = pneg %p72
        %p223 = pneg %p96
        %p224 = pneg %p93
        %p225 = pneg %p124
        %p226 = pneg %p121
        %s227 = sand.u32 %s111, 1
        %s228 = scalar_lea.sflag [#allocation6], %s227
        %s229 = sand.u32 %s111, 1
        %s230 = smul.addr %s229, 128
        %s231 = scalar_lea.vmem [#allocation10], %s230
        %s232 = smul.u32 16, %s26
        %s233 = smul.u32 %s26, 16
        %vm234 = vcmask 172032
        %235 = vst.msk [vmem:[#allocation2] sm:$0x1] %vm234, 0.0
        %236 = vst.msk [vmem:[#allocation2 + $0x1] sm:$0x1] %vm234, 0.0
        %237 = vst.msk [vmem:[#allocation2 + $0x2] sm:$0x1] %vm234, 0.0
        %238 = vst.msk [vmem:[#allocation2 + $0x3] sm:$0x1] %vm234, 0.0
        %239 = vst.msk [vmem:[#allocation2 + $0x4] sm:$0x1] %vm234, 0.0
        %240 = vst.msk [vmem:[#allocation2 + $0x5] sm:$0x1] %vm234, 0.0
        %241 = vst.msk [vmem:[#allocation2 + $0x6] sm:$0x1] %vm234, 0.0
        %242 = vst.msk [vmem:[#allocation2 + $0x7] sm:$0x1] %vm234, 0.0
        %243 = vst.msk [vmem:[#allocation2 + $0x8] sm:$0x1] %vm234, 0.0
        %244 = vst.msk [vmem:[#allocation2 + $0x9] sm:$0x1] %vm234, 0.0
        %245 = vst.msk [vmem:[#allocation2 + $0xa] sm:$0x1] %vm234, 0.0
        %246 = vst.msk [vmem:[#allocation2 + $0xb] sm:$0x1] %vm234, 0.0
        %247 = vst.msk [vmem:[#allocation2 + $0xc] sm:$0x1] %vm234, 0.0
        %248 = vst.msk [vmem:[#allocation2 + $0xd] sm:$0x1] %vm234, 0.0
        %249 = vst.msk [vmem:[#allocation2 + $0xe] sm:$0x1] %vm234, 0.0
        %250 = vst.msk [vmem:[#allocation2 + $0xf] sm:$0x1] %vm234, 0.0
        %251 = vst.msk [vmem:[#allocation2 + $0x10] sm:$0x1] %vm234, 0.0
        %252 = vst.msk [vmem:[#allocation2 + $0x11] sm:$0x1] %vm234, 0.0
        %253 = vst.msk [vmem:[#allocation2 + $0x12] sm:$0x1] %vm234, 0.0
        %254 = vst.msk [vmem:[#allocation2 + $0x13] sm:$0x1] %vm234, 0.0
        %255 = vst.msk [vmem:[#allocation2 + $0x14] sm:$0x1] %vm234, 0.0
        %256 = vst.msk [vmem:[#allocation2 + $0x15] sm:$0x1] %vm234, 0.0
        %s257 = ssub.s32 %s233, 3
        %p258 = scmp.gt.s32.totalorder %s257, 0
        %s259 = scalar_select %p258, %s257, 0
        %p260 = scmp.lt.s32.totalorder %s259, 15
        %s261 = scalar_select %p260, %s259, 15
        %p262 = scmp.ge.s32.totalorder %s257, 0
        %p263 = scmp.lt.s32.totalorder %s257, 16
        %p264 = pnand %p262, %p263
        %p265 = pneg %p264
        %s266 = scalar_select %p265, 1, 0
        %s267 = scvt.s32.f32 %s266
        %s268 = scalar_lea.vmem %s201, %s261 [#allocation4]
        %v269 = vld [vmem:[%s268] sm:$0x1]
        %v270 = vstv %s267
        %v271 = vmul.f32 %v269, %v270
        %v273 = vlaneseq
        %v274 = vshrl.u32 %v273, 7
        %v275 = vsub.s32 0, %v274
        %v276 = vrot.slane %v271, %v275
        %277 = vrot.lane.b32.xlu0 %v276, 3
        %v278 = vpop.permute.xlu0 %277
        %vm280 = vcmask 147480
        %281 = vst.msk [vmem:[#allocation2] sm:$0x1] %vm280, %v278
        %s282 = sadd.s32 %s233, 4294967294
        %p283 = scmp.gt.s32.totalorder %s282, 0
        %s284 = scalar_select %p283, %s282, 0
        %p285 = scmp.lt.s32.totalorder %s284, 15
        %s286 = scalar_select %p285, %s284, 15
        %p287 = scmp.ge.s32.totalorder %s282, 0
        %p288 = scmp.lt.s32.totalorder %s282, 16
        %p289 = pnand %p287, %p288
        %p290 = pneg %p289
        %s291 = scalar_select %p290, 1, 0
        %s292 = scvt.s32.f32 %s291
        %s293 = scalar_lea.vmem %s201, %s286 [#allocation4]
        %v294 = vld [vmem:[%s293] sm:$0x1]
        %v295 = vstv %s292
        %v296 = vmul.f32 %v294, %v295
        %v298 = vlaneseq
        %v299 = vshrl.u32 %v298, 7
        %v300 = vsub.s32 0, %v299
        %v301 = vrot.slane %v296, %v300
        %302 = vrot.lane.b32.xlu0 %v301, 3
        %v303 = vpop.permute.xlu0 %302
        %s305 = scalar_lea.vmem [#allocation2], 1
        %306 = vst.msk [vmem:[%s305] sm:$0x1] %vm280, %v303
        %s307 = sadd.s32 %s233, 4294967295
        %p308 = scmp.gt.s32.totalorder %s307, 0
        %s309 = scalar_select %p308, %s307, 0
        %p310 = scmp.lt.s32.totalorder %s309, 15
        %s311 = scalar_select %p310, %s309, 15
        %p312 = scmp.ge.s32.totalorder %s307, 0
        %p313 = scmp.lt.s32.totalorder %s307, 16
        %p314 = pnand %p312, %p313
        %p315 = pneg %p314
        %s316 = scalar_select %p315, 1, 0
        %s317 = scvt.s32.f32 %s316
        %s318 = scalar_lea.vmem %s201, %s311 [#allocation4]
        %v319 = vld [vmem:[%s318] sm:$0x1]
        %v320 = vstv %s317
        %v321 = vmul.f32 %v319, %v320
        %v323 = vlaneseq
        %v324 = vshrl.u32 %v323, 7
        %v325 = vsub.s32 0, %v324
        %v326 = vrot.slane %v321, %v325
        %327 = vrot.lane.b32.xlu0 %v326, 3
        %v328 = vpop.permute.xlu0 %327
        %s330 = scalar_lea.vmem [#allocation2], 2
        %331 = vst.msk [vmem:[%s330] sm:$0x1] %vm280, %v328
        %p332 = scmp.gt.s32.totalorder %s233, 0
        %s333 = scalar_select %p332, %s233, 0
        %p334 = scmp.lt.s32.totalorder %s333, 15
        %s335 = scalar_select %p334, %s333, 15
        %p336 = scmp.ge.s32.totalorder %s233, 0
        %p337 = scmp.lt.s32.totalorder %s233, 16
        %p338 = pnand %p336, %p337
        %p339 = pneg %p338
        %s340 = scalar_select %p339, 1, 0
        %s341 = scvt.s32.f32 %s340
        %s342 = scalar_lea.vmem %s201, %s335 [#allocation4]
        %v343 = vld [vmem:[%s342] sm:$0x1]
        %v344 = vstv %s341
        %v345 = vmul.f32 %v343, %v344
        %v347 = vlaneseq
        %v348 = vshrl.u32 %v347, 7
        %v349 = vsub.s32 0, %v348
        %v350 = vrot.slane %v345, %v349
        %351 = vrot.lane.b32.xlu0 %v350, 3
        %v352 = vpop.permute.xlu0 %351
        %s354 = scalar_lea.vmem [#allocation2], 3
        %355 = vst.msk [vmem:[%s354] sm:$0x1] %vm280, %v352
        %s356 = sadd.s32 %s233, 1
        %p357 = scmp.gt.s32.totalorder %s356, 0
        %s358 = scalar_select %p357, %s356, 0
        %p359 = scmp.lt.s32.totalorder %s358, 15
        %s360 = scalar_select %p359, %s358, 15
        %p361 = scmp.ge.s32.totalorder %s356, 0
        %p362 = scmp.lt.s32.totalorder %s356, 16
        %p363 = pnand %p361, %p362
        %p364 = pneg %p363
        %s365 = scalar_select %p364, 1, 0
        %s366 = scvt.s32.f32 %s365
        %s367 = scalar_lea.vmem %s201, %s360 [#allocation4]
        %v368 = vld [vmem:[%s367] sm:$0x1]
        %v369 = vstv %s366
        %v370 = vmul.f32 %v368, %v369
        %v372 = vlaneseq
        %v373 = vshrl.u32 %v372, 7
        %v374 = vsub.s32 0, %v373
        %v375 = vrot.slane %v370, %v374
        %376 = vrot.lane.b32.xlu0 %v375, 3
        %v377 = vpop.permute.xlu0 %376
        %s379 = scalar_lea.vmem [#allocation2], 4
        %380 = vst.msk [vmem:[%s379] sm:$0x1] %vm280, %v377
        %s381 = sadd.s32 %s233, 2
        %p382 = scmp.gt.s32.totalorder %s381, 0
        %s383 = scalar_select %p382, %s381, 0
        %p384 = scmp.lt.s32.totalorder %s383, 15
        %s385 = scalar_select %p384, %s383, 15
        %p386 = scmp.ge.s32.totalorder %s381, 0
        %p387 = scmp.lt.s32.totalorder %s381, 16
        %p388 = pnand %p386, %p387
        %p389 = pneg %p388
        %s390 = scalar_select %p389, 1, 0
        %s391 = scvt.s32.f32 %s390
        %s392 = scalar_lea.vmem %s201, %s385 [#allocation4]
        %v393 = vld [vmem:[%s392] sm:$0x1]
        %v394 = vstv %s391
        %v395 = vmul.f32 %v393, %v394
        %v397 = vlaneseq
        %v398 = vshrl.u32 %v397, 7
        %v399 = vsub.s32 0, %v398
        %v400 = vrot.slane %v395, %v399
        %401 = vrot.lane.b32.xlu0 %v400, 3
        %v402 = vpop.permute.xlu0 %401
        %s404 = scalar_lea.vmem [#allocation2], 5
        %405 = vst.msk [vmem:[%s404] sm:$0x1] %vm280, %v402
        %s406 = sadd.s32 %s233, 3
        %p407 = scmp.gt.s32.totalorder %s406, 0
        %s408 = scalar_select %p407, %s406, 0
        %p409 = scmp.lt.s32.totalorder %s408, 15
        %s410 = scalar_select %p409, %s408, 15
        %p411 = scmp.ge.s32.totalorder %s406, 0
        %p412 = scmp.lt.s32.totalorder %s406, 16
        %p413 = pnand %p411, %p412
        %p414 = pneg %p413
        %s415 = scalar_select %p414, 1, 0
        %s416 = scvt.s32.f32 %s415
        %s417 = scalar_lea.vmem %s201, %s410 [#allocation4]
        %v418 = vld [vmem:[%s417] sm:$0x1]
        %v419 = vstv %s416
        %v420 = vmul.f32 %v418, %v419
        %v422 = vlaneseq
        %v423 = vshrl.u32 %v422, 7
        %v424 = vsub.s32 0, %v423
        %v425 = vrot.slane %v420, %v424
        %426 = vrot.lane.b32.xlu0 %v425, 3
        %v427 = vpop.permute.xlu0 %426
        %s429 = scalar_lea.vmem [#allocation2], 6
        %430 = vst.msk [vmem:[%s429] sm:$0x1] %vm280, %v427
        %s431 = sadd.s32 %s233, 4
        %p432 = scmp.gt.s32.totalorder %s431, 0
        %s433 = scalar_select %p432, %s431, 0
        %p434 = scmp.lt.s32.totalorder %s433, 15
        %s435 = scalar_select %p434, %s433, 15
        %p436 = scmp.ge.s32.totalorder %s431, 0
        %p437 = scmp.lt.s32.totalorder %s431, 16
        %p438 = pnand %p436, %p437
        %p439 = pneg %p438
        %s440 = scalar_select %p439, 1, 0
        %s441 = scvt.s32.f32 %s440
        %s442 = scalar_lea.vmem %s201, %s435 [#allocation4]
        %v443 = vld [vmem:[%s442] sm:$0x1]
        %v444 = vstv %s441
        %v445 = vmul.f32 %v443, %v444
        %v447 = vlaneseq
        %v448 = vshrl.u32 %v447, 7
        %v449 = vsub.s32 0, %v448
        %v450 = vrot.slane %v445, %v449
        %451 = vrot.lane.b32.xlu0 %v450, 3
        %v452 = vpop.permute.xlu0 %451
        %s454 = scalar_lea.vmem [#allocation2], 7
        %455 = vst.msk [vmem:[%s454] sm:$0x1] %vm280, %v452
        %s456 = sadd.s32 %s233, 5
        %p457 = scmp.gt.s32.totalorder %s456, 0
        %s458 = scalar_select %p457, %s456, 0
        %p459 = scmp.lt.s32.totalorder %s458, 15
        %s460 = scalar_select %p459, %s458, 15
        %p461 = scmp.ge.s32.totalorder %s456, 0
        %p462 = scmp.lt.s32.totalorder %s456, 16
        %p463 = pnand %p461, %p462
        %p464 = pneg %p463
        %s465 = scalar_select %p464, 1, 0
        %s466 = scvt.s32.f32 %s465
        %s467 = scalar_lea.vmem %s201, %s460 [#allocation4]
        %v468 = vld [vmem:[%s467] sm:$0x1]
        %v469 = vstv %s466
        %v470 = vmul.f32 %v468, %v469
        %v472 = vlaneseq
        %v473 = vshrl.u32 %v472, 7
        %v474 = vsub.s32 0, %v473
        %v475 = vrot.slane %v470, %v474
        %476 = vrot.lane.b32.xlu0 %v475, 3
        %v477 = vpop.permute.xlu0 %476
        %s479 = scalar_lea.vmem [#allocation2], 8
        %480 = vst.msk [vmem:[%s479] sm:$0x1] %vm280, %v477
        %s481 = sadd.s32 %s233, 6
        %p482 = scmp.gt.s32.totalorder %s481, 0
        %s483 = scalar_select %p482, %s481, 0
        %p484 = scmp.lt.s32.totalorder %s483, 15
        %s485 = scalar_select %p484, %s483, 15
        %p486 = scmp.ge.s32.totalorder %s481, 0
        %p487 = scmp.lt.s32.totalorder %s481, 16
        %p488 = pnand %p486, %p487
        %p489 = pneg %p488
        %s490 = scalar_select %p489, 1, 0
        %s491 = scvt.s32.f32 %s490
        %s492 = scalar_lea.vmem %s201, %s485 [#allocation4]
        %v493 = vld [vmem:[%s492] sm:$0x1]
        %v494 = vstv %s491
        %v495 = vmul.f32 %v493, %v494
        %v497 = vlaneseq
        %v498 = vshrl.u32 %v497, 7
        %v499 = vsub.s32 0, %v498
        %v500 = vrot.slane %v495, %v499
        %501 = vrot.lane.b32.xlu0 %v500, 3
        %v502 = vpop.permute.xlu0 %501
        %s504 = scalar_lea.vmem [#allocation2], 9
        %505 = vst.msk [vmem:[%s504] sm:$0x1] %vm280, %v502
        %s506 = sadd.s32 %s233, 7
        %p507 = scmp.gt.s32.totalorder %s506, 0
        %s508 = scalar_select %p507, %s506, 0
        %p509 = scmp.lt.s32.totalorder %s508, 15
        %s510 = scalar_select %p509, %s508, 15
        %p511 = scmp.ge.s32.totalorder %s506, 0
        %p512 = scmp.lt.s32.totalorder %s506, 16
        %p513 = pnand %p511, %p512
        %p514 = pneg %p513
        %s515 = scalar_select %p514, 1, 0
        %s516 = scvt.s32.f32 %s515
        %s517 = scalar_lea.vmem %s201, %s510 [#allocation4]
        %v518 = vld [vmem:[%s517] sm:$0x1]
        %v519 = vstv %s516
        %v520 = vmul.f32 %v518, %v519
        %v522 = vlaneseq
        %v523 = vshrl.u32 %v522, 7
        %v524 = vsub.s32 0, %v523
        %v525 = vrot.slane %v520, %v524
        %526 = vrot.lane.b32.xlu0 %v525, 3
        %v527 = vpop.permute.xlu0 %526
        %s529 = scalar_lea.vmem [#allocation2], 10
        %530 = vst.msk [vmem:[%s529] sm:$0x1] %vm280, %v527
        %s531 = sadd.s32 %s233, 8
        %p532 = scmp.gt.s32.totalorder %s531, 0
        %s533 = scalar_select %p532, %s531, 0
        %p534 = scmp.lt.s32.totalorder %s533, 15
        %s535 = scalar_select %p534, %s533, 15
        %p536 = scmp.ge.s32.totalorder %s531, 0
        %p537 = scmp.lt.s32.totalorder %s531, 16
        %p538 = pnand %p536, %p537
        %p539 = pneg %p538
        %s540 = scalar_select %p539, 1, 0
        %s541 = scvt.s32.f32 %s540
        %s542 = scalar_lea.vmem %s201, %s535 [#allocation4]
        %v543 = vld [vmem:[%s542] sm:$0x1]
        %v544 = vstv %s541
        %v545 = vmul.f32 %v543, %v544
        %v547 = vlaneseq
        %v548 = vshrl.u32 %v547, 7
        %v549 = vsub.s32 0, %v548
        %v550 = vrot.slane %v545, %v549
        %551 = vrot.lane.b32.xlu0 %v550, 3
        %v552 = vpop.permute.xlu0 %551
        %s554 = scalar_lea.vmem [#allocation2], 11
        %555 = vst.msk [vmem:[%s554] sm:$0x1] %vm280, %v552
        %s556 = sadd.s32 %s233, 9
        %p557 = scmp.gt.s32.totalorder %s556, 0
        %s558 = scalar_select %p557, %s556, 0
        %p559 = scmp.lt.s32.totalorder %s558, 15
        %s560 = scalar_select %p559, %s558, 15
        %p561 = scmp.ge.s32.totalorder %s556, 0
        %p562 = scmp.lt.s32.totalorder %s556, 16
        %p563 = pnand %p561, %p562
        %p564 = pneg %p563
        %s565 = scalar_select %p564, 1, 0
        %s566 = scvt.s32.f32 %s565
        %s567 = scalar_lea.vmem %s201, %s560 [#allocation4]
        %v568 = vld [vmem:[%s567] sm:$0x1]
        %v569 = vstv %s566
        %v570 = vmul.f32 %v568, %v569
        %v572 = vlaneseq
        %v573 = vshrl.u32 %v572, 7
        %v574 = vsub.s32 0, %v573
        %v575 = vrot.slane %v570, %v574
        %576 = vrot.lane.b32.xlu0 %v575, 3
        %v577 = vpop.permute.xlu0 %576
        %s579 = scalar_lea.vmem [#allocation2], 12
        %580 = vst.msk [vmem:[%s579] sm:$0x1] %vm280, %v577
        %s581 = sadd.s32 %s233, 10
        %p582 = scmp.gt.s32.totalorder %s581, 0
        %s583 = scalar_select %p582, %s581, 0
        %p584 = scmp.lt.s32.totalorder %s583, 15
        %s585 = scalar_select %p584, %s583, 15
        %p586 = scmp.ge.s32.totalorder %s581, 0
        %p587 = scmp.lt.s32.totalorder %s581, 16
        %p588 = pnand %p586, %p587
        %p589 = pneg %p588
        %s590 = scalar_select %p589, 1, 0
        %s591 = scvt.s32.f32 %s590
        %s592 = scalar_lea.vmem %s201, %s585 [#allocation4]
        %v593 = vld [vmem:[%s592] sm:$0x1]
        %v594 = vstv %s591
        %v595 = vmul.f32 %v593, %v594
        %v597 = vlaneseq
        %v598 = vshrl.u32 %v597, 7
        %v599 = vsub.s32 0, %v598
        %v600 = vrot.slane %v595, %v599
        %601 = vrot.lane.b32.xlu0 %v600, 3
        %v602 = vpop.permute.xlu0 %601
        %s604 = scalar_lea.vmem [#allocation2], 13
        %605 = vst.msk [vmem:[%s604] sm:$0x1] %vm280, %v602
        %s606 = sadd.s32 %s233, 11
        %p607 = scmp.gt.s32.totalorder %s606, 0
        %s608 = scalar_select %p607, %s606, 0
        %p609 = scmp.lt.s32.totalorder %s608, 15
        %s610 = scalar_select %p609, %s608, 15
        %p611 = scmp.ge.s32.totalorder %s606, 0
        %p612 = scmp.lt.s32.totalorder %s606, 16
        %p613 = pnand %p611, %p612
        %p614 = pneg %p613
        %s615 = scalar_select %p614, 1, 0
        %s616 = scvt.s32.f32 %s615
        %s617 = scalar_lea.vmem %s201, %s610 [#allocation4]
        %v618 = vld [vmem:[%s617] sm:$0x1]
        %v619 = vstv %s616
        %v620 = vmul.f32 %v618, %v619
        %v622 = vlaneseq
        %v623 = vshrl.u32 %v622, 7
        %v624 = vsub.s32 0, %v623
        %v625 = vrot.slane %v620, %v624
        %626 = vrot.lane.b32.xlu0 %v625, 3
        %v627 = vpop.permute.xlu0 %626
        %s629 = scalar_lea.vmem [#allocation2], 14
        %630 = vst.msk [vmem:[%s629] sm:$0x1] %vm280, %v627
        %s631 = sadd.s32 %s233, 12
        %p632 = scmp.gt.s32.totalorder %s631, 0
        %s633 = scalar_select %p632, %s631, 0
        %p634 = scmp.lt.s32.totalorder %s633, 15
        %s635 = scalar_select %p634, %s633, 15
        %p636 = scmp.ge.s32.totalorder %s631, 0
        %p637 = scmp.lt.s32.totalorder %s631, 16
        %p638 = pnand %p636, %p637
        %p639 = pneg %p638
        %s640 = scalar_select %p639, 1, 0
        %s641 = scvt.s32.f32 %s640
        %s642 = scalar_lea.vmem %s201, %s635 [#allocation4]
        %v643 = vld [vmem:[%s642] sm:$0x1]
        %v644 = vstv %s641
        %v645 = vmul.f32 %v643, %v644
        %v647 = vlaneseq
        %v648 = vshrl.u32 %v647, 7
        %v649 = vsub.s32 0, %v648
        %v650 = vrot.slane %v645, %v649
        %651 = vrot.lane.b32.xlu0 %v650, 3
        %v652 = vpop.permute.xlu0 %651
        %s654 = scalar_lea.vmem [#allocation2], 15
        %655 = vst.msk [vmem:[%s654] sm:$0x1] %vm280, %v652
        %s656 = sadd.s32 %s233, 13
        %p657 = scmp.gt.s32.totalorder %s656, 0
        %s658 = scalar_select %p657, %s656, 0
        %p659 = scmp.lt.s32.totalorder %s658, 15
        %s660 = scalar_select %p659, %s658, 15
        %p661 = scmp.ge.s32.totalorder %s656, 0
        %p662 = scmp.lt.s32.totalorder %s656, 16
        %p663 = pnand %p661, %p662
        %p664 = pneg %p663
        %s665 = scalar_select %p664, 1, 0
        %s666 = scvt.s32.f32 %s665
        %s667 = scalar_lea.vmem %s201, %s660 [#allocation4]
        %v668 = vld [vmem:[%s667] sm:$0x1]
        %v669 = vstv %s666
        %v670 = vmul.f32 %v668, %v669
        %v672 = vlaneseq
        %v673 = vshrl.u32 %v672, 7
        %v674 = vsub.s32 0, %v673
        %v675 = vrot.slane %v670, %v674
        %676 = vrot.lane.b32.xlu0 %v675, 3
        %v677 = vpop.permute.xlu0 %676
        %s679 = scalar_lea.vmem [#allocation2], 16
        %680 = vst.msk [vmem:[%s679] sm:$0x1] %vm280, %v677
        %s681 = sadd.s32 %s233, 14
        %p682 = scmp.gt.s32.totalorder %s681, 0
        %s683 = scalar_select %p682, %s681, 0
        %p684 = scmp.lt.s32.totalorder %s683, 15
        %s685 = scalar_select %p684, %s683, 15
        %p686 = scmp.ge.s32.totalorder %s681, 0
        %p687 = scmp.lt.s32.totalorder %s681, 16
        %p688 = pnand %p686, %p687
        %p689 = pneg %p688
        %s690 = scalar_select %p689, 1, 0
        %s691 = scvt.s32.f32 %s690
        %s692 = scalar_lea.vmem %s201, %s685 [#allocation4]
        %v693 = vld [vmem:[%s692] sm:$0x1]
        %v694 = vstv %s691
        %v695 = vmul.f32 %v693, %v694
        %v697 = vlaneseq
        %v698 = vshrl.u32 %v697, 7
        %v699 = vsub.s32 0, %v698
        %v700 = vrot.slane %v695, %v699
        %701 = vrot.lane.b32.xlu0 %v700, 3
        %v702 = vpop.permute.xlu0 %701
        %s704 = scalar_lea.vmem [#allocation2], 17
        %705 = vst.msk [vmem:[%s704] sm:$0x1] %vm280, %v702
        %s706 = sadd.s32 %s233, 15
        %p707 = scmp.gt.s32.totalorder %s706, 0
        %s708 = scalar_select %p707, %s706, 0
        %p709 = scmp.lt.s32.totalorder %s708, 15
        %s710 = scalar_select %p709, %s708, 15
        %p711 = scmp.ge.s32.totalorder %s706, 0
        %p712 = scmp.lt.s32.totalorder %s706, 16
        %p713 = pnand %p711, %p712
        %p714 = pneg %p713
        %s715 = scalar_select %p714, 1, 0
        %s716 = scvt.s32.f32 %s715
        %s717 = scalar_lea.vmem %s201, %s710 [#allocation4]
        %v718 = vld [vmem:[%s717] sm:$0x1]
        %v719 = vstv %s716
        %v720 = vmul.f32 %v718, %v719
        %v722 = vlaneseq
        %v723 = vshrl.u32 %v722, 7
        %v724 = vsub.s32 0, %v723
        %v725 = vrot.slane %v720, %v724
        %726 = vrot.lane.b32.xlu0 %v725, 3
        %v727 = vpop.permute.xlu0 %726
        %s729 = scalar_lea.vmem [#allocation2], 18
        %730 = vst.msk [vmem:[%s729] sm:$0x1] %vm280, %v727
        %s731 = sadd.s32 %s233, 16
        %p732 = scmp.gt.s32.totalorder %s731, 0
        %s733 = scalar_select %p732, %s731, 0
        %p734 = scmp.lt.s32.totalorder %s733, 15
        %s735 = scalar_select %p734, %s733, 15
        %p736 = scmp.ge.s32.totalorder %s731, 0
        %p737 = scmp.lt.s32.totalorder %s731, 16
        %p738 = pnand %p736, %p737
        %p739 = pneg %p738
        %s740 = scalar_select %p739, 1, 0
        %s741 = scvt.s32.f32 %s740
        %s742 = scalar_lea.vmem %s201, %s735 [#allocation4]
        %v743 = vld [vmem:[%s742] sm:$0x1]
        %v744 = vstv %s741
        %v745 = vmul.f32 %v743, %v744
        %v747 = vlaneseq
        %v748 = vshrl.u32 %v747, 7
        %v749 = vsub.s32 0, %v748
        %v750 = vrot.slane %v745, %v749
        %751 = vrot.lane.b32.xlu0 %v750, 3
        %v752 = vpop.permute.xlu0 %751
        %s754 = scalar_lea.vmem [#allocation2], 19
        %755 = vst.msk [vmem:[%s754] sm:$0x1] %vm280, %v752
        %s756 = sadd.s32 %s233, 17
        %p757 = scmp.gt.s32.totalorder %s756, 0
        %s758 = scalar_select %p757, %s756, 0
        %p759 = scmp.lt.s32.totalorder %s758, 15
        %s760 = scalar_select %p759, %s758, 15
        %p761 = scmp.ge.s32.totalorder %s756, 0
        %p762 = scmp.lt.s32.totalorder %s756, 16
        %p763 = pnand %p761, %p762
        %p764 = pneg %p763
        %s765 = scalar_select %p764, 1, 0
        %s766 = scvt.s32.f32 %s765
        %s767 = scalar_lea.vmem %s201, %s760 [#allocation4]
        %v768 = vld [vmem:[%s767] sm:$0x1]
        %v769 = vstv %s766
        %v770 = vmul.f32 %v768, %v769
        %v772 = vlaneseq
        %v773 = vshrl.u32 %v772, 7
        %v774 = vsub.s32 0, %v773
        %v775 = vrot.slane %v770, %v774
        %776 = vrot.lane.b32.xlu0 %v775, 3
        %v777 = vpop.permute.xlu0 %776
        %s779 = scalar_lea.vmem [#allocation2], 20
        %780 = vst.msk [vmem:[%s779] sm:$0x1] %vm280, %v777
        %s781 = sadd.s32 %s233, 18
        %p782 = scmp.gt.s32.totalorder %s781, 0
        %s783 = scalar_select %p782, %s781, 0
        %p784 = scmp.lt.s32.totalorder %s783, 15
        %s785 = scalar_select %p784, %s783, 15
        %p786 = scmp.ge.s32.totalorder %s781, 0
        %p787 = scmp.lt.s32.totalorder %s781, 16
        %p788 = pnand %p786, %p787
        %p789 = pneg %p788
        %s790 = scalar_select %p789, 1, 0
        %s791 = scvt.s32.f32 %s790
        %s792 = scalar_lea.vmem %s201, %s785 [#allocation4]
        %v793 = vld [vmem:[%s792] sm:$0x1]
        %v794 = vstv %s791
        %v795 = vmul.f32 %v793, %v794
        %v797 = vlaneseq
        %v798 = vshrl.u32 %v797, 7
        %v799 = vsub.s32 0, %v798
        %v800 = vrot.slane %v795, %v799
        %801 = vrot.lane.b32.xlu0 %v800, 3
        %v802 = vpop.permute.xlu0 %801
        %s804 = scalar_lea.vmem [#allocation2], 21
        %805 = vst.msk [vmem:[%s804] sm:$0x1] %vm280, %v802
        loop: start=0, step=1, limit=16
        $region45: #{ristdnet_forward.4} parent=31 // loop_pre_header
          _
        $region46: #{ristdnet_forward.4} parent=31 // loop_header
          %s807 = sphi 0, %s811
          %p808 = scmp.ge.s32.totalorder %s807, 16
        $region47: #{ristdnet_forward.4} parent=31 // loop_header_branch
          %810 = sbr.rel (%p808) target = $region51
        $region48: #{ristdnet_forward.4} parent=31 // loop_body
          %s812 = scalar_lea.vmem [#allocation2], %s807
          %v813 = vld [vmem:[%s812] sm:$0x1]
          %vm814 = vcmask 122880
          %815 = vst.msk [vmem:[#allocation3] sm:$0x1] %vm814, %v813
          %v817 = vlaneseq
          %v818 = vshrl.u32 %v817, 7
          %v819 = vsub.s32 0, %v818
          %v820 = vrot.slane %v813, %v819
          %821 = vrot.lane.b32.xlu0 %v820, 127
          %v822 = vpop.permute.xlu0 %821
          %824 = vst.msk [vmem:[#allocation3 + $0x1] sm:$0x1] %vm814, %v822
          %825 = vrot.lane.b32.xlu0 %v820, 126
          %v826 = vpop.permute.xlu0 %825
          %828 = vst.msk [vmem:[#allocation3 + $0x2] sm:$0x1] %vm814, %v826
          %829 = vrot.lane.b32.xlu0 %v820, 125
          %v830 = vpop.permute.xlu0 %829
          %832 = vst.msk [vmem:[#allocation3 + $0x3] sm:$0x1] %vm814, %v830
          %833 = vrot.lane.b32.xlu0 %v820, 124
          %v834 = vpop.permute.xlu0 %833
          %836 = vst.msk [vmem:[#allocation3 + $0x4] sm:$0x1] %vm814, %v834
          %837 = vrot.lane.b32.xlu0 %v820, 123
          %v838 = vpop.permute.xlu0 %837
          %840 = vst.msk [vmem:[#allocation3 + $0x5] sm:$0x1] %vm814, %v838
          %841 = vrot.lane.b32.xlu0 %v820, 122
          %v842 = vpop.permute.xlu0 %841
          %844 = vst.msk [vmem:[#allocation3 + $0x6] sm:$0x1] %vm814, %v842
          %s845 = sadd.s32 %s807, 1
          %s846 = scalar_lea.vmem [#allocation2], %s845
          %v847 = vld [vmem:[%s846] sm:$0x1]
          %848 = vst.msk [vmem:[#allocation3 + $0x7] sm:$0x1] %vm814, %v847
          %v850 = vlaneseq
          %v851 = vshrl.u32 %v850, 7
          %v852 = vsub.s32 0, %v851
          %v853 = vrot.slane %v847, %v852
          %854 = vrot.lane.b32.xlu0 %v853, 127
          %v855 = vpop.permute.xlu0 %854
          %857 = vst.msk [vmem:[#allocation3 + $0x8] sm:$0x1] %vm814, %v855
          %858 = vrot.lane.b32.xlu0 %v853, 126
          %v859 = vpop.permute.xlu0 %858
          %861 = vst.msk [vmem:[#allocation3 + $0x9] sm:$0x1] %vm814, %v859
          %862 = vrot.lane.b32.xlu0 %v853, 125
          %v863 = vpop.permute.xlu0 %862
          %865 = vst.msk [vmem:[#allocation3 + $0xa] sm:$0x1] %vm814, %v863
          %866 = vrot.lane.b32.xlu0 %v853, 124
          %v867 = vpop.permute.xlu0 %866
          %869 = vst.msk [vmem:[#allocation3 + $0xb] sm:$0x1] %vm814, %v867
          %870 = vrot.lane.b32.xlu0 %v853, 123
          %v871 = vpop.permute.xlu0 %870
          %873 = vst.msk [vmem:[#allocation3 + $0xc] sm:$0x1] %vm814, %v871
          %874 = vrot.lane.b32.xlu0 %v853, 122
          %v875 = vpop.permute.xlu0 %874
          %877 = vst.msk [vmem:[#allocation3 + $0xd] sm:$0x1] %vm814, %v875
          %s878 = sadd.s32 %s807, 2
          %s879 = scalar_lea.vmem [#allocation2], %s878
          %v880 = vld [vmem:[%s879] sm:$0x1]
          %881 = vst.msk [vmem:[#allocation3 + $0xe] sm:$0x1] %vm814, %v880
          %v883 = vlaneseq
          %v884 = vshrl.u32 %v883, 7
          %v885 = vsub.s32 0, %v884
          %v886 = vrot.slane %v880, %v885
          %887 = vrot.lane.b32.xlu0 %v886, 127
          %v888 = vpop.permute.xlu0 %887
          %890 = vst.msk [vmem:[#allocation3 + $0xf] sm:$0x1] %vm814, %v888
          %891 = vrot.lane.b32.xlu0 %v886, 126
          %v892 = vpop.permute.xlu0 %891
          %894 = vst.msk [vmem:[#allocation3 + $0x10] sm:$0x1] %vm814, %v892
          %895 = vrot.lane.b32.xlu0 %v886, 125
          %v896 = vpop.permute.xlu0 %895
          %898 = vst.msk [vmem:[#allocation3 + $0x11] sm:$0x1] %vm814, %v896
          %899 = vrot.lane.b32.xlu0 %v886, 124
          %v900 = vpop.permute.xlu0 %899
          %902 = vst.msk [vmem:[#allocation3 + $0x12] sm:$0x1] %vm814, %v900
          %903 = vrot.lane.b32.xlu0 %v886, 123
          %v904 = vpop.permute.xlu0 %903
          %906 = vst.msk [vmem:[#allocation3 + $0x13] sm:$0x1] %vm814, %v904
          %907 = vrot.lane.b32.xlu0 %v886, 122
          %v908 = vpop.permute.xlu0 %907
          %910 = vst.msk [vmem:[#allocation3 + $0x14] sm:$0x1] %vm814, %v908
          %s911 = sadd.s32 %s807, 3
          %s912 = scalar_lea.vmem [#allocation2], %s911
          %v913 = vld [vmem:[%s912] sm:$0x1]
          %914 = vst.msk [vmem:[#allocation3 + $0x15] sm:$0x1] %vm814, %v913
          %v916 = vlaneseq
          %v917 = vshrl.u32 %v916, 7
          %v918 = vsub.s32 0, %v917
          %v919 = vrot.slane %v913, %v918
          %920 = vrot.lane.b32.xlu0 %v919, 127
          %v921 = vpop.permute.xlu0 %920
          %923 = vst.msk [vmem:[#allocation3 + $0x16] sm:$0x1] %vm814, %v921
          %924 = vrot.lane.b32.xlu0 %v919, 126
          %v925 = vpop.permute.xlu0 %924
          %927 = vst.msk [vmem:[#allocation3 + $0x17] sm:$0x1] %vm814, %v925
          %928 = vrot.lane.b32.xlu0 %v919, 125
          %v929 = vpop.permute.xlu0 %928
          %931 = vst.msk [vmem:[#allocation3 + $0x18] sm:$0x1] %vm814, %v929
          %932 = vrot.lane.b32.xlu0 %v919, 124
          %v933 = vpop.permute.xlu0 %932
          %935 = vst.msk [vmem:[#allocation3 + $0x19] sm:$0x1] %vm814, %v933
          %936 = vrot.lane.b32.xlu0 %v919, 123
          %v937 = vpop.permute.xlu0 %936
          %939 = vst.msk [vmem:[#allocation3 + $0x1a] sm:$0x1] %vm814, %v937
          %940 = vrot.lane.b32.xlu0 %v919, 122
          %v941 = vpop.permute.xlu0 %940
          %943 = vst.msk [vmem:[#allocation3 + $0x1b] sm:$0x1] %vm814, %v941
          %s944 = sadd.s32 %s807, 4
          %s945 = scalar_lea.vmem [#allocation2], %s944
          %v946 = vld [vmem:[%s945] sm:$0x1]
          %947 = vst.msk [vmem:[#allocation3 + $0x1c] sm:$0x1] %vm814, %v946
          %v949 = vlaneseq
          %v950 = vshrl.u32 %v949, 7
          %v951 = vsub.s32 0, %v950
          %v952 = vrot.slane %v946, %v951
          %953 = vrot.lane.b32.xlu0 %v952, 127
          %v954 = vpop.permute.xlu0 %953
          %956 = vst.msk [vmem:[#allocation3 + $0x1d] sm:$0x1] %vm814, %v954
          %957 = vrot.lane.b32.xlu0 %v952, 126
          %v958 = vpop.permute.xlu0 %957
          %960 = vst.msk [vmem:[#allocation3 + $0x1e] sm:$0x1] %vm814, %v958
          %961 = vrot.lane.b32.xlu0 %v952, 125
          %v962 = vpop.permute.xlu0 %961
          %964 = vst.msk [vmem:[#allocation3 + $0x1f] sm:$0x1] %vm814, %v962
          %965 = vrot.lane.b32.xlu0 %v952, 124
          %v966 = vpop.permute.xlu0 %965
          %968 = vst.msk [vmem:[#allocation3 + $0x20] sm:$0x1] %vm814, %v966
          %969 = vrot.lane.b32.xlu0 %v952, 123
          %v970 = vpop.permute.xlu0 %969
          %972 = vst.msk [vmem:[#allocation3 + $0x21] sm:$0x1] %vm814, %v970
          %973 = vrot.lane.b32.xlu0 %v952, 122
          %v974 = vpop.permute.xlu0 %973
          %976 = vst.msk [vmem:[#allocation3 + $0x22] sm:$0x1] %vm814, %v974
          %s977 = sadd.s32 %s807, 5
          %s978 = scalar_lea.vmem [#allocation2], %s977
          %v979 = vld [vmem:[%s978] sm:$0x1]
          %980 = vst.msk [vmem:[#allocation3 + $0x23] sm:$0x1] %vm814, %v979
          %v982 = vlaneseq
          %v983 = vshrl.u32 %v982, 7
          %v984 = vsub.s32 0, %v983
          %v985 = vrot.slane %v979, %v984
          %986 = vrot.lane.b32.xlu0 %v985, 127
          %v987 = vpop.permute.xlu0 %986
          %989 = vst.msk [vmem:[#allocation3 + $0x24] sm:$0x1] %vm814, %v987
          %990 = vrot.lane.b32.xlu0 %v985, 126
          %v991 = vpop.permute.xlu0 %990
          %993 = vst.msk [vmem:[#allocation3 + $0x25] sm:$0x1] %vm814, %v991
          %994 = vrot.lane.b32.xlu0 %v985, 125
          %v995 = vpop.permute.xlu0 %994
          %997 = vst.msk [vmem:[#allocation3 + $0x26] sm:$0x1] %vm814, %v995
          %998 = vrot.lane.b32.xlu0 %v985, 124
          %v999 = vpop.permute.xlu0 %998
          %1001 = vst.msk [vmem:[#allocation3 + $0x27] sm:$0x1] %vm814, %v999
          %1002 = vrot.lane.b32.xlu0 %v985, 123
          %v1003 = vpop.permute.xlu0 %1002
          %1005 = vst.msk [vmem:[#allocation3 + $0x28] sm:$0x1] %vm814, %v1003
          %1006 = vrot.lane.b32.xlu0 %v985, 122
          %v1007 = vpop.permute.xlu0 %1006
          %1009 = vst.msk [vmem:[#allocation3 + $0x29] sm:$0x1] %vm814, %v1007
          %s1010 = sadd.s32 %s807, 6
          %s1011 = scalar_lea.vmem [#allocation2], %s1010
          %v1012 = vld [vmem:[%s1011] sm:$0x1]
          %1013 = vst.msk [vmem:[#allocation3 + $0x2a] sm:$0x1] %vm814, %v1012
          %v1015 = vlaneseq
          %v1016 = vshrl.u32 %v1015, 7
          %v1017 = vsub.s32 0, %v1016
          %v1018 = vrot.slane %v1012, %v1017
          %1019 = vrot.lane.b32.xlu0 %v1018, 127
          %v1020 = vpop.permute.xlu0 %1019
          %1022 = vst.msk [vmem:[#allocation3 + $0x2b] sm:$0x1] %vm814, %v1020
          %1023 = vrot.lane.b32.xlu0 %v1018, 126
          %v1024 = vpop.permute.xlu0 %1023
          %1026 = vst.msk [vmem:[#allocation3 + $0x2c] sm:$0x1] %vm814, %v1024
          %1027 = vrot.lane.b32.xlu0 %v1018, 125
          %v1028 = vpop.permute.xlu0 %1027
          %1030 = vst.msk [vmem:[#allocation3 + $0x2d] sm:$0x1] %vm814, %v1028
          %1031 = vrot.lane.b32.xlu0 %v1018, 124
          %v1032 = vpop.permute.xlu0 %1031
          %1034 = vst.msk [vmem:[#allocation3 + $0x2e] sm:$0x1] %vm814, %v1032
          %1035 = vrot.lane.b32.xlu0 %v1018, 123
          %v1036 = vpop.permute.xlu0 %1035
          %1038 = vst.msk [vmem:[#allocation3 + $0x2f] sm:$0x1] %vm814, %v1036
          %1039 = vrot.lane.b32.xlu0 %v1018, 122
          %v1040 = vpop.permute.xlu0 %1039
          %1042 = vst.msk [vmem:[#allocation3 + $0x30] sm:$0x1] %vm814, %v1040
          %v1043 = vld [vmem:[#allocation7] sm:$0xff]
          %v1044 = vld [vmem:[#allocation7 + $0x8] sm:$0xff]
          %v1045 = vld [vmem:[#allocation3] sm:$0xff]
          %v1046 = vld [vmem:[#allocation3 + $0x8] sm:$0xff]
          %v1047 = vld [vmem:[#allocation3 + $0x10] sm:$0xff]
          %v1048 = vld [vmem:[#allocation3 + $0x18] sm:$0xff]
          %v1049 = vld [vmem:[#allocation3 + $0x20] sm:$0xff]
          %v1050 = vld [vmem:[#allocation3 + $0x28] sm:$0xff]
          %v1051 = vld [vmem:[#allocation3 + $0x30] sm:$0x1]
          %v1052 = vld [vmem:[#allocation9] sm:$0xff]
          %v1053 = vld [vmem:[#allocation9 + $0x8] sm:$0xff]
          %1055 = vset.pattern.permute.xlu0 0
          %1056 = vperm.xlu0 %1055, %v1052
          %v1057 = vpop.permute.xlu0 %1056
          %1060 = vset.pattern.permute.xlu0 0
          %1061 = vperm.xlu0 %1060, %v1053
          %v1062 = vpop.permute.xlu0 %1061
          %vm1064 = vcmask 400384
          %v1066 = vsel %vm1064, %v1043, 0
          %v1069 = vsel %vm1064, %v1044, 0
          %vm1071 = vcmask 1040384
          %v1073 = vsel %vm1071, %v1051, 0
          %1075 = vmatprep.subr.mxu0 0.0
          %1076 = vmatpush1.msra.mxu0 %v1045
          %1077 = vmatprep.subr.mxu0 0.0
          %1078 = vmatpush1.msra.mxu0 %v1046
          %1079 = vmatprep.subr.mxu0 0.0
          %1080 = vmatpush1.msra.mxu0 %v1047
          %1081 = vmatprep.subr.mxu0 0.0
          %1082 = vmatpush1.msra.mxu0 %v1048
          %1083 = vmatprep.subr.mxu0 0.0
          %1084 = vmatpush1.msra.mxu0 %v1049
          %1085 = vmatprep.subr.mxu0 0.0
          %1086 = vmatpush1.msra.mxu0 %v1050
          %1087 = vmatprep.subr.mxu0 0.0
          %1088 = vmatpush1.msra.mxu0 %v1073
          %1089 = vmatprep.subr.mxu0 0.0
          %1090 = vmatpush1.msra.mxu0 0.0
          %1091 = vmatprep.subr.mxu0 0.0
          %1092 = vmatpush1.msra.mxu0 0.0
          %1093 = vmatprep.subr.mxu0 0.0
          %1094 = vmatpush1.msra.mxu0 0.0
          %1095 = vmatprep.subr.mxu0 0.0
          %1096 = vmatpush1.msra.mxu0 0.0
          %1097 = vmatprep.subr.mxu0 0.0
          %1098 = vmatpush1.msra.mxu0 0.0
          %1099 = vmatprep.subr.mxu0 0.0
          %1100 = vmatpush1.msra.mxu0 0.0
          %1101 = vmatprep.subr.mxu0 0.0
          %1102 = vmatpush1.msra.mxu0 0.0
          %1103 = vmatprep.subr.mxu0 0.0
          %1104 = vmatpush1.msra.mxu0 0.0
          %1105 = vmatprep.subr.mxu0 0.0
          %1106 = vmatpush1.msra.mxu0 0.0
          %1107 = vmatprep.subr.mxu0 0.0
          %1108 = vmatpush1.msra.mxu0 0.0
          %1109 = vmatprep.subr.mxu0 0.0
          %1110 = vmatpush1.msra.mxu0 0.0
          %1111 = vmatprep.subr.mxu0 0.0
          %1112 = vmatpush1.msra.mxu0 0.0
          %1113 = vmatprep.subr.mxu0 0.0
          %1114 = vmatpush1.msra.mxu0 0.0
          %1115 = vmatprep.subr.mxu0 0.0
          %1116 = vmatpush1.msra.mxu0 0.0
          %1117 = vmatprep.subr.mxu0 0.0
          %1118 = vmatpush1.msra.mxu0 0.0
          %1119 = vmatprep.subr.mxu0 0.0
          %1120 = vmatpush1.msra.mxu0 0.0
          %1121 = vmatprep.subr.mxu0 0.0
          %1122 = vmatpush1.msra.mxu0 0.0
          %1123 = vmatprep.subr.mxu0 0.0
          %1124 = vmatpush1.msra.mxu0 0.0
          %1125 = vmatprep.subr.mxu0 0.0
          %1126 = vmatpush1.msra.mxu0 0.0
          %1127 = vmatprep.subr.mxu0 0.0
          %1128 = vmatpush1.msra.mxu0 0.0
          %1129 = vmatprep.subr.mxu0 0.0
          %1130 = vmatpush1.msra.mxu0 0.0
          %1131 = vmatprep.subr.mxu0 0.0
          %1132 = vmatpush1.msra.mxu0 0.0
          %1133 = vmatprep.subr.mxu0 0.0
          %1134 = vmatpush1.msra.mxu0 0.0
          %1135 = vmatprep.subr.mxu0 0.0
          %1136 = vmatpush1.msra.mxu0 0.0
          %1137 = vmatprep.subr.mxu0 0.0
          %1138 = vmatpush1.msra.mxu0 0.0
          %1139 = vmatprep.mubr.f32.mxu0 0.0
          %1140 = vmatmul.mubr.f32.gmra.mrb[0].mxu0 %v1066
          %v1141 = vpop.f32.mrb[0].mxu0
          %v1142 = vadd.f32 %v1057, %v1141
          %v1143 = vpop.f32.mrb[0].mxu0
          %1144 = vmatprep.mubr.f32.mxu0 0.0
          %1145 = vmatmul.mubr.f32.gmra.mrb[0].mxu0 %v1069
          %v1146 = vpop.f32.mrb[0].mxu0
          %v1147 = vadd.f32 %v1062, %v1146
          %v1148 = vpop.f32.mrb[0].mxu0
          %1149 = vdwg.mxu0
          %v1150 = vpack.c.bf16 %v1147, %v1142
          %v1152 = vunpack.c.l.b16 %v1150
          %v1153 = vunpack.c.h.b16 %v1150
          %v1154 = vpack.c.b16 %v1152, %v1152
          %v1155 = vpack.c.b16 %v1153, %v1153
          %s1158 = smul.u32 %s807, 2
          %s1159 = smul.addr %s1158, 4
          %s1160 = scalar_lea.vmem %s231, %s1159 [#allocation10]
          %vm1161 = vcmask 125952
          %1162 = vst.msk [vmem:[%s1160] sm:$0xf] %vm1161, %v1154
          %1163 = vst.msk [vmem:[%s1160 + $0x4] sm:$0xf] %vm1161, %v1155
        $region49: #{ristdnet_forward.4} parent=31 // loop_footer
          %s811 = sadd.s32 1, %s807
        $region50: #{ristdnet_forward.4} parent=31 // loop_footer_branch
          %806 = sbr.rel target = $region46
        $region51: #{ristdnet_forward.4} parent=31 // loop_exit
          _
        %s1164 = sand.u32 %s111, 1
        %s1165 = scalar_lea.sflag [#allocation6], %s1164
        %s1166 = sand.u32 %s111, 1
        %s1167 = smul.addr %s1166, 128
        %s1168 = scalar_lea.vmem [#allocation10], %s1167
        // Predicated region
        $region52: #{ristdnet_forward.4} parent=31 // pred_check
          %p1169 = pneg %p121
        $region53: #{ristdnet_forward.4} parent=31 // pred_check_branch
          %1171 = sbr.rel (%p1169) target = $region55
        $region54: #{ristdnet_forward.4} parent=31 // pred_region
          %s1172 = smul.u32 16, %s26
          %s1174 = ssub.s32 2048, 2048
          %1175 = vsyncadd %s1165, %s1174
          %s1176 = smul.addr %s1172, 2
          %s1177 = smul.addr %s25, 32
          %s1178 = sadd.s32 %s1176, %s1177
          %s1179 = smul.addr %s1178, 64
          %s1180 = scalar_lea.hbm %s3, %s1179
          %s1181 = sshll.u32 %s1168, 4
          %s1182 = int_to_ptr.vmem [resolvable:$true] %s1181
          %1187 = dma.vmem_to_hbm [thread:$0]  %s1182, 2048, %s1180, %s1165, 64, 64, 4
        $region55: #{ristdnet_forward.4} parent=31 // pred_fallthru
          _
      $region32: #{ristdnet_forward.4} parent=5 // pred_fallthru
        _
      %p1188 = scmp.le.s32.totalorder 2, %s16
      // Predicated region
      $region56: #{ristdnet_forward.4} parent=5 // pred_check
        %p1189 = pneg %p1188
      $region57: #{ristdnet_forward.4} parent=5 // pred_check_branch
        %1191 = sbr.rel (%p1189) target = $region59
      $region58: #{ristdnet_forward.4} parent=5 // pred_region
        %s1192 = ssub.s32 %s16, 2
        // Predicated region
        $region60: #{ristdnet_forward.4} parent=58 // pred_check
          %p1193 = pneg %p127
        $region61: #{ristdnet_forward.4} parent=58 // pred_check_branch
          %1195 = sbr.rel (%p1193) target = $region63
        $region62: #{ristdnet_forward.4} parent=58 // pred_region
          %s1196 = sand.u32 %s112, 1
          %s1197 = scalar_lea.sflag [#allocation6], %s1196
          %s1198 = sand.u32 %s112, 1
          %s1199 = smul.addr %s1198, 128
          %s1200 = scalar_lea.vmem [#allocation10], %s1199
          %1201 = dma.done %s1197, 2048
        $region63: #{ristdnet_forward.4} parent=58 // pred_fallthru
          _
      $region59: #{ristdnet_forward.4} parent=5 // pred_fallthru
        _
    $region6: #{ristdnet_forward.4} parent=1 // loop_footer
      %s20 = sadd.s32 1, %s16
    $region7: #{ristdnet_forward.4} parent=1 // loop_footer_branch
      %15 = sbr.rel target = $region3
    $region8: #{ristdnet_forward.4} parent=1 // loop_exit
      _
    %1202 = vsyncpa [#allocation5], 1
    %s1203 = scalar_lea.sflag [#allocation5], 1
    %1204 = vsyncpa %s1203, 1
    %1205 = vsyncpa [#allocation8], 1
    %1206 = vsyncpa [#allocation6], 1
    %s1207 = scalar_lea.sflag [#allocation6], 1
    %1208 = vsyncpa %s1207, 1

// kernel: ristdnet_forward.5
$region0: #{ristdnet_forward.5}
  #allocation0 [shape = 'u32[]', space=smem, size = 0x4, offset = 0x4, fixed_abs, tag = 'smem constant byte address 0x4 - core index']
  #allocation1 [shape = 'u32[144,128]{1,0:T(1,128)}', space=vmem, size = 0x12000, scoped, tag = 'internal scratch']
  #allocation2 [shape = 'bf16[18,16,18]{2,1,0:T(16,128)(2,1)}', space=vmem, size = 0x12000, scoped, tag = 'scratch operand']
  #allocation3 [shape = 'bf16[144,16]{1,0:T(16,128)(2,1)}', space=vmem, size = 0x9000, scoped, tag = 'scratch operand']
  %s0 = inlined_call_operand.hbm [shape: bf16[2,16,16,16], index: 0, kind: input, shape index: {}]
  %s1 = inlined_call_operand.hbm [shape: bf16[16,144], index: 1, kind: input, shape index: {}]
  %s2 = inlined_call_operand.hbm [shape: f32[16,1], index: 2, kind: input, shape index: {}]
  %s3 = inlined_call_operand.hbm [shape: bf16[2,8,16,8], index: 3, kind: output, shape index: {}]
  %s4 = sld [smem:[#allocation0]]
  $region64: #{ristdnet_forward.5} parent=0
    _
  %s6 = ssub.s32 1, %s4
  %s7 = scalar_select 0, %s6, %s4
  $region1: #{ristdnet_forward.5} parent=0
    #allocation4 [shape = 'u8[131072]{0}', space=vmem, size = 0x20000, scoped, tag = 'input window, operand 0']
    #allocation5 [shape = 's32[2]{0}', space=sflag, size = 0x8, scoped, tag = 'scoped memory for ristdnet_forward.5']
    #allocation6 [shape = 's32[2]{0}', space=sflag, size = 0x8, scoped, tag = 'scoped memory for ristdnet_forward.5']
    #allocation7 [shape = 'u8[8192]{0}', space=vmem, size = 0x2000, scoped, tag = 'input window, operand 1, single buffered']
    #allocation8 [shape = 's32[1]{0}', space=sflag, size = 0x4, scoped, tag = 'scoped memory for ristdnet_forward.5']
    #allocation9 [shape = 'u8[8192]{0}', space=vmem, size = 0x2000, scoped, tag = 'input window, operand 2, single buffered']
    #allocation10 [shape = 'u8[65536]{0}', space=vmem, size = 0x10000, scoped, tag = 'output window, operand 0']
    %8 = vsyncpa [#allocation5], 0
    %s9 = scalar_lea.sflag [#allocation5], 1
    %10 = vsyncpa %s9, 0
    %11 = vsyncpa [#allocation8], 0
    %12 = vsyncpa [#allocation6], 0
    %s13 = scalar_lea.sflag [#allocation6], 1
    %14 = vsyncpa %s13, 0
    loop: start=0, step=1, limit=4
    $region2: #{ristdnet_forward.5} parent=1 // loop_pre_header
      _
    $region3: #{ristdnet_forward.5} parent=1 // loop_header
      %s16 = sphi 0, %s20
      %p17 = scmp.ge.s32.totalorder %s16, 4
      %s23 = sphi 0, %s35
      %s24 = sphi 0, %s31
      %s25 = sphi 0, %s23
      %s26 = sphi 0, %s24
      %s27 = sphi 0, %s25
      %s28 = sphi 0, %s26
      %s38 = sphi 0, %s40
      %s41 = sphi 0, %s38
      %s42 = sphi 0, %s41
      %s58 = sphi 0, %s42
      %s62 = sphi 0, %s62
      %s64 = sphi 0, %s62
      %s65 = sphi 0, %s64
      %s79 = sphi 0, %s65
      %s83 = sphi 0, %s83
      %s85 = sphi 0, %s83
      %s86 = sphi 0, %s85
      %s100 = sphi 0, %s86
      %s108 = sphi 0, %s110
      %s111 = sphi 0, %s108
      %s112 = sphi 0, %s111
      %s128 = sphi 0, %s112
    $region4: #{ristdnet_forward.5} parent=1 // loop_header_branch
      %19 = sbr.rel (%p17) target = $region8
    $region5: #{ristdnet_forward.5} parent=1 // loop_body
      %s21 = ssub.s32 %s16, 1
      %s22 = ssub.s32 %s16, 2
      %s29 = sadd.s32 1, %s24
      %p30 = scmp.ge.s32.totalorder %s29, 1
      %s31 = scalar_select %p30, 0, %s29
      %s32 = sadd.s32 1, %s23
      %s33 = scalar_select %p30, %s32, %s23
      %p34 = scmp.ge.s32.totalorder %s33, 2
      %s35 = scalar_select %p34, 0, %s33
      %s36 = ssub.s32 %s23, %s35
      %p37 = scmp.eq.s32.totalorder %s36, 0
      %s39 = sadd.s32 %s38, 1
      %s40 = scalar_select %p37, %s38, %s39
      %p43 = pneg %p37
      %p44 = scmp.eq.s32.totalorder %s16, 1
      %p45 = por %p43, %p44
      %p46 = scmp.ne.s32.totalorder %s38, %s41
      %p47 = scmp.eq.s32.totalorder %s16, 0
      %p48 = por %p46, %p47
      %p49 = scmp.ne.s32.totalorder %s38, %s41
      %p50 = scmp.eq.s32.totalorder %s21, 1
      %p51 = por %p49, %p50
      %p52 = scmp.ne.s32.totalorder %s41, %s42
      %p53 = scmp.eq.s32.totalorder %s21, 0
      %p54 = por %p52, %p53
      %p55 = scmp.ne.s32.totalorder %s41, %s42
      %p56 = scmp.eq.s32.totalorder %s22, 1
      %p57 = por %p55, %p56
      %p59 = scmp.ne.s32.totalorder %s42, %s58
      %p60 = scmp.eq.s32.totalorder %s22, 0
      %p61 = por %p59, %p60
      %s63 = sadd.s32 %s62, 1
      %p66 = scmp.eq.s32.totalorder %s16, 1
      %p67 = scmp.ne.s32.totalorder %s62, %s64
      %p68 = scmp.eq.s32.totalorder %s16, 0
      %p69 = por %p67, %p68
      %p70 = scmp.ne.s32.totalorder %s62, %s64
      %p71 = scmp.eq.s32.totalorder %s21, 1
      %p72 = por %p70, %p71
      %p73 = scmp.ne.s32.totalorder %s64, %s65
      %p74 = scmp.eq.s32.totalorder %s21, 0
      %p75 = por %p73, %p74
      %p76 = scmp.ne.s32.totalorder %s64, %s65
      %p77 = scmp.eq.s32.totalorder %s22, 1
      %p78 = por %p76, %p77
      %p80 = scmp.ne.s32.totalorder %s65, %s79
      %p81 = scmp.eq.s32.totalorder %s22, 0
      %p82 = por %p80, %p81
      %s84 = sadd.s32 %s83, 1
      %p87 = scmp.eq.s32.totalorder %s16, 1
      %p88 = scmp.ne.s32.totalorder %s83, %s85
      %p89 = scmp.eq.s32.totalorder %s16, 0
      %p90 = por %p88, %p89
      %p91 = scmp.ne.s32.totalorder %s83, %s85
      %p92 = scmp.eq.s32.totalorder %s21, 1
      %p93 = por %p91, %p92
      %p94 = scmp.ne.s32.totalorder %s85, %s86
      %p95 = scmp.eq.s32.totalorder %s21, 0
      %p96 = por %p94, %p95
      %p97 = scmp.ne.s32.totalorder %s85, %s86
      %p98 = scmp.eq.s32.totalorder %s22, 1
      %p99 = por %p97, %p98
      %p101 = scmp.ne.s32.totalorder %s86, %s100
      %p102 = scmp.eq.s32.totalorder %s22, 0
      %p103 = por %p101, %p102
      %s104 = ssub.s32 %s23, %s35
      %s105 = ssub.s32 %s24, %s31
      %s106 = sor.u32 %s104, %s105
      %p107 = scmp.eq.s32.totalorder %s106, 0
      %s109 = sadd.s32 %s108, 1
      %s110 = scalar_select %p107, %s108, %s109
      %p113 = pneg %p107
      %p114 = scmp.eq.s32.totalorder %s16, 1
      %p115 = por %p113, %p114
      %p116 = scmp.ne.s32.totalorder %s108, %s111
      %p117 = scmp.eq.s32.totalorder %s16, 0
      %p118 = por %p116, %p117
      %p119 = scmp.ne.s32.totalorder %s108, %s111
      %p120 = scmp.eq.s32.totalorder %s21, 1
      %p121 = por %p119, %p120
      %p122 = scmp.ne.s32.totalorder %s111, %s112
      %p123 = scmp.eq.s32.totalorder %s21, 0
      %p124 = por %p122, %p123
      %p125 = scmp.ne.s32.totalorder %s111, %s112
      %p126 = scmp.eq.s32.totalorder %s22, 1
      %p127 = por %p125, %p126
      %p129 = scmp.ne.s32.totalorder %s112, %s128
      %p130 = scmp.eq.s32.totalorder %s22, 0
      %p131 = por %p129, %p130
      %p132 = scmp.le.s32.totalorder 1, %s16
      %p133 = scmp.lt.s32.totalorder %s16, 3
      %p134 = pnand %p132, %p133
      %p135 = pneg %p134
      // Predicated region
      $region9: #{ristdnet_forward.5} parent=5 // pred_check
        _
      $region10: #{ristdnet_forward.5} parent=5 // pred_check_branch
        %137 = sbr.rel (%p134) target = $region12
      $region11: #{ristdnet_forward.5} parent=5 // pred_region
        %s138 = ssub.s32 %s16, 1
        // Predicated region
        $region13: #{ristdnet_forward.5} parent=11 // pred_check
          %p139 = pneg %p75
        $region14: #{ristdnet_forward.5} parent=11 // pred_check_branch
          %141 = sbr.rel (%p139) target = $region16
        $region15: #{ristdnet_forward.5} parent=11 // pred_region
          %s143 = ssub.s32 256, 256
          %144 = vsyncadd [#allocation8], %s143
          %s145 = sshll.u32 [#allocation7], 4
          %s146 = int_to_ptr.vmem [resolvable:$true] %s145
          %151 = dma.hbm_to_vmem [thread:$0]  %s1, 256, %s146, [#allocation8], 128, 128, 8
        $region16: #{ristdnet_forward.5} parent=11 // pred_fallthru
          _
        // Predicated region
        $region17: #{ristdnet_forward.5} parent=11 // pred_check
          %p152 = pneg %p96
        $region18: #{ristdnet_forward.5} parent=11 // pred_check_branch
          %154 = sbr.rel (%p152) target = $region20
        $region19: #{ristdnet_forward.5} parent=11 // pred_region
          %s156 = ssub.s32 256, 256
          %157 = vsyncadd [#allocation8], %s156
          %s158 = sshll.u32 [#allocation9], 4
          %s159 = int_to_ptr.vmem [resolvable:$true] %s158
          %164 = dma.hbm_to_vmem [thread:$0]  %s2, 256, %s159, [#allocation8], 128, 128, 8
        $region20: #{ristdnet_forward.5} parent=11 // pred_fallthru
          _
      $region12: #{ristdnet_forward.5} parent=5 // pred_fallthru
        _
      %p165 = scmp.lt.s32.totalorder %s16, 2
      // Predicated region
      $region21: #{ristdnet_forward.5} parent=5 // pred_check
        %p166 = pneg %p165
      $region22: #{ristdnet_forward.5} parent=5 // pred_check_branch
        %168 = sbr.rel (%p166) target = $region24
      $region23: #{ristdnet_forward.5} parent=5 // pred_region
        // Predicated region
        $region25: #{ristdnet_forward.5} parent=23 // pred_check
          %p169 = pneg %p48
        $region26: #{ristdnet_forward.5} parent=23 // pred_check_branch
          %171 = sbr.rel (%p169) target = $region28
        $region27: #{ristdnet_forward.5} parent=23 // pred_region
          %s172 = sand.u32 %s38, 1
          %s173 = scalar_lea.sflag [#allocation5], %s172
          %s174 = sand.u32 %s38, 1
          %s175 = smul.addr %s174, 128
          %s176 = scalar_lea.vmem [#allocation4], %s175
          %s178 = ssub.s32 2048, 2048
          %179 = vsyncadd %s173, %s178
          %s180 = smul.addr %s23, 32
          %s181 = smul.addr %s180, 64
          %s182 = scalar_lea.hbm %s0, %s181
          %s183 = sshll.u32 %s176, 4
          %s184 = int_to_ptr.vmem [resolvable:$true] %s183
          %189 = dma.hbm_to_vmem [thread:$0]  %s182, 2048, %s184, %s173, 64, 64, 4
        $region28: #{ristdnet_forward.5} parent=23 // pred_fallthru
          _
      $region24: #{ristdnet_forward.5} parent=5 // pred_fallthru
        _
      %p190 = scmp.le.s32.totalorder 1, %s16
      %p191 = scmp.lt.s32.totalorder %s16, 3
      %p192 = pnand %p190, %p191
      %p193 = pneg %p192
      // Predicated region
      $region29: #{ristdnet_forward.5} parent=5 // pred_check
        _
      $region30: #{ristdnet_forward.5} parent=5 // pred_check_branch
        %195 = sbr.rel (%p192) target = $region32
      $region31: #{ristdnet_forward.5} parent=5 // pred_region
        %s196 = ssub.s32 %s16, 1
        %s197 = sand.u32 %s41, 1
        %s198 = scalar_lea.sflag [#allocation5], %s197
        %s199 = sand.u32 %s41, 1
        %s200 = smul.addr %s199, 128
        %s201 = scalar_lea.vmem [#allocation4], %s200
        // Predicated region
        $region33: #{ristdnet_forward.5} parent=31 // pred_check
          %p202 = pneg %p54
        $region34: #{ristdnet_forward.5} parent=31 // pred_check_branch
          %204 = sbr.rel (%p202) target = $region36
        $region35: #{ristdnet_forward.5} parent=31 // pred_region
          %205 = dma.done %s198, 2048
        $region36: #{ristdnet_forward.5} parent=31 // pred_fallthru
          _
        // Predicated region
        $region37: #{ristdnet_forward.5} parent=31 // pred_check
          %p206 = pneg %p75
        $region38: #{ristdnet_forward.5} parent=31 // pred_check_branch
          %208 = sbr.rel (%p206) target = $region40
        $region39: #{ristdnet_forward.5} parent=31 // pred_region
          %209 = dma.done [#allocation8], 256
        $region40: #{ristdnet_forward.5} parent=31 // pred_fallthru
          _
        // Predicated region
        $region41: #{ristdnet_forward.5} parent=31 // pred_check
          %p210 = pneg %p96
        $region42: #{ristdnet_forward.5} parent=31 // pred_check_branch
          %212 = sbr.rel (%p210) target = $region44
        $region43: #{ristdnet_forward.5} parent=31 // pred_region
          %213 = dma.done [#allocation8], 256
        $region44: #{ristdnet_forward.5} parent=31 // pred_fallthru
          _
        %s214 = sand.u32 %s41, 1
        %s215 = scalar_lea.sflag [#allocation5], %s214
        %s216 = sand.u32 %s41, 1
        %s217 = smul.addr %s216, 128
        %s218 = scalar_lea.vmem [#allocation4], %s217
        %p219 = pneg %p54
        %p220 = pneg %p51
        %p221 = pneg %p75
        %p222 = pneg %p72
        %p223 = pneg %p96
        %p224 = pneg %p93
        %p225 = pneg %p124
        %p226 = pneg %p121
        %s227 = sand.u32 %s111, 1
        %s228 = scalar_lea.sflag [#allocation6], %s227
        %s229 = sand.u32 %s111, 1
        %s230 = smul.addr %s229, 64
        %s231 = scalar_lea.vmem [#allocation10], %s230
        %s232 = smul.u32 8, %s26
        %s234 = smul.u32 %s26, 16
        %vm235 = vcmask 146432
        %236 = vst.msk [vmem:[#allocation2] sm:$0xff] %vm235, 0
        %237 = vst.msk [vmem:[#allocation2 + $0x8] sm:$0xff] %vm235, 0
        %238 = vst.msk [vmem:[#allocation2 + $0x10] sm:$0xff] %vm235, 0
        %239 = vst.msk [vmem:[#allocation2 + $0x18] sm:$0xff] %vm235, 0
        %240 = vst.msk [vmem:[#allocation2 + $0x20] sm:$0xff] %vm235, 0
        %241 = vst.msk [vmem:[#allocation2 + $0x28] sm:$0xff] %vm235, 0
        %242 = vst.msk [vmem:[#allocation2 + $0x30] sm:$0xff] %vm235, 0
        %243 = vst.msk [vmem:[#allocation2 + $0x38] sm:$0xff] %vm235, 0
        %244 = vst.msk [vmem:[#allocation2 + $0x40] sm:$0xff] %vm235, 0
        %245 = vst.msk [vmem:[#allocation2 + $0x48] sm:$0xff] %vm235, 0
        %246 = vst.msk [vmem:[#allocation2 + $0x50] sm:$0xff] %vm235, 0
        %247 = vst.msk [vmem:[#allocation2 + $0x58] sm:$0xff] %vm235, 0
        %248 = vst.msk [vmem:[#allocation2 + $0x60] sm:$0xff] %vm235, 0
        %249 = vst.msk [vmem:[#allocation2 + $0x68] sm:$0xff] %vm235, 0
        %250 = vst.msk [vmem:[#allocation2 + $0x70] sm:$0xff] %vm235, 0
        %251 = vst.msk [vmem:[#allocation2 + $0x78] sm:$0xff] %vm235, 0
        %252 = vst.msk [vmem:[#allocation2 + $0x80] sm:$0xff] %vm235, 0
        %253 = vst.msk [vmem:[#allocation2 + $0x88] sm:$0xff] %vm235, 0
        %s254 = ssub.s32 %s234, 1
        %p255 = scmp.gt.s32.totalorder %s254, 0
        %s256 = scalar_select %p255, %s254, 0
        %p257 = scmp.lt.s32.totalorder %s256, 15
        %s258 = scalar_select %p257, %s256, 15
        %p259 = scmp.ge.s32.totalorder %s254, 0
        %p260 = scmp.lt.s32.totalorder %s254, 16
        %p261 = pnand %p259, %p260
        %p262 = pneg %p261
        %s263 = scalar_select %p262, 1, 0
        %s264 = scvt.s32.f32 %s263
        %p266 = scmp.ne.f32.partialorder %s264, %s264
        %s267 = sshrl.u32 %s264, 16
        %s268 = sand.u32 %s267, 1
        %s269 = sadd.s32 32767, %s268
        %s270 = sadd.s32 %s264, %s269
        %s271 = sand.u32 %s270, 4294901760
        %s272 = scalar_select %p266, 2143289344, %s271
        %s274 = sshrl.u32 %s272, 16
        %s275 = smul.u32 %s258, 2
        %s276 = smul.addr %s275, 4
        %s277 = scalar_lea.vmem %s201, %s276 [#allocation4]
        %v278 = vld [vmem:[%s277] sm:$0xf]
        %v279 = vld [vmem:[%s277 + $0x4] sm:$0xf]
        %s280 = sshll.u32 %s274, 16
        %s281 = sor.u32 %s274, %s280
        %v282 = vstv %s281
        %v284 = vmul.bf16 %v278, %v282
        %v285 = vmul.bf16 %v279, %v282
        %v288 = vunpack.c.l.b16 %v284
        %v289 = vunpack.c.l.b16 %v285
        %v290 = vpack.c.b16 %v289, %v288
        %291 = vrot.lane.b32.xlu0 %v290, 1
        %v292 = vpop.permute.xlu0 %291
        %vm294 = vcmask 138248
        %295 = vst.msk [vmem:[#allocation2] sm:$0xff] %vm294, %v292
        %p296 = scmp.gt.s32.totalorder %s234, 0
        %s297 = scalar_select %p296, %s234, 0
        %p298 = scmp.lt.s32.totalorder %s297, 15
        %s299 = scalar_select %p298, %s297, 15
        %p300 = scmp.ge.s32.totalorder %s234, 0
        %p301 = scmp.lt.s32.totalorder %s234, 16
        %p302 = pnand %p300, %p301
        %p303 = pneg %p302
        %s304 = scalar_select %p303, 1, 0
        %s305 = scvt.s32.f32 %s304
        %p307 = scmp.ne.f32.partialorder %s305, %s305
        %s308 = sshrl.u32 %s305, 16
        %s309 = sand.u32 %s308, 1
        %s310 = sadd.s32 32767, %s309
        %s311 = sadd.s32 %s305, %s310
        %s312 = sand.u32 %s311, 4294901760
        %s313 = scalar_select %p307, 2143289344, %s312
        %s315 = sshrl.u32 %s313, 16
        %s316 = smul.u32 %s299, 2
        %s317 = smul.addr %s316, 4
        %s318 = scalar_lea.vmem %s201, %s317 [#allocation4]
        %v319 = vld [vmem:[%s318] sm:$0xf]
        %v320 = vld [vmem:[%s318 + $0x4] sm:$0xf]
        %s321 = sshll.u32 %s315, 16
        %s322 = sor.u32 %s315, %s321
        %v323 = vstv %s322
        %v325 = vmul.bf16 %v319, %v323
        %v326 = vmul.bf16 %v320, %v323
        %v329 = vunpack.c.l.b16 %v325
        %v330 = vunpack.c.l.b16 %v326
        %v331 = vpack.c.b16 %v330, %v329
        %332 = vrot.lane.b32.xlu0 %v331, 1
        %v333 = vpop.permute.xlu0 %332
        %s335 = scalar_lea.vmem [#allocation2], 8
        %336 = vst.msk [vmem:[%s335] sm:$0xff] %vm294, %v333
        %s337 = sadd.s32 %s234, 1
        %p338 = scmp.gt.s32.totalorder %s337, 0
        %s339 = scalar_select %p338, %s337, 0
        %p340 = scmp.lt.s32.totalorder %s339, 15
        %s341 = scalar_select %p340, %s339, 15
        %p342 = scmp.ge.s32.totalorder %s337, 0
        %p343 = scmp.lt.s32.totalorder %s337, 16
        %p344 = pnand %p342, %p343
        %p345 = pneg %p344
        %s346 = scalar_select %p345, 1, 0
        %s347 = scvt.s32.f32 %s346
        %p349 = scmp.ne.f32.partialorder %s347, %s347
        %s350 = sshrl.u32 %s347, 16
        %s351 = sand.u32 %s350, 1
        %s352 = sadd.s32 32767, %s351
        %s353 = sadd.s32 %s347, %s352
        %s354 = sand.u32 %s353, 4294901760
        %s355 = scalar_select %p349, 2143289344, %s354
        %s357 = sshrl.u32 %s355, 16
        %s358 = smul.u32 %s341, 2
        %s359 = smul.addr %s358, 4
        %s360 = scalar_lea.vmem %s201, %s359 [#allocation4]
        %v361 = vld [vmem:[%s360] sm:$0xf]
        %v362 = vld [vmem:[%s360 + $0x4] sm:$0xf]
        %s363 = sshll.u32 %s357, 16
        %s364 = sor.u32 %s357, %s363
        %v365 = vstv %s364
        %v367 = vmul.bf16 %v361, %v365
        %v368 = vmul.bf16 %v362, %v365
        %v371 = vunpack.c.l.b16 %v367
        %v372 = vunpack.c.l.b16 %v368
        %v373 = vpack.c.b16 %v372, %v371
        %374 = vrot.lane.b32.xlu0 %v373, 1
        %v375 = vpop.permute.xlu0 %374
        %s377 = scalar_lea.vmem [#allocation2], 16
        %378 = vst.msk [vmem:[%s377] sm:$0xff] %vm294, %v375
        %s379 = sadd.s32 %s234, 2
        %p380 = scmp.gt.s32.totalorder %s379, 0
        %s381 = scalar_select %p380, %s379, 0
        %p382 = scmp.lt.s32.totalorder %s381, 15
        %s383 = scalar_select %p382, %s381, 15
        %p384 = scmp.ge.s32.totalorder %s379, 0
        %p385 = scmp.lt.s32.totalorder %s379, 16
        %p386 = pnand %p384, %p385
        %p387 = pneg %p386
        %s388 = scalar_select %p387, 1, 0
        %s389 = scvt.s32.f32 %s388
        %p391 = scmp.ne.f32.partialorder %s389, %s389
        %s392 = sshrl.u32 %s389, 16
        %s393 = sand.u32 %s392, 1
        %s394 = sadd.s32 32767, %s393
        %s395 = sadd.s32 %s389, %s394
        %s396 = sand.u32 %s395, 4294901760
        %s397 = scalar_select %p391, 2143289344, %s396
        %s399 = sshrl.u32 %s397, 16
        %s400 = smul.u32 %s383, 2
        %s401 = smul.addr %s400, 4
        %s402 = scalar_lea.vmem %s201, %s401 [#allocation4]
        %v403 = vld [vmem:[%s402] sm:$0xf]
        %v404 = vld [vmem:[%s402 + $0x4] sm:$0xf]
        %s405 = sshll.u32 %s399, 16
        %s406 = sor.u32 %s399, %s405
        %v407 = vstv %s406
        %v409 = vmul.bf16 %v403, %v407
        %v410 = vmul.bf16 %v404, %v407
        %v413 = vunpack.c.l.b16 %v409
        %v414 = vunpack.c.l.b16 %v410
        %v415 = vpack.c.b16 %v414, %v413
        %416 = vrot.lane.b32.xlu0 %v415, 1
        %v417 = vpop.permute.xlu0 %416
        %s419 = scalar_lea.vmem [#allocation2], 24
        %420 = vst.msk [vmem:[%s419] sm:$0xff] %vm294, %v417
        %s421 = sadd.s32 %s234, 3
        %p422 = scmp.gt.s32.totalorder %s421, 0
        %s423 = scalar_select %p422, %s421, 0
        %p424 = scmp.lt.s32.totalorder %s423, 15
        %s425 = scalar_select %p424, %s423, 15
        %p426 = scmp.ge.s32.totalorder %s421, 0
        %p427 = scmp.lt.s32.totalorder %s421, 16
        %p428 = pnand %p426, %p427
        %p429 = pneg %p428
        %s430 = scalar_select %p429, 1, 0
        %s431 = scvt.s32.f32 %s430
        %p433 = scmp.ne.f32.partialorder %s431, %s431
        %s434 = sshrl.u32 %s431, 16
        %s435 = sand.u32 %s434, 1
        %s436 = sadd.s32 32767, %s435
        %s437 = sadd.s32 %s431, %s436
        %s438 = sand.u32 %s437, 4294901760
        %s439 = scalar_select %p433, 2143289344, %s438
        %s441 = sshrl.u32 %s439, 16
        %s442 = smul.u32 %s425, 2
        %s443 = smul.addr %s442, 4
        %s444 = scalar_lea.vmem %s201, %s443 [#allocation4]
        %v445 = vld [vmem:[%s444] sm:$0xf]
        %v446 = vld [vmem:[%s444 + $0x4] sm:$0xf]
        %s447 = sshll.u32 %s441, 16
        %s448 = sor.u32 %s441, %s447
        %v449 = vstv %s448
        %v451 = vmul.bf16 %v445, %v449
        %v452 = vmul.bf16 %v446, %v449
        %v455 = vunpack.c.l.b16 %v451
        %v456 = vunpack.c.l.b16 %v452
        %v457 = vpack.c.b16 %v456, %v455
        %458 = vrot.lane.b32.xlu0 %v457, 1
        %v459 = vpop.permute.xlu0 %458
        %s461 = scalar_lea.vmem [#allocation2], 32
        %462 = vst.msk [vmem:[%s461] sm:$0xff] %vm294, %v459
        %s463 = sadd.s32 %s234, 4
        %p464 = scmp.gt.s32.totalorder %s463, 0
        %s465 = scalar_select %p464, %s463, 0
        %p466 = scmp.lt.s32.totalorder %s465, 15
        %s467 = scalar_select %p466, %s465, 15
        %p468 = scmp.ge.s32.totalorder %s463, 0
        %p469 = scmp.lt.s32.totalorder %s463, 16
        %p470 = pnand %p468, %p469
        %p471 = pneg %p470
        %s472 = scalar_select %p471, 1, 0
        %s473 = scvt.s32.f32 %s472
        %p475 = scmp.ne.f32.partialorder %s473, %s473
        %s476 = sshrl.u32 %s473, 16
        %s477 = sand.u32 %s476, 1
        %s478 = sadd.s32 32767, %s477
        %s479 = sadd.s32 %s473, %s478
        %s480 = sand.u32 %s479, 4294901760
        %s481 = scalar_select %p475, 2143289344, %s480
        %s483 = sshrl.u32 %s481, 16
        %s484 = smul.u32 %s467, 2
        %s485 = smul.addr %s484, 4
        %s486 = scalar_lea.vmem %s201, %s485 [#allocation4]
        %v487 = vld [vmem:[%s486] sm:$0xf]
        %v488 = vld [vmem:[%s486 + $0x4] sm:$0xf]
        %s489 = sshll.u32 %s483, 16
        %s490 = sor.u32 %s483, %s489
        %v491 = vstv %s490
        %v493 = vmul.bf16 %v487, %v491
        %v494 = vmul.bf16 %v488, %v491
        %v497 = vunpack.c.l.b16 %v493
        %v498 = vunpack.c.l.b16 %v494
        %v499 = vpack.c.b16 %v498, %v497
        %500 = vrot.lane.b32.xlu0 %v499, 1
        %v501 = vpop.permute.xlu0 %500
        %s503 = scalar_lea.vmem [#allocation2], 40
        %504 = vst.msk [vmem:[%s503] sm:$0xff] %vm294, %v501
        %s505 = sadd.s32 %s234, 5
        %p506 = scmp.gt.s32.totalorder %s505, 0
        %s507 = scalar_select %p506, %s505, 0
        %p508 = scmp.lt.s32.totalorder %s507, 15
        %s509 = scalar_select %p508, %s507, 15
        %p510 = scmp.ge.s32.totalorder %s505, 0
        %p511 = scmp.lt.s32.totalorder %s505, 16
        %p512 = pnand %p510, %p511
        %p513 = pneg %p512
        %s514 = scalar_select %p513, 1, 0
        %s515 = scvt.s32.f32 %s514
        %p517 = scmp.ne.f32.partialorder %s515, %s515
        %s518 = sshrl.u32 %s515, 16
        %s519 = sand.u32 %s518, 1
        %s520 = sadd.s32 32767, %s519
        %s521 = sadd.s32 %s515, %s520
        %s522 = sand.u32 %s521, 4294901760
        %s523 = scalar_select %p517, 2143289344, %s522
        %s525 = sshrl.u32 %s523, 16
        %s526 = smul.u32 %s509, 2
        %s527 = smul.addr %s526, 4
        %s528 = scalar_lea.vmem %s201, %s527 [#allocation4]
        %v529 = vld [vmem:[%s528] sm:$0xf]
        %v530 = vld [vmem:[%s528 + $0x4] sm:$0xf]
        %s531 = sshll.u32 %s525, 16
        %s532 = sor.u32 %s525, %s531
        %v533 = vstv %s532
        %v535 = vmul.bf16 %v529, %v533
        %v536 = vmul.bf16 %v530, %v533
        %v539 = vunpack.c.l.b16 %v535
        %v540 = vunpack.c.l.b16 %v536
        %v541 = vpack.c.b16 %v540, %v539
        %542 = vrot.lane.b32.xlu0 %v541, 1
        %v543 = vpop.permute.xlu0 %542
        %s545 = scalar_lea.vmem [#allocation2], 48
        %546 = vst.msk [vmem:[%s545] sm:$0xff] %vm294, %v543
        %s547 = sadd.s32 %s234, 6
        %p548 = scmp.gt.s32.totalorder %s547, 0
        %s549 = scalar_select %p548, %s547, 0
        %p550 = scmp.lt.s32.totalorder %s549, 15
        %s551 = scalar_select %p550, %s549, 15
        %p552 = scmp.ge.s32.totalorder %s547, 0
        %p553 = scmp.lt.s32.totalorder %s547, 16
        %p554 = pnand %p552, %p553
        %p555 = pneg %p554
        %s556 = scalar_select %p555, 1, 0
        %s557 = scvt.s32.f32 %s556
        %p559 = scmp.ne.f32.partialorder %s557, %s557
        %s560 = sshrl.u32 %s557, 16
        %s561 = sand.u32 %s560, 1
        %s562 = sadd.s32 32767, %s561
        %s563 = sadd.s32 %s557, %s562
        %s564 = sand.u32 %s563, 4294901760
        %s565 = scalar_select %p559, 2143289344, %s564
        %s567 = sshrl.u32 %s565, 16
        %s568 = smul.u32 %s551, 2
        %s569 = smul.addr %s568, 4
        %s570 = scalar_lea.vmem %s201, %s569 [#allocation4]
        %v571 = vld [vmem:[%s570] sm:$0xf]
        %v572 = vld [vmem:[%s570 + $0x4] sm:$0xf]
        %s573 = sshll.u32 %s567, 16
        %s574 = sor.u32 %s567, %s573
        %v575 = vstv %s574
        %v577 = vmul.bf16 %v571, %v575
        %v578 = vmul.bf16 %v572, %v575
        %v581 = vunpack.c.l.b16 %v577
        %v582 = vunpack.c.l.b16 %v578
        %v583 = vpack.c.b16 %v582, %v581
        %584 = vrot.lane.b32.xlu0 %v583, 1
        %v585 = vpop.permute.xlu0 %584
        %s587 = scalar_lea.vmem [#allocation2], 56
        %588 = vst.msk [vmem:[%s587] sm:$0xff] %vm294, %v585
        %s589 = sadd.s32 %s234, 7
        %p590 = scmp.gt.s32.totalorder %s589, 0
        %s591 = scalar_select %p590, %s589, 0
        %p592 = scmp.lt.s32.totalorder %s591, 15
        %s593 = scalar_select %p592, %s591, 15
        %p594 = scmp.ge.s32.totalorder %s589, 0
        %p595 = scmp.lt.s32.totalorder %s589, 16
        %p596 = pnand %p594, %p595
        %p597 = pneg %p596
        %s598 = scalar_select %p597, 1, 0
        %s599 = scvt.s32.f32 %s598
        %p601 = scmp.ne.f32.partialorder %s599, %s599
        %s602 = sshrl.u32 %s599, 16
        %s603 = sand.u32 %s602, 1
        %s604 = sadd.s32 32767, %s603
        %s605 = sadd.s32 %s599, %s604
        %s606 = sand.u32 %s605, 4294901760
        %s607 = scalar_select %p601, 2143289344, %s606
        %s609 = sshrl.u32 %s607, 16
        %s610 = smul.u32 %s593, 2
        %s611 = smul.addr %s610, 4
        %s612 = scalar_lea.vmem %s201, %s611 [#allocation4]
        %v613 = vld [vmem:[%s612] sm:$0xf]
        %v614 = vld [vmem:[%s612 + $0x4] sm:$0xf]
        %s615 = sshll.u32 %s609, 16
        %s616 = sor.u32 %s609, %s615
        %v617 = vstv %s616
        %v619 = vmul.bf16 %v613, %v617
        %v620 = vmul.bf16 %v614, %v617
        %v623 = vunpack.c.l.b16 %v619
        %v624 = vunpack.c.l.b16 %v620
        %v625 = vpack.c.b16 %v624, %v623
        %626 = vrot.lane.b32.xlu0 %v625, 1
        %v627 = vpop.permute.xlu0 %626
        %s629 = scalar_lea.vmem [#allocation2], 64
        %630 = vst.msk [vmem:[%s629] sm:$0xff] %vm294, %v627
        %s631 = sadd.s32 %s234, 8
        %p632 = scmp.gt.s32.totalorder %s631, 0
        %s633 = scalar_select %p632, %s631, 0
        %p634 = scmp.lt.s32.totalorder %s633, 15
        %s635 = scalar_select %p634, %s633, 15
        %p636 = scmp.ge.s32.totalorder %s631, 0
        %p637 = scmp.lt.s32.totalorder %s631, 16
        %p638 = pnand %p636, %p637
        %p639 = pneg %p638
        %s640 = scalar_select %p639, 1, 0
        %s641 = scvt.s32.f32 %s640
        %p643 = scmp.ne.f32.partialorder %s641, %s641
        %s644 = sshrl.u32 %s641, 16
        %s645 = sand.u32 %s644, 1
        %s646 = sadd.s32 32767, %s645
        %s647 = sadd.s32 %s641, %s646
        %s648 = sand.u32 %s647, 4294901760
        %s649 = scalar_select %p643, 2143289344, %s648
        %s651 = sshrl.u32 %s649, 16
        %s652 = smul.u32 %s635, 2
        %s653 = smul.addr %s652, 4
        %s654 = scalar_lea.vmem %s201, %s653 [#allocation4]
        %v655 = vld [vmem:[%s654] sm:$0xf]
        %v656 = vld [vmem:[%s654 + $0x4] sm:$0xf]
        %s657 = sshll.u32 %s651, 16
        %s658 = sor.u32 %s651, %s657
        %v659 = vstv %s658
        %v661 = vmul.bf16 %v655, %v659
        %v662 = vmul.bf16 %v656, %v659
        %v665 = vunpack.c.l.b16 %v661
        %v666 = vunpack.c.l.b16 %v662
        %v667 = vpack.c.b16 %v666, %v665
        %668 = vrot.lane.b32.xlu0 %v667, 1
        %v669 = vpop.permute.xlu0 %668
        %s671 = scalar_lea.vmem [#allocation2], 72
        %672 = vst.msk [vmem:[%s671] sm:$0xff] %vm294, %v669
        %s673 = sadd.s32 %s234, 9
        %p674 = scmp.gt.s32.totalorder %s673, 0
        %s675 = scalar_select %p674, %s673, 0
        %p676 = scmp.lt.s32.totalorder %s675, 15
        %s677 = scalar_select %p676, %s675, 15
        %p678 = scmp.ge.s32.totalorder %s673, 0
        %p679 = scmp.lt.s32.totalorder %s673, 16
        %p680 = pnand %p678, %p679
        %p681 = pneg %p680
        %s682 = scalar_select %p681, 1, 0
        %s683 = scvt.s32.f32 %s682
        %p685 = scmp.ne.f32.partialorder %s683, %s683
        %s686 = sshrl.u32 %s683, 16
        %s687 = sand.u32 %s686, 1
        %s688 = sadd.s32 32767, %s687
        %s689 = sadd.s32 %s683, %s688
        %s690 = sand.u32 %s689, 4294901760
        %s691 = scalar_select %p685, 2143289344, %s690
        %s693 = sshrl.u32 %s691, 16
        %s694 = smul.u32 %s677, 2
        %s695 = smul.addr %s694, 4
        %s696 = scalar_lea.vmem %s201, %s695 [#allocation4]
        %v697 = vld [vmem:[%s696] sm:$0xf]
        %v698 = vld [vmem:[%s696 + $0x4] sm:$0xf]
        %s699 = sshll.u32 %s693, 16
        %s700 = sor.u32 %s693, %s699
        %v701 = vstv %s700
        %v703 = vmul.bf16 %v697, %v701
        %v704 = vmul.bf16 %v698, %v701
        %v707 = vunpack.c.l.b16 %v703
        %v708 = vunpack.c.l.b16 %v704
        %v709 = vpack.c.b16 %v708, %v707
        %710 = vrot.lane.b32.xlu0 %v709, 1
        %v711 = vpop.permute.xlu0 %710
        %s713 = scalar_lea.vmem [#allocation2], 80
        %714 = vst.msk [vmem:[%s713] sm:$0xff] %vm294, %v711
        %s715 = sadd.s32 %s234, 10
        %p716 = scmp.gt.s32.totalorder %s715, 0
        %s717 = scalar_select %p716, %s715, 0
        %p718 = scmp.lt.s32.totalorder %s717, 15
        %s719 = scalar_select %p718, %s717, 15
        %p720 = scmp.ge.s32.totalorder %s715, 0
        %p721 = scmp.lt.s32.totalorder %s715, 16
        %p722 = pnand %p720, %p721
        %p723 = pneg %p722
        %s724 = scalar_select %p723, 1, 0
        %s725 = scvt.s32.f32 %s724
        %p727 = scmp.ne.f32.partialorder %s725, %s725
        %s728 = sshrl.u32 %s725, 16
        %s729 = sand.u32 %s728, 1
        %s730 = sadd.s32 32767, %s729
        %s731 = sadd.s32 %s725, %s730
        %s732 = sand.u32 %s731, 4294901760
        %s733 = scalar_select %p727, 2143289344, %s732
        %s735 = sshrl.u32 %s733, 16
        %s736 = smul.u32 %s719, 2
        %s737 = smul.addr %s736, 4
        %s738 = scalar_lea.vmem %s201, %s737 [#allocation4]
        %v739 = vld [vmem:[%s738] sm:$0xf]
        %v740 = vld [vmem:[%s738 + $0x4] sm:$0xf]
        %s741 = sshll.u32 %s735, 16
        %s742 = sor.u32 %s735, %s741
        %v743 = vstv %s742
        %v745 = vmul.bf16 %v739, %v743
        %v746 = vmul.bf16 %v740, %v743
        %v749 = vunpack.c.l.b16 %v745
        %v750 = vunpack.c.l.b16 %v746
        %v751 = vpack.c.b16 %v750, %v749
        %752 = vrot.lane.b32.xlu0 %v751, 1
        %v753 = vpop.permute.xlu0 %752
        %s755 = scalar_lea.vmem [#allocation2], 88
        %756 = vst.msk [vmem:[%s755] sm:$0xff] %vm294, %v753
        %s757 = sadd.s32 %s234, 11
        %p758 = scmp.gt.s32.totalorder %s757, 0
        %s759 = scalar_select %p758, %s757, 0
        %p760 = scmp.lt.s32.totalorder %s759, 15
        %s761 = scalar_select %p760, %s759, 15
        %p762 = scmp.ge.s32.totalorder %s757, 0
        %p763 = scmp.lt.s32.totalorder %s757, 16
        %p764 = pnand %p762, %p763
        %p765 = pneg %p764
        %s766 = scalar_select %p765, 1, 0
        %s767 = scvt.s32.f32 %s766
        %p769 = scmp.ne.f32.partialorder %s767, %s767
        %s770 = sshrl.u32 %s767, 16
        %s771 = sand.u32 %s770, 1
        %s772 = sadd.s32 32767, %s771
        %s773 = sadd.s32 %s767, %s772
        %s774 = sand.u32 %s773, 4294901760
        %s775 = scalar_select %p769, 2143289344, %s774
        %s777 = sshrl.u32 %s775, 16
        %s778 = smul.u32 %s761, 2
        %s779 = smul.addr %s778, 4
        %s780 = scalar_lea.vmem %s201, %s779 [#allocation4]
        %v781 = vld [vmem:[%s780] sm:$0xf]
        %v782 = vld [vmem:[%s780 + $0x4] sm:$0xf]
        %s783 = sshll.u32 %s777, 16
        %s784 = sor.u32 %s777, %s783
        %v785 = vstv %s784
        %v787 = vmul.bf16 %v781, %v785
        %v788 = vmul.bf16 %v782, %v785
        %v791 = vunpack.c.l.b16 %v787
        %v792 = vunpack.c.l.b16 %v788
        %v793 = vpack.c.b16 %v792, %v791
        %794 = vrot.lane.b32.xlu0 %v793, 1
        %v795 = vpop.permute.xlu0 %794
        %s797 = scalar_lea.vmem [#allocation2], 96
        %798 = vst.msk [vmem:[%s797] sm:$0xff] %vm294, %v795
        %s799 = sadd.s32 %s234, 12
        %p800 = scmp.gt.s32.totalorder %s799, 0
        %s801 = scalar_select %p800, %s799, 0
        %p802 = scmp.lt.s32.totalorder %s801, 15
        %s803 = scalar_select %p802, %s801, 15
        %p804 = scmp.ge.s32.totalorder %s799, 0
        %p805 = scmp.lt.s32.totalorder %s799, 16
        %p806 = pnand %p804, %p805
        %p807 = pneg %p806
        %s808 = scalar_select %p807, 1, 0
        %s809 = scvt.s32.f32 %s808
        %p811 = scmp.ne.f32.partialorder %s809, %s809
        %s812 = sshrl.u32 %s809, 16
        %s813 = sand.u32 %s812, 1
        %s814 = sadd.s32 32767, %s813
        %s815 = sadd.s32 %s809, %s814
        %s816 = sand.u32 %s815, 4294901760
        %s817 = scalar_select %p811, 2143289344, %s816
        %s819 = sshrl.u32 %s817, 16
        %s820 = smul.u32 %s803, 2
        %s821 = smul.addr %s820, 4
        %s822 = scalar_lea.vmem %s201, %s821 [#allocation4]
        %v823 = vld [vmem:[%s822] sm:$0xf]
        %v824 = vld [vmem:[%s822 + $0x4] sm:$0xf]
        %s825 = sshll.u32 %s819, 16
        %s826 = sor.u32 %s819, %s825
        %v827 = vstv %s826
        %v829 = vmul.bf16 %v823, %v827
        %v830 = vmul.bf16 %v824, %v827
        %v833 = vunpack.c.l.b16 %v829
        %v834 = vunpack.c.l.b16 %v830
        %v835 = vpack.c.b16 %v834, %v833
        %836 = vrot.lane.b32.xlu0 %v835, 1
        %v837 = vpop.permute.xlu0 %836
        %s839 = scalar_lea.vmem [#allocation2], 104
        %840 = vst.msk [vmem:[%s839] sm:$0xff] %vm294, %v837
        %s841 = sadd.s32 %s234, 13
        %p842 = scmp.gt.s32.totalorder %s841, 0
        %s843 = scalar_select %p842, %s841, 0
        %p844 = scmp.lt.s32.totalorder %s843, 15
        %s845 = scalar_select %p844, %s843, 15
        %p846 = scmp.ge.s32.totalorder %s841, 0
        %p847 = scmp.lt.s32.totalorder %s841, 16
        %p848 = pnand %p846, %p847
        %p849 = pneg %p848
        %s850 = scalar_select %p849, 1, 0
        %s851 = scvt.s32.f32 %s850
        %p853 = scmp.ne.f32.partialorder %s851, %s851
        %s854 = sshrl.u32 %s851, 16
        %s855 = sand.u32 %s854, 1
        %s856 = sadd.s32 32767, %s855
        %s857 = sadd.s32 %s851, %s856
        %s858 = sand.u32 %s857, 4294901760
        %s859 = scalar_select %p853, 2143289344, %s858
        %s861 = sshrl.u32 %s859, 16
        %s862 = smul.u32 %s845, 2
        %s863 = smul.addr %s862, 4
        %s864 = scalar_lea.vmem %s201, %s863 [#allocation4]
        %v865 = vld [vmem:[%s864] sm:$0xf]
        %v866 = vld [vmem:[%s864 + $0x4] sm:$0xf]
        %s867 = sshll.u32 %s861, 16
        %s868 = sor.u32 %s861, %s867
        %v869 = vstv %s868
        %v871 = vmul.bf16 %v865, %v869
        %v872 = vmul.bf16 %v866, %v869
        %v875 = vunpack.c.l.b16 %v871
        %v876 = vunpack.c.l.b16 %v872
        %v877 = vpack.c.b16 %v876, %v875
        %878 = vrot.lane.b32.xlu0 %v877, 1
        %v879 = vpop.permute.xlu0 %878
        %s881 = scalar_lea.vmem [#allocation2], 112
        %882 = vst.msk [vmem:[%s881] sm:$0xff] %vm294, %v879
        %s883 = sadd.s32 %s234, 14
        %p884 = scmp.gt.s32.totalorder %s883, 0
        %s885 = scalar_select %p884, %s883, 0
        %p886 = scmp.lt.s32.totalorder %s885, 15
        %s887 = scalar_select %p886, %s885, 15
        %p888 = scmp.ge.s32.totalorder %s883, 0
        %p889 = scmp.lt.s32.totalorder %s883, 16
        %p890 = pnand %p888, %p889
        %p891 = pneg %p890
        %s892 = scalar_select %p891, 1, 0
        %s893 = scvt.s32.f32 %s892
        %p895 = scmp.ne.f32.partialorder %s893, %s893
        %s896 = sshrl.u32 %s893, 16
        %s897 = sand.u32 %s896, 1
        %s898 = sadd.s32 32767, %s897
        %s899 = sadd.s32 %s893, %s898
        %s900 = sand.u32 %s899, 4294901760
        %s901 = scalar_select %p895, 2143289344, %s900
        %s903 = sshrl.u32 %s901, 16
        %s904 = smul.u32 %s887, 2
        %s905 = smul.addr %s904, 4
        %s906 = scalar_lea.vmem %s201, %s905 [#allocation4]
        %v907 = vld [vmem:[%s906] sm:$0xf]
        %v908 = vld [vmem:[%s906 + $0x4] sm:$0xf]
        %s909 = sshll.u32 %s903, 16
        %s910 = sor.u32 %s903, %s909
        %v911 = vstv %s910
        %v913 = vmul.bf16 %v907, %v911
        %v914 = vmul.bf16 %v908, %v911
        %v917 = vunpack.c.l.b16 %v913
        %v918 = vunpack.c.l.b16 %v914
        %v919 = vpack.c.b16 %v918, %v917
        %920 = vrot.lane.b32.xlu0 %v919, 1
        %v921 = vpop.permute.xlu0 %920
        %s923 = scalar_lea.vmem [#allocation2], 120
        %924 = vst.msk [vmem:[%s923] sm:$0xff] %vm294, %v921
        %s925 = sadd.s32 %s234, 15
        %p926 = scmp.gt.s32.totalorder %s925, 0
        %s927 = scalar_select %p926, %s925, 0
        %p928 = scmp.lt.s32.totalorder %s927, 15
        %s929 = scalar_select %p928, %s927, 15
        %p930 = scmp.ge.s32.totalorder %s925, 0
        %p931 = scmp.lt.s32.totalorder %s925, 16
        %p932 = pnand %p930, %p931
        %p933 = pneg %p932
        %s934 = scalar_select %p933, 1, 0
        %s935 = scvt.s32.f32 %s934
        %p937 = scmp.ne.f32.partialorder %s935, %s935
        %s938 = sshrl.u32 %s935, 16
        %s939 = sand.u32 %s938, 1
        %s940 = sadd.s32 32767, %s939
        %s941 = sadd.s32 %s935, %s940
        %s942 = sand.u32 %s941, 4294901760
        %s943 = scalar_select %p937, 2143289344, %s942
        %s945 = sshrl.u32 %s943, 16
        %s946 = smul.u32 %s929, 2
        %s947 = smul.addr %s946, 4
        %s948 = scalar_lea.vmem %s201, %s947 [#allocation4]
        %v949 = vld [vmem:[%s948] sm:$0xf]
        %v950 = vld [vmem:[%s948 + $0x4] sm:$0xf]
        %s951 = sshll.u32 %s945, 16
        %s952 = sor.u32 %s945, %s951
        %v953 = vstv %s952
        %v955 = vmul.bf16 %v949, %v953
        %v956 = vmul.bf16 %v950, %v953
        %v959 = vunpack.c.l.b16 %v955
        %v960 = vunpack.c.l.b16 %v956
        %v961 = vpack.c.b16 %v960, %v959
        %962 = vrot.lane.b32.xlu0 %v961, 1
        %v963 = vpop.permute.xlu0 %962
        %s965 = scalar_lea.vmem [#allocation2], 128
        %966 = vst.msk [vmem:[%s965] sm:$0xff] %vm294, %v963
        %s967 = sadd.s32 %s234, 16
        %p968 = scmp.gt.s32.totalorder %s967, 0
        %s969 = scalar_select %p968, %s967, 0
        %p970 = scmp.lt.s32.totalorder %s969, 15
        %s971 = scalar_select %p970, %s969, 15
        %p972 = scmp.ge.s32.totalorder %s967, 0
        %p973 = scmp.lt.s32.totalorder %s967, 16
        %p974 = pnand %p972, %p973
        %p975 = pneg %p974
        %s976 = scalar_select %p975, 1, 0
        %s977 = scvt.s32.f32 %s976
        %p979 = scmp.ne.f32.partialorder %s977, %s977
        %s980 = sshrl.u32 %s977, 16
        %s981 = sand.u32 %s980, 1
        %s982 = sadd.s32 32767, %s981
        %s983 = sadd.s32 %s977, %s982
        %s984 = sand.u32 %s983, 4294901760
        %s985 = scalar_select %p979, 2143289344, %s984
        %s987 = sshrl.u32 %s985, 16
        %s988 = smul.u32 %s971, 2
        %s989 = smul.addr %s988, 4
        %s990 = scalar_lea.vmem %s201, %s989 [#allocation4]
        %v991 = vld [vmem:[%s990] sm:$0xf]
        %v992 = vld [vmem:[%s990 + $0x4] sm:$0xf]
        %s993 = sshll.u32 %s987, 16
        %s994 = sor.u32 %s987, %s993
        %v995 = vstv %s994
        %v997 = vmul.bf16 %v991, %v995
        %v998 = vmul.bf16 %v992, %v995
        %v1001 = vunpack.c.l.b16 %v997
        %v1002 = vunpack.c.l.b16 %v998
        %v1003 = vpack.c.b16 %v1002, %v1001
        %1004 = vrot.lane.b32.xlu0 %v1003, 1
        %v1005 = vpop.permute.xlu0 %1004
        %s1007 = scalar_lea.vmem [#allocation2], 136
        %1008 = vst.msk [vmem:[%s1007] sm:$0xff] %vm294, %v1005
        loop: start=0, step=1, limit=8
        $region45: #{ristdnet_forward.5} parent=31 // loop_pre_header
          _
        $region46: #{ristdnet_forward.5} parent=31 // loop_header
          %s1010 = sphi 0, %s1014
          %p1011 = scmp.ge.s32.totalorder %s1010, 8
        $region47: #{ristdnet_forward.5} parent=31 // loop_header_branch
          %1013 = sbr.rel (%p1011) target = $region51
        $region48: #{ristdnet_forward.5} parent=31 // loop_body
          %s1015 = smul.u32 %s1010, 2
          %s1016 = smul.addr %s1015, 8
          %s1017 = scalar_lea.vmem [#allocation2], %s1016
          %v1018 = vld [vmem:[%s1017] sm:$0xff]
          %vm1019 = vcmask 130048
          %1020 = vst.msk [vmem:[#allocation3] sm:$0xff] %vm1019, %v1018
          %1022 = vrot.lane.b32.xlu0 %v1018, 127
          %v1023 = vpop.permute.xlu0 %1022
          %1025 = vst.msk [vmem:[#allocation3 + $0x8] sm:$0xff] %vm1019, %v1023
          %1026 = vrot.lane.b32.xlu0 %v1018, 126
          %v1027 = vpop.permute.xlu0 %1026
          %1029 = vst.msk [vmem:[#allocation3 + $0x10] sm:$0xff] %vm1019, %v1027
          %s1030 = sadd.s32 %s1015, 1
          %s1031 = smul.addr %s1030, 8
          %s1032 = scalar_lea.vmem [#allocation2], %s1031
          %v1033 = vld [vmem:[%s1032] sm:$0xff]
          %1034 = vst.msk [vmem:[#allocation3 + $0x18] sm:$0xff] %vm1019, %v1033
          %1036 = vrot.lane.b32.xlu0 %v1033, 127
          %v1037 = vpop.permute.xlu0 %1036
          %1039 = vst.msk [vmem:[#allocation3 + $0x20] sm:$0xff] %vm1019, %v1037
          %1040 = vrot.lane.b32.xlu0 %v1033, 126
          %v1041 = vpop.permute.xlu0 %1040
          %1043 = vst.msk [vmem:[#allocation3 + $0x28] sm:$0xff] %vm1019, %v1041
          %s1044 = sadd.s32 %s1015, 2
          %s1045 = smul.addr %s1044, 8
          %s1046 = scalar_lea.vmem [#allocation2], %s1045
          %v1047 = vld [vmem:[%s1046] sm:$0xff]
          %1048 = vst.msk [vmem:[#allocation3 + $0x30] sm:$0xff] %vm1019, %v1047
          %1050 = vrot.lane.b32.xlu0 %v1047, 127
          %v1051 = vpop.permute.xlu0 %1050
          %1053 = vst.msk [vmem:[#allocation3 + $0x38] sm:$0xff] %vm1019, %v1051
          %1054 = vrot.lane.b32.xlu0 %v1047, 126
          %v1055 = vpop.permute.xlu0 %1054
          %1057 = vst.msk [vmem:[#allocation3 + $0x40] sm:$0xff] %vm1019, %v1055
          %v1058 = vld [vmem:[#allocation7] sm:$0xff]
          %v1059 = vld [vmem:[#allocation7 + $0x8] sm:$0xff]
          %v1060 = vld [vmem:[#allocation3] sm:$0xff]
          %v1061 = vld [vmem:[#allocation3 + $0x8] sm:$0xff]
          %v1062 = vld [vmem:[#allocation3 + $0x10] sm:$0xff]
          %v1063 = vld [vmem:[#allocation3 + $0x18] sm:$0xff]
          %v1064 = vld [vmem:[#allocation3 + $0x20] sm:$0xff]
          %v1065 = vld [vmem:[#allocation3 + $0x28] sm:$0xff]
          %v1066 = vld [vmem:[#allocation3 + $0x30] sm:$0xff]
          %v1067 = vld [vmem:[#allocation3 + $0x38] sm:$0xff]
          %v1068 = vld [vmem:[#allocation3 + $0x40] sm:$0xff]
          %v1069 = vld [vmem:[#allocation9] sm:$0xff]
          %v1070 = vld [vmem:[#allocation9 + $0x8] sm:$0xff]
          %1072 = vset.pattern.permute.xlu0 0
          %1073 = vperm.xlu0 %1072, %v1069
          %v1074 = vpop.permute.xlu0 %1073
          %1077 = vset.pattern.permute.xlu0 0
          %1078 = vperm.xlu0 %1077, %v1070
          %v1079 = vpop.permute.xlu0 %1078
          %v1083 = vunpack.c.l.b16 %v1058
          %v1084 = vunpack.c.h.b16 %v1058
          %v1085 = vunpack.c.l.b16 %v1059
          %v1086 = vunpack.c.h.b16 %v1059
          %v1087 = vpack.c.b16 %v1085, %v1083
          %v1088 = vpack.c.b16 %v1086, %v1084
          %v1091 = vsel %vm1019, %v1088, 0
          %1093 = vmatprep.subr.bf16.mxu0 0
          %1094 = vmatpush1.bf16.msra.mxu0 %v1060
          %1095 = vmatprep.subr.bf16.mxu0 0
          %1096 = vmatpush1.bf16.msra.mxu0 %v1061
          %1097 = vmatprep.subr.bf16.mxu0 0
          %1098 = vmatpush1.bf16.msra.mxu0 %v1062
          %1099 = vmatprep.subr.bf16.mxu0 0
          %1100 = vmatpush1.bf16.msra.mxu0 %v1063
          %1101 = vmatprep.subr.bf16.mxu0 0
          %1102 = vmatpush1.bf16.msra.mxu0 %v1064
          %1103 = vmatprep.subr.bf16.mxu0 0
          %1104 = vmatpush1.bf16.msra.mxu0 %v1065
          %1105 = vmatprep.subr.bf16.mxu0 0
          %1106 = vmatpush1.bf16.msra.mxu0 %v1066
          %1107 = vmatprep.subr.bf16.mxu0 0
          %1108 = vmatpush1.bf16.msra.mxu0 %v1067
          %1109 = vmatprep.subr.bf16.mxu0 0
          %1110 = vmatpush1.bf16.msra.mxu0 %v1068
          %1111 = vmatprep.subr.bf16.mxu0 0
          %1112 = vmatpush1.bf16.msra.mxu0 0
          %1113 = vmatprep.subr.bf16.mxu0 0
          %1114 = vmatpush1.bf16.msra.mxu0 0
          %1115 = vmatprep.subr.bf16.mxu0 0
          %1116 = vmatpush1.bf16.msra.mxu0 0
          %1117 = vmatprep.subr.bf16.mxu0 0
          %1118 = vmatpush1.bf16.msra.mxu0 0
          %1119 = vmatprep.subr.bf16.mxu0 0
          %1120 = vmatpush1.bf16.msra.mxu0 0
          %1121 = vmatprep.subr.bf16.mxu0 0
          %1122 = vmatpush1.bf16.msra.mxu0 0
          %1123 = vmatprep.subr.bf16.mxu0 0
          %1124 = vmatpush1.bf16.msra.mxu0 0
          %1125 = vmatprep.mubr.bf16.mxu0 %v1091
          %1126 = vmatmul.mubr.bf16.gmra.mrb[0].mxu0 %v1087
          %v1127 = vpop.f32.mrb[0].mxu0
          %v1128 = vadd.f32 %v1074, %v1127
          %v1129 = vpop.f32.mrb[0].mxu0
          %v1130 = vpop.f32.mrb[0].mxu0
          %v1131 = vadd.f32 %v1079, %v1130
          %v1132 = vpop.f32.mrb[0].mxu0
          %1133 = vdwg.mxu0
          %v1134 = vmax.f32 %v1128, 0.0
          %v1135 = vmax.f32 %v1131, 0.0
          %v1136 = vld [vmem:[%s1032] sm:$0xff]
          %1137 = vst.msk [vmem:[#allocation3] sm:$0xff] %vm1019, %v1136
          %1139 = vrot.lane.b32.xlu0 %v1136, 127
          %v1140 = vpop.permute.xlu0 %1139
          %1142 = vst.msk [vmem:[#allocation3 + $0x8] sm:$0xff] %vm1019, %v1140
          %1143 = vrot.lane.b32.xlu0 %v1136, 126
          %v1144 = vpop.permute.xlu0 %1143
          %1146 = vst.msk [vmem:[#allocation3 + $0x10] sm:$0xff] %vm1019, %v1144
          %v1147 = vld [vmem:[%s1046] sm:$0xff]
          %1148 = vst.msk [vmem:[#allocation3 + $0x18] sm:$0xff] %vm1019, %v1147
          %1150 = vrot.lane.b32.xlu0 %v1147, 127
          %v1151 = vpop.permute.xlu0 %1150
          %1153 = vst.msk [vmem:[#allocation3 + $0x20] sm:$0xff] %vm1019, %v1151
          %1154 = vrot.lane.b32.xlu0 %v1147, 126
          %v1155 = vpop.permute.xlu0 %1154
          %1157 = vst.msk [vmem:[#allocation3 + $0x28] sm:$0xff] %vm1019, %v1155
          %s1158 = sadd.s32 %s1015, 3
          %s1159 = smul.addr %s1158, 8
          %s1160 = scalar_lea.vmem [#allocation2], %s1159
          %v1161 = vld [vmem:[%s1160] sm:$0xff]
          %1162 = vst.msk [vmem:[#allocation3 + $0x30] sm:$0xff] %vm1019, %v1161
          %1164 = vrot.lane.b32.xlu0 %v1161, 127
          %v1165 = vpop.permute.xlu0 %1164
          %1167 = vst.msk [vmem:[#allocation3 + $0x38] sm:$0xff] %vm1019, %v1165
          %1168 = vrot.lane.b32.xlu0 %v1161, 126
          %v1169 = vpop.permute.xlu0 %1168
          %1171 = vst.msk [vmem:[#allocation3 + $0x40] sm:$0xff] %vm1019, %v1169
          %v1172 = vld [vmem:[#allocation7] sm:$0xff]
          %v1173 = vld [vmem:[#allocation7 + $0x8] sm:$0xff]
          %v1174 = vld [vmem:[#allocation3] sm:$0xff]
          %v1175 = vld [vmem:[#allocation3 + $0x8] sm:$0xff]
          %v1176 = vld [vmem:[#allocation3 + $0x10] sm:$0xff]
          %v1177 = vld [vmem:[#allocation3 + $0x18] sm:$0xff]
          %v1178 = vld [vmem:[#allocation3 + $0x20] sm:$0xff]
          %v1179 = vld [vmem:[#allocation3 + $0x28] sm:$0xff]
          %v1180 = vld [vmem:[#allocation3 + $0x30] sm:$0xff]
          %v1181 = vld [vmem:[#allocation3 + $0x38] sm:$0xff]
          %v1182 = vld [vmem:[#allocation3 + $0x40] sm:$0xff]
          %v1183 = vld [vmem:[#allocation9] sm:$0xff]
          %v1184 = vld [vmem:[#allocation9 + $0x8] sm:$0xff]
          %1186 = vset.pattern.permute.xlu0 0
          %1187 = vperm.xlu0 %1186, %v1183
          %v1188 = vpop.permute.xlu0 %1187
          %1191 = vset.pattern.permute.xlu0 0
          %1192 = vperm.xlu0 %1191, %v1184
          %v1193 = vpop.permute.xlu0 %1192
          %v1197 = vunpack.c.l.b16 %v1172
          %v1198 = vunpack.c.h.b16 %v1172
          %v1199 = vunpack.c.l.b16 %v1173
          %v1200 = vunpack.c.h.b16 %v1173
          %v1201 = vpack.c.b16 %v1199, %v1197
          %v1202 = vpack.c.b16 %v1200, %v1198
          %v1205 = vsel %vm1019, %v1202, 0
          %1207 = vmatprep.subr.bf16.mxu0 0
          %1208 = vmatpush1.bf16.msra.mxu0 %v1174
          %1209 = vmatprep.subr.bf16.mxu0 0
          %1210 = vmatpush1.bf16.msra.mxu0 %v1175
          %1211 = vmatprep.subr.bf16.mxu0 0
          %1212 = vmatpush1.bf16.msra.mxu0 %v1176
          %1213 = vmatprep.subr.bf16.mxu0 0
          %1214 = vmatpush1.bf16.msra.mxu0 %v1177
          %1215 = vmatprep.subr.bf16.mxu0 0
          %1216 = vmatpush1.bf16.msra.mxu0 %v1178
          %1217 = vmatprep.subr.bf16.mxu0 0
          %1218 = vmatpush1.bf16.msra.mxu0 %v1179
          %1219 = vmatprep.subr.bf16.mxu0 0
          %1220 = vmatpush1.bf16.msra.mxu0 %v1180
          %1221 = vmatprep.subr.bf16.mxu0 0
          %1222 = vmatpush1.bf16.msra.mxu0 %v1181
          %1223 = vmatprep.subr.bf16.mxu0 0
          %1224 = vmatpush1.bf16.msra.mxu0 %v1182
          %1225 = vmatprep.subr.bf16.mxu0 0
          %1226 = vmatpush1.bf16.msra.mxu0 0
          %1227 = vmatprep.subr.bf16.mxu0 0
          %1228 = vmatpush1.bf16.msra.mxu0 0
          %1229 = vmatprep.subr.bf16.mxu0 0
          %1230 = vmatpush1.bf16.msra.mxu0 0
          %1231 = vmatprep.subr.bf16.mxu0 0
          %1232 = vmatpush1.bf16.msra.mxu0 0
          %1233 = vmatprep.subr.bf16.mxu0 0
          %1234 = vmatpush1.bf16.msra.mxu0 0
          %1235 = vmatprep.subr.bf16.mxu0 0
          %1236 = vmatpush1.bf16.msra.mxu0 0
          %1237 = vmatprep.subr.bf16.mxu0 0
          %1238 = vmatpush1.bf16.msra.mxu0 0
          %1239 = vmatprep.mubr.bf16.mxu0 %v1205
          %1240 = vmatmul.mubr.bf16.gmra.mrb[0].mxu0 %v1201
          %v1241 = vpop.f32.mrb[0].mxu0
          %v1242 = vadd.f32 %v1188, %v1241
          %v1243 = vpop.f32.mrb[0].mxu0
          %v1244 = vpop.f32.mrb[0].mxu0
          %v1245 = vadd.f32 %v1193, %v1244
          %v1246 = vpop.f32.mrb[0].mxu0
          %1247 = vdwg.mxu0
          %v1248 = vmax.f32 %v1242, 0.0
          %v1249 = vmax.f32 %v1245, 0.0
          %v1250 = vmax.f32 %v1134, %v1248
          %v1251 = vmax.f32 %v1135, %v1249
          %1254 = vrot.lane.b32.xlu0 %v1250, 127
          %v1255 = vpop.permute.xlu0 %1254
          %1256 = vrot.lane.b32.xlu0 %v1251, 127
          %v1257 = vpop.permute.xlu0 %1256
          %1260 = vrot.lane.b32.xlu0 %v1250, 15
          %v1261 = vpop.permute.xlu0 %1260
          %1262 = vrot.lane.b32.xlu0 %v1251, 15
          %v1263 = vpop.permute.xlu0 %1262
          %vm1266 = vcmask 121856
          %v1267 = vsel %vm1266, %v1255, %v1261
          %v1268 = vsel %vm1266, %v1257, %v1263
          %v1269 = vmax.f32 %v1250, %v1267
          %v1270 = vmax.f32 %v1251, %v1268
          %v1271 = vlaneseq
          %v1272 = vand.u32 %v1271, 127
          %v1273 = vand.u32 %v1272, 1
          %vm1274 = vcmp.ne.s32.totalorder %v1273, 0
          %1277 = vrot.lane.b32.xlu0 %v1269, 127
          %v1278 = vpop.permute.xlu0 %1277
          %1279 = vrot.lane.b32.xlu0 %v1270, 127
          %v1280 = vpop.permute.xlu0 %1279
          %1283 = vrot.lane.b32.xlu0 %v1269, 15
          %v1284 = vpop.permute.xlu0 %1283
          %1285 = vrot.lane.b32.xlu0 %v1270, 15
          %v1286 = vpop.permute.xlu0 %1285
          %v1289 = vsel %vm1266, %v1278, %v1284
          %v1290 = vsel %vm1266, %v1280, %v1286
          %v1291 = vsel %vm1274, %v1289, %v1269
          %v1292 = vsel %vm1274, %v1290, %v1270
          %v1293 = vand.u32 %v1272, 2
          %vm1294 = vcmp.ne.s32.totalorder %v1293, 0
          %1297 = vrot.lane.b32.xlu0 %v1291, 126
          %v1298 = vpop.permute.xlu0 %1297
          %1299 = vrot.lane.b32.xlu0 %v1292, 126
          %v1300 = vpop.permute.xlu0 %1299
          %1303 = vrot.lane.b32.xlu0 %v1291, 14
          %v1304 = vpop.permute.xlu0 %1303
          %1305 = vrot.lane.b32.xlu0 %v1292, 14
          %v1306 = vpop.permute.xlu0 %1305
          %vm1309 = vcmask 113664
          %v1310 = vsel %vm1309, %v1298, %v1304
          %v1311 = vsel %vm1309, %v1300, %v1306
          %v1312 = vsel %vm1294, %v1310, %v1291
          %v1313 = vsel %vm1294, %v1311, %v1292
          %v1314 = vand.u32 %v1272, 4
          %vm1315 = vcmp.ne.s32.totalorder %v1314, 0
          %1318 = vrot.lane.b32.xlu0 %v1312, 124
          %v1319 = vpop.permute.xlu0 %1318
          %1320 = vrot.lane.b32.xlu0 %v1313, 124
          %v1321 = vpop.permute.xlu0 %1320
          %1324 = vrot.lane.b32.xlu0 %v1312, 12
          %v1325 = vpop.permute.xlu0 %1324
          %1326 = vrot.lane.b32.xlu0 %v1313, 12
          %v1327 = vpop.permute.xlu0 %1326
          %vm1330 = vcmask 97280
          %v1331 = vsel %vm1330, %v1319, %v1325
          %v1332 = vsel %vm1330, %v1321, %v1327
          %v1333 = vsel %vm1315, %v1331, %v1312
          %v1334 = vsel %vm1315, %v1332, %v1313
          %v1335 = vpack.c.bf16 %v1334, %v1333
          %v1337 = vunpack.c.l.b16 %v1335
          %v1338 = vunpack.c.h.b16 %v1335
          %v1339 = vpack.c.b16 %v1337, %v1337
          %v1340 = vpack.c.b16 %v1338, %v1338
          %s1343 = smul.addr %s1015, 4
          %s1344 = scalar_lea.vmem %s231, %s1343 [#allocation10]
          %vm1345 = vcmask 60416
          %1346 = vst.msk [vmem:[%s1344] sm:$0xf] %vm1345, %v1339
          %1347 = vst.msk [vmem:[%s1344 + $0x4] sm:$0xf] %vm1345, %v1340
        $region49: #{ristdnet_forward.5} parent=31 // loop_footer
          %s1014 = sadd.s32 1, %s1010
        $region50: #{ristdnet_forward.5} parent=31 // loop_footer_branch
          %1009 = sbr.rel target = $region46
        $region51: #{ristdnet_forward.5} parent=31 // loop_exit
          _
        %s1348 = sand.u32 %s111, 1
        %s1349 = scalar_lea.sflag [#allocation6], %s1348
        %s1350 = sand.u32 %s111, 1
        %s1351 = smul.addr %s1350, 64
        %s1352 = scalar_lea.vmem [#allocation10], %s1351
        // Predicated region
        $region52: #{ristdnet_forward.5} parent=31 // pred_check
          %p1353 = pneg %p121
        $region53: #{ristdnet_forward.5} parent=31 // pred_check_branch
          %1355 = sbr.rel (%p1353) target = $region55
        $region54: #{ristdnet_forward.5} parent=31 // pred_region
          %s1356 = smul.u32 8, %s26
          %s1358 = ssub.s32 1024, 1024
          %1359 = vsyncadd %s1349, %s1358
          %s1360 = smul.addr %s1356, 2
          %s1361 = smul.addr %s25, 16
          %s1362 = sadd.s32 %s1360, %s1361
          %s1363 = smul.addr %s1362, 64
          %s1364 = scalar_lea.hbm %s3, %s1363
          %s1365 = sshll.u32 %s1352, 4
          %s1366 = int_to_ptr.vmem [resolvable:$true] %s1365
          %1371 = dma.vmem_to_hbm [thread:$0]  %s1366, 1024, %s1364, %s1349, 64, 64, 4
        $region55: #{ristdnet_forward.5} parent=31 // pred_fallthru
          _
      $region32: #{ristdnet_forward.5} parent=5 // pred_fallthru
        _
      %p1372 = scmp.le.s32.totalorder 2, %s16
      // Predicated region
      $region56: #{ristdnet_forward.5} parent=5 // pred_check
        %p1373 = pneg %p1372
      $region57: #{ristdnet_forward.5} parent=5 // pred_check_branch
        %1375 = sbr.rel (%p1373) target = $region59
      $region58: #{ristdnet_forward.5} parent=5 // pred_region
        %s1376 = ssub.s32 %s16, 2
        // Predicated region
        $region60: #{ristdnet_forward.5} parent=58 // pred_check
          %p1377 = pneg %p127
        $region61: #{ristdnet_forward.5} parent=58 // pred_check_branch
          %1379 = sbr.rel (%p1377) target = $region63
        $region62: #{ristdnet_forward.5} parent=58 // pred_region
          %s1380 = sand.u32 %s112, 1
          %s1381 = scalar_lea.sflag [#allocation6], %s1380
          %s1382 = sand.u32 %s112, 1
          %s1383 = smul.addr %s1382, 64
          %s1384 = scalar_lea.vmem [#allocation10], %s1383
          %1385 = dma.done %s1381, 1024
        $region63: #{ristdnet_forward.5} parent=58 // pred_fallthru
          _
      $region59: #{ristdnet_forward.5} parent=5 // pred_fallthru
        _
    $region6: #{ristdnet_forward.5} parent=1 // loop_footer
      %s20 = sadd.s32 1, %s16
    $region7: #{ristdnet_forward.5} parent=1 // loop_footer_branch
      %15 = sbr.rel target = $region3
    $region8: #{ristdnet_forward.5} parent=1 // loop_exit
      _
    %1386 = vsyncpa [#allocation5], 1
    %s1387 = scalar_lea.sflag [#allocation5], 1
    %1388 = vsyncpa %s1387, 1
    %1389 = vsyncpa [#allocation8], 1
    %1390 = vsyncpa [#allocation6], 1
    %s1391 = scalar_lea.sflag [#allocation6], 1
    %1392 = vsyncpa %s1391, 1

</llo_original>
